<compile_context>
chip_gen: v7x
topology: tpu7x:2x2x1
jax: 0.10.0
libtpu: 0.0.40
codegen_flags: <defaults>
</compile_context>

<pallas_src>
import functools

import jax
import jax.numpy as jnp
from jax import lax
from jax.experimental import pallas as pl
from jax.experimental.pallas import tpu as pltpu

_COMPUTE = jnp.bfloat16            # MXU operand dtype
_VMEM_LIMIT = 48 * 1024 * 1024     # fits v5e/v6e (128 MiB) and v7x (64 MiB)


def _silu(v):
    return v * jax.nn.sigmoid(v)


def _pick_div(n, candidates):
    for c in candidates:
        if n % c == 0:
            return c
    return n


# --------------------------------------------------------------------------- #
# Kernel 1: fused cv1 / cv2 (two 1x1 conv + BN + SiLU sharing one input)
# --------------------------------------------------------------------------- #
def _pw_dual_kernel(x_ref, wa_ref, ba_ref, wb_ref, bb_ref, oa_ref, ob_ref):
    x = x_ref[...]
    ya = jnp.dot(x, wa_ref[...], preferred_element_type=jnp.float32) + ba_ref[...]
    oa_ref[...] = _silu(ya).astype(oa_ref.dtype)
    yb = jnp.dot(x, wb_ref[...], preferred_element_type=jnp.float32) + bb_ref[...]
    ob_ref[...] = _silu(yb).astype(ob_ref.dtype)


def pointwise_dual(x2d, wa, ba, wb, bb):
    """x2d: (M, Cin) bf16 -> (cv1(x), cv2(x)), each (M, Cout) bf16."""
    M, Cin = x2d.shape
    Cout = wa.shape[-1]
    MT = _pick_div(M, [2048, 1024, 512, 256, 128, 64, 32, 16, 8])
    ba2 = ba.reshape(1, Cout).astype(jnp.float32)
    bb2 = bb.reshape(1, Cout).astype(jnp.float32)
    return pl.pallas_call(
        _pw_dual_kernel,
        out_shape=(jax.ShapeDtypeStruct((M, Cout), _COMPUTE),
                   jax.ShapeDtypeStruct((M, Cout), _COMPUTE)),
        grid_spec=pltpu.PrefetchScalarGridSpec(
            num_scalar_prefetch=0,
            grid=(M // MT,),
            in_specs=[
                pl.BlockSpec((MT, Cin), lambda i: (i, 0)),
                pl.BlockSpec((Cin, Cout), lambda i: (0, 0)),
                pl.BlockSpec((1, Cout), lambda i: (0, 0)),
                pl.BlockSpec((Cin, Cout), lambda i: (0, 0)),
                pl.BlockSpec((1, Cout), lambda i: (0, 0)),
            ],
            out_specs=(pl.BlockSpec((MT, Cout), lambda i: (i, 0)),
                       pl.BlockSpec((MT, Cout), lambda i: (i, 0))),
        ),
        compiler_params=pltpu.CompilerParams(
            dimension_semantics=("parallel",),
            vmem_limit_bytes=_VMEM_LIMIT),
    )(x2d, wa, ba2, wb, bb2)


# --------------------------------------------------------------------------- #
# Kernel 2: folded QARepVGGB = 3x3 conv + bias + SiLU
# --------------------------------------------------------------------------- #
def _rep3x3_kernel(xp_ref, w_ref, b_ref, o_ref, patch_ref, *, RB, W, Cin):
    # xp_ref   : (H+2, W+2, Cin)  full padded image, resident across r/c axes
    # w_ref    : (9*Cin, CT)      fused 3x3 weights, taps flattened into K
    # b_ref    : (1, CT)
    # o_ref    : (RB*W, CT)       flat output slab for this (row-block, c) tile
    # patch_ref: (RB*W, 9*Cin)    VMEM im2col scratch
    r = pl.program_id(1)
    row0 = pl.multiple_of(r * RB, RB)
    # im2col: tap (kh, kw) lands in contraction columns [j*Cin, (j+1)*Cin),
    # matching the (kh, kw, ci) flattening of w_ref.  This turns the 9 small
    # K=Cin matmuls into a single K=9*Cin MXU matmul per tile.
    for kh in range(3):
        for kw in range(3):
            j = 3 * kh + kw
            tap = xp_ref[pl.ds(row0 + kh, RB), kw:kw + W, :]     # (RB, W, Cin)
            patch_ref[:, j * Cin:(j + 1) * Cin] = tap.reshape(RB * W, Cin)
    acc = jnp.dot(patch_ref[...], w_ref[...],
                  preferred_element_type=jnp.float32)            # (RB*W, CT) f32
    y = acc + b_ref[...]
    o_ref[...] = _silu(y).astype(o_ref.dtype)


def rep3x3_silu(x_nhwc, w_mat, bias):
    """Folded QARepVGGB: 3x3 conv (pad=1, stride=1) + bias + SiLU.

    x_nhwc: (N, H, W, Cin) bf16; w_mat: (9*Cin, Cout) bf16; bias: (Cout,) f32.
    Returns (N, H*W, Cout) bf16.
    """
    N, H, W, Cin = x_nhwc.shape
    Cout = w_mat.shape[-1]
    xp = jnp.pad(x_nhwc, ((0, 0), (1, 1), (1, 1), (0, 0)))

    RB = _pick_div(H, [8, 16, 4, 2, 1])          # row block
    if (RB * W) % 8 != 0:
        RB = H                                   # fall back to full-H blocks
    CT = 128 if Cout % 128 == 0 else Cout        # lane-dense Cout tiles if possible
    bias2 = bias.reshape(1, Cout).astype(jnp.float32)

    kernel = functools.partial(_rep3x3_kernel, RB=RB, W=W, Cin=Cin)
    return pl.pallas_call(
        kernel,
        out_shape=jax.ShapeDtypeStruct((N, H * W, Cout), _COMPUTE),
        grid_spec=pltpu.PrefetchScalarGridSpec(
            num_scalar_prefetch=0,
            grid=(N, H // RB, Cout // CT),
            in_specs=[
                # index_map ignores (r, c): the padded image is fetched once
                # per batch element and stays resident in VMEM.
                pl.BlockSpec((pl.Squeezed(), H + 2, W + 2, Cin),
                             lambda n, r, c: (n, 0, 0, 0)),
                pl.BlockSpec((9 * Cin, CT), lambda n, r, c: (0, c)),
                pl.BlockSpec((1, CT), lambda n, r, c: (0, c)),
            ],
            out_specs=pl.BlockSpec((pl.Squeezed(), RB * W, CT),
                                   lambda n, r, c: (n, r, c)),
            scratch_shapes=[pltpu.VMEM((RB * W, 9 * Cin), _COMPUTE)],
        ),
        compiler_params=pltpu.CompilerParams(
            dimension_semantics=("parallel", "parallel", "arbitrary"),
            vmem_limit_bytes=_VMEM_LIMIT),
    )(xp, w_mat, bias2)


# --------------------------------------------------------------------------- #
# Kernel 3: cv3 then cv4 fused (concat realised as two summed matmuls)
# --------------------------------------------------------------------------- #
def _pw_cv34_kernel(yb_ref, y2_ref, w3_ref, b3_ref, w4a_ref, w4b_ref, b4_ref,
                    o_ref):
    t = jnp.dot(yb_ref[...], w3_ref[...],
                preferred_element_type=jnp.float32) + b3_ref[...]
    t = _silu(t).astype(yb_ref.dtype)            # cv3 output (= y1), bf16 for MXU
    z = (jnp.dot(t, w4a_ref[...], preferred_element_type=jnp.float32)
         + jnp.dot(y2_ref[...], w4b_ref[...], preferred_element_type=jnp.float32)
         + b4_ref[...])
    o_ref[...] = _silu(z).astype(o_ref.dtype)


def pointwise_cv34(yb2d, y22d, w3, b3, w4a, w4b, b4):
    M, Ci = yb2d.shape
    Cmid = w3.shape[-1]
    Cout = w4a.shape[-1]
    MT = _pick_div(M, [2048, 1024, 512, 256, 128, 64, 32, 16, 8])
    b3r = b3.reshape(1, Cmid).astype(jnp.float32)
    b4r = b4.reshape(1, Cout).astype(jnp.float32)
    return pl.pallas_call(
        _pw_cv34_kernel,
        out_shape=jax.ShapeDtypeStruct((M, Cout), jnp.float32),
        grid_spec=pltpu.PrefetchScalarGridSpec(
            num_scalar_prefetch=0,
            grid=(M // MT,),
            in_specs=[
                pl.BlockSpec((MT, Ci), lambda i: (i, 0)),
                pl.BlockSpec((MT, Ci), lambda i: (i, 0)),
                pl.BlockSpec((Ci, Cmid), lambda i: (0, 0)),
                pl.BlockSpec((1, Cmid), lambda i: (0, 0)),
                pl.BlockSpec((Cmid, Cout), lambda i: (0, 0)),
                pl.BlockSpec((Ci, Cout), lambda i: (0, 0)),
                pl.BlockSpec((1, Cout), lambda i: (0, 0)),
            ],
            out_specs=pl.BlockSpec((MT, Cout), lambda i: (i, 0)),
        ),
        compiler_params=pltpu.CompilerParams(
            dimension_semantics=("parallel",),
            vmem_limit_bytes=_VMEM_LIMIT),
    )(yb2d, y22d, w3, b3r, w4a, w4b, b4r)


# --------------------------------------------------------------------------- #
# Parameter folding (inference-mode BN)
# --------------------------------------------------------------------------- #
def _fuse_conv_bn(w_oihw, gamma, beta, mean, var, eps=1e-5):
    t = gamma / jnp.sqrt(var + eps)
    return w_oihw * t.reshape(-1, 1, 1, 1), beta - mean * t


def _pw_matrix(w_oihw):
    # (Cout, Cin, 1, 1) -> (Cin, Cout)
    return jnp.transpose(w_oihw[:, :, 0, 0], (1, 0))


def fold_params(p, c_):
    f = {}
    for name in ("cv1", "cv2", "cv3", "cv4"):
        w, b = _fuse_conv_bn(p[name]["w"], p[name]["g"], p[name]["b"],
                             p[name]["m"], p[name]["v"])
        f[name + "_w"], f[name + "_b"] = _pw_matrix(w), b

    # QARepVGGB (in==out, stride 1, groups 1):
    #   SiLU( BN( conv3x3_bn(x) + conv1x1(x) + x ) ) == SiLU( conv3x3(x;Kq)+bq )
    q = p["rep"]
    k3, b3 = _fuse_conv_bn(q["dense_w"], q["dense_g"], q["dense_b"],
                           q["dense_m"], q["dense_v"])
    k1 = jnp.pad(q["w1x1"], ((0, 0), (0, 0), (1, 1), (1, 1)))
    eye = jnp.zeros((c_, c_, 3, 3), jnp.float32)
    eye = eye.at[jnp.arange(c_), jnp.arange(c_), 1, 1].set(1.0)
    k = k3 + k1 + eye                                        # OIHW
    t = q["bn_g"] / jnp.sqrt(q["bn_v"] + 1e-5)
    kq = k * t.reshape(-1, 1, 1, 1)                          # fold post-sum BN
    bq = q["bn_b"] - (q["bn_m"] - b3) * t
    f["rep_w"] = jnp.transpose(kq, (2, 3, 1, 0)).reshape(9 * c_, c_)  # HWIO flat
    f["rep_b"] = bq

    # cv4 consumes concat(y1, y2): split its weight so the concat never
    # materializes (two matmuls summed inside the kernel instead).
    f["cv4_wa"], f["cv4_wb"] = f["cv4_w"][:c_], f["cv4_w"][c_:]
    return f


# --------------------------------------------------------------------------- #
# Full CSCQARep forward (n = 1)
# --------------------------------------------------------------------------- #
def csc_qarep_forward(x_nchw, f):
    N, C1, H, W = x_nchw.shape
    c_ = f["cv1_w"].shape[-1]
    C2 = f["cv4_wa"].shape[-1]

    # one NCHW -> NHWC relayout for the whole block; activations move as bf16
    x2d = jnp.transpose(x_nchw, (0, 2, 3, 1)).reshape(N * H * W, C1)
    x2d = x2d.astype(_COMPUTE)

    ya, y2 = pointwise_dual(
        x2d,
        f["cv1_w"].astype(_COMPUTE), f["cv1_b"],
        f["cv2_w"].astype(_COMPUTE), f["cv2_b"])

    yb = rep3x3_silu(ya.reshape(N, H, W, c_),
                     f["rep_w"].astype(_COMPUTE), f["rep_b"])    # (N, H*W, c_)

    out2d = pointwise_cv34(
        yb.reshape(N * H * W, c_), y2,
        f["cv3_w"].astype(_COMPUTE), f["cv3_b"],
        f["cv4_wa"].astype(_COMPUTE), f["cv4_wb"].astype(_COMPUTE),
        f["cv4_b"])

    return jnp.transpose(out2d.reshape(N, H, W, C2), (0, 3, 1, 2))


def csc_qarep_reference(x_nchw, f):
    """Pure-JAX reference with the same bf16-operand / f32-accumulate math."""
    bf = lambda a: a.astype(jnp.bfloat16).astype(jnp.float32)
    c_ = f["cv1_w"].shape[-1]
    x = jnp.transpose(x_nchw, (0, 2, 3, 1))

    def pw(inp, w, b):
        return _silu(jnp.einsum("nhwc,cd->nhwd", bf(inp), bf(w)) + b)

    ya = pw(x, f["cv1_w"], f["cv1_b"])
    y2 = pw(x, f["cv2_w"], f["cv2_b"])
    yb = lax.conv_general_dilated(
        bf(ya), bf(f["rep_w"].reshape(3, 3, c_, c_)),
        window_strides=(1, 1), padding=((1, 1), (1, 1)),
        dimension_numbers=("NHWC", "HWIO", "NHWC")) + f["rep_b"]
    yb = _silu(yb)
    y1 = pw(yb, f["cv3_w"], f["cv3_b"])
    z = (jnp.einsum("nhwc,cd->nhwd", bf(y1), bf(f["cv4_wa"]))
         + jnp.einsum("nhwc,cd->nhwd", bf(y2), bf(f["cv4_wb"]))
         + f["cv4_b"])
    return jnp.transpose(_silu(z), (0, 3, 1, 2))


# --------------------------------------------------------------------------- #
if __name__ == "__main__":
    N, C1, C2, H, W = 2, 4, 4, 16, 16
    e = 0.5
    c_ = int(C2 * e)                     # hidden width of the CSC block

    keys = iter(jax.random.split(jax.random.PRNGKey(0), 64))

    def nk():
        return next(keys)

    def conv_bn(cin, cout, k):
        return dict(
            w=jax.random.normal(nk(), (cout, cin, k, k), jnp.float32) * 0.2,
            g=jax.random.uniform(nk(), (cout,), jnp.float32, 0.5, 1.5),
            b=jax.random.normal(nk(), (cout,), jnp.float32) * 0.1,
            m=jax.random.normal(nk(), (cout,), jnp.float32) * 0.1,
            v=jax.random.uniform(nk(), (cout,), jnp.float32, 0.5, 1.5),
        )

    params = {
        "cv1": conv_bn(C1, c_, 1),
        "cv2": conv_bn(C1, c_, 1),
        "cv3": conv_bn(c_, c_, 1),
        "cv4": conv_bn(2 * c_, C2, 1),
        "rep": dict(
            dense_w=jax.random.normal(nk(), (c_, c_, 3, 3), jnp.float32) * 0.2,
            dense_g=jax.random.uniform(nk(), (c_,), jnp.float32, 0.5, 1.5),
            dense_b=jax.random.normal(nk(), (c_,), jnp.float32) * 0.1,
            dense_m=jax.random.normal(nk(), (c_,), jnp.float32) * 0.1,
            dense_v=jax.random.uniform(nk(), (c_,), jnp.float32, 0.5, 1.5),
            w1x1=jax.random.normal(nk(), (c_, c_, 1, 1), jnp.float32) * 0.2,
            bn_g=jax.random.uniform(nk(), (c_,), jnp.float32, 0.5, 1.5),
            bn_b=jax.random.normal(nk(), (c_,), jnp.float32) * 0.1,
            bn_m=jax.random.normal(nk(), (c_,), jnp.float32) * 0.1,
            bn_v=jax.random.uniform(nk(), (c_,), jnp.float32, 0.5, 1.5),
        ),
    }
    x = jax.random.normal(nk(), (N, C1, H, W), jnp.float32)

    folded = fold_params(params, c_)

    out = jax.block_until_ready(jax.jit(csc_qarep_forward)(x, folded))
    ref = csc_qarep_reference(x, folded)

    assert out.shape == (N, C2, H, W), out.shape
    err = float(jnp.max(jnp.abs(out - ref)))
    assert err < 5e-2, f"max abs err {err}"
    print("KERNEL_OK")
</pallas_src>

<mosaic_0001>
module attributes {stable_mosaic.version = 11 : i64} {
  func.func @_pw_dual_kernel(%arg0: i32, %arg1: memref<512x4xbf16, #tpu.memory_space<vmem>>, %arg2: memref<4x2xbf16, #tpu.memory_space<vmem>>, %arg3: memref<1x2xf32, #tpu.memory_space<vmem>>, %arg4: memref<4x2xbf16, #tpu.memory_space<vmem>>, %arg5: memref<1x2xf32, #tpu.memory_space<vmem>>, %arg6: memref<512x2xbf16, #tpu.memory_space<vmem>>, %arg7: memref<512x2xbf16, #tpu.memory_space<vmem>>) attributes {dimension_semantics = [#tpu.dimension_semantics<parallel>], iteration_bounds = array<i64: 1>, scalar_prefetch = 0 : i64, scratch_operands = 0 : i64, tpu.core_type = #tpu.core_type<tc>, window_params = [{transform_indices = @transform_0, window_bounds = array<i64: 512, 4>}, {pipeline_mode = #tpu.pipeline_mode<synchronous>, transform_indices = @transform_1, window_bounds = array<i64: 4, 2>}, {pipeline_mode = #tpu.pipeline_mode<synchronous>, transform_indices = @transform_2, window_bounds = array<i64: 1, 2>}, {pipeline_mode = #tpu.pipeline_mode<synchronous>, transform_indices = @transform_3, window_bounds = array<i64: 4, 2>}, {pipeline_mode = #tpu.pipeline_mode<synchronous>, transform_indices = @transform_4, window_bounds = array<i64: 1, 2>}, {transform_indices = @transform_5, window_bounds = array<i64: 512, 2>}, {transform_indices = @transform_6, window_bounds = array<i64: 512, 2>}]} {
    %c0 = arith.constant 0 : index
    %c0_0 = arith.constant 0 : index
    %0 = vector.load %arg1[%c0, %c0_0] : memref<512x4xbf16, #tpu.memory_space<vmem>>, vector<512x4xbf16>
    %c0_1 = arith.constant 0 : index
    %c0_2 = arith.constant 0 : index
    %1 = vector.load %arg2[%c0_1, %c0_2] : memref<4x2xbf16, #tpu.memory_space<vmem>>, vector<4x2xbf16>
    %cst = arith.constant dense<0.000000e+00> : vector<512x2xf32>
    %2 = tpu.matmul %0, %1, %cst {dimension_numbers = #tpu.dot_dimension_numbers<[1], [0], [0], [1], [0, 0, 1, 1], [], []>} : vector<512x4xbf16>, vector<4x2xbf16>, vector<512x2xf32> -> vector<512x2xf32>
    %c0_3 = arith.constant 0 : index
    %c0_4 = arith.constant 0 : index
    %3 = vector.load %arg3[%c0_3, %c0_4] : memref<1x2xf32, #tpu.memory_space<vmem>>, vector<1x2xf32>
    %4 = vector.broadcast %3 : vector<1x2xf32> to vector<512x2xf32>
    %5 = arith.addf %2, %4 : vector<512x2xf32>
    %6 = arith.negf %5 : vector<512x2xf32>
    %7 = math.exp %6 : vector<512x2xf32>
    %cst_5 = arith.constant 1.000000e+00 : f32
    %8 = vector.broadcast %cst_5 : f32 to vector<512x2xf32>
    %9 = arith.addf %8, %7 : vector<512x2xf32>
    %10 = arith.divf %8, %9 : vector<512x2xf32>
    %11 = arith.mulf %5, %10 : vector<512x2xf32>
    %12 = arith.truncf %11 : vector<512x2xf32> to vector<512x2xbf16>
    %c0_6 = arith.constant 0 : index
    %c0_7 = arith.constant 0 : index
    %13 = vector.load %arg6[%c0_6, %c0_7] : memref<512x2xbf16, #tpu.memory_space<vmem>>, vector<512x2xbf16>
    tpu.vector_store %arg6[%c0_6, %c0_7], %12 {strides = array<i32>} : memref<512x2xbf16, #tpu.memory_space<vmem>>, vector<512x2xbf16>,
    %c0_8 = arith.constant 0 : index
    %c0_9 = arith.constant 0 : index
    %14 = vector.load %arg4[%c0_8, %c0_9] : memref<4x2xbf16, #tpu.memory_space<vmem>>, vector<4x2xbf16>
    %cst_10 = arith.constant dense<0.000000e+00> : vector<512x2xf32>
    %15 = tpu.matmul %0, %14, %cst_10 {dimension_numbers = #tpu.dot_dimension_numbers<[1], [0], [0], [1], [0, 0, 1, 1], [], []>} : vector<512x4xbf16>, vector<4x2xbf16>, vector<512x2xf32> -> vector<512x2xf32>
    %c0_11 = arith.constant 0 : index
    %c0_12 = arith.constant 0 : index
    %16 = vector.load %arg5[%c0_11, %c0_12] : memref<1x2xf32, #tpu.memory_space<vmem>>, vector<1x2xf32>
    %17 = vector.broadcast %16 : vector<1x2xf32> to vector<512x2xf32>
    %18 = arith.addf %15, %17 : vector<512x2xf32>
    %19 = arith.negf %18 : vector<512x2xf32>
    %20 = math.exp %19 : vector<512x2xf32>
    %cst_13 = arith.constant 1.000000e+00 : f32
    %21 = vector.broadcast %cst_13 : f32 to vector<512x2xf32>
    %22 = arith.addf %21, %20 : vector<512x2xf32>
    %23 = arith.divf %21, %22 : vector<512x2xf32>
    %24 = arith.mulf %18, %23 : vector<512x2xf32>
    %25 = arith.truncf %24 : vector<512x2xf32> to vector<512x2xbf16>
    %c0_14 = arith.constant 0 : index
    %c0_15 = arith.constant 0 : index
    %26 = vector.load %arg7[%c0_14, %c0_15] : memref<512x2xbf16, #tpu.memory_space<vmem>>, vector<512x2xbf16>
    tpu.vector_store %arg7[%c0_14, %c0_15], %25 {strides = array<i32>} : memref<512x2xbf16, #tpu.memory_space<vmem>>, vector<512x2xbf16>,
    return
  }
  func.func @transform_0(%arg0: i32) -> (i32, i32) {
    %c0_i32 = arith.constant 0 : i32
    %c0_i32_0 = arith.constant 0 : i32
    return %arg0, %c0_i32 : i32, i32
  }
  func.func @transform_1(%arg0: i32) -> (i32, i32) {
    %c0_i32 = arith.constant 0 : i32
    %c0_i32_0 = arith.constant 0 : i32
    %c0_i32_1 = arith.constant 0 : i32
    return %c0_i32, %c0_i32_0 : i32, i32
  }
  func.func @transform_2(%arg0: i32) -> (i32, i32) {
    %c0_i32 = arith.constant 0 : i32
    %c0_i32_0 = arith.constant 0 : i32
    %c0_i32_1 = arith.constant 0 : i32
    return %c0_i32, %c0_i32_0 : i32, i32
  }
  func.func @transform_3(%arg0: i32) -> (i32, i32) {
    %c0_i32 = arith.constant 0 : i32
    %c0_i32_0 = arith.constant 0 : i32
    %c0_i32_1 = arith.constant 0 : i32
    return %c0_i32, %c0_i32_0 : i32, i32
  }
  func.func @transform_4(%arg0: i32) -> (i32, i32) {
    %c0_i32 = arith.constant 0 : i32
    %c0_i32_0 = arith.constant 0 : i32
    %c0_i32_1 = arith.constant 0 : i32
    return %c0_i32, %c0_i32_0 : i32, i32
  }
  func.func @transform_5(%arg0: i32) -> (i32, i32) {
    %c0_i32 = arith.constant 0 : i32
    %c0_i32_0 = arith.constant 0 : i32
    return %arg0, %c0_i32 : i32, i32
  }
  func.func @transform_6(%arg0: i32) -> (i32, i32) {
    %c0_i32 = arith.constant 0 : i32
    %c0_i32_0 = arith.constant 0 : i32
    return %arg0, %c0_i32 : i32, i32
  }
}

module attributes {stable_mosaic.version = 11 : i64} {
  func.func @_rep3x3_kernel(%arg0: i32, %arg1: i32, %arg2: i32, %arg3: memref<1x18x18x2xbf16, #tpu.memory_space<vmem>>, %arg4: memref<18x2xbf16, #tpu.memory_space<vmem>>, %arg5: memref<1x2xf32, #tpu.memory_space<vmem>>, %arg6: memref<1x128x2xbf16, #tpu.memory_space<vmem>>, %arg7: memref<128x18xbf16, #tpu.memory_space<vmem>>) attributes {dimension_semantics = [#tpu.dimension_semantics<parallel>, #tpu.dimension_semantics<parallel>, #tpu.dimension_semantics<arbitrary>], iteration_bounds = array<i64: 2, 2, 1>, scalar_prefetch = 0 : i64, scratch_operands = 1 : i64, tpu.core_type = #tpu.core_type<tc>, window_params = [{transform_indices = @transform_0, window_bounds = array<i64: 1, 18, 18, 2>}, {transform_indices = @transform_1, window_bounds = array<i64: 18, 2>}, {transform_indices = @transform_2, window_bounds = array<i64: 1, 2>}, {transform_indices = @transform_3, window_bounds = array<i64: 1, 128, 2>}]} {
    %c8_i32 = arith.constant 8 : i32
    %0 = arith.muli %arg1, %c8_i32 : i32
    %1 = tpu.assume_multiple %0, 8 : i32
    %c0_i32 = arith.constant 0 : i32
    %2 = arith.addi %1, %c0_i32 : i32
    %c0 = arith.constant 0 : index
    %3 = arith.index_cast %2 : i32 to index
    %c0_0 = arith.constant 0 : index
    %c0_1 = arith.constant 0 : index
    %4 = vector.load %arg3[%c0, %3, %c0_0, %c0_1] : memref<1x18x18x2xbf16, #tpu.memory_space<vmem>>, vector<1x8x16x2xbf16>
    %5 = vector.shape_cast %4 : vector<1x8x16x2xbf16> to vector<8x16x2xbf16>
    %6 = vector.shape_cast %5 : vector<8x16x2xbf16> to vector<128x2xbf16>
    %c0_2 = arith.constant 0 : index
    %c0_3 = arith.constant 0 : index
    %7 = vector.load %arg7[%c0_2, %c0_3] : memref<128x18xbf16, #tpu.memory_space<vmem>>, vector<128x2xbf16>
    tpu.vector_store %arg7[%c0_2, %c0_3], %6 {strides = array<i32>} : memref<128x18xbf16, #tpu.memory_space<vmem>>, vector<128x2xbf16>,
    %c0_i32_4 = arith.constant 0 : i32
    %8 = arith.addi %1, %c0_i32_4 : i32
    %c0_5 = arith.constant 0 : index
    %9 = arith.index_cast %8 : i32 to index
    %c1 = arith.constant 1 : index
    %c0_6 = arith.constant 0 : index
    %10 = vector.load %arg3[%c0_5, %9, %c1, %c0_6] : memref<1x18x18x2xbf16, #tpu.memory_space<vmem>>, vector<1x8x16x2xbf16>
    %11 = vector.shape_cast %10 : vector<1x8x16x2xbf16> to vector<8x16x2xbf16>
    %12 = vector.shape_cast %11 : vector<8x16x2xbf16> to vector<128x2xbf16>
    %c0_7 = arith.constant 0 : index
    %c2 = arith.constant 2 : index
    %13 = vector.load %arg7[%c0_7, %c2] : memref<128x18xbf16, #tpu.memory_space<vmem>>, vector<128x2xbf16>
    tpu.vector_store %arg7[%c0_7, %c2], %12 {strides = array<i32>} : memref<128x18xbf16, #tpu.memory_space<vmem>>, vector<128x2xbf16>,
    %c0_i32_8 = arith.constant 0 : i32
    %14 = arith.addi %1, %c0_i32_8 : i32
    %c0_9 = arith.constant 0 : index
    %15 = arith.index_cast %14 : i32 to index
    %c2_10 = arith.constant 2 : index
    %c0_11 = arith.constant 0 : index
    %16 = vector.load %arg3[%c0_9, %15, %c2_10, %c0_11] : memref<1x18x18x2xbf16, #tpu.memory_space<vmem>>, vector<1x8x16x2xbf16>
    %17 = vector.shape_cast %16 : vector<1x8x16x2xbf16> to vector<8x16x2xbf16>
    %18 = vector.shape_cast %17 : vector<8x16x2xbf16> to vector<128x2xbf16>
    %c0_12 = arith.constant 0 : index
    %c4 = arith.constant 4 : index
    %19 = vector.load %arg7[%c0_12, %c4] : memref<128x18xbf16, #tpu.memory_space<vmem>>, vector<128x2xbf16>
    tpu.vector_store %arg7[%c0_12, %c4], %18 {strides = array<i32>} : memref<128x18xbf16, #tpu.memory_space<vmem>>, vector<128x2xbf16>,
    %c1_i32 = arith.constant 1 : i32
    %20 = arith.addi %1, %c1_i32 : i32
    %c0_13 = arith.constant 0 : index
    %21 = arith.index_cast %20 : i32 to index
    %c0_14 = arith.constant 0 : index
    %c0_15 = arith.constant 0 : index
    %22 = vector.load %arg3[%c0_13, %21, %c0_14, %c0_15] : memref<1x18x18x2xbf16, #tpu.memory_space<vmem>>, vector<1x8x16x2xbf16>
    %23 = vector.shape_cast %22 : vector<1x8x16x2xbf16> to vector<8x16x2xbf16>
    %24 = vector.shape_cast %23 : vector<8x16x2xbf16> to vector<128x2xbf16>
    %c0_16 = arith.constant 0 : index
    %c6 = arith.constant 6 : index
    %25 = vector.load %arg7[%c0_16, %c6] : memref<128x18xbf16, #tpu.memory_space<vmem>>, vector<128x2xbf16>
    tpu.vector_store %arg7[%c0_16, %c6], %24 {strides = array<i32>} : memref<128x18xbf16, #tpu.memory_space<vmem>>, vector<128x2xbf16>,
    %c1_i32_17 = arith.constant 1 : i32
    %26 = arith.addi %1, %c1_i32_17 : i32
    %c0_18 = arith.constant 0 : index
    %27 = arith.index_cast %26 : i32 to index
    %c1_19 = arith.constant 1 : index
    %c0_20 = arith.constant 0 : index
    %28 = vector.load %arg3[%c0_18, %27, %c1_19, %c0_20] : memref<1x18x18x2xbf16, #tpu.memory_space<vmem>>, vector<1x8x16x2xbf16>
    %29 = vector.shape_cast %28 : vector<1x8x16x2xbf16> to vector<8x16x2xbf16>
    %30 = vector.shape_cast %29 : vector<8x16x2xbf16> to vector<128x2xbf16>
    %c0_21 = arith.constant 0 : index
    %c8 = arith.constant 8 : index
    %31 = vector.load %arg7[%c0_21, %c8] : memref<128x18xbf16, #tpu.memory_space<vmem>>, vector<128x2xbf16>
    tpu.vector_store %arg7[%c0_21, %c8], %30 {strides = array<i32>} : memref<128x18xbf16, #tpu.memory_space<vmem>>, vector<128x2xbf16>,
    %c1_i32_22 = arith.constant 1 : i32
    %32 = arith.addi %1, %c1_i32_22 : i32
    %c0_23 = arith.constant 0 : index
    %33 = arith.index_cast %32 : i32 to index
    %c2_24 = arith.constant 2 : index
    %c0_25 = arith.constant 0 : index
    %34 = vector.load %arg3[%c0_23, %33, %c2_24, %c0_25] : memref<1x18x18x2xbf16, #tpu.memory_space<vmem>>, vector<1x8x16x2xbf16>
    %35 = vector.shape_cast %34 : vector<1x8x16x2xbf16> to vector<8x16x2xbf16>
    %36 = vector.shape_cast %35 : vector<8x16x2xbf16> to vector<128x2xbf16>
    %c0_26 = arith.constant 0 : index
    %c10 = arith.constant 10 : index
    %37 = vector.load %arg7[%c0_26, %c10] : memref<128x18xbf16, #tpu.memory_space<vmem>>, vector<128x2xbf16>
    tpu.vector_store %arg7[%c0_26, %c10], %36 {strides = array<i32>} : memref<128x18xbf16, #tpu.memory_space<vmem>>, vector<128x2xbf16>,
    %c2_i32 = arith.constant 2 : i32
    %38 = arith.addi %1, %c2_i32 : i32
    %c0_27 = arith.constant 0 : index
    %39 = arith.index_cast %38 : i32 to index
    %c0_28 = arith.constant 0 : index
    %c0_29 = arith.constant 0 : index
    %40 = vector.load %arg3[%c0_27, %39, %c0_28, %c0_29] : memref<1x18x18x2xbf16, #tpu.memory_space<vmem>>, vector<1x8x16x2xbf16>
    %41 = vector.shape_cast %40 : vector<1x8x16x2xbf16> to vector<8x16x2xbf16>
    %42 = vector.shape_cast %41 : vector<8x16x2xbf16> to vector<128x2xbf16>
    %c0_30 = arith.constant 0 : index
    %c12 = arith.constant 12 : index
    %43 = vector.load %arg7[%c0_30, %c12] : memref<128x18xbf16, #tpu.memory_space<vmem>>, vector<128x2xbf16>
    tpu.vector_store %arg7[%c0_30, %c12], %42 {strides = array<i32>} : memref<128x18xbf16, #tpu.memory_space<vmem>>, vector<128x2xbf16>,
    %c2_i32_31 = arith.constant 2 : i32
    %44 = arith.addi %1, %c2_i32_31 : i32
    %c0_32 = arith.constant 0 : index
    %45 = arith.index_cast %44 : i32 to index
    %c1_33 = arith.constant 1 : index
    %c0_34 = arith.constant 0 : index
    %46 = vector.load %arg3[%c0_32, %45, %c1_33, %c0_34] : memref<1x18x18x2xbf16, #tpu.memory_space<vmem>>, vector<1x8x16x2xbf16>
    %47 = vector.shape_cast %46 : vector<1x8x16x2xbf16> to vector<8x16x2xbf16>
    %48 = vector.shape_cast %47 : vector<8x16x2xbf16> to vector<128x2xbf16>
    %c0_35 = arith.constant 0 : index
    %c14 = arith.constant 14 : index
    %49 = vector.load %arg7[%c0_35, %c14] : memref<128x18xbf16, #tpu.memory_space<vmem>>, vector<128x2xbf16>
    tpu.vector_store %arg7[%c0_35, %c14], %48 {strides = array<i32>} : memref<128x18xbf16, #tpu.memory_space<vmem>>, vector<128x2xbf16>,
    %c2_i32_36 = arith.constant 2 : i32
    %50 = arith.addi %1, %c2_i32_36 : i32
    %c0_37 = arith.constant 0 : index
    %51 = arith.index_cast %50 : i32 to index
    %c2_38 = arith.constant 2 : index
    %c0_39 = arith.constant 0 : index
    %52 = vector.load %arg3[%c0_37, %51, %c2_38, %c0_39] : memref<1x18x18x2xbf16, #tpu.memory_space<vmem>>, vector<1x8x16x2xbf16>
    %53 = vector.shape_cast %52 : vector<1x8x16x2xbf16> to vector<8x16x2xbf16>
    %54 = vector.shape_cast %53 : vector<8x16x2xbf16> to vector<128x2xbf16>
    %c0_40 = arith.constant 0 : index
    %c16 = arith.constant 16 : index
    %55 = vector.load %arg7[%c0_40, %c16] : memref<128x18xbf16, #tpu.memory_space<vmem>>, vector<128x2xbf16>
    tpu.vector_store %arg7[%c0_40, %c16], %54 {strides = array<i32>} : memref<128x18xbf16, #tpu.memory_space<vmem>>, vector<128x2xbf16>,
    %c0_41 = arith.constant 0 : index
    %c0_42 = arith.constant 0 : index
    %56 = vector.load %arg7[%c0_41, %c0_42] : memref<128x18xbf16, #tpu.memory_space<vmem>>, vector<128x18xbf16>
    %c0_43 = arith.constant 0 : index
    %c0_44 = arith.constant 0 : index
    %57 = vector.load %arg4[%c0_43, %c0_44] : memref<18x2xbf16, #tpu.memory_space<vmem>>, vector<18x2xbf16>
    %cst = arith.constant dense<0.000000e+00> : vector<128x2xf32>
    %58 = tpu.matmul %56, %57, %cst {dimension_numbers = #tpu.dot_dimension_numbers<[1], [0], [0], [1], [0, 0, 1, 1], [], []>} : vector<128x18xbf16>, vector<18x2xbf16>, vector<128x2xf32> -> vector<128x2xf32>
    %c0_45 = arith.constant 0 : index
    %c0_46 = arith.constant 0 : index
    %59 = vector.load %arg5[%c0_45, %c0_46] : memref<1x2xf32, #tpu.memory_space<vmem>>, vector<1x2xf32>
    %60 = vector.broadcast %59 : vector<1x2xf32> to vector<128x2xf32>
    %61 = arith.addf %58, %60 : vector<128x2xf32>
    %62 = arith.negf %61 : vector<128x2xf32>
    %63 = math.exp %62 : vector<128x2xf32>
    %cst_47 = arith.constant 1.000000e+00 : f32
    %64 = vector.broadcast %cst_47 : f32 to vector<128x2xf32>
    %65 = arith.addf %64, %63 : vector<128x2xf32>
    %66 = arith.divf %64, %65 : vector<128x2xf32>
    %67 = arith.mulf %61, %66 : vector<128x2xf32>
    %68 = arith.truncf %67 : vector<128x2xf32> to vector<128x2xbf16>
    %c0_48 = arith.constant 0 : index
    %c0_49 = arith.constant 0 : index
    %c0_50 = arith.constant 0 : index
    %69 = vector.load %arg6[%c0_48, %c0_49, %c0_50] : memref<1x128x2xbf16, #tpu.memory_space<vmem>>, vector<1x128x2xbf16>
    %70 = vector.shape_cast %69 : vector<1x128x2xbf16> to vector<128x2xbf16>
    %71 = vector.shape_cast %68 : vector<128x2xbf16> to vector<1x128x2xbf16>
    tpu.vector_store %arg6[%c0_48, %c0_49, %c0_50], %71 {strides = array<i32>} : memref<1x128x2xbf16, #tpu.memory_space<vmem>>, vector<1x128x2xbf16>,
    return
  }
  func.func @transform_0(%arg0: i32, %arg1: i32, %arg2: i32) -> (i32, i32, i32, i32) {
    %c0_i32 = arith.constant 0 : i32
    %c0_i32_0 = arith.constant 0 : i32
    %c0_i32_1 = arith.constant 0 : i32
    %c0_i32_2 = arith.constant 0 : i32
    return %arg0, %c0_i32, %c0_i32_0, %c0_i32_1 : i32, i32, i32, i32
  }
  func.func @transform_1(%arg0: i32, %arg1: i32, %arg2: i32) -> (i32, i32) {
    %c0_i32 = arith.constant 0 : i32
    %c0_i32_0 = arith.constant 0 : i32
    return %c0_i32, %arg2 : i32, i32
  }
  func.func @transform_2(%arg0: i32, %arg1: i32, %arg2: i32) -> (i32, i32) {
    %c0_i32 = arith.constant 0 : i32
    %c0_i32_0 = arith.constant 0 : i32
    return %c0_i32, %arg2 : i32, i32
  }
  func.func @transform_3(%arg0: i32, %arg1: i32, %arg2: i32) -> (i32, i32, i32) {
    %c0_i32 = arith.constant 0 : i32
    return %arg0, %arg1, %arg2 : i32, i32, i32
  }
}

module attributes {stable_mosaic.version = 11 : i64} {
  func.func @_pw_cv34_kernel(%arg0: i32, %arg1: memref<512x2xbf16, #tpu.memory_space<vmem>>, %arg2: memref<512x2xbf16, #tpu.memory_space<vmem>>, %arg3: memref<2x2xbf16, #tpu.memory_space<vmem>>, %arg4: memref<1x2xf32, #tpu.memory_space<vmem>>, %arg5: memref<2x4xbf16, #tpu.memory_space<vmem>>, %arg6: memref<2x4xbf16, #tpu.memory_space<vmem>>, %arg7: memref<1x4xf32, #tpu.memory_space<vmem>>, %arg8: memref<512x4xf32, #tpu.memory_space<vmem>>) attributes {dimension_semantics = [#tpu.dimension_semantics<parallel>], iteration_bounds = array<i64: 1>, scalar_prefetch = 0 : i64, scratch_operands = 0 : i64, tpu.core_type = #tpu.core_type<tc>, window_params = [{transform_indices = @transform_0, window_bounds = array<i64: 512, 2>}, {transform_indices = @transform_1, window_bounds = array<i64: 512, 2>}, {pipeline_mode = #tpu.pipeline_mode<synchronous>, transform_indices = @transform_2, window_bounds = array<i64: 2, 2>}, {pipeline_mode = #tpu.pipeline_mode<synchronous>, transform_indices = @transform_3, window_bounds = array<i64: 1, 2>}, {pipeline_mode = #tpu.pipeline_mode<synchronous>, transform_indices = @transform_4, window_bounds = array<i64: 2, 4>}, {pipeline_mode = #tpu.pipeline_mode<synchronous>, transform_indices = @transform_5, window_bounds = array<i64: 2, 4>}, {pipeline_mode = #tpu.pipeline_mode<synchronous>, transform_indices = @transform_6, window_bounds = array<i64: 1, 4>}, {transform_indices = @transform_7, window_bounds = array<i64: 512, 4>}]} {
    %c0 = arith.constant 0 : index
    %c0_0 = arith.constant 0 : index
    %0 = vector.load %arg1[%c0, %c0_0] : memref<512x2xbf16, #tpu.memory_space<vmem>>, vector<512x2xbf16>
    %c0_1 = arith.constant 0 : index
    %c0_2 = arith.constant 0 : index
    %1 = vector.load %arg3[%c0_1, %c0_2] : memref<2x2xbf16, #tpu.memory_space<vmem>>, vector<2x2xbf16>
    %cst = arith.constant dense<0.000000e+00> : vector<512x2xf32>
    %2 = tpu.matmul %0, %1, %cst {dimension_numbers = #tpu.dot_dimension_numbers<[1], [0], [0], [1], [0, 0, 1, 1], [], []>} : vector<512x2xbf16>, vector<2x2xbf16>, vector<512x2xf32> -> vector<512x2xf32>
    %c0_3 = arith.constant 0 : index
    %c0_4 = arith.constant 0 : index
    %3 = vector.load %arg4[%c0_3, %c0_4] : memref<1x2xf32, #tpu.memory_space<vmem>>, vector<1x2xf32>
    %4 = vector.broadcast %3 : vector<1x2xf32> to vector<512x2xf32>
    %5 = arith.addf %2, %4 : vector<512x2xf32>
    %6 = arith.negf %5 : vector<512x2xf32>
    %7 = math.exp %6 : vector<512x2xf32>
    %cst_5 = arith.constant 1.000000e+00 : f32
    %8 = vector.broadcast %cst_5 : f32 to vector<512x2xf32>
    %9 = arith.addf %8, %7 : vector<512x2xf32>
    %10 = arith.divf %8, %9 : vector<512x2xf32>
    %11 = arith.mulf %5, %10 : vector<512x2xf32>
    %12 = arith.truncf %11 : vector<512x2xf32> to vector<512x2xbf16>
    %c0_6 = arith.constant 0 : index
    %c0_7 = arith.constant 0 : index
    %13 = vector.load %arg5[%c0_6, %c0_7] : memref<2x4xbf16, #tpu.memory_space<vmem>>, vector<2x4xbf16>
    %cst_8 = arith.constant dense<0.000000e+00> : vector<512x4xf32>
    %14 = tpu.matmul %12, %13, %cst_8 {dimension_numbers = #tpu.dot_dimension_numbers<[1], [0], [0], [1], [0, 0, 1, 1], [], []>} : vector<512x2xbf16>, vector<2x4xbf16>, vector<512x4xf32> -> vector<512x4xf32>
    %c0_9 = arith.constant 0 : index
    %c0_10 = arith.constant 0 : index
    %15 = vector.load %arg2[%c0_9, %c0_10] : memref<512x2xbf16, #tpu.memory_space<vmem>>, vector<512x2xbf16>
    %c0_11 = arith.constant 0 : index
    %c0_12 = arith.constant 0 : index
    %16 = vector.load %arg6[%c0_11, %c0_12] : memref<2x4xbf16, #tpu.memory_space<vmem>>, vector<2x4xbf16>
    %cst_13 = arith.constant dense<0.000000e+00> : vector<512x4xf32>
    %17 = tpu.matmul %15, %16, %cst_13 {dimension_numbers = #tpu.dot_dimension_numbers<[1], [0], [0], [1], [0, 0, 1, 1], [], []>} : vector<512x2xbf16>, vector<2x4xbf16>, vector<512x4xf32> -> vector<512x4xf32>
    %18 = arith.addf %14, %17 : vector<512x4xf32>
    %c0_14 = arith.constant 0 : index
    %c0_15 = arith.constant 0 : index
    %19 = vector.load %arg7[%c0_14, %c0_15] : memref<1x4xf32, #tpu.memory_space<vmem>>, vector<1x4xf32>
    %20 = vector.broadcast %19 : vector<1x4xf32> to vector<512x4xf32>
    %21 = arith.addf %18, %20 : vector<512x4xf32>
    %22 = arith.negf %21 : vector<512x4xf32>
    %23 = math.exp %22 : vector<512x4xf32>
    %cst_16 = arith.constant 1.000000e+00 : f32
    %24 = vector.broadcast %cst_16 : f32 to vector<512x4xf32>
    %25 = arith.addf %24, %23 : vector<512x4xf32>
    %26 = arith.divf %24, %25 : vector<512x4xf32>
    %27 = arith.mulf %21, %26 : vector<512x4xf32>
    %c0_17 = arith.constant 0 : index
    %c0_18 = arith.constant 0 : index
    %28 = vector.load %arg8[%c0_17, %c0_18] : memref<512x4xf32, #tpu.memory_space<vmem>>, vector<512x4xf32>
    tpu.vector_store %arg8[%c0_17, %c0_18], %27 {strides = array<i32>} : memref<512x4xf32, #tpu.memory_space<vmem>>, vector<512x4xf32>,
    return
  }
  func.func @transform_0(%arg0: i32) -> (i32, i32) {
    %c0_i32 = arith.constant 0 : i32
    %c0_i32_0 = arith.constant 0 : i32
    return %arg0, %c0_i32 : i32, i32
  }
  func.func @transform_1(%arg0: i32) -> (i32, i32) {
    %c0_i32 = arith.constant 0 : i32
    %c0_i32_0 = arith.constant 0 : i32
    return %arg0, %c0_i32 : i32, i32
  }
  func.func @transform_2(%arg0: i32) -> (i32, i32) {
    %c0_i32 = arith.constant 0 : i32
    %c0_i32_0 = arith.constant 0 : i32
    %c0_i32_1 = arith.constant 0 : i32
    return %c0_i32, %c0_i32_0 : i32, i32
  }
  func.func @transform_3(%arg0: i32) -> (i32, i32) {
    %c0_i32 = arith.constant 0 : i32
    %c0_i32_0 = arith.constant 0 : i32
    %c0_i32_1 = arith.constant 0 : i32
    return %c0_i32, %c0_i32_0 : i32, i32
  }
  func.func @transform_4(%arg0: i32) -> (i32, i32) {
    %c0_i32 = arith.constant 0 : i32
    %c0_i32_0 = arith.constant 0 : i32
    %c0_i32_1 = arith.constant 0 : i32
    return %c0_i32, %c0_i32_0 : i32, i32
  }
  func.func @transform_5(%arg0: i32) -> (i32, i32) {
    %c0_i32 = arith.constant 0 : i32
    %c0_i32_0 = arith.constant 0 : i32
    %c0_i32_1 = arith.constant 0 : i32
    return %c0_i32, %c0_i32_0 : i32, i32
  }
  func.func @transform_6(%arg0: i32) -> (i32, i32) {
    %c0_i32 = arith.constant 0 : i32
    %c0_i32_0 = arith.constant 0 : i32
    %c0_i32_1 = arith.constant 0 : i32
    return %c0_i32, %c0_i32_0 : i32, i32
  }
  func.func @transform_7(%arg0: i32) -> (i32, i32) {
    %c0_i32 = arith.constant 0 : i32
    %c0_i32_0 = arith.constant 0 : i32
    return %arg0, %c0_i32 : i32, i32
  }
}

</mosaic_0001>

<llo_original>
// kernel: csc_qarep_forward.3
$region0: #{csc_qarep_forward.3}
  #allocation0 [shape = 'u32[]', space=smem, size = 0x4, offset = 0x4, fixed_abs, tag = 'smem constant byte address 0x4 - core index']
  #allocation1 [shape = 'u32[144,128]{1,0:T(1,128)}', space=vmem, size = 0x12000, scoped, tag = 'internal scratch']
  %s0 = inlined_call_operand.vmem [shape: bf16[512,4], index: 0, kind: input, shape index: {}]
  %s1 = inlined_call_operand.vmem [shape: bf16[4,2], index: 1, kind: input, shape index: {}]
  %s2 = inlined_call_operand.vmem [shape: f32[1,2], index: 2, kind: input, shape index: {}]
  %s3 = inlined_call_operand.vmem [shape: bf16[4,2], index: 3, kind: input, shape index: {}]
  %s4 = inlined_call_operand.vmem [shape: f32[1,2], index: 4, kind: input, shape index: {}]
  %s5 = inlined_call_operand.vmem [shape: bf16[512,2], index: 5, kind: output, shape index: {0}]
  %s6 = inlined_call_operand.vmem [shape: bf16[512,2], index: 6, kind: output, shape index: {1}]
  %7 = xla_tuple %s5, %s6
  %s8 = sld [smem:[#allocation0]]
  $region38: #{csc_qarep_forward.3} parent=0
    _
  %s10 = ssub.s32 1, %s8
  %s11 = scalar_select 0, %s10, %s8
  // Predicated region
  $region2: #{csc_qarep_forward.3} parent=0 // pred_check
    _
  $region3: #{csc_qarep_forward.3} parent=0 // pred_check_branch
    %13 = sbr.rel (0) target = $region5
  $region4: #{csc_qarep_forward.3} parent=0 // pred_region
    _
  $region5: #{csc_qarep_forward.3} parent=0 // pred_fallthru
    _
  // Predicated region
  $region6: #{csc_qarep_forward.3} parent=0 // pred_check
    _
  $region7: #{csc_qarep_forward.3} parent=0 // pred_check_branch
    %15 = sbr.rel (0) target = $region9
  $region8: #{csc_qarep_forward.3} parent=0 // pred_region
    _
  $region9: #{csc_qarep_forward.3} parent=0 // pred_fallthru
    _
  // Predicated region
  $region10: #{csc_qarep_forward.3} parent=0 // pred_check
    _
  $region11: #{csc_qarep_forward.3} parent=0 // pred_check_branch
    %17 = sbr.rel (0) target = $region13
  $region12: #{csc_qarep_forward.3} parent=0 // pred_region
    _
  $region13: #{csc_qarep_forward.3} parent=0 // pred_fallthru
    _
  // Predicated region
  $region14: #{csc_qarep_forward.3} parent=0 // pred_check
    _
  $region15: #{csc_qarep_forward.3} parent=0 // pred_check_branch
    %19 = sbr.rel (0) target = $region17
  $region16: #{csc_qarep_forward.3} parent=0 // pred_region
    _
  $region17: #{csc_qarep_forward.3} parent=0 // pred_fallthru
    _
  // Predicated region
  $region18: #{csc_qarep_forward.3} parent=0 // pred_check
    _
  $region19: #{csc_qarep_forward.3} parent=0 // pred_check_branch
    %21 = sbr.rel (0) target = $region21
  $region20: #{csc_qarep_forward.3} parent=0 // pred_region
    _
  $region21: #{csc_qarep_forward.3} parent=0 // pred_fallthru
    _
  %v23 = vld [vmem:[%s0] sm:$0xf]
  %v24 = vld [vmem:[%s0 + $0x4] sm:$0xf]
  %v25 = vld [vmem:[%s0 + $0x8] sm:$0xf]
  %v26 = vld [vmem:[%s0 + $0xc] sm:$0xf]
  %v27 = vld [vmem:[%s0 + $0x10] sm:$0xf]
  %v28 = vld [vmem:[%s0 + $0x14] sm:$0xf]
  %v29 = vld [vmem:[%s0 + $0x18] sm:$0xf]
  %v30 = vld [vmem:[%s0 + $0x1c] sm:$0xf]
  %v31 = vld [vmem:[%s0 + $0x20] sm:$0xf]
  %v32 = vld [vmem:[%s0 + $0x24] sm:$0xf]
  %v33 = vld [vmem:[%s0 + $0x28] sm:$0xf]
  %v34 = vld [vmem:[%s0 + $0x2c] sm:$0xf]
  %v35 = vld [vmem:[%s0 + $0x30] sm:$0xf]
  %v36 = vld [vmem:[%s0 + $0x34] sm:$0xf]
  %v37 = vld [vmem:[%s0 + $0x38] sm:$0xf]
  %v38 = vld [vmem:[%s0 + $0x3c] sm:$0xf]
  %v39 = vld [vmem:[%s0 + $0x40] sm:$0xf]
  %v40 = vld [vmem:[%s0 + $0x44] sm:$0xf]
  %v41 = vld [vmem:[%s0 + $0x48] sm:$0xf]
  %v42 = vld [vmem:[%s0 + $0x4c] sm:$0xf]
  %v43 = vld [vmem:[%s0 + $0x50] sm:$0xf]
  %v44 = vld [vmem:[%s0 + $0x54] sm:$0xf]
  %v45 = vld [vmem:[%s0 + $0x58] sm:$0xf]
  %v46 = vld [vmem:[%s0 + $0x5c] sm:$0xf]
  %v47 = vld [vmem:[%s0 + $0x60] sm:$0xf]
  %v48 = vld [vmem:[%s0 + $0x64] sm:$0xf]
  %v49 = vld [vmem:[%s0 + $0x68] sm:$0xf]
  %v50 = vld [vmem:[%s0 + $0x6c] sm:$0xf]
  %v51 = vld [vmem:[%s0 + $0x70] sm:$0xf]
  %v52 = vld [vmem:[%s0 + $0x74] sm:$0xf]
  %v53 = vld [vmem:[%s0 + $0x78] sm:$0xf]
  %v54 = vld [vmem:[%s0 + $0x7c] sm:$0xf]
  %v55 = vld [vmem:[%s0 + $0x80] sm:$0xf]
  %v56 = vld [vmem:[%s0 + $0x84] sm:$0xf]
  %v57 = vld [vmem:[%s0 + $0x88] sm:$0xf]
  %v58 = vld [vmem:[%s0 + $0x8c] sm:$0xf]
  %v59 = vld [vmem:[%s0 + $0x90] sm:$0xf]
  %v60 = vld [vmem:[%s0 + $0x94] sm:$0xf]
  %v61 = vld [vmem:[%s0 + $0x98] sm:$0xf]
  %v62 = vld [vmem:[%s0 + $0x9c] sm:$0xf]
  %v63 = vld [vmem:[%s0 + $0xa0] sm:$0xf]
  %v64 = vld [vmem:[%s0 + $0xa4] sm:$0xf]
  %v65 = vld [vmem:[%s0 + $0xa8] sm:$0xf]
  %v66 = vld [vmem:[%s0 + $0xac] sm:$0xf]
  %v67 = vld [vmem:[%s0 + $0xb0] sm:$0xf]
  %v68 = vld [vmem:[%s0 + $0xb4] sm:$0xf]
  %v69 = vld [vmem:[%s0 + $0xb8] sm:$0xf]
  %v70 = vld [vmem:[%s0 + $0xbc] sm:$0xf]
  %v71 = vld [vmem:[%s0 + $0xc0] sm:$0xf]
  %v72 = vld [vmem:[%s0 + $0xc4] sm:$0xf]
  %v73 = vld [vmem:[%s0 + $0xc8] sm:$0xf]
  %v74 = vld [vmem:[%s0 + $0xcc] sm:$0xf]
  %v75 = vld [vmem:[%s0 + $0xd0] sm:$0xf]
  %v76 = vld [vmem:[%s0 + $0xd4] sm:$0xf]
  %v77 = vld [vmem:[%s0 + $0xd8] sm:$0xf]
  %v78 = vld [vmem:[%s0 + $0xdc] sm:$0xf]
  %v79 = vld [vmem:[%s0 + $0xe0] sm:$0xf]
  %v80 = vld [vmem:[%s0 + $0xe4] sm:$0xf]
  %v81 = vld [vmem:[%s0 + $0xe8] sm:$0xf]
  %v82 = vld [vmem:[%s0 + $0xec] sm:$0xf]
  %v83 = vld [vmem:[%s0 + $0xf0] sm:$0xf]
  %v84 = vld [vmem:[%s0 + $0xf4] sm:$0xf]
  %v85 = vld [vmem:[%s0 + $0xf8] sm:$0xf]
  %v86 = vld [vmem:[%s0 + $0xfc] sm:$0xf]
  %v87 = vld [vmem:[%s1] sm:$0x3]
  %v88 = vld [vmem:[%s2] sm:$0x1]
  %v90 = vlaneseq
  %v91 = vshrl.u32 %v90, 7
  %v92 = vsub.s32 0, %v91
  %v93 = vrot.slane %v88, %v92
  %v159 = vunpack.c.l.b16 %v23
  %v160 = vunpack.c.l.b16 %v24
  %v161 = vunpack.c.l.b16 %v25
  %v162 = vunpack.c.l.b16 %v26
  %v163 = vunpack.c.l.b16 %v27
  %v164 = vunpack.c.l.b16 %v28
  %v165 = vunpack.c.l.b16 %v29
  %v166 = vunpack.c.l.b16 %v30
  %v167 = vunpack.c.l.b16 %v31
  %v168 = vunpack.c.l.b16 %v32
  %v169 = vunpack.c.l.b16 %v33
  %v170 = vunpack.c.l.b16 %v34
  %v171 = vunpack.c.l.b16 %v35
  %v172 = vunpack.c.l.b16 %v36
  %v173 = vunpack.c.l.b16 %v37
  %v174 = vunpack.c.l.b16 %v38
  %v175 = vunpack.c.l.b16 %v39
  %v176 = vunpack.c.l.b16 %v40
  %v177 = vunpack.c.l.b16 %v41
  %v178 = vunpack.c.l.b16 %v42
  %v179 = vunpack.c.l.b16 %v43
  %v180 = vunpack.c.l.b16 %v44
  %v181 = vunpack.c.l.b16 %v45
  %v182 = vunpack.c.l.b16 %v46
  %v183 = vunpack.c.l.b16 %v47
  %v184 = vunpack.c.l.b16 %v48
  %v185 = vunpack.c.l.b16 %v49
  %v186 = vunpack.c.l.b16 %v50
  %v187 = vunpack.c.l.b16 %v51
  %v188 = vunpack.c.l.b16 %v52
  %v189 = vunpack.c.l.b16 %v53
  %v190 = vunpack.c.l.b16 %v54
  %v191 = vunpack.c.l.b16 %v55
  %v192 = vunpack.c.l.b16 %v56
  %v193 = vunpack.c.l.b16 %v57
  %v194 = vunpack.c.l.b16 %v58
  %v195 = vunpack.c.l.b16 %v59
  %v196 = vunpack.c.l.b16 %v60
  %v197 = vunpack.c.l.b16 %v61
  %v198 = vunpack.c.l.b16 %v62
  %v199 = vunpack.c.l.b16 %v63
  %v200 = vunpack.c.l.b16 %v64
  %v201 = vunpack.c.l.b16 %v65
  %v202 = vunpack.c.l.b16 %v66
  %v203 = vunpack.c.l.b16 %v67
  %v204 = vunpack.c.l.b16 %v68
  %v205 = vunpack.c.l.b16 %v69
  %v206 = vunpack.c.l.b16 %v70
  %v207 = vunpack.c.l.b16 %v71
  %v208 = vunpack.c.l.b16 %v72
  %v209 = vunpack.c.l.b16 %v73
  %v210 = vunpack.c.l.b16 %v74
  %v211 = vunpack.c.l.b16 %v75
  %v212 = vunpack.c.l.b16 %v76
  %v213 = vunpack.c.l.b16 %v77
  %v214 = vunpack.c.l.b16 %v78
  %v215 = vunpack.c.l.b16 %v79
  %v216 = vunpack.c.l.b16 %v80
  %v217 = vunpack.c.l.b16 %v81
  %v218 = vunpack.c.l.b16 %v82
  %v219 = vunpack.c.l.b16 %v83
  %v220 = vunpack.c.l.b16 %v84
  %v221 = vunpack.c.l.b16 %v85
  %v222 = vunpack.c.l.b16 %v86
  %v223 = vpack.c.b16 %v160, %v159
  %v224 = vpack.c.b16 %v162, %v161
  %v225 = vpack.c.b16 %v164, %v163
  %v226 = vpack.c.b16 %v166, %v165
  %v227 = vpack.c.b16 %v168, %v167
  %v228 = vpack.c.b16 %v170, %v169
  %v229 = vpack.c.b16 %v172, %v171
  %v230 = vpack.c.b16 %v174, %v173
  %v231 = vpack.c.b16 %v176, %v175
  %v232 = vpack.c.b16 %v178, %v177
  %v233 = vpack.c.b16 %v180, %v179
  %v234 = vpack.c.b16 %v182, %v181
  %v235 = vpack.c.b16 %v184, %v183
  %v236 = vpack.c.b16 %v186, %v185
  %v237 = vpack.c.b16 %v188, %v187
  %v238 = vpack.c.b16 %v190, %v189
  %v239 = vpack.c.b16 %v192, %v191
  %v240 = vpack.c.b16 %v194, %v193
  %v241 = vpack.c.b16 %v196, %v195
  %v242 = vpack.c.b16 %v198, %v197
  %v243 = vpack.c.b16 %v200, %v199
  %v244 = vpack.c.b16 %v202, %v201
  %v245 = vpack.c.b16 %v204, %v203
  %v246 = vpack.c.b16 %v206, %v205
  %v247 = vpack.c.b16 %v208, %v207
  %v248 = vpack.c.b16 %v210, %v209
  %v249 = vpack.c.b16 %v212, %v211
  %v250 = vpack.c.b16 %v214, %v213
  %v251 = vpack.c.b16 %v216, %v215
  %v252 = vpack.c.b16 %v218, %v217
  %v253 = vpack.c.b16 %v220, %v219
  %v254 = vpack.c.b16 %v222, %v221
  %vm255 = vcmask 31744
  %v257 = vsel %vm255, %v223, 0
  %v260 = vsel %vm255, %v224, 0
  %v263 = vsel %vm255, %v225, 0
  %v266 = vsel %vm255, %v226, 0
  %v269 = vsel %vm255, %v227, 0
  %v272 = vsel %vm255, %v228, 0
  %v275 = vsel %vm255, %v229, 0
  %v278 = vsel %vm255, %v230, 0
  %v281 = vsel %vm255, %v231, 0
  %v284 = vsel %vm255, %v232, 0
  %v287 = vsel %vm255, %v233, 0
  %v290 = vsel %vm255, %v234, 0
  %v293 = vsel %vm255, %v235, 0
  %v296 = vsel %vm255, %v236, 0
  %v299 = vsel %vm255, %v237, 0
  %v302 = vsel %vm255, %v238, 0
  %v305 = vsel %vm255, %v239, 0
  %v308 = vsel %vm255, %v240, 0
  %v311 = vsel %vm255, %v241, 0
  %v314 = vsel %vm255, %v242, 0
  %v317 = vsel %vm255, %v243, 0
  %v320 = vsel %vm255, %v244, 0
  %v323 = vsel %vm255, %v245, 0
  %v326 = vsel %vm255, %v246, 0
  %v329 = vsel %vm255, %v247, 0
  %v332 = vsel %vm255, %v248, 0
  %v335 = vsel %vm255, %v249, 0
  %v338 = vsel %vm255, %v250, 0
  %v341 = vsel %vm255, %v251, 0
  %v344 = vsel %vm255, %v252, 0
  %v347 = vsel %vm255, %v253, 0
  %v350 = vsel %vm255, %v254, 0
  %vm352 = vcmask 1041408
  %v354 = vsel %vm352, %v87, 0
  %356 = vmatprep.subr.bf16.mxu0 0
  %357 = vmatpush1.bf16.msra.mxu0 %v354
  %358 = vmatprep.subr.bf16.mxu0 0
  %359 = vmatpush1.bf16.msra.mxu0 0
  %360 = vmatprep.subr.bf16.mxu0 0
  %361 = vmatpush1.bf16.msra.mxu0 0
  %362 = vmatprep.subr.bf16.mxu0 0
  %363 = vmatpush1.bf16.msra.mxu0 0
  %364 = vmatprep.subr.bf16.mxu0 0
  %365 = vmatpush1.bf16.msra.mxu0 0
  %366 = vmatprep.subr.bf16.mxu0 0
  %367 = vmatpush1.bf16.msra.mxu0 0
  %368 = vmatprep.subr.bf16.mxu0 0
  %369 = vmatpush1.bf16.msra.mxu0 0
  %370 = vmatprep.subr.bf16.mxu0 0
  %371 = vmatpush1.bf16.msra.mxu0 0
  %372 = vmatprep.subr.bf16.mxu0 0
  %373 = vmatpush1.bf16.msra.mxu0 0
  %374 = vmatprep.subr.bf16.mxu0 0
  %375 = vmatpush1.bf16.msra.mxu0 0
  %376 = vmatprep.subr.bf16.mxu0 0
  %377 = vmatpush1.bf16.msra.mxu0 0
  %378 = vmatprep.subr.bf16.mxu0 0
  %379 = vmatpush1.bf16.msra.mxu0 0
  %380 = vmatprep.subr.bf16.mxu0 0
  %381 = vmatpush1.bf16.msra.mxu0 0
  %382 = vmatprep.subr.bf16.mxu0 0
  %383 = vmatpush1.bf16.msra.mxu0 0
  %384 = vmatprep.subr.bf16.mxu0 0
  %385 = vmatpush1.bf16.msra.mxu0 0
  %386 = vmatprep.subr.bf16.mxu0 0
  %387 = vmatpush1.bf16.msra.mxu0 0
  %388 = vmatprep.mubr.bf16.mxu0 0
  %389 = vmatmul.mubr.bf16.gmra.mrb[0].mxu0 %v257
  %v390 = vpop.f32.mrb[0].mxu0
  %v391 = vadd.f32 %v93, %v390
  %v392 = vpop.f32.mrb[0].mxu0
  %v393 = vpop.f32.mrb[0].mxu0
  %v394 = vadd.f32 %v93, %v393
  %v395 = vpop.f32.mrb[0].mxu0
  %396 = vmatprep.mubr.bf16.mxu0 0
  %397 = vmatmul.mubr.bf16.gmra.mrb[0].mxu0 %v260
  %v398 = vpop.f32.mrb[0].mxu0
  %v399 = vadd.f32 %v93, %v398
  %v400 = vpop.f32.mrb[0].mxu0
  %v401 = vpop.f32.mrb[0].mxu0
  %v402 = vadd.f32 %v93, %v401
  %v403 = vpop.f32.mrb[0].mxu0
  %404 = vmatprep.mubr.bf16.mxu0 0
  %405 = vmatmul.mubr.bf16.gmra.mrb[0].mxu0 %v263
  %v406 = vpop.f32.mrb[0].mxu0
  %v407 = vadd.f32 %v93, %v406
  %v408 = vpop.f32.mrb[0].mxu0
  %v409 = vpop.f32.mrb[0].mxu0
  %v410 = vadd.f32 %v93, %v409
  %v411 = vpop.f32.mrb[0].mxu0
  %412 = vmatprep.mubr.bf16.mxu0 0
  %413 = vmatmul.mubr.bf16.gmra.mrb[0].mxu0 %v266
  %v414 = vpop.f32.mrb[0].mxu0
  %v415 = vadd.f32 %v93, %v414
  %v416 = vpop.f32.mrb[0].mxu0
  %v417 = vpop.f32.mrb[0].mxu0
  %v418 = vadd.f32 %v93, %v417
  %v419 = vpop.f32.mrb[0].mxu0
  %420 = vmatprep.mubr.bf16.mxu0 0
  %421 = vmatmul.mubr.bf16.gmra.mrb[0].mxu0 %v269
  %v422 = vpop.f32.mrb[0].mxu0
  %v423 = vadd.f32 %v93, %v422
  %v424 = vpop.f32.mrb[0].mxu0
  %v425 = vpop.f32.mrb[0].mxu0
  %v426 = vadd.f32 %v93, %v425
  %v427 = vpop.f32.mrb[0].mxu0
  %428 = vmatprep.mubr.bf16.mxu0 0
  %429 = vmatmul.mubr.bf16.gmra.mrb[0].mxu0 %v272
  %v430 = vpop.f32.mrb[0].mxu0
  %v431 = vadd.f32 %v93, %v430
  %v432 = vpop.f32.mrb[0].mxu0
  %v433 = vpop.f32.mrb[0].mxu0
  %v434 = vadd.f32 %v93, %v433
  %v435 = vpop.f32.mrb[0].mxu0
  %436 = vmatprep.mubr.bf16.mxu0 0
  %437 = vmatmul.mubr.bf16.gmra.mrb[0].mxu0 %v275
  %v438 = vpop.f32.mrb[0].mxu0
  %v439 = vadd.f32 %v93, %v438
  %v440 = vpop.f32.mrb[0].mxu0
  %v441 = vpop.f32.mrb[0].mxu0
  %v442 = vadd.f32 %v93, %v441
  %v443 = vpop.f32.mrb[0].mxu0
  %444 = vmatprep.mubr.bf16.mxu0 0
  %445 = vmatmul.mubr.bf16.gmra.mrb[0].mxu0 %v278
  %v446 = vpop.f32.mrb[0].mxu0
  %v447 = vadd.f32 %v93, %v446
  %v448 = vpop.f32.mrb[0].mxu0
  %v449 = vpop.f32.mrb[0].mxu0
  %v450 = vadd.f32 %v93, %v449
  %v451 = vpop.f32.mrb[0].mxu0
  %452 = vmatprep.mubr.bf16.mxu0 0
  %453 = vmatmul.mubr.bf16.gmra.mrb[0].mxu0 %v281
  %v454 = vpop.f32.mrb[0].mxu0
  %v455 = vadd.f32 %v93, %v454
  %v456 = vpop.f32.mrb[0].mxu0
  %v457 = vpop.f32.mrb[0].mxu0
  %v458 = vadd.f32 %v93, %v457
  %v459 = vpop.f32.mrb[0].mxu0
  %460 = vmatprep.mubr.bf16.mxu0 0
  %461 = vmatmul.mubr.bf16.gmra.mrb[0].mxu0 %v284
  %v462 = vpop.f32.mrb[0].mxu0
  %v463 = vadd.f32 %v93, %v462
  %v464 = vpop.f32.mrb[0].mxu0
  %v465 = vpop.f32.mrb[0].mxu0
  %v466 = vadd.f32 %v93, %v465
  %v467 = vpop.f32.mrb[0].mxu0
  %468 = vmatprep.mubr.bf16.mxu0 0
  %469 = vmatmul.mubr.bf16.gmra.mrb[0].mxu0 %v287
  %v470 = vpop.f32.mrb[0].mxu0
  %v471 = vadd.f32 %v93, %v470
  %v472 = vpop.f32.mrb[0].mxu0
  %v473 = vpop.f32.mrb[0].mxu0
  %v474 = vadd.f32 %v93, %v473
  %v475 = vpop.f32.mrb[0].mxu0
  %476 = vmatprep.mubr.bf16.mxu0 0
  %477 = vmatmul.mubr.bf16.gmra.mrb[0].mxu0 %v290
  %v478 = vpop.f32.mrb[0].mxu0
  %v479 = vadd.f32 %v93, %v478
  %v480 = vpop.f32.mrb[0].mxu0
  %v481 = vpop.f32.mrb[0].mxu0
  %v482 = vadd.f32 %v93, %v481
  %v483 = vpop.f32.mrb[0].mxu0
  %484 = vmatprep.mubr.bf16.mxu0 0
  %485 = vmatmul.mubr.bf16.gmra.mrb[0].mxu0 %v293
  %v486 = vpop.f32.mrb[0].mxu0
  %v487 = vadd.f32 %v93, %v486
  %v488 = vpop.f32.mrb[0].mxu0
  %v489 = vpop.f32.mrb[0].mxu0
  %v490 = vadd.f32 %v93, %v489
  %v491 = vpop.f32.mrb[0].mxu0
  %492 = vmatprep.mubr.bf16.mxu0 0
  %493 = vmatmul.mubr.bf16.gmra.mrb[0].mxu0 %v296
  %v494 = vpop.f32.mrb[0].mxu0
  %v495 = vadd.f32 %v93, %v494
  %v496 = vpop.f32.mrb[0].mxu0
  %v497 = vpop.f32.mrb[0].mxu0
  %v498 = vadd.f32 %v93, %v497
  %v499 = vpop.f32.mrb[0].mxu0
  %500 = vmatprep.mubr.bf16.mxu0 0
  %501 = vmatmul.mubr.bf16.gmra.mrb[0].mxu0 %v299
  %v502 = vpop.f32.mrb[0].mxu0
  %v503 = vadd.f32 %v93, %v502
  %v504 = vpop.f32.mrb[0].mxu0
  %v505 = vpop.f32.mrb[0].mxu0
  %v506 = vadd.f32 %v93, %v505
  %v507 = vpop.f32.mrb[0].mxu0
  %508 = vmatprep.mubr.bf16.mxu0 0
  %509 = vmatmul.mubr.bf16.gmra.mrb[0].mxu0 %v302
  %v510 = vpop.f32.mrb[0].mxu0
  %v511 = vadd.f32 %v93, %v510
  %v512 = vpop.f32.mrb[0].mxu0
  %v513 = vpop.f32.mrb[0].mxu0
  %v514 = vadd.f32 %v93, %v513
  %v515 = vpop.f32.mrb[0].mxu0
  %516 = vmatprep.mubr.bf16.mxu0 0
  %517 = vmatmul.mubr.bf16.gmra.mrb[0].mxu0 %v305
  %v518 = vpop.f32.mrb[0].mxu0
  %v519 = vadd.f32 %v93, %v518
  %v520 = vpop.f32.mrb[0].mxu0
  %v521 = vpop.f32.mrb[0].mxu0
  %v522 = vadd.f32 %v93, %v521
  %v523 = vpop.f32.mrb[0].mxu0
  %524 = vmatprep.mubr.bf16.mxu0 0
  %525 = vmatmul.mubr.bf16.gmra.mrb[0].mxu0 %v308
  %v526 = vpop.f32.mrb[0].mxu0
  %v527 = vadd.f32 %v93, %v526
  %v528 = vpop.f32.mrb[0].mxu0
  %v529 = vpop.f32.mrb[0].mxu0
  %v530 = vadd.f32 %v93, %v529
  %v531 = vpop.f32.mrb[0].mxu0
  %532 = vmatprep.mubr.bf16.mxu0 0
  %533 = vmatmul.mubr.bf16.gmra.mrb[0].mxu0 %v311
  %v534 = vpop.f32.mrb[0].mxu0
  %v535 = vadd.f32 %v93, %v534
  %v536 = vpop.f32.mrb[0].mxu0
  %v537 = vpop.f32.mrb[0].mxu0
  %v538 = vadd.f32 %v93, %v537
  %v539 = vpop.f32.mrb[0].mxu0
  %540 = vmatprep.mubr.bf16.mxu0 0
  %541 = vmatmul.mubr.bf16.gmra.mrb[0].mxu0 %v314
  %v542 = vpop.f32.mrb[0].mxu0
  %v543 = vadd.f32 %v93, %v542
  %v544 = vpop.f32.mrb[0].mxu0
  %v545 = vpop.f32.mrb[0].mxu0
  %v546 = vadd.f32 %v93, %v545
  %v547 = vpop.f32.mrb[0].mxu0
  %548 = vmatprep.mubr.bf16.mxu0 0
  %549 = vmatmul.mubr.bf16.gmra.mrb[0].mxu0 %v317
  %v550 = vpop.f32.mrb[0].mxu0
  %v551 = vadd.f32 %v93, %v550
  %v552 = vpop.f32.mrb[0].mxu0
  %v553 = vpop.f32.mrb[0].mxu0
  %v554 = vadd.f32 %v93, %v553
  %v555 = vpop.f32.mrb[0].mxu0
  %556 = vmatprep.mubr.bf16.mxu0 0
  %557 = vmatmul.mubr.bf16.gmra.mrb[0].mxu0 %v320
  %v558 = vpop.f32.mrb[0].mxu0
  %v559 = vadd.f32 %v93, %v558
  %v560 = vpop.f32.mrb[0].mxu0
  %v561 = vpop.f32.mrb[0].mxu0
  %v562 = vadd.f32 %v93, %v561
  %v563 = vpop.f32.mrb[0].mxu0
  %564 = vmatprep.mubr.bf16.mxu0 0
  %565 = vmatmul.mubr.bf16.gmra.mrb[0].mxu0 %v323
  %v566 = vpop.f32.mrb[0].mxu0
  %v567 = vadd.f32 %v93, %v566
  %v568 = vpop.f32.mrb[0].mxu0
  %v569 = vpop.f32.mrb[0].mxu0
  %v570 = vadd.f32 %v93, %v569
  %v571 = vpop.f32.mrb[0].mxu0
  %572 = vmatprep.mubr.bf16.mxu0 0
  %573 = vmatmul.mubr.bf16.gmra.mrb[0].mxu0 %v326
  %v574 = vpop.f32.mrb[0].mxu0
  %v575 = vadd.f32 %v93, %v574
  %v576 = vpop.f32.mrb[0].mxu0
  %v577 = vpop.f32.mrb[0].mxu0
  %v578 = vadd.f32 %v93, %v577
  %v579 = vpop.f32.mrb[0].mxu0
  %580 = vmatprep.mubr.bf16.mxu0 0
  %581 = vmatmul.mubr.bf16.gmra.mrb[0].mxu0 %v329
  %v582 = vpop.f32.mrb[0].mxu0
  %v583 = vadd.f32 %v93, %v582
  %v584 = vpop.f32.mrb[0].mxu0
  %v585 = vpop.f32.mrb[0].mxu0
  %v586 = vadd.f32 %v93, %v585
  %v587 = vpop.f32.mrb[0].mxu0
  %588 = vmatprep.mubr.bf16.mxu0 0
  %589 = vmatmul.mubr.bf16.gmra.mrb[0].mxu0 %v332
  %v590 = vpop.f32.mrb[0].mxu0
  %v591 = vadd.f32 %v93, %v590
  %v592 = vpop.f32.mrb[0].mxu0
  %v593 = vpop.f32.mrb[0].mxu0
  %v594 = vadd.f32 %v93, %v593
  %v595 = vpop.f32.mrb[0].mxu0
  %596 = vmatprep.mubr.bf16.mxu0 0
  %597 = vmatmul.mubr.bf16.gmra.mrb[0].mxu0 %v335
  %v598 = vpop.f32.mrb[0].mxu0
  %v599 = vadd.f32 %v93, %v598
  %v600 = vpop.f32.mrb[0].mxu0
  %v601 = vpop.f32.mrb[0].mxu0
  %v602 = vadd.f32 %v93, %v601
  %v603 = vpop.f32.mrb[0].mxu0
  %604 = vmatprep.mubr.bf16.mxu0 0
  %605 = vmatmul.mubr.bf16.gmra.mrb[0].mxu0 %v338
  %v606 = vpop.f32.mrb[0].mxu0
  %v607 = vadd.f32 %v93, %v606
  %v608 = vpop.f32.mrb[0].mxu0
  %v609 = vpop.f32.mrb[0].mxu0
  %v610 = vadd.f32 %v93, %v609
  %v611 = vpop.f32.mrb[0].mxu0
  %612 = vmatprep.mubr.bf16.mxu0 0
  %613 = vmatmul.mubr.bf16.gmra.mrb[0].mxu0 %v341
  %v614 = vpop.f32.mrb[0].mxu0
  %v615 = vadd.f32 %v93, %v614
  %v616 = vpop.f32.mrb[0].mxu0
  %v617 = vpop.f32.mrb[0].mxu0
  %v618 = vadd.f32 %v93, %v617
  %v619 = vpop.f32.mrb[0].mxu0
  %620 = vmatprep.mubr.bf16.mxu0 0
  %621 = vmatmul.mubr.bf16.gmra.mrb[0].mxu0 %v344
  %v622 = vpop.f32.mrb[0].mxu0
  %v623 = vadd.f32 %v93, %v622
  %v624 = vpop.f32.mrb[0].mxu0
  %v625 = vpop.f32.mrb[0].mxu0
  %v626 = vadd.f32 %v93, %v625
  %v627 = vpop.f32.mrb[0].mxu0
  %628 = vmatprep.mubr.bf16.mxu0 0
  %629 = vmatmul.mubr.bf16.gmra.mrb[0].mxu0 %v347
  %v630 = vpop.f32.mrb[0].mxu0
  %v631 = vadd.f32 %v93, %v630
  %v632 = vpop.f32.mrb[0].mxu0
  %v633 = vpop.f32.mrb[0].mxu0
  %v634 = vadd.f32 %v93, %v633
  %v635 = vpop.f32.mrb[0].mxu0
  %636 = vmatprep.mubr.bf16.mxu0 0
  %637 = vmatmul.mubr.bf16.gmra.mrb[0].mxu0 %v350
  %v638 = vpop.f32.mrb[0].mxu0
  %v639 = vadd.f32 %v93, %v638
  %v640 = vpop.f32.mrb[0].mxu0
  %v641 = vpop.f32.mrb[0].mxu0
  %v642 = vadd.f32 %v93, %v641
  %v643 = vpop.f32.mrb[0].mxu0
  %644 = vdwg.mxu0
  %v645 = vxor.u32 %v391, 2147483648
  %v646 = vxor.u32 %v394, 2147483648
  %v647 = vxor.u32 %v399, 2147483648
  %v648 = vxor.u32 %v402, 2147483648
  %v649 = vxor.u32 %v407, 2147483648
  %v650 = vxor.u32 %v410, 2147483648
  %v651 = vxor.u32 %v415, 2147483648
  %v652 = vxor.u32 %v418, 2147483648
  %v653 = vxor.u32 %v423, 2147483648
  %v654 = vxor.u32 %v426, 2147483648
  %v655 = vxor.u32 %v431, 2147483648
  %v656 = vxor.u32 %v434, 2147483648
  %v657 = vxor.u32 %v439, 2147483648
  %v658 = vxor.u32 %v442, 2147483648
  %v659 = vxor.u32 %v447, 2147483648
  %v660 = vxor.u32 %v450, 2147483648
  %v661 = vxor.u32 %v455, 2147483648
  %v662 = vxor.u32 %v458, 2147483648
  %v663 = vxor.u32 %v463, 2147483648
  %v664 = vxor.u32 %v466, 2147483648
  %v665 = vxor.u32 %v471, 2147483648
  %v666 = vxor.u32 %v474, 2147483648
  %v667 = vxor.u32 %v479, 2147483648
  %v668 = vxor.u32 %v482, 2147483648
  %v669 = vxor.u32 %v487, 2147483648
  %v670 = vxor.u32 %v490, 2147483648
  %v671 = vxor.u32 %v495, 2147483648
  %v672 = vxor.u32 %v498, 2147483648
  %v673 = vxor.u32 %v503, 2147483648
  %v674 = vxor.u32 %v506, 2147483648
  %v675 = vxor.u32 %v511, 2147483648
  %v676 = vxor.u32 %v514, 2147483648
  %v677 = vxor.u32 %v519, 2147483648
  %v678 = vxor.u32 %v522, 2147483648
  %v679 = vxor.u32 %v527, 2147483648
  %v680 = vxor.u32 %v530, 2147483648
  %v681 = vxor.u32 %v535, 2147483648
  %v682 = vxor.u32 %v538, 2147483648
  %v683 = vxor.u32 %v543, 2147483648
  %v684 = vxor.u32 %v546, 2147483648
  %v685 = vxor.u32 %v551, 2147483648
  %v686 = vxor.u32 %v554, 2147483648
  %v687 = vxor.u32 %v559, 2147483648
  %v688 = vxor.u32 %v562, 2147483648
  %v689 = vxor.u32 %v567, 2147483648
  %v690 = vxor.u32 %v570, 2147483648
  %v691 = vxor.u32 %v575, 2147483648
  %v692 = vxor.u32 %v578, 2147483648
  %v693 = vxor.u32 %v583, 2147483648
  %v694 = vxor.u32 %v586, 2147483648
  %v695 = vxor.u32 %v591, 2147483648
  %v696 = vxor.u32 %v594, 2147483648
  %v697 = vxor.u32 %v599, 2147483648
  %v698 = vxor.u32 %v602, 2147483648
  %v699 = vxor.u32 %v607, 2147483648
  %v700 = vxor.u32 %v610, 2147483648
  %v701 = vxor.u32 %v615, 2147483648
  %v702 = vxor.u32 %v618, 2147483648
  %v703 = vxor.u32 %v623, 2147483648
  %v704 = vxor.u32 %v626, 2147483648
  %v705 = vxor.u32 %v631, 2147483648
  %v706 = vxor.u32 %v634, 2147483648
  %v707 = vxor.u32 %v639, 2147483648
  %v708 = vxor.u32 %v642, 2147483648
  %v709 = vmul.f32 %v645, 1.442695
  %v710 = vpow.pop %v709
  %v711 = vmul.f32 %v646, 1.442695
  %v712 = vpow.pop %v711
  %v713 = vmul.f32 %v647, 1.442695
  %v714 = vpow.pop %v713
  %v715 = vmul.f32 %v648, 1.442695
  %v716 = vpow.pop %v715
  %v717 = vmul.f32 %v649, 1.442695
  %v718 = vpow.pop %v717
  %v719 = vmul.f32 %v650, 1.442695
  %v720 = vpow.pop %v719
  %v721 = vmul.f32 %v651, 1.442695
  %v722 = vpow.pop %v721
  %v723 = vmul.f32 %v652, 1.442695
  %v724 = vpow.pop %v723
  %v725 = vmul.f32 %v653, 1.442695
  %v726 = vpow.pop %v725
  %v727 = vmul.f32 %v654, 1.442695
  %v728 = vpow.pop %v727
  %v729 = vmul.f32 %v655, 1.442695
  %v730 = vpow.pop %v729
  %v731 = vmul.f32 %v656, 1.442695
  %v732 = vpow.pop %v731
  %v733 = vmul.f32 %v657, 1.442695
  %v734 = vpow.pop %v733
  %v735 = vmul.f32 %v658, 1.442695
  %v736 = vpow.pop %v735
  %v737 = vmul.f32 %v659, 1.442695
  %v738 = vpow.pop %v737
  %v739 = vmul.f32 %v660, 1.442695
  %v740 = vpow.pop %v739
  %v741 = vmul.f32 %v661, 1.442695
  %v742 = vpow.pop %v741
  %v743 = vmul.f32 %v662, 1.442695
  %v744 = vpow.pop %v743
  %v745 = vmul.f32 %v663, 1.442695
  %v746 = vpow.pop %v745
  %v747 = vmul.f32 %v664, 1.442695
  %v748 = vpow.pop %v747
  %v749 = vmul.f32 %v665, 1.442695
  %v750 = vpow.pop %v749
  %v751 = vmul.f32 %v666, 1.442695
  %v752 = vpow.pop %v751
  %v753 = vmul.f32 %v667, 1.442695
  %v754 = vpow.pop %v753
  %v755 = vmul.f32 %v668, 1.442695
  %v756 = vpow.pop %v755
  %v757 = vmul.f32 %v669, 1.442695
  %v758 = vpow.pop %v757
  %v759 = vmul.f32 %v670, 1.442695
  %v760 = vpow.pop %v759
  %v761 = vmul.f32 %v671, 1.442695
  %v762 = vpow.pop %v761
  %v763 = vmul.f32 %v672, 1.442695
  %v764 = vpow.pop %v763
  %v765 = vmul.f32 %v673, 1.442695
  %v766 = vpow.pop %v765
  %v767 = vmul.f32 %v674, 1.442695
  %v768 = vpow.pop %v767
  %v769 = vmul.f32 %v675, 1.442695
  %v770 = vpow.pop %v769
  %v771 = vmul.f32 %v676, 1.442695
  %v772 = vpow.pop %v771
  %v773 = vmul.f32 %v677, 1.442695
  %v774 = vpow.pop %v773
  %v775 = vmul.f32 %v678, 1.442695
  %v776 = vpow.pop %v775
  %v777 = vmul.f32 %v679, 1.442695
  %v778 = vpow.pop %v777
  %v779 = vmul.f32 %v680, 1.442695
  %v780 = vpow.pop %v779
  %v781 = vmul.f32 %v681, 1.442695
  %v782 = vpow.pop %v781
  %v783 = vmul.f32 %v682, 1.442695
  %v784 = vpow.pop %v783
  %v785 = vmul.f32 %v683, 1.442695
  %v786 = vpow.pop %v785
  %v787 = vmul.f32 %v684, 1.442695
  %v788 = vpow.pop %v787
  %v789 = vmul.f32 %v685, 1.442695
  %v790 = vpow.pop %v789
  %v791 = vmul.f32 %v686, 1.442695
  %v792 = vpow.pop %v791
  %v793 = vmul.f32 %v687, 1.442695
  %v794 = vpow.pop %v793
  %v795 = vmul.f32 %v688, 1.442695
  %v796 = vpow.pop %v795
  %v797 = vmul.f32 %v689, 1.442695
  %v798 = vpow.pop %v797
  %v799 = vmul.f32 %v690, 1.442695
  %v800 = vpow.pop %v799
  %v801 = vmul.f32 %v691, 1.442695
  %v802 = vpow.pop %v801
  %v803 = vmul.f32 %v692, 1.442695
  %v804 = vpow.pop %v803
  %v805 = vmul.f32 %v693, 1.442695
  %v806 = vpow.pop %v805
  %v807 = vmul.f32 %v694, 1.442695
  %v808 = vpow.pop %v807
  %v809 = vmul.f32 %v695, 1.442695
  %v810 = vpow.pop %v809
  %v811 = vmul.f32 %v696, 1.442695
  %v812 = vpow.pop %v811
  %v813 = vmul.f32 %v697, 1.442695
  %v814 = vpow.pop %v813
  %v815 = vmul.f32 %v698, 1.442695
  %v816 = vpow.pop %v815
  %v817 = vmul.f32 %v699, 1.442695
  %v818 = vpow.pop %v817
  %v819 = vmul.f32 %v700, 1.442695
  %v820 = vpow.pop %v819
  %v821 = vmul.f32 %v701, 1.442695
  %v822 = vpow.pop %v821
  %v823 = vmul.f32 %v702, 1.442695
  %v824 = vpow.pop %v823
  %v825 = vmul.f32 %v703, 1.442695
  %v826 = vpow.pop %v825
  %v827 = vmul.f32 %v704, 1.442695
  %v828 = vpow.pop %v827
  %v829 = vmul.f32 %v705, 1.442695
  %v830 = vpow.pop %v829
  %v831 = vmul.f32 %v706, 1.442695
  %v832 = vpow.pop %v831
  %v833 = vmul.f32 %v707, 1.442695
  %v834 = vpow.pop %v833
  %v835 = vmul.f32 %v708, 1.442695
  %v836 = vpow.pop %v835
  %v837 = vadd.f32 %v710, 1.0
  %v838 = vadd.f32 %v712, 1.0
  %v839 = vadd.f32 %v714, 1.0
  %v840 = vadd.f32 %v716, 1.0
  %v841 = vadd.f32 %v718, 1.0
  %v842 = vadd.f32 %v720, 1.0
  %v843 = vadd.f32 %v722, 1.0
  %v844 = vadd.f32 %v724, 1.0
  %v845 = vadd.f32 %v726, 1.0
  %v846 = vadd.f32 %v728, 1.0
  %v847 = vadd.f32 %v730, 1.0
  %v848 = vadd.f32 %v732, 1.0
  %v849 = vadd.f32 %v734, 1.0
  %v850 = vadd.f32 %v736, 1.0
  %v851 = vadd.f32 %v738, 1.0
  %v852 = vadd.f32 %v740, 1.0
  %v853 = vadd.f32 %v742, 1.0
  %v854 = vadd.f32 %v744, 1.0
  %v855 = vadd.f32 %v746, 1.0
  %v856 = vadd.f32 %v748, 1.0
  %v857 = vadd.f32 %v750, 1.0
  %v858 = vadd.f32 %v752, 1.0
  %v859 = vadd.f32 %v754, 1.0
  %v860 = vadd.f32 %v756, 1.0
  %v861 = vadd.f32 %v758, 1.0
  %v862 = vadd.f32 %v760, 1.0
  %v863 = vadd.f32 %v762, 1.0
  %v864 = vadd.f32 %v764, 1.0
  %v865 = vadd.f32 %v766, 1.0
  %v866 = vadd.f32 %v768, 1.0
  %v867 = vadd.f32 %v770, 1.0
  %v868 = vadd.f32 %v772, 1.0
  %v869 = vadd.f32 %v774, 1.0
  %v870 = vadd.f32 %v776, 1.0
  %v871 = vadd.f32 %v778, 1.0
  %v872 = vadd.f32 %v780, 1.0
  %v873 = vadd.f32 %v782, 1.0
  %v874 = vadd.f32 %v784, 1.0
  %v875 = vadd.f32 %v786, 1.0
  %v876 = vadd.f32 %v788, 1.0
  %v877 = vadd.f32 %v790, 1.0
  %v878 = vadd.f32 %v792, 1.0
  %v879 = vadd.f32 %v794, 1.0
  %v880 = vadd.f32 %v796, 1.0
  %v881 = vadd.f32 %v798, 1.0
  %v882 = vadd.f32 %v800, 1.0
  %v883 = vadd.f32 %v802, 1.0
  %v884 = vadd.f32 %v804, 1.0
  %v885 = vadd.f32 %v806, 1.0
  %v886 = vadd.f32 %v808, 1.0
  %v887 = vadd.f32 %v810, 1.0
  %v888 = vadd.f32 %v812, 1.0
  %v889 = vadd.f32 %v814, 1.0
  %v890 = vadd.f32 %v816, 1.0
  %v891 = vadd.f32 %v818, 1.0
  %v892 = vadd.f32 %v820, 1.0
  %v893 = vadd.f32 %v822, 1.0
  %v894 = vadd.f32 %v824, 1.0
  %v895 = vadd.f32 %v826, 1.0
  %v896 = vadd.f32 %v828, 1.0
  %v897 = vadd.f32 %v830, 1.0
  %v898 = vadd.f32 %v832, 1.0
  %v899 = vadd.f32 %v834, 1.0
  %v900 = vadd.f32 %v836, 1.0
  %v901 = vrcp.pop %v837
  %v902 = vmul.f32 1.0, %v901
  %v903 = vrcp.pop %v838
  %v904 = vmul.f32 1.0, %v903
  %v905 = vrcp.pop %v839
  %v906 = vmul.f32 1.0, %v905
  %v907 = vrcp.pop %v840
  %v908 = vmul.f32 1.0, %v907
  %v909 = vrcp.pop %v841
  %v910 = vmul.f32 1.0, %v909
  %v911 = vrcp.pop %v842
  %v912 = vmul.f32 1.0, %v911
  %v913 = vrcp.pop %v843
  %v914 = vmul.f32 1.0, %v913
  %v915 = vrcp.pop %v844
  %v916 = vmul.f32 1.0, %v915
  %v917 = vrcp.pop %v845
  %v918 = vmul.f32 1.0, %v917
  %v919 = vrcp.pop %v846
  %v920 = vmul.f32 1.0, %v919
  %v921 = vrcp.pop %v847
  %v922 = vmul.f32 1.0, %v921
  %v923 = vrcp.pop %v848
  %v924 = vmul.f32 1.0, %v923
  %v925 = vrcp.pop %v849
  %v926 = vmul.f32 1.0, %v925
  %v927 = vrcp.pop %v850
  %v928 = vmul.f32 1.0, %v927
  %v929 = vrcp.pop %v851
  %v930 = vmul.f32 1.0, %v929
  %v931 = vrcp.pop %v852
  %v932 = vmul.f32 1.0, %v931
  %v933 = vrcp.pop %v853
  %v934 = vmul.f32 1.0, %v933
  %v935 = vrcp.pop %v854
  %v936 = vmul.f32 1.0, %v935
  %v937 = vrcp.pop %v855
  %v938 = vmul.f32 1.0, %v937
  %v939 = vrcp.pop %v856
  %v940 = vmul.f32 1.0, %v939
  %v941 = vrcp.pop %v857
  %v942 = vmul.f32 1.0, %v941
  %v943 = vrcp.pop %v858
  %v944 = vmul.f32 1.0, %v943
  %v945 = vrcp.pop %v859
  %v946 = vmul.f32 1.0, %v945
  %v947 = vrcp.pop %v860
  %v948 = vmul.f32 1.0, %v947
  %v949 = vrcp.pop %v861
  %v950 = vmul.f32 1.0, %v949
  %v951 = vrcp.pop %v862
  %v952 = vmul.f32 1.0, %v951
  %v953 = vrcp.pop %v863
  %v954 = vmul.f32 1.0, %v953
  %v955 = vrcp.pop %v864
  %v956 = vmul.f32 1.0, %v955
  %v957 = vrcp.pop %v865
  %v958 = vmul.f32 1.0, %v957
  %v959 = vrcp.pop %v866
  %v960 = vmul.f32 1.0, %v959
  %v961 = vrcp.pop %v867
  %v962 = vmul.f32 1.0, %v961
  %v963 = vrcp.pop %v868
  %v964 = vmul.f32 1.0, %v963
  %v965 = vrcp.pop %v869
  %v966 = vmul.f32 1.0, %v965
  %v967 = vrcp.pop %v870
  %v968 = vmul.f32 1.0, %v967
  %v969 = vrcp.pop %v871
  %v970 = vmul.f32 1.0, %v969
  %v971 = vrcp.pop %v872
  %v972 = vmul.f32 1.0, %v971
  %v973 = vrcp.pop %v873
  %v974 = vmul.f32 1.0, %v973
  %v975 = vrcp.pop %v874
  %v976 = vmul.f32 1.0, %v975
  %v977 = vrcp.pop %v875
  %v978 = vmul.f32 1.0, %v977
  %v979 = vrcp.pop %v876
  %v980 = vmul.f32 1.0, %v979
  %v981 = vrcp.pop %v877
  %v982 = vmul.f32 1.0, %v981
  %v983 = vrcp.pop %v878
  %v984 = vmul.f32 1.0, %v983
  %v985 = vrcp.pop %v879
  %v986 = vmul.f32 1.0, %v985
  %v987 = vrcp.pop %v880
  %v988 = vmul.f32 1.0, %v987
  %v989 = vrcp.pop %v881
  %v990 = vmul.f32 1.0, %v989
  %v991 = vrcp.pop %v882
  %v992 = vmul.f32 1.0, %v991
  %v993 = vrcp.pop %v883
  %v994 = vmul.f32 1.0, %v993
  %v995 = vrcp.pop %v884
  %v996 = vmul.f32 1.0, %v995
  %v997 = vrcp.pop %v885
  %v998 = vmul.f32 1.0, %v997
  %v999 = vrcp.pop %v886
  %v1000 = vmul.f32 1.0, %v999
  %v1001 = vrcp.pop %v887
  %v1002 = vmul.f32 1.0, %v1001
  %v1003 = vrcp.pop %v888
  %v1004 = vmul.f32 1.0, %v1003
  %v1005 = vrcp.pop %v889
  %v1006 = vmul.f32 1.0, %v1005
  %v1007 = vrcp.pop %v890
  %v1008 = vmul.f32 1.0, %v1007
  %v1009 = vrcp.pop %v891
  %v1010 = vmul.f32 1.0, %v1009
  %v1011 = vrcp.pop %v892
  %v1012 = vmul.f32 1.0, %v1011
  %v1013 = vrcp.pop %v893
  %v1014 = vmul.f32 1.0, %v1013
  %v1015 = vrcp.pop %v894
  %v1016 = vmul.f32 1.0, %v1015
  %v1017 = vrcp.pop %v895
  %v1018 = vmul.f32 1.0, %v1017
  %v1019 = vrcp.pop %v896
  %v1020 = vmul.f32 1.0, %v1019
  %v1021 = vrcp.pop %v897
  %v1022 = vmul.f32 1.0, %v1021
  %v1023 = vrcp.pop %v898
  %v1024 = vmul.f32 1.0, %v1023
  %v1025 = vrcp.pop %v899
  %v1026 = vmul.f32 1.0, %v1025
  %v1027 = vrcp.pop %v900
  %v1028 = vmul.f32 1.0, %v1027
  %v1029 = vmul.f32 %v391, %v902
  %v1030 = vmul.f32 %v394, %v904
  %v1031 = vmul.f32 %v399, %v906
  %v1032 = vmul.f32 %v402, %v908
  %v1033 = vmul.f32 %v407, %v910
  %v1034 = vmul.f32 %v410, %v912
  %v1035 = vmul.f32 %v415, %v914
  %v1036 = vmul.f32 %v418, %v916
  %v1037 = vmul.f32 %v423, %v918
  %v1038 = vmul.f32 %v426, %v920
  %v1039 = vmul.f32 %v431, %v922
  %v1040 = vmul.f32 %v434, %v924
  %v1041 = vmul.f32 %v439, %v926
  %v1042 = vmul.f32 %v442, %v928
  %v1043 = vmul.f32 %v447, %v930
  %v1044 = vmul.f32 %v450, %v932
  %v1045 = vmul.f32 %v455, %v934
  %v1046 = vmul.f32 %v458, %v936
  %v1047 = vmul.f32 %v463, %v938
  %v1048 = vmul.f32 %v466, %v940
  %v1049 = vmul.f32 %v471, %v942
  %v1050 = vmul.f32 %v474, %v944
  %v1051 = vmul.f32 %v479, %v946
  %v1052 = vmul.f32 %v482, %v948
  %v1053 = vmul.f32 %v487, %v950
  %v1054 = vmul.f32 %v490, %v952
  %v1055 = vmul.f32 %v495, %v954
  %v1056 = vmul.f32 %v498, %v956
  %v1057 = vmul.f32 %v503, %v958
  %v1058 = vmul.f32 %v506, %v960
  %v1059 = vmul.f32 %v511, %v962
  %v1060 = vmul.f32 %v514, %v964
  %v1061 = vmul.f32 %v519, %v966
  %v1062 = vmul.f32 %v522, %v968
  %v1063 = vmul.f32 %v527, %v970
  %v1064 = vmul.f32 %v530, %v972
  %v1065 = vmul.f32 %v535, %v974
  %v1066 = vmul.f32 %v538, %v976
  %v1067 = vmul.f32 %v543, %v978
  %v1068 = vmul.f32 %v546, %v980
  %v1069 = vmul.f32 %v551, %v982
  %v1070 = vmul.f32 %v554, %v984
  %v1071 = vmul.f32 %v559, %v986
  %v1072 = vmul.f32 %v562, %v988
  %v1073 = vmul.f32 %v567, %v990
  %v1074 = vmul.f32 %v570, %v992
  %v1075 = vmul.f32 %v575, %v994
  %v1076 = vmul.f32 %v578, %v996
  %v1077 = vmul.f32 %v583, %v998
  %v1078 = vmul.f32 %v586, %v1000
  %v1079 = vmul.f32 %v591, %v1002
  %v1080 = vmul.f32 %v594, %v1004
  %v1081 = vmul.f32 %v599, %v1006
  %v1082 = vmul.f32 %v602, %v1008
  %v1083 = vmul.f32 %v607, %v1010
  %v1084 = vmul.f32 %v610, %v1012
  %v1085 = vmul.f32 %v615, %v1014
  %v1086 = vmul.f32 %v618, %v1016
  %v1087 = vmul.f32 %v623, %v1018
  %v1088 = vmul.f32 %v626, %v1020
  %v1089 = vmul.f32 %v631, %v1022
  %v1090 = vmul.f32 %v634, %v1024
  %v1091 = vmul.f32 %v639, %v1026
  %v1092 = vmul.f32 %v642, %v1028
  %v1093 = vpack.c.bf16 %v1030, %v1029
  %v1094 = vpack.c.bf16 %v1032, %v1031
  %v1095 = vpack.c.bf16 %v1034, %v1033
  %v1096 = vpack.c.bf16 %v1036, %v1035
  %v1097 = vpack.c.bf16 %v1038, %v1037
  %v1098 = vpack.c.bf16 %v1040, %v1039
  %v1099 = vpack.c.bf16 %v1042, %v1041
  %v1100 = vpack.c.bf16 %v1044, %v1043
  %v1101 = vpack.c.bf16 %v1046, %v1045
  %v1102 = vpack.c.bf16 %v1048, %v1047
  %v1103 = vpack.c.bf16 %v1050, %v1049
  %v1104 = vpack.c.bf16 %v1052, %v1051
  %v1105 = vpack.c.bf16 %v1054, %v1053
  %v1106 = vpack.c.bf16 %v1056, %v1055
  %v1107 = vpack.c.bf16 %v1058, %v1057
  %v1108 = vpack.c.bf16 %v1060, %v1059
  %v1109 = vpack.c.bf16 %v1062, %v1061
  %v1110 = vpack.c.bf16 %v1064, %v1063
  %v1111 = vpack.c.bf16 %v1066, %v1065
  %v1112 = vpack.c.bf16 %v1068, %v1067
  %v1113 = vpack.c.bf16 %v1070, %v1069
  %v1114 = vpack.c.bf16 %v1072, %v1071
  %v1115 = vpack.c.bf16 %v1074, %v1073
  %v1116 = vpack.c.bf16 %v1076, %v1075
  %v1117 = vpack.c.bf16 %v1078, %v1077
  %v1118 = vpack.c.bf16 %v1080, %v1079
  %v1119 = vpack.c.bf16 %v1082, %v1081
  %v1120 = vpack.c.bf16 %v1084, %v1083
  %v1121 = vpack.c.bf16 %v1086, %v1085
  %v1122 = vpack.c.bf16 %v1088, %v1087
  %v1123 = vpack.c.bf16 %v1090, %v1089
  %v1124 = vpack.c.bf16 %v1092, %v1091
  %v1157 = vunpack.c.l.b16 %v1093
  %v1158 = vunpack.c.h.b16 %v1093
  %v1159 = vunpack.c.l.b16 %v1094
  %v1160 = vunpack.c.h.b16 %v1094
  %v1161 = vunpack.c.l.b16 %v1095
  %v1162 = vunpack.c.h.b16 %v1095
  %v1163 = vunpack.c.l.b16 %v1096
  %v1164 = vunpack.c.h.b16 %v1096
  %v1165 = vunpack.c.l.b16 %v1097
  %v1166 = vunpack.c.h.b16 %v1097
  %v1167 = vunpack.c.l.b16 %v1098
  %v1168 = vunpack.c.h.b16 %v1098
  %v1169 = vunpack.c.l.b16 %v1099
  %v1170 = vunpack.c.h.b16 %v1099
  %v1171 = vunpack.c.l.b16 %v1100
  %v1172 = vunpack.c.h.b16 %v1100
  %v1173 = vunpack.c.l.b16 %v1101
  %v1174 = vunpack.c.h.b16 %v1101
  %v1175 = vunpack.c.l.b16 %v1102
  %v1176 = vunpack.c.h.b16 %v1102
  %v1177 = vunpack.c.l.b16 %v1103
  %v1178 = vunpack.c.h.b16 %v1103
  %v1179 = vunpack.c.l.b16 %v1104
  %v1180 = vunpack.c.h.b16 %v1104
  %v1181 = vunpack.c.l.b16 %v1105
  %v1182 = vunpack.c.h.b16 %v1105
  %v1183 = vunpack.c.l.b16 %v1106
  %v1184 = vunpack.c.h.b16 %v1106
  %v1185 = vunpack.c.l.b16 %v1107
  %v1186 = vunpack.c.h.b16 %v1107
  %v1187 = vunpack.c.l.b16 %v1108
  %v1188 = vunpack.c.h.b16 %v1108
  %v1189 = vunpack.c.l.b16 %v1109
  %v1190 = vunpack.c.h.b16 %v1109
  %v1191 = vunpack.c.l.b16 %v1110
  %v1192 = vunpack.c.h.b16 %v1110
  %v1193 = vunpack.c.l.b16 %v1111
  %v1194 = vunpack.c.h.b16 %v1111
  %v1195 = vunpack.c.l.b16 %v1112
  %v1196 = vunpack.c.h.b16 %v1112
  %v1197 = vunpack.c.l.b16 %v1113
  %v1198 = vunpack.c.h.b16 %v1113
  %v1199 = vunpack.c.l.b16 %v1114
  %v1200 = vunpack.c.h.b16 %v1114
  %v1201 = vunpack.c.l.b16 %v1115
  %v1202 = vunpack.c.h.b16 %v1115
  %v1203 = vunpack.c.l.b16 %v1116
  %v1204 = vunpack.c.h.b16 %v1116
  %v1205 = vunpack.c.l.b16 %v1117
  %v1206 = vunpack.c.h.b16 %v1117
  %v1207 = vunpack.c.l.b16 %v1118
  %v1208 = vunpack.c.h.b16 %v1118
  %v1209 = vunpack.c.l.b16 %v1119
  %v1210 = vunpack.c.h.b16 %v1119
  %v1211 = vunpack.c.l.b16 %v1120
  %v1212 = vunpack.c.h.b16 %v1120
  %v1213 = vunpack.c.l.b16 %v1121
  %v1214 = vunpack.c.h.b16 %v1121
  %v1215 = vunpack.c.l.b16 %v1122
  %v1216 = vunpack.c.h.b16 %v1122
  %v1217 = vunpack.c.l.b16 %v1123
  %v1218 = vunpack.c.h.b16 %v1123
  %v1219 = vunpack.c.l.b16 %v1124
  %v1220 = vunpack.c.h.b16 %v1124
  %v1221 = vpack.c.b16 %v1157, %v1157
  %v1222 = vpack.c.b16 %v1158, %v1158
  %v1223 = vpack.c.b16 %v1159, %v1159
  %v1224 = vpack.c.b16 %v1160, %v1160
  %v1225 = vpack.c.b16 %v1161, %v1161
  %v1226 = vpack.c.b16 %v1162, %v1162
  %v1227 = vpack.c.b16 %v1163, %v1163
  %v1228 = vpack.c.b16 %v1164, %v1164
  %v1229 = vpack.c.b16 %v1165, %v1165
  %v1230 = vpack.c.b16 %v1166, %v1166
  %v1231 = vpack.c.b16 %v1167, %v1167
  %v1232 = vpack.c.b16 %v1168, %v1168
  %v1233 = vpack.c.b16 %v1169, %v1169
  %v1234 = vpack.c.b16 %v1170, %v1170
  %v1235 = vpack.c.b16 %v1171, %v1171
  %v1236 = vpack.c.b16 %v1172, %v1172
  %v1237 = vpack.c.b16 %v1173, %v1173
  %v1238 = vpack.c.b16 %v1174, %v1174
  %v1239 = vpack.c.b16 %v1175, %v1175
  %v1240 = vpack.c.b16 %v1176, %v1176
  %v1241 = vpack.c.b16 %v1177, %v1177
  %v1242 = vpack.c.b16 %v1178, %v1178
  %v1243 = vpack.c.b16 %v1179, %v1179
  %v1244 = vpack.c.b16 %v1180, %v1180
  %v1245 = vpack.c.b16 %v1181, %v1181
  %v1246 = vpack.c.b16 %v1182, %v1182
  %v1247 = vpack.c.b16 %v1183, %v1183
  %v1248 = vpack.c.b16 %v1184, %v1184
  %v1249 = vpack.c.b16 %v1185, %v1185
  %v1250 = vpack.c.b16 %v1186, %v1186
  %v1251 = vpack.c.b16 %v1187, %v1187
  %v1252 = vpack.c.b16 %v1188, %v1188
  %v1253 = vpack.c.b16 %v1189, %v1189
  %v1254 = vpack.c.b16 %v1190, %v1190
  %v1255 = vpack.c.b16 %v1191, %v1191
  %v1256 = vpack.c.b16 %v1192, %v1192
  %v1257 = vpack.c.b16 %v1193, %v1193
  %v1258 = vpack.c.b16 %v1194, %v1194
  %v1259 = vpack.c.b16 %v1195, %v1195
  %v1260 = vpack.c.b16 %v1196, %v1196
  %v1261 = vpack.c.b16 %v1197, %v1197
  %v1262 = vpack.c.b16 %v1198, %v1198
  %v1263 = vpack.c.b16 %v1199, %v1199
  %v1264 = vpack.c.b16 %v1200, %v1200
  %v1265 = vpack.c.b16 %v1201, %v1201
  %v1266 = vpack.c.b16 %v1202, %v1202
  %v1267 = vpack.c.b16 %v1203, %v1203
  %v1268 = vpack.c.b16 %v1204, %v1204
  %v1269 = vpack.c.b16 %v1205, %v1205
  %v1270 = vpack.c.b16 %v1206, %v1206
  %v1271 = vpack.c.b16 %v1207, %v1207
  %v1272 = vpack.c.b16 %v1208, %v1208
  %v1273 = vpack.c.b16 %v1209, %v1209
  %v1274 = vpack.c.b16 %v1210, %v1210
  %v1275 = vpack.c.b16 %v1211, %v1211
  %v1276 = vpack.c.b16 %v1212, %v1212
  %v1277 = vpack.c.b16 %v1213, %v1213
  %v1278 = vpack.c.b16 %v1214, %v1214
  %v1279 = vpack.c.b16 %v1215, %v1215
  %v1280 = vpack.c.b16 %v1216, %v1216
  %v1281 = vpack.c.b16 %v1217, %v1217
  %v1282 = vpack.c.b16 %v1218, %v1218
  %v1283 = vpack.c.b16 %v1219, %v1219
  %v1284 = vpack.c.b16 %v1220, %v1220
  %vm1349 = vcmask 11264
  %1350 = vst.msk [vmem:[%s5] sm:$0xf] %vm1349, %v1221
  %1351 = vst.msk [vmem:[%s5 + $0x4] sm:$0xf] %vm1349, %v1222
  %1352 = vst.msk [vmem:[%s5 + $0x8] sm:$0xf] %vm1349, %v1223
  %1353 = vst.msk [vmem:[%s5 + $0xc] sm:$0xf] %vm1349, %v1224
  %1354 = vst.msk [vmem:[%s5 + $0x10] sm:$0xf] %vm1349, %v1225
  %1355 = vst.msk [vmem:[%s5 + $0x14] sm:$0xf] %vm1349, %v1226
  %1356 = vst.msk [vmem:[%s5 + $0x18] sm:$0xf] %vm1349, %v1227
  %1357 = vst.msk [vmem:[%s5 + $0x1c] sm:$0xf] %vm1349, %v1228
  %1358 = vst.msk [vmem:[%s5 + $0x20] sm:$0xf] %vm1349, %v1229
  %1359 = vst.msk [vmem:[%s5 + $0x24] sm:$0xf] %vm1349, %v1230
  %1360 = vst.msk [vmem:[%s5 + $0x28] sm:$0xf] %vm1349, %v1231
  %1361 = vst.msk [vmem:[%s5 + $0x2c] sm:$0xf] %vm1349, %v1232
  %1362 = vst.msk [vmem:[%s5 + $0x30] sm:$0xf] %vm1349, %v1233
  %1363 = vst.msk [vmem:[%s5 + $0x34] sm:$0xf] %vm1349, %v1234
  %1364 = vst.msk [vmem:[%s5 + $0x38] sm:$0xf] %vm1349, %v1235
  %1365 = vst.msk [vmem:[%s5 + $0x3c] sm:$0xf] %vm1349, %v1236
  %1366 = vst.msk [vmem:[%s5 + $0x40] sm:$0xf] %vm1349, %v1237
  %1367 = vst.msk [vmem:[%s5 + $0x44] sm:$0xf] %vm1349, %v1238
  %1368 = vst.msk [vmem:[%s5 + $0x48] sm:$0xf] %vm1349, %v1239
  %1369 = vst.msk [vmem:[%s5 + $0x4c] sm:$0xf] %vm1349, %v1240
  %1370 = vst.msk [vmem:[%s5 + $0x50] sm:$0xf] %vm1349, %v1241
  %1371 = vst.msk [vmem:[%s5 + $0x54] sm:$0xf] %vm1349, %v1242
  %1372 = vst.msk [vmem:[%s5 + $0x58] sm:$0xf] %vm1349, %v1243
  %1373 = vst.msk [vmem:[%s5 + $0x5c] sm:$0xf] %vm1349, %v1244
  %1374 = vst.msk [vmem:[%s5 + $0x60] sm:$0xf] %vm1349, %v1245
  %1375 = vst.msk [vmem:[%s5 + $0x64] sm:$0xf] %vm1349, %v1246
  %1376 = vst.msk [vmem:[%s5 + $0x68] sm:$0xf] %vm1349, %v1247
  %1377 = vst.msk [vmem:[%s5 + $0x6c] sm:$0xf] %vm1349, %v1248
  %1378 = vst.msk [vmem:[%s5 + $0x70] sm:$0xf] %vm1349, %v1249
  %1379 = vst.msk [vmem:[%s5 + $0x74] sm:$0xf] %vm1349, %v1250
  %1380 = vst.msk [vmem:[%s5 + $0x78] sm:$0xf] %vm1349, %v1251
  %1381 = vst.msk [vmem:[%s5 + $0x7c] sm:$0xf] %vm1349, %v1252
  %1382 = vst.msk [vmem:[%s5 + $0x80] sm:$0xf] %vm1349, %v1253
  %1383 = vst.msk [vmem:[%s5 + $0x84] sm:$0xf] %vm1349, %v1254
  %1384 = vst.msk [vmem:[%s5 + $0x88] sm:$0xf] %vm1349, %v1255
  %1385 = vst.msk [vmem:[%s5 + $0x8c] sm:$0xf] %vm1349, %v1256
  %1386 = vst.msk [vmem:[%s5 + $0x90] sm:$0xf] %vm1349, %v1257
  %1387 = vst.msk [vmem:[%s5 + $0x94] sm:$0xf] %vm1349, %v1258
  %1388 = vst.msk [vmem:[%s5 + $0x98] sm:$0xf] %vm1349, %v1259
  %1389 = vst.msk [vmem:[%s5 + $0x9c] sm:$0xf] %vm1349, %v1260
  %1390 = vst.msk [vmem:[%s5 + $0xa0] sm:$0xf] %vm1349, %v1261
  %1391 = vst.msk [vmem:[%s5 + $0xa4] sm:$0xf] %vm1349, %v1262
  %1392 = vst.msk [vmem:[%s5 + $0xa8] sm:$0xf] %vm1349, %v1263
  %1393 = vst.msk [vmem:[%s5 + $0xac] sm:$0xf] %vm1349, %v1264
  %1394 = vst.msk [vmem:[%s5 + $0xb0] sm:$0xf] %vm1349, %v1265
  %1395 = vst.msk [vmem:[%s5 + $0xb4] sm:$0xf] %vm1349, %v1266
  %1396 = vst.msk [vmem:[%s5 + $0xb8] sm:$0xf] %vm1349, %v1267
  %1397 = vst.msk [vmem:[%s5 + $0xbc] sm:$0xf] %vm1349, %v1268
  %1398 = vst.msk [vmem:[%s5 + $0xc0] sm:$0xf] %vm1349, %v1269
  %1399 = vst.msk [vmem:[%s5 + $0xc4] sm:$0xf] %vm1349, %v1270
  %1400 = vst.msk [vmem:[%s5 + $0xc8] sm:$0xf] %vm1349, %v1271
  %1401 = vst.msk [vmem:[%s5 + $0xcc] sm:$0xf] %vm1349, %v1272
  %1402 = vst.msk [vmem:[%s5 + $0xd0] sm:$0xf] %vm1349, %v1273
  %1403 = vst.msk [vmem:[%s5 + $0xd4] sm:$0xf] %vm1349, %v1274
  %1404 = vst.msk [vmem:[%s5 + $0xd8] sm:$0xf] %vm1349, %v1275
  %1405 = vst.msk [vmem:[%s5 + $0xdc] sm:$0xf] %vm1349, %v1276
  %1406 = vst.msk [vmem:[%s5 + $0xe0] sm:$0xf] %vm1349, %v1277
  %1407 = vst.msk [vmem:[%s5 + $0xe4] sm:$0xf] %vm1349, %v1278
  %1408 = vst.msk [vmem:[%s5 + $0xe8] sm:$0xf] %vm1349, %v1279
  %1409 = vst.msk [vmem:[%s5 + $0xec] sm:$0xf] %vm1349, %v1280
  %1410 = vst.msk [vmem:[%s5 + $0xf0] sm:$0xf] %vm1349, %v1281
  %1411 = vst.msk [vmem:[%s5 + $0xf4] sm:$0xf] %vm1349, %v1282
  %1412 = vst.msk [vmem:[%s5 + $0xf8] sm:$0xf] %vm1349, %v1283
  %1413 = vst.msk [vmem:[%s5 + $0xfc] sm:$0xf] %vm1349, %v1284
  %v1414 = vld [vmem:[%s3] sm:$0x3]
  %v1415 = vld [vmem:[%s4] sm:$0x1]
  %v1417 = vlaneseq
  %v1418 = vshrl.u32 %v1417, 7
  %v1419 = vsub.s32 0, %v1418
  %v1420 = vrot.slane %v1415, %v1419
  %v1423 = vsel %vm352, %v1414, 0
  %1425 = vmatprep.subr.bf16.mxu0 0
  %1426 = vmatpush1.bf16.msra.mxu0 %v1423
  %1427 = vmatprep.subr.bf16.mxu0 0
  %1428 = vmatpush1.bf16.msra.mxu0 0
  %1429 = vmatprep.subr.bf16.mxu0 0
  %1430 = vmatpush1.bf16.msra.mxu0 0
  %1431 = vmatprep.subr.bf16.mxu0 0
  %1432 = vmatpush1.bf16.msra.mxu0 0
  %1433 = vmatprep.subr.bf16.mxu0 0
  %1434 = vmatpush1.bf16.msra.mxu0 0
  %1435 = vmatprep.subr.bf16.mxu0 0
  %1436 = vmatpush1.bf16.msra.mxu0 0
  %1437 = vmatprep.subr.bf16.mxu0 0
  %1438 = vmatpush1.bf16.msra.mxu0 0
  %1439 = vmatprep.subr.bf16.mxu0 0
  %1440 = vmatpush1.bf16.msra.mxu0 0
  %1441 = vmatprep.subr.bf16.mxu0 0
  %1442 = vmatpush1.bf16.msra.mxu0 0
  %1443 = vmatprep.subr.bf16.mxu0 0
  %1444 = vmatpush1.bf16.msra.mxu0 0
  %1445 = vmatprep.subr.bf16.mxu0 0
  %1446 = vmatpush1.bf16.msra.mxu0 0
  %1447 = vmatprep.subr.bf16.mxu0 0
  %1448 = vmatpush1.bf16.msra.mxu0 0
  %1449 = vmatprep.subr.bf16.mxu0 0
  %1450 = vmatpush1.bf16.msra.mxu0 0
  %1451 = vmatprep.subr.bf16.mxu0 0
  %1452 = vmatpush1.bf16.msra.mxu0 0
  %1453 = vmatprep.subr.bf16.mxu0 0
  %1454 = vmatpush1.bf16.msra.mxu0 0
  %1455 = vmatprep.subr.bf16.mxu0 0
  %1456 = vmatpush1.bf16.msra.mxu0 0
  %1457 = vmatprep.mubr.bf16.mxu0 0
  %1458 = vmatmul.mubr.bf16.gmra.mrb[0].mxu0 %v257
  %v1459 = vpop.f32.mrb[0].mxu0
  %v1460 = vadd.f32 %v1420, %v1459
  %v1461 = vpop.f32.mrb[0].mxu0
  %v1462 = vpop.f32.mrb[0].mxu0
  %v1463 = vadd.f32 %v1420, %v1462
  %v1464 = vpop.f32.mrb[0].mxu0
  %1465 = vmatprep.mubr.bf16.mxu0 0
  %1466 = vmatmul.mubr.bf16.gmra.mrb[0].mxu0 %v260
  %v1467 = vpop.f32.mrb[0].mxu0
  %v1468 = vadd.f32 %v1420, %v1467
  %v1469 = vpop.f32.mrb[0].mxu0
  %v1470 = vpop.f32.mrb[0].mxu0
  %v1471 = vadd.f32 %v1420, %v1470
  %v1472 = vpop.f32.mrb[0].mxu0
  %1473 = vmatprep.mubr.bf16.mxu0 0
  %1474 = vmatmul.mubr.bf16.gmra.mrb[0].mxu0 %v263
  %v1475 = vpop.f32.mrb[0].mxu0
  %v1476 = vadd.f32 %v1420, %v1475
  %v1477 = vpop.f32.mrb[0].mxu0
  %v1478 = vpop.f32.mrb[0].mxu0
  %v1479 = vadd.f32 %v1420, %v1478
  %v1480 = vpop.f32.mrb[0].mxu0
  %1481 = vmatprep.mubr.bf16.mxu0 0
  %1482 = vmatmul.mubr.bf16.gmra.mrb[0].mxu0 %v266
  %v1483 = vpop.f32.mrb[0].mxu0
  %v1484 = vadd.f32 %v1420, %v1483
  %v1485 = vpop.f32.mrb[0].mxu0
  %v1486 = vpop.f32.mrb[0].mxu0
  %v1487 = vadd.f32 %v1420, %v1486
  %v1488 = vpop.f32.mrb[0].mxu0
  %1489 = vmatprep.mubr.bf16.mxu0 0
  %1490 = vmatmul.mubr.bf16.gmra.mrb[0].mxu0 %v269
  %v1491 = vpop.f32.mrb[0].mxu0
  %v1492 = vadd.f32 %v1420, %v1491
  %v1493 = vpop.f32.mrb[0].mxu0
  %v1494 = vpop.f32.mrb[0].mxu0
  %v1495 = vadd.f32 %v1420, %v1494
  %v1496 = vpop.f32.mrb[0].mxu0
  %1497 = vmatprep.mubr.bf16.mxu0 0
  %1498 = vmatmul.mubr.bf16.gmra.mrb[0].mxu0 %v272
  %v1499 = vpop.f32.mrb[0].mxu0
  %v1500 = vadd.f32 %v1420, %v1499
  %v1501 = vpop.f32.mrb[0].mxu0
  %v1502 = vpop.f32.mrb[0].mxu0
  %v1503 = vadd.f32 %v1420, %v1502
  %v1504 = vpop.f32.mrb[0].mxu0
  %1505 = vmatprep.mubr.bf16.mxu0 0
  %1506 = vmatmul.mubr.bf16.gmra.mrb[0].mxu0 %v275
  %v1507 = vpop.f32.mrb[0].mxu0
  %v1508 = vadd.f32 %v1420, %v1507
  %v1509 = vpop.f32.mrb[0].mxu0
  %v1510 = vpop.f32.mrb[0].mxu0
  %v1511 = vadd.f32 %v1420, %v1510
  %v1512 = vpop.f32.mrb[0].mxu0
  %1513 = vmatprep.mubr.bf16.mxu0 0
  %1514 = vmatmul.mubr.bf16.gmra.mrb[0].mxu0 %v278
  %v1515 = vpop.f32.mrb[0].mxu0
  %v1516 = vadd.f32 %v1420, %v1515
  %v1517 = vpop.f32.mrb[0].mxu0
  %v1518 = vpop.f32.mrb[0].mxu0
  %v1519 = vadd.f32 %v1420, %v1518
  %v1520 = vpop.f32.mrb[0].mxu0
  %1521 = vmatprep.mubr.bf16.mxu0 0
  %1522 = vmatmul.mubr.bf16.gmra.mrb[0].mxu0 %v281
  %v1523 = vpop.f32.mrb[0].mxu0
  %v1524 = vadd.f32 %v1420, %v1523
  %v1525 = vpop.f32.mrb[0].mxu0
  %v1526 = vpop.f32.mrb[0].mxu0
  %v1527 = vadd.f32 %v1420, %v1526
  %v1528 = vpop.f32.mrb[0].mxu0
  %1529 = vmatprep.mubr.bf16.mxu0 0
  %1530 = vmatmul.mubr.bf16.gmra.mrb[0].mxu0 %v284
  %v1531 = vpop.f32.mrb[0].mxu0
  %v1532 = vadd.f32 %v1420, %v1531
  %v1533 = vpop.f32.mrb[0].mxu0
  %v1534 = vpop.f32.mrb[0].mxu0
  %v1535 = vadd.f32 %v1420, %v1534
  %v1536 = vpop.f32.mrb[0].mxu0
  %1537 = vmatprep.mubr.bf16.mxu0 0
  %1538 = vmatmul.mubr.bf16.gmra.mrb[0].mxu0 %v287
  %v1539 = vpop.f32.mrb[0].mxu0
  %v1540 = vadd.f32 %v1420, %v1539
  %v1541 = vpop.f32.mrb[0].mxu0
  %v1542 = vpop.f32.mrb[0].mxu0
  %v1543 = vadd.f32 %v1420, %v1542
  %v1544 = vpop.f32.mrb[0].mxu0
  %1545 = vmatprep.mubr.bf16.mxu0 0
  %1546 = vmatmul.mubr.bf16.gmra.mrb[0].mxu0 %v290
  %v1547 = vpop.f32.mrb[0].mxu0
  %v1548 = vadd.f32 %v1420, %v1547
  %v1549 = vpop.f32.mrb[0].mxu0
  %v1550 = vpop.f32.mrb[0].mxu0
  %v1551 = vadd.f32 %v1420, %v1550
  %v1552 = vpop.f32.mrb[0].mxu0
  %1553 = vmatprep.mubr.bf16.mxu0 0
  %1554 = vmatmul.mubr.bf16.gmra.mrb[0].mxu0 %v293
  %v1555 = vpop.f32.mrb[0].mxu0
  %v1556 = vadd.f32 %v1420, %v1555
  %v1557 = vpop.f32.mrb[0].mxu0
  %v1558 = vpop.f32.mrb[0].mxu0
  %v1559 = vadd.f32 %v1420, %v1558
  %v1560 = vpop.f32.mrb[0].mxu0
  %1561 = vmatprep.mubr.bf16.mxu0 0
  %1562 = vmatmul.mubr.bf16.gmra.mrb[0].mxu0 %v296
  %v1563 = vpop.f32.mrb[0].mxu0
  %v1564 = vadd.f32 %v1420, %v1563
  %v1565 = vpop.f32.mrb[0].mxu0
  %v1566 = vpop.f32.mrb[0].mxu0
  %v1567 = vadd.f32 %v1420, %v1566
  %v1568 = vpop.f32.mrb[0].mxu0
  %1569 = vmatprep.mubr.bf16.mxu0 0
  %1570 = vmatmul.mubr.bf16.gmra.mrb[0].mxu0 %v299
  %v1571 = vpop.f32.mrb[0].mxu0
  %v1572 = vadd.f32 %v1420, %v1571
  %v1573 = vpop.f32.mrb[0].mxu0
  %v1574 = vpop.f32.mrb[0].mxu0
  %v1575 = vadd.f32 %v1420, %v1574
  %v1576 = vpop.f32.mrb[0].mxu0
  %1577 = vmatprep.mubr.bf16.mxu0 0
  %1578 = vmatmul.mubr.bf16.gmra.mrb[0].mxu0 %v302
  %v1579 = vpop.f32.mrb[0].mxu0
  %v1580 = vadd.f32 %v1420, %v1579
  %v1581 = vpop.f32.mrb[0].mxu0
  %v1582 = vpop.f32.mrb[0].mxu0
  %v1583 = vadd.f32 %v1420, %v1582
  %v1584 = vpop.f32.mrb[0].mxu0
  %1585 = vmatprep.mubr.bf16.mxu0 0
  %1586 = vmatmul.mubr.bf16.gmra.mrb[0].mxu0 %v305
  %v1587 = vpop.f32.mrb[0].mxu0
  %v1588 = vadd.f32 %v1420, %v1587
  %v1589 = vpop.f32.mrb[0].mxu0
  %v1590 = vpop.f32.mrb[0].mxu0
  %v1591 = vadd.f32 %v1420, %v1590
  %v1592 = vpop.f32.mrb[0].mxu0
  %1593 = vmatprep.mubr.bf16.mxu0 0
  %1594 = vmatmul.mubr.bf16.gmra.mrb[0].mxu0 %v308
  %v1595 = vpop.f32.mrb[0].mxu0
  %v1596 = vadd.f32 %v1420, %v1595
  %v1597 = vpop.f32.mrb[0].mxu0
  %v1598 = vpop.f32.mrb[0].mxu0
  %v1599 = vadd.f32 %v1420, %v1598
  %v1600 = vpop.f32.mrb[0].mxu0
  %1601 = vmatprep.mubr.bf16.mxu0 0
  %1602 = vmatmul.mubr.bf16.gmra.mrb[0].mxu0 %v311
  %v1603 = vpop.f32.mrb[0].mxu0
  %v1604 = vadd.f32 %v1420, %v1603
  %v1605 = vpop.f32.mrb[0].mxu0
  %v1606 = vpop.f32.mrb[0].mxu0
  %v1607 = vadd.f32 %v1420, %v1606
  %v1608 = vpop.f32.mrb[0].mxu0
  %1609 = vmatprep.mubr.bf16.mxu0 0
  %1610 = vmatmul.mubr.bf16.gmra.mrb[0].mxu0 %v314
  %v1611 = vpop.f32.mrb[0].mxu0
  %v1612 = vadd.f32 %v1420, %v1611
  %v1613 = vpop.f32.mrb[0].mxu0
  %v1614 = vpop.f32.mrb[0].mxu0
  %v1615 = vadd.f32 %v1420, %v1614
  %v1616 = vpop.f32.mrb[0].mxu0
  %1617 = vmatprep.mubr.bf16.mxu0 0
  %1618 = vmatmul.mubr.bf16.gmra.mrb[0].mxu0 %v317
  %v1619 = vpop.f32.mrb[0].mxu0
  %v1620 = vadd.f32 %v1420, %v1619
  %v1621 = vpop.f32.mrb[0].mxu0
  %v1622 = vpop.f32.mrb[0].mxu0
  %v1623 = vadd.f32 %v1420, %v1622
  %v1624 = vpop.f32.mrb[0].mxu0
  %1625 = vmatprep.mubr.bf16.mxu0 0
  %1626 = vmatmul.mubr.bf16.gmra.mrb[0].mxu0 %v320
  %v1627 = vpop.f32.mrb[0].mxu0
  %v1628 = vadd.f32 %v1420, %v1627
  %v1629 = vpop.f32.mrb[0].mxu0
  %v1630 = vpop.f32.mrb[0].mxu0
  %v1631 = vadd.f32 %v1420, %v1630
  %v1632 = vpop.f32.mrb[0].mxu0
  %1633 = vmatprep.mubr.bf16.mxu0 0
  %1634 = vmatmul.mubr.bf16.gmra.mrb[0].mxu0 %v323
  %v1635 = vpop.f32.mrb[0].mxu0
  %v1636 = vadd.f32 %v1420, %v1635
  %v1637 = vpop.f32.mrb[0].mxu0
  %v1638 = vpop.f32.mrb[0].mxu0
  %v1639 = vadd.f32 %v1420, %v1638
  %v1640 = vpop.f32.mrb[0].mxu0
  %1641 = vmatprep.mubr.bf16.mxu0 0
  %1642 = vmatmul.mubr.bf16.gmra.mrb[0].mxu0 %v326
  %v1643 = vpop.f32.mrb[0].mxu0
  %v1644 = vadd.f32 %v1420, %v1643
  %v1645 = vpop.f32.mrb[0].mxu0
  %v1646 = vpop.f32.mrb[0].mxu0
  %v1647 = vadd.f32 %v1420, %v1646
  %v1648 = vpop.f32.mrb[0].mxu0
  %1649 = vmatprep.mubr.bf16.mxu0 0
  %1650 = vmatmul.mubr.bf16.gmra.mrb[0].mxu0 %v329
  %v1651 = vpop.f32.mrb[0].mxu0
  %v1652 = vadd.f32 %v1420, %v1651
  %v1653 = vpop.f32.mrb[0].mxu0
  %v1654 = vpop.f32.mrb[0].mxu0
  %v1655 = vadd.f32 %v1420, %v1654
  %v1656 = vpop.f32.mrb[0].mxu0
  %1657 = vmatprep.mubr.bf16.mxu0 0
  %1658 = vmatmul.mubr.bf16.gmra.mrb[0].mxu0 %v332
  %v1659 = vpop.f32.mrb[0].mxu0
  %v1660 = vadd.f32 %v1420, %v1659
  %v1661 = vpop.f32.mrb[0].mxu0
  %v1662 = vpop.f32.mrb[0].mxu0
  %v1663 = vadd.f32 %v1420, %v1662
  %v1664 = vpop.f32.mrb[0].mxu0
  %1665 = vmatprep.mubr.bf16.mxu0 0
  %1666 = vmatmul.mubr.bf16.gmra.mrb[0].mxu0 %v335
  %v1667 = vpop.f32.mrb[0].mxu0
  %v1668 = vadd.f32 %v1420, %v1667
  %v1669 = vpop.f32.mrb[0].mxu0
  %v1670 = vpop.f32.mrb[0].mxu0
  %v1671 = vadd.f32 %v1420, %v1670
  %v1672 = vpop.f32.mrb[0].mxu0
  %1673 = vmatprep.mubr.bf16.mxu0 0
  %1674 = vmatmul.mubr.bf16.gmra.mrb[0].mxu0 %v338
  %v1675 = vpop.f32.mrb[0].mxu0
  %v1676 = vadd.f32 %v1420, %v1675
  %v1677 = vpop.f32.mrb[0].mxu0
  %v1678 = vpop.f32.mrb[0].mxu0
  %v1679 = vadd.f32 %v1420, %v1678
  %v1680 = vpop.f32.mrb[0].mxu0
  %1681 = vmatprep.mubr.bf16.mxu0 0
  %1682 = vmatmul.mubr.bf16.gmra.mrb[0].mxu0 %v341
  %v1683 = vpop.f32.mrb[0].mxu0
  %v1684 = vadd.f32 %v1420, %v1683
  %v1685 = vpop.f32.mrb[0].mxu0
  %v1686 = vpop.f32.mrb[0].mxu0
  %v1687 = vadd.f32 %v1420, %v1686
  %v1688 = vpop.f32.mrb[0].mxu0
  %1689 = vmatprep.mubr.bf16.mxu0 0
  %1690 = vmatmul.mubr.bf16.gmra.mrb[0].mxu0 %v344
  %v1691 = vpop.f32.mrb[0].mxu0
  %v1692 = vadd.f32 %v1420, %v1691
  %v1693 = vpop.f32.mrb[0].mxu0
  %v1694 = vpop.f32.mrb[0].mxu0
  %v1695 = vadd.f32 %v1420, %v1694
  %v1696 = vpop.f32.mrb[0].mxu0
  %1697 = vmatprep.mubr.bf16.mxu0 0
  %1698 = vmatmul.mubr.bf16.gmra.mrb[0].mxu0 %v347
  %v1699 = vpop.f32.mrb[0].mxu0
  %v1700 = vadd.f32 %v1420, %v1699
  %v1701 = vpop.f32.mrb[0].mxu0
  %v1702 = vpop.f32.mrb[0].mxu0
  %v1703 = vadd.f32 %v1420, %v1702
  %v1704 = vpop.f32.mrb[0].mxu0
  %1705 = vmatprep.mubr.bf16.mxu0 0
  %1706 = vmatmul.mubr.bf16.gmra.mrb[0].mxu0 %v350
  %v1707 = vpop.f32.mrb[0].mxu0
  %v1708 = vadd.f32 %v1420, %v1707
  %v1709 = vpop.f32.mrb[0].mxu0
  %v1710 = vpop.f32.mrb[0].mxu0
  %v1711 = vadd.f32 %v1420, %v1710
  %v1712 = vpop.f32.mrb[0].mxu0
  %1713 = vdwg.mxu0
  %v1714 = vxor.u32 %v1460, 2147483648
  %v1715 = vxor.u32 %v1463, 2147483648
  %v1716 = vxor.u32 %v1468, 2147483648
  %v1717 = vxor.u32 %v1471, 2147483648
  %v1718 = vxor.u32 %v1476, 2147483648
  %v1719 = vxor.u32 %v1479, 2147483648
  %v1720 = vxor.u32 %v1484, 2147483648
  %v1721 = vxor.u32 %v1487, 2147483648
  %v1722 = vxor.u32 %v1492, 2147483648
  %v1723 = vxor.u32 %v1495, 2147483648
  %v1724 = vxor.u32 %v1500, 2147483648
  %v1725 = vxor.u32 %v1503, 2147483648
  %v1726 = vxor.u32 %v1508, 2147483648
  %v1727 = vxor.u32 %v1511, 2147483648
  %v1728 = vxor.u32 %v1516, 2147483648
  %v1729 = vxor.u32 %v1519, 2147483648
  %v1730 = vxor.u32 %v1524, 2147483648
  %v1731 = vxor.u32 %v1527, 2147483648
  %v1732 = vxor.u32 %v1532, 2147483648
  %v1733 = vxor.u32 %v1535, 2147483648
  %v1734 = vxor.u32 %v1540, 2147483648
  %v1735 = vxor.u32 %v1543, 2147483648
  %v1736 = vxor.u32 %v1548, 2147483648
  %v1737 = vxor.u32 %v1551, 2147483648
  %v1738 = vxor.u32 %v1556, 2147483648
  %v1739 = vxor.u32 %v1559, 2147483648
  %v1740 = vxor.u32 %v1564, 2147483648
  %v1741 = vxor.u32 %v1567, 2147483648
  %v1742 = vxor.u32 %v1572, 2147483648
  %v1743 = vxor.u32 %v1575, 2147483648
  %v1744 = vxor.u32 %v1580, 2147483648
  %v1745 = vxor.u32 %v1583, 2147483648
  %v1746 = vxor.u32 %v1588, 2147483648
  %v1747 = vxor.u32 %v1591, 2147483648
  %v1748 = vxor.u32 %v1596, 2147483648
  %v1749 = vxor.u32 %v1599, 2147483648
  %v1750 = vxor.u32 %v1604, 2147483648
  %v1751 = vxor.u32 %v1607, 2147483648
  %v1752 = vxor.u32 %v1612, 2147483648
  %v1753 = vxor.u32 %v1615, 2147483648
  %v1754 = vxor.u32 %v1620, 2147483648
  %v1755 = vxor.u32 %v1623, 2147483648
  %v1756 = vxor.u32 %v1628, 2147483648
  %v1757 = vxor.u32 %v1631, 2147483648
  %v1758 = vxor.u32 %v1636, 2147483648
  %v1759 = vxor.u32 %v1639, 2147483648
  %v1760 = vxor.u32 %v1644, 2147483648
  %v1761 = vxor.u32 %v1647, 2147483648
  %v1762 = vxor.u32 %v1652, 2147483648
  %v1763 = vxor.u32 %v1655, 2147483648
  %v1764 = vxor.u32 %v1660, 2147483648
  %v1765 = vxor.u32 %v1663, 2147483648
  %v1766 = vxor.u32 %v1668, 2147483648
  %v1767 = vxor.u32 %v1671, 2147483648
  %v1768 = vxor.u32 %v1676, 2147483648
  %v1769 = vxor.u32 %v1679, 2147483648
  %v1770 = vxor.u32 %v1684, 2147483648
  %v1771 = vxor.u32 %v1687, 2147483648
  %v1772 = vxor.u32 %v1692, 2147483648
  %v1773 = vxor.u32 %v1695, 2147483648
  %v1774 = vxor.u32 %v1700, 2147483648
  %v1775 = vxor.u32 %v1703, 2147483648
  %v1776 = vxor.u32 %v1708, 2147483648
  %v1777 = vxor.u32 %v1711, 2147483648
  %v1778 = vmul.f32 %v1714, 1.442695
  %v1779 = vpow.pop %v1778
  %v1780 = vmul.f32 %v1715, 1.442695
  %v1781 = vpow.pop %v1780
  %v1782 = vmul.f32 %v1716, 1.442695
  %v1783 = vpow.pop %v1782
  %v1784 = vmul.f32 %v1717, 1.442695
  %v1785 = vpow.pop %v1784
  %v1786 = vmul.f32 %v1718, 1.442695
  %v1787 = vpow.pop %v1786
  %v1788 = vmul.f32 %v1719, 1.442695
  %v1789 = vpow.pop %v1788
  %v1790 = vmul.f32 %v1720, 1.442695
  %v1791 = vpow.pop %v1790
  %v1792 = vmul.f32 %v1721, 1.442695
  %v1793 = vpow.pop %v1792
  %v1794 = vmul.f32 %v1722, 1.442695
  %v1795 = vpow.pop %v1794
  %v1796 = vmul.f32 %v1723, 1.442695
  %v1797 = vpow.pop %v1796
  %v1798 = vmul.f32 %v1724, 1.442695
  %v1799 = vpow.pop %v1798
  %v1800 = vmul.f32 %v1725, 1.442695
  %v1801 = vpow.pop %v1800
  %v1802 = vmul.f32 %v1726, 1.442695
  %v1803 = vpow.pop %v1802
  %v1804 = vmul.f32 %v1727, 1.442695
  %v1805 = vpow.pop %v1804
  %v1806 = vmul.f32 %v1728, 1.442695
  %v1807 = vpow.pop %v1806
  %v1808 = vmul.f32 %v1729, 1.442695
  %v1809 = vpow.pop %v1808
  %v1810 = vmul.f32 %v1730, 1.442695
  %v1811 = vpow.pop %v1810
  %v1812 = vmul.f32 %v1731, 1.442695
  %v1813 = vpow.pop %v1812
  %v1814 = vmul.f32 %v1732, 1.442695
  %v1815 = vpow.pop %v1814
  %v1816 = vmul.f32 %v1733, 1.442695
  %v1817 = vpow.pop %v1816
  %v1818 = vmul.f32 %v1734, 1.442695
  %v1819 = vpow.pop %v1818
  %v1820 = vmul.f32 %v1735, 1.442695
  %v1821 = vpow.pop %v1820
  %v1822 = vmul.f32 %v1736, 1.442695
  %v1823 = vpow.pop %v1822
  %v1824 = vmul.f32 %v1737, 1.442695
  %v1825 = vpow.pop %v1824
  %v1826 = vmul.f32 %v1738, 1.442695
  %v1827 = vpow.pop %v1826
  %v1828 = vmul.f32 %v1739, 1.442695
  %v1829 = vpow.pop %v1828
  %v1830 = vmul.f32 %v1740, 1.442695
  %v1831 = vpow.pop %v1830
  %v1832 = vmul.f32 %v1741, 1.442695
  %v1833 = vpow.pop %v1832
  %v1834 = vmul.f32 %v1742, 1.442695
  %v1835 = vpow.pop %v1834
  %v1836 = vmul.f32 %v1743, 1.442695
  %v1837 = vpow.pop %v1836
  %v1838 = vmul.f32 %v1744, 1.442695
  %v1839 = vpow.pop %v1838
  %v1840 = vmul.f32 %v1745, 1.442695
  %v1841 = vpow.pop %v1840
  %v1842 = vmul.f32 %v1746, 1.442695
  %v1843 = vpow.pop %v1842
  %v1844 = vmul.f32 %v1747, 1.442695
  %v1845 = vpow.pop %v1844
  %v1846 = vmul.f32 %v1748, 1.442695
  %v1847 = vpow.pop %v1846
  %v1848 = vmul.f32 %v1749, 1.442695
  %v1849 = vpow.pop %v1848
  %v1850 = vmul.f32 %v1750, 1.442695
  %v1851 = vpow.pop %v1850
  %v1852 = vmul.f32 %v1751, 1.442695
  %v1853 = vpow.pop %v1852
  %v1854 = vmul.f32 %v1752, 1.442695
  %v1855 = vpow.pop %v1854
  %v1856 = vmul.f32 %v1753, 1.442695
  %v1857 = vpow.pop %v1856
  %v1858 = vmul.f32 %v1754, 1.442695
  %v1859 = vpow.pop %v1858
  %v1860 = vmul.f32 %v1755, 1.442695
  %v1861 = vpow.pop %v1860
  %v1862 = vmul.f32 %v1756, 1.442695
  %v1863 = vpow.pop %v1862
  %v1864 = vmul.f32 %v1757, 1.442695
  %v1865 = vpow.pop %v1864
  %v1866 = vmul.f32 %v1758, 1.442695
  %v1867 = vpow.pop %v1866
  %v1868 = vmul.f32 %v1759, 1.442695
  %v1869 = vpow.pop %v1868
  %v1870 = vmul.f32 %v1760, 1.442695
  %v1871 = vpow.pop %v1870
  %v1872 = vmul.f32 %v1761, 1.442695
  %v1873 = vpow.pop %v1872
  %v1874 = vmul.f32 %v1762, 1.442695
  %v1875 = vpow.pop %v1874
  %v1876 = vmul.f32 %v1763, 1.442695
  %v1877 = vpow.pop %v1876
  %v1878 = vmul.f32 %v1764, 1.442695
  %v1879 = vpow.pop %v1878
  %v1880 = vmul.f32 %v1765, 1.442695
  %v1881 = vpow.pop %v1880
  %v1882 = vmul.f32 %v1766, 1.442695
  %v1883 = vpow.pop %v1882
  %v1884 = vmul.f32 %v1767, 1.442695
  %v1885 = vpow.pop %v1884
  %v1886 = vmul.f32 %v1768, 1.442695
  %v1887 = vpow.pop %v1886
  %v1888 = vmul.f32 %v1769, 1.442695
  %v1889 = vpow.pop %v1888
  %v1890 = vmul.f32 %v1770, 1.442695
  %v1891 = vpow.pop %v1890
  %v1892 = vmul.f32 %v1771, 1.442695
  %v1893 = vpow.pop %v1892
  %v1894 = vmul.f32 %v1772, 1.442695
  %v1895 = vpow.pop %v1894
  %v1896 = vmul.f32 %v1773, 1.442695
  %v1897 = vpow.pop %v1896
  %v1898 = vmul.f32 %v1774, 1.442695
  %v1899 = vpow.pop %v1898
  %v1900 = vmul.f32 %v1775, 1.442695
  %v1901 = vpow.pop %v1900
  %v1902 = vmul.f32 %v1776, 1.442695
  %v1903 = vpow.pop %v1902
  %v1904 = vmul.f32 %v1777, 1.442695
  %v1905 = vpow.pop %v1904
  %v1906 = vadd.f32 %v1779, 1.0
  %v1907 = vadd.f32 %v1781, 1.0
  %v1908 = vadd.f32 %v1783, 1.0
  %v1909 = vadd.f32 %v1785, 1.0
  %v1910 = vadd.f32 %v1787, 1.0
  %v1911 = vadd.f32 %v1789, 1.0
  %v1912 = vadd.f32 %v1791, 1.0
  %v1913 = vadd.f32 %v1793, 1.0
  %v1914 = vadd.f32 %v1795, 1.0
  %v1915 = vadd.f32 %v1797, 1.0
  %v1916 = vadd.f32 %v1799, 1.0
  %v1917 = vadd.f32 %v1801, 1.0
  %v1918 = vadd.f32 %v1803, 1.0
  %v1919 = vadd.f32 %v1805, 1.0
  %v1920 = vadd.f32 %v1807, 1.0
  %v1921 = vadd.f32 %v1809, 1.0
  %v1922 = vadd.f32 %v1811, 1.0
  %v1923 = vadd.f32 %v1813, 1.0
  %v1924 = vadd.f32 %v1815, 1.0
  %v1925 = vadd.f32 %v1817, 1.0
  %v1926 = vadd.f32 %v1819, 1.0
  %v1927 = vadd.f32 %v1821, 1.0
  %v1928 = vadd.f32 %v1823, 1.0
  %v1929 = vadd.f32 %v1825, 1.0
  %v1930 = vadd.f32 %v1827, 1.0
  %v1931 = vadd.f32 %v1829, 1.0
  %v1932 = vadd.f32 %v1831, 1.0
  %v1933 = vadd.f32 %v1833, 1.0
  %v1934 = vadd.f32 %v1835, 1.0
  %v1935 = vadd.f32 %v1837, 1.0
  %v1936 = vadd.f32 %v1839, 1.0
  %v1937 = vadd.f32 %v1841, 1.0
  %v1938 = vadd.f32 %v1843, 1.0
  %v1939 = vadd.f32 %v1845, 1.0
  %v1940 = vadd.f32 %v1847, 1.0
  %v1941 = vadd.f32 %v1849, 1.0
  %v1942 = vadd.f32 %v1851, 1.0
  %v1943 = vadd.f32 %v1853, 1.0
  %v1944 = vadd.f32 %v1855, 1.0
  %v1945 = vadd.f32 %v1857, 1.0
  %v1946 = vadd.f32 %v1859, 1.0
  %v1947 = vadd.f32 %v1861, 1.0
  %v1948 = vadd.f32 %v1863, 1.0
  %v1949 = vadd.f32 %v1865, 1.0
  %v1950 = vadd.f32 %v1867, 1.0
  %v1951 = vadd.f32 %v1869, 1.0
  %v1952 = vadd.f32 %v1871, 1.0
  %v1953 = vadd.f32 %v1873, 1.0
  %v1954 = vadd.f32 %v1875, 1.0
  %v1955 = vadd.f32 %v1877, 1.0
  %v1956 = vadd.f32 %v1879, 1.0
  %v1957 = vadd.f32 %v1881, 1.0
  %v1958 = vadd.f32 %v1883, 1.0
  %v1959 = vadd.f32 %v1885, 1.0
  %v1960 = vadd.f32 %v1887, 1.0
  %v1961 = vadd.f32 %v1889, 1.0
  %v1962 = vadd.f32 %v1891, 1.0
  %v1963 = vadd.f32 %v1893, 1.0
  %v1964 = vadd.f32 %v1895, 1.0
  %v1965 = vadd.f32 %v1897, 1.0
  %v1966 = vadd.f32 %v1899, 1.0
  %v1967 = vadd.f32 %v1901, 1.0
  %v1968 = vadd.f32 %v1903, 1.0
  %v1969 = vadd.f32 %v1905, 1.0
  %v1970 = vrcp.pop %v1906
  %v1971 = vmul.f32 1.0, %v1970
  %v1972 = vrcp.pop %v1907
  %v1973 = vmul.f32 1.0, %v1972
  %v1974 = vrcp.pop %v1908
  %v1975 = vmul.f32 1.0, %v1974
  %v1976 = vrcp.pop %v1909
  %v1977 = vmul.f32 1.0, %v1976
  %v1978 = vrcp.pop %v1910
  %v1979 = vmul.f32 1.0, %v1978
  %v1980 = vrcp.pop %v1911
  %v1981 = vmul.f32 1.0, %v1980
  %v1982 = vrcp.pop %v1912
  %v1983 = vmul.f32 1.0, %v1982
  %v1984 = vrcp.pop %v1913
  %v1985 = vmul.f32 1.0, %v1984
  %v1986 = vrcp.pop %v1914
  %v1987 = vmul.f32 1.0, %v1986
  %v1988 = vrcp.pop %v1915
  %v1989 = vmul.f32 1.0, %v1988
  %v1990 = vrcp.pop %v1916
  %v1991 = vmul.f32 1.0, %v1990
  %v1992 = vrcp.pop %v1917
  %v1993 = vmul.f32 1.0, %v1992
  %v1994 = vrcp.pop %v1918
  %v1995 = vmul.f32 1.0, %v1994
  %v1996 = vrcp.pop %v1919
  %v1997 = vmul.f32 1.0, %v1996
  %v1998 = vrcp.pop %v1920
  %v1999 = vmul.f32 1.0, %v1998
  %v2000 = vrcp.pop %v1921
  %v2001 = vmul.f32 1.0, %v2000
  %v2002 = vrcp.pop %v1922
  %v2003 = vmul.f32 1.0, %v2002
  %v2004 = vrcp.pop %v1923
  %v2005 = vmul.f32 1.0, %v2004
  %v2006 = vrcp.pop %v1924
  %v2007 = vmul.f32 1.0, %v2006
  %v2008 = vrcp.pop %v1925
  %v2009 = vmul.f32 1.0, %v2008
  %v2010 = vrcp.pop %v1926
  %v2011 = vmul.f32 1.0, %v2010
  %v2012 = vrcp.pop %v1927
  %v2013 = vmul.f32 1.0, %v2012
  %v2014 = vrcp.pop %v1928
  %v2015 = vmul.f32 1.0, %v2014
  %v2016 = vrcp.pop %v1929
  %v2017 = vmul.f32 1.0, %v2016
  %v2018 = vrcp.pop %v1930
  %v2019 = vmul.f32 1.0, %v2018
  %v2020 = vrcp.pop %v1931
  %v2021 = vmul.f32 1.0, %v2020
  %v2022 = vrcp.pop %v1932
  %v2023 = vmul.f32 1.0, %v2022
  %v2024 = vrcp.pop %v1933
  %v2025 = vmul.f32 1.0, %v2024
  %v2026 = vrcp.pop %v1934
  %v2027 = vmul.f32 1.0, %v2026
  %v2028 = vrcp.pop %v1935
  %v2029 = vmul.f32 1.0, %v2028
  %v2030 = vrcp.pop %v1936
  %v2031 = vmul.f32 1.0, %v2030
  %v2032 = vrcp.pop %v1937
  %v2033 = vmul.f32 1.0, %v2032
  %v2034 = vrcp.pop %v1938
  %v2035 = vmul.f32 1.0, %v2034
  %v2036 = vrcp.pop %v1939
  %v2037 = vmul.f32 1.0, %v2036
  %v2038 = vrcp.pop %v1940
  %v2039 = vmul.f32 1.0, %v2038
  %v2040 = vrcp.pop %v1941
  %v2041 = vmul.f32 1.0, %v2040
  %v2042 = vrcp.pop %v1942
  %v2043 = vmul.f32 1.0, %v2042
  %v2044 = vrcp.pop %v1943
  %v2045 = vmul.f32 1.0, %v2044
  %v2046 = vrcp.pop %v1944
  %v2047 = vmul.f32 1.0, %v2046
  %v2048 = vrcp.pop %v1945
  %v2049 = vmul.f32 1.0, %v2048
  %v2050 = vrcp.pop %v1946
  %v2051 = vmul.f32 1.0, %v2050
  %v2052 = vrcp.pop %v1947
  %v2053 = vmul.f32 1.0, %v2052
  %v2054 = vrcp.pop %v1948
  %v2055 = vmul.f32 1.0, %v2054
  %v2056 = vrcp.pop %v1949
  %v2057 = vmul.f32 1.0, %v2056
  %v2058 = vrcp.pop %v1950
  %v2059 = vmul.f32 1.0, %v2058
  %v2060 = vrcp.pop %v1951
  %v2061 = vmul.f32 1.0, %v2060
  %v2062 = vrcp.pop %v1952
  %v2063 = vmul.f32 1.0, %v2062
  %v2064 = vrcp.pop %v1953
  %v2065 = vmul.f32 1.0, %v2064
  %v2066 = vrcp.pop %v1954
  %v2067 = vmul.f32 1.0, %v2066
  %v2068 = vrcp.pop %v1955
  %v2069 = vmul.f32 1.0, %v2068
  %v2070 = vrcp.pop %v1956
  %v2071 = vmul.f32 1.0, %v2070
  %v2072 = vrcp.pop %v1957
  %v2073 = vmul.f32 1.0, %v2072
  %v2074 = vrcp.pop %v1958
  %v2075 = vmul.f32 1.0, %v2074
  %v2076 = vrcp.pop %v1959
  %v2077 = vmul.f32 1.0, %v2076
  %v2078 = vrcp.pop %v1960
  %v2079 = vmul.f32 1.0, %v2078
  %v2080 = vrcp.pop %v1961
  %v2081 = vmul.f32 1.0, %v2080
  %v2082 = vrcp.pop %v1962
  %v2083 = vmul.f32 1.0, %v2082
  %v2084 = vrcp.pop %v1963
  %v2085 = vmul.f32 1.0, %v2084
  %v2086 = vrcp.pop %v1964
  %v2087 = vmul.f32 1.0, %v2086
  %v2088 = vrcp.pop %v1965
  %v2089 = vmul.f32 1.0, %v2088
  %v2090 = vrcp.pop %v1966
  %v2091 = vmul.f32 1.0, %v2090
  %v2092 = vrcp.pop %v1967
  %v2093 = vmul.f32 1.0, %v2092
  %v2094 = vrcp.pop %v1968
  %v2095 = vmul.f32 1.0, %v2094
  %v2096 = vrcp.pop %v1969
  %v2097 = vmul.f32 1.0, %v2096
  %v2098 = vmul.f32 %v1460, %v1971
  %v2099 = vmul.f32 %v1463, %v1973
  %v2100 = vmul.f32 %v1468, %v1975
  %v2101 = vmul.f32 %v1471, %v1977
  %v2102 = vmul.f32 %v1476, %v1979
  %v2103 = vmul.f32 %v1479, %v1981
  %v2104 = vmul.f32 %v1484, %v1983
  %v2105 = vmul.f32 %v1487, %v1985
  %v2106 = vmul.f32 %v1492, %v1987
  %v2107 = vmul.f32 %v1495, %v1989
  %v2108 = vmul.f32 %v1500, %v1991
  %v2109 = vmul.f32 %v1503, %v1993
  %v2110 = vmul.f32 %v1508, %v1995
  %v2111 = vmul.f32 %v1511, %v1997
  %v2112 = vmul.f32 %v1516, %v1999
  %v2113 = vmul.f32 %v1519, %v2001
  %v2114 = vmul.f32 %v1524, %v2003
  %v2115 = vmul.f32 %v1527, %v2005
  %v2116 = vmul.f32 %v1532, %v2007
  %v2117 = vmul.f32 %v1535, %v2009
  %v2118 = vmul.f32 %v1540, %v2011
  %v2119 = vmul.f32 %v1543, %v2013
  %v2120 = vmul.f32 %v1548, %v2015
  %v2121 = vmul.f32 %v1551, %v2017
  %v2122 = vmul.f32 %v1556, %v2019
  %v2123 = vmul.f32 %v1559, %v2021
  %v2124 = vmul.f32 %v1564, %v2023
  %v2125 = vmul.f32 %v1567, %v2025
  %v2126 = vmul.f32 %v1572, %v2027
  %v2127 = vmul.f32 %v1575, %v2029
  %v2128 = vmul.f32 %v1580, %v2031
  %v2129 = vmul.f32 %v1583, %v2033
  %v2130 = vmul.f32 %v1588, %v2035
  %v2131 = vmul.f32 %v1591, %v2037
  %v2132 = vmul.f32 %v1596, %v2039
  %v2133 = vmul.f32 %v1599, %v2041
  %v2134 = vmul.f32 %v1604, %v2043
  %v2135 = vmul.f32 %v1607, %v2045
  %v2136 = vmul.f32 %v1612, %v2047
  %v2137 = vmul.f32 %v1615, %v2049
  %v2138 = vmul.f32 %v1620, %v2051
  %v2139 = vmul.f32 %v1623, %v2053
  %v2140 = vmul.f32 %v1628, %v2055
  %v2141 = vmul.f32 %v1631, %v2057
  %v2142 = vmul.f32 %v1636, %v2059
  %v2143 = vmul.f32 %v1639, %v2061
  %v2144 = vmul.f32 %v1644, %v2063
  %v2145 = vmul.f32 %v1647, %v2065
  %v2146 = vmul.f32 %v1652, %v2067
  %v2147 = vmul.f32 %v1655, %v2069
  %v2148 = vmul.f32 %v1660, %v2071
  %v2149 = vmul.f32 %v1663, %v2073
  %v2150 = vmul.f32 %v1668, %v2075
  %v2151 = vmul.f32 %v1671, %v2077
  %v2152 = vmul.f32 %v1676, %v2079
  %v2153 = vmul.f32 %v1679, %v2081
  %v2154 = vmul.f32 %v1684, %v2083
  %v2155 = vmul.f32 %v1687, %v2085
  %v2156 = vmul.f32 %v1692, %v2087
  %v2157 = vmul.f32 %v1695, %v2089
  %v2158 = vmul.f32 %v1700, %v2091
  %v2159 = vmul.f32 %v1703, %v2093
  %v2160 = vmul.f32 %v1708, %v2095
  %v2161 = vmul.f32 %v1711, %v2097
  %v2162 = vpack.c.bf16 %v2099, %v2098
  %v2163 = vpack.c.bf16 %v2101, %v2100
  %v2164 = vpack.c.bf16 %v2103, %v2102
  %v2165 = vpack.c.bf16 %v2105, %v2104
  %v2166 = vpack.c.bf16 %v2107, %v2106
  %v2167 = vpack.c.bf16 %v2109, %v2108
  %v2168 = vpack.c.bf16 %v2111, %v2110
  %v2169 = vpack.c.bf16 %v2113, %v2112
  %v2170 = vpack.c.bf16 %v2115, %v2114
  %v2171 = vpack.c.bf16 %v2117, %v2116
  %v2172 = vpack.c.bf16 %v2119, %v2118
  %v2173 = vpack.c.bf16 %v2121, %v2120
  %v2174 = vpack.c.bf16 %v2123, %v2122
  %v2175 = vpack.c.bf16 %v2125, %v2124
  %v2176 = vpack.c.bf16 %v2127, %v2126
  %v2177 = vpack.c.bf16 %v2129, %v2128
  %v2178 = vpack.c.bf16 %v2131, %v2130
  %v2179 = vpack.c.bf16 %v2133, %v2132
  %v2180 = vpack.c.bf16 %v2135, %v2134
  %v2181 = vpack.c.bf16 %v2137, %v2136
  %v2182 = vpack.c.bf16 %v2139, %v2138
  %v2183 = vpack.c.bf16 %v2141, %v2140
  %v2184 = vpack.c.bf16 %v2143, %v2142
  %v2185 = vpack.c.bf16 %v2145, %v2144
  %v2186 = vpack.c.bf16 %v2147, %v2146
  %v2187 = vpack.c.bf16 %v2149, %v2148
  %v2188 = vpack.c.bf16 %v2151, %v2150
  %v2189 = vpack.c.bf16 %v2153, %v2152
  %v2190 = vpack.c.bf16 %v2155, %v2154
  %v2191 = vpack.c.bf16 %v2157, %v2156
  %v2192 = vpack.c.bf16 %v2159, %v2158
  %v2193 = vpack.c.bf16 %v2161, %v2160
  %v2226 = vunpack.c.l.b16 %v2162
  %v2227 = vunpack.c.h.b16 %v2162
  %v2228 = vunpack.c.l.b16 %v2163
  %v2229 = vunpack.c.h.b16 %v2163
  %v2230 = vunpack.c.l.b16 %v2164
  %v2231 = vunpack.c.h.b16 %v2164
  %v2232 = vunpack.c.l.b16 %v2165
  %v2233 = vunpack.c.h.b16 %v2165
  %v2234 = vunpack.c.l.b16 %v2166
  %v2235 = vunpack.c.h.b16 %v2166
  %v2236 = vunpack.c.l.b16 %v2167
  %v2237 = vunpack.c.h.b16 %v2167
  %v2238 = vunpack.c.l.b16 %v2168
  %v2239 = vunpack.c.h.b16 %v2168
  %v2240 = vunpack.c.l.b16 %v2169
  %v2241 = vunpack.c.h.b16 %v2169
  %v2242 = vunpack.c.l.b16 %v2170
  %v2243 = vunpack.c.h.b16 %v2170
  %v2244 = vunpack.c.l.b16 %v2171
  %v2245 = vunpack.c.h.b16 %v2171
  %v2246 = vunpack.c.l.b16 %v2172
  %v2247 = vunpack.c.h.b16 %v2172
  %v2248 = vunpack.c.l.b16 %v2173
  %v2249 = vunpack.c.h.b16 %v2173
  %v2250 = vunpack.c.l.b16 %v2174
  %v2251 = vunpack.c.h.b16 %v2174
  %v2252 = vunpack.c.l.b16 %v2175
  %v2253 = vunpack.c.h.b16 %v2175
  %v2254 = vunpack.c.l.b16 %v2176
  %v2255 = vunpack.c.h.b16 %v2176
  %v2256 = vunpack.c.l.b16 %v2177
  %v2257 = vunpack.c.h.b16 %v2177
  %v2258 = vunpack.c.l.b16 %v2178
  %v2259 = vunpack.c.h.b16 %v2178
  %v2260 = vunpack.c.l.b16 %v2179
  %v2261 = vunpack.c.h.b16 %v2179
  %v2262 = vunpack.c.l.b16 %v2180
  %v2263 = vunpack.c.h.b16 %v2180
  %v2264 = vunpack.c.l.b16 %v2181
  %v2265 = vunpack.c.h.b16 %v2181
  %v2266 = vunpack.c.l.b16 %v2182
  %v2267 = vunpack.c.h.b16 %v2182
  %v2268 = vunpack.c.l.b16 %v2183
  %v2269 = vunpack.c.h.b16 %v2183
  %v2270 = vunpack.c.l.b16 %v2184
  %v2271 = vunpack.c.h.b16 %v2184
  %v2272 = vunpack.c.l.b16 %v2185
  %v2273 = vunpack.c.h.b16 %v2185
  %v2274 = vunpack.c.l.b16 %v2186
  %v2275 = vunpack.c.h.b16 %v2186
  %v2276 = vunpack.c.l.b16 %v2187
  %v2277 = vunpack.c.h.b16 %v2187
  %v2278 = vunpack.c.l.b16 %v2188
  %v2279 = vunpack.c.h.b16 %v2188
  %v2280 = vunpack.c.l.b16 %v2189
  %v2281 = vunpack.c.h.b16 %v2189
  %v2282 = vunpack.c.l.b16 %v2190
  %v2283 = vunpack.c.h.b16 %v2190
  %v2284 = vunpack.c.l.b16 %v2191
  %v2285 = vunpack.c.h.b16 %v2191
  %v2286 = vunpack.c.l.b16 %v2192
  %v2287 = vunpack.c.h.b16 %v2192
  %v2288 = vunpack.c.l.b16 %v2193
  %v2289 = vunpack.c.h.b16 %v2193
  %v2290 = vpack.c.b16 %v2226, %v2226
  %v2291 = vpack.c.b16 %v2227, %v2227
  %v2292 = vpack.c.b16 %v2228, %v2228
  %v2293 = vpack.c.b16 %v2229, %v2229
  %v2294 = vpack.c.b16 %v2230, %v2230
  %v2295 = vpack.c.b16 %v2231, %v2231
  %v2296 = vpack.c.b16 %v2232, %v2232
  %v2297 = vpack.c.b16 %v2233, %v2233
  %v2298 = vpack.c.b16 %v2234, %v2234
  %v2299 = vpack.c.b16 %v2235, %v2235
  %v2300 = vpack.c.b16 %v2236, %v2236
  %v2301 = vpack.c.b16 %v2237, %v2237
  %v2302 = vpack.c.b16 %v2238, %v2238
  %v2303 = vpack.c.b16 %v2239, %v2239
  %v2304 = vpack.c.b16 %v2240, %v2240
  %v2305 = vpack.c.b16 %v2241, %v2241
  %v2306 = vpack.c.b16 %v2242, %v2242
  %v2307 = vpack.c.b16 %v2243, %v2243
  %v2308 = vpack.c.b16 %v2244, %v2244
  %v2309 = vpack.c.b16 %v2245, %v2245
  %v2310 = vpack.c.b16 %v2246, %v2246
  %v2311 = vpack.c.b16 %v2247, %v2247
  %v2312 = vpack.c.b16 %v2248, %v2248
  %v2313 = vpack.c.b16 %v2249, %v2249
  %v2314 = vpack.c.b16 %v2250, %v2250
  %v2315 = vpack.c.b16 %v2251, %v2251
  %v2316 = vpack.c.b16 %v2252, %v2252
  %v2317 = vpack.c.b16 %v2253, %v2253
  %v2318 = vpack.c.b16 %v2254, %v2254
  %v2319 = vpack.c.b16 %v2255, %v2255
  %v2320 = vpack.c.b16 %v2256, %v2256
  %v2321 = vpack.c.b16 %v2257, %v2257
  %v2322 = vpack.c.b16 %v2258, %v2258
  %v2323 = vpack.c.b16 %v2259, %v2259
  %v2324 = vpack.c.b16 %v2260, %v2260
  %v2325 = vpack.c.b16 %v2261, %v2261
  %v2326 = vpack.c.b16 %v2262, %v2262
  %v2327 = vpack.c.b16 %v2263, %v2263
  %v2328 = vpack.c.b16 %v2264, %v2264
  %v2329 = vpack.c.b16 %v2265, %v2265
  %v2330 = vpack.c.b16 %v2266, %v2266
  %v2331 = vpack.c.b16 %v2267, %v2267
  %v2332 = vpack.c.b16 %v2268, %v2268
  %v2333 = vpack.c.b16 %v2269, %v2269
  %v2334 = vpack.c.b16 %v2270, %v2270
  %v2335 = vpack.c.b16 %v2271, %v2271
  %v2336 = vpack.c.b16 %v2272, %v2272
  %v2337 = vpack.c.b16 %v2273, %v2273
  %v2338 = vpack.c.b16 %v2274, %v2274
  %v2339 = vpack.c.b16 %v2275, %v2275
  %v2340 = vpack.c.b16 %v2276, %v2276
  %v2341 = vpack.c.b16 %v2277, %v2277
  %v2342 = vpack.c.b16 %v2278, %v2278
  %v2343 = vpack.c.b16 %v2279, %v2279
  %v2344 = vpack.c.b16 %v2280, %v2280
  %v2345 = vpack.c.b16 %v2281, %v2281
  %v2346 = vpack.c.b16 %v2282, %v2282
  %v2347 = vpack.c.b16 %v2283, %v2283
  %v2348 = vpack.c.b16 %v2284, %v2284
  %v2349 = vpack.c.b16 %v2285, %v2285
  %v2350 = vpack.c.b16 %v2286, %v2286
  %v2351 = vpack.c.b16 %v2287, %v2287
  %v2352 = vpack.c.b16 %v2288, %v2288
  %v2353 = vpack.c.b16 %v2289, %v2289
  %2418 = vst.msk [vmem:[%s6] sm:$0xf] %vm1349, %v2290
  %2419 = vst.msk [vmem:[%s6 + $0x4] sm:$0xf] %vm1349, %v2291
  %2420 = vst.msk [vmem:[%s6 + $0x8] sm:$0xf] %vm1349, %v2292
  %2421 = vst.msk [vmem:[%s6 + $0xc] sm:$0xf] %vm1349, %v2293
  %2422 = vst.msk [vmem:[%s6 + $0x10] sm:$0xf] %vm1349, %v2294
  %2423 = vst.msk [vmem:[%s6 + $0x14] sm:$0xf] %vm1349, %v2295
  %2424 = vst.msk [vmem:[%s6 + $0x18] sm:$0xf] %vm1349, %v2296
  %2425 = vst.msk [vmem:[%s6 + $0x1c] sm:$0xf] %vm1349, %v2297
  %2426 = vst.msk [vmem:[%s6 + $0x20] sm:$0xf] %vm1349, %v2298
  %2427 = vst.msk [vmem:[%s6 + $0x24] sm:$0xf] %vm1349, %v2299
  %2428 = vst.msk [vmem:[%s6 + $0x28] sm:$0xf] %vm1349, %v2300
  %2429 = vst.msk [vmem:[%s6 + $0x2c] sm:$0xf] %vm1349, %v2301
  %2430 = vst.msk [vmem:[%s6 + $0x30] sm:$0xf] %vm1349, %v2302
  %2431 = vst.msk [vmem:[%s6 + $0x34] sm:$0xf] %vm1349, %v2303
  %2432 = vst.msk [vmem:[%s6 + $0x38] sm:$0xf] %vm1349, %v2304
  %2433 = vst.msk [vmem:[%s6 + $0x3c] sm:$0xf] %vm1349, %v2305
  %2434 = vst.msk [vmem:[%s6 + $0x40] sm:$0xf] %vm1349, %v2306
  %2435 = vst.msk [vmem:[%s6 + $0x44] sm:$0xf] %vm1349, %v2307
  %2436 = vst.msk [vmem:[%s6 + $0x48] sm:$0xf] %vm1349, %v2308
  %2437 = vst.msk [vmem:[%s6 + $0x4c] sm:$0xf] %vm1349, %v2309
  %2438 = vst.msk [vmem:[%s6 + $0x50] sm:$0xf] %vm1349, %v2310
  %2439 = vst.msk [vmem:[%s6 + $0x54] sm:$0xf] %vm1349, %v2311
  %2440 = vst.msk [vmem:[%s6 + $0x58] sm:$0xf] %vm1349, %v2312
  %2441 = vst.msk [vmem:[%s6 + $0x5c] sm:$0xf] %vm1349, %v2313
  %2442 = vst.msk [vmem:[%s6 + $0x60] sm:$0xf] %vm1349, %v2314
  %2443 = vst.msk [vmem:[%s6 + $0x64] sm:$0xf] %vm1349, %v2315
  %2444 = vst.msk [vmem:[%s6 + $0x68] sm:$0xf] %vm1349, %v2316
  %2445 = vst.msk [vmem:[%s6 + $0x6c] sm:$0xf] %vm1349, %v2317
  %2446 = vst.msk [vmem:[%s6 + $0x70] sm:$0xf] %vm1349, %v2318
  %2447 = vst.msk [vmem:[%s6 + $0x74] sm:$0xf] %vm1349, %v2319
  %2448 = vst.msk [vmem:[%s6 + $0x78] sm:$0xf] %vm1349, %v2320
  %2449 = vst.msk [vmem:[%s6 + $0x7c] sm:$0xf] %vm1349, %v2321
  %2450 = vst.msk [vmem:[%s6 + $0x80] sm:$0xf] %vm1349, %v2322
  %2451 = vst.msk [vmem:[%s6 + $0x84] sm:$0xf] %vm1349, %v2323
  %2452 = vst.msk [vmem:[%s6 + $0x88] sm:$0xf] %vm1349, %v2324
  %2453 = vst.msk [vmem:[%s6 + $0x8c] sm:$0xf] %vm1349, %v2325
  %2454 = vst.msk [vmem:[%s6 + $0x90] sm:$0xf] %vm1349, %v2326
  %2455 = vst.msk [vmem:[%s6 + $0x94] sm:$0xf] %vm1349, %v2327
  %2456 = vst.msk [vmem:[%s6 + $0x98] sm:$0xf] %vm1349, %v2328
  %2457 = vst.msk [vmem:[%s6 + $0x9c] sm:$0xf] %vm1349, %v2329
  %2458 = vst.msk [vmem:[%s6 + $0xa0] sm:$0xf] %vm1349, %v2330
  %2459 = vst.msk [vmem:[%s6 + $0xa4] sm:$0xf] %vm1349, %v2331
  %2460 = vst.msk [vmem:[%s6 + $0xa8] sm:$0xf] %vm1349, %v2332
  %2461 = vst.msk [vmem:[%s6 + $0xac] sm:$0xf] %vm1349, %v2333
  %2462 = vst.msk [vmem:[%s6 + $0xb0] sm:$0xf] %vm1349, %v2334
  %2463 = vst.msk [vmem:[%s6 + $0xb4] sm:$0xf] %vm1349, %v2335
  %2464 = vst.msk [vmem:[%s6 + $0xb8] sm:$0xf] %vm1349, %v2336
  %2465 = vst.msk [vmem:[%s6 + $0xbc] sm:$0xf] %vm1349, %v2337
  %2466 = vst.msk [vmem:[%s6 + $0xc0] sm:$0xf] %vm1349, %v2338
  %2467 = vst.msk [vmem:[%s6 + $0xc4] sm:$0xf] %vm1349, %v2339
  %2468 = vst.msk [vmem:[%s6 + $0xc8] sm:$0xf] %vm1349, %v2340
  %2469 = vst.msk [vmem:[%s6 + $0xcc] sm:$0xf] %vm1349, %v2341
  %2470 = vst.msk [vmem:[%s6 + $0xd0] sm:$0xf] %vm1349, %v2342
  %2471 = vst.msk [vmem:[%s6 + $0xd4] sm:$0xf] %vm1349, %v2343
  %2472 = vst.msk [vmem:[%s6 + $0xd8] sm:$0xf] %vm1349, %v2344
  %2473 = vst.msk [vmem:[%s6 + $0xdc] sm:$0xf] %vm1349, %v2345
  %2474 = vst.msk [vmem:[%s6 + $0xe0] sm:$0xf] %vm1349, %v2346
  %2475 = vst.msk [vmem:[%s6 + $0xe4] sm:$0xf] %vm1349, %v2347
  %2476 = vst.msk [vmem:[%s6 + $0xe8] sm:$0xf] %vm1349, %v2348
  %2477 = vst.msk [vmem:[%s6 + $0xec] sm:$0xf] %vm1349, %v2349
  %2478 = vst.msk [vmem:[%s6 + $0xf0] sm:$0xf] %vm1349, %v2350
  %2479 = vst.msk [vmem:[%s6 + $0xf4] sm:$0xf] %vm1349, %v2351
  %2480 = vst.msk [vmem:[%s6 + $0xf8] sm:$0xf] %vm1349, %v2352
  %2481 = vst.msk [vmem:[%s6 + $0xfc] sm:$0xf] %vm1349, %v2353
  // Predicated region
  $region22: #{csc_qarep_forward.3} parent=0 // pred_check
    _
  $region23: #{csc_qarep_forward.3} parent=0 // pred_check_branch
    %2483 = sbr.rel (0) target = $region25
  $region24: #{csc_qarep_forward.3} parent=0 // pred_region
    _
  $region25: #{csc_qarep_forward.3} parent=0 // pred_fallthru
    _
  // Predicated region
  $region26: #{csc_qarep_forward.3} parent=0 // pred_check
    _
  $region27: #{csc_qarep_forward.3} parent=0 // pred_check_branch
    %2485 = sbr.rel (0) target = $region29
  $region28: #{csc_qarep_forward.3} parent=0 // pred_region
    _
  $region29: #{csc_qarep_forward.3} parent=0 // pred_fallthru
    _
  // Predicated region
  $region30: #{csc_qarep_forward.3} parent=0 // pred_check
    _
  $region31: #{csc_qarep_forward.3} parent=0 // pred_check_branch
    %2487 = sbr.rel (0) target = $region33
  $region32: #{csc_qarep_forward.3} parent=0 // pred_region
    _
  $region33: #{csc_qarep_forward.3} parent=0 // pred_fallthru
    _
  // Predicated region
  $region34: #{csc_qarep_forward.3} parent=0 // pred_check
    _
  $region35: #{csc_qarep_forward.3} parent=0 // pred_check_branch
    %2489 = sbr.rel (0) target = $region37
  $region36: #{csc_qarep_forward.3} parent=0 // pred_region
    _
  $region37: #{csc_qarep_forward.3} parent=0 // pred_fallthru
    _

// kernel: csc_qarep_forward.5
$region0: #{csc_qarep_forward.5}
  #allocation0 [shape = 'u32[]', space=smem, size = 0x4, offset = 0x4, fixed_abs, tag = 'smem constant byte address 0x4 - core index']
  #allocation1 [shape = 'u32[144,128]{1,0:T(1,128)}', space=vmem, size = 0x12000, scoped, tag = 'internal scratch']
  %s0 = inlined_call_operand.vmem [shape: bf16[512,2], index: 0, kind: input, shape index: {}]
  %s1 = inlined_call_operand.vmem [shape: bf16[512,2], index: 1, kind: input, shape index: {}]
  %s2 = inlined_call_operand.vmem [shape: bf16[2,2], index: 2, kind: input, shape index: {}]
  %s3 = inlined_call_operand.vmem [shape: f32[1,2], index: 3, kind: input, shape index: {}]
  %s4 = inlined_call_operand.vmem [shape: bf16[2,4], index: 4, kind: input, shape index: {}]
  %s5 = inlined_call_operand.vmem [shape: bf16[2,4], index: 5, kind: input, shape index: {}]
  %s6 = inlined_call_operand.vmem [shape: f32[1,4], index: 6, kind: input, shape index: {}]
  %s7 = inlined_call_operand.vmem [shape: f32[512,4], index: 7, kind: output, shape index: {}]
  %s8 = sld [smem:[#allocation0]]
  $region38: #{csc_qarep_forward.5} parent=0
    _
  %s10 = ssub.s32 1, %s8
  %s11 = scalar_select 0, %s10, %s8
  // Predicated region
  $region2: #{csc_qarep_forward.5} parent=0 // pred_check
    _
  $region3: #{csc_qarep_forward.5} parent=0 // pred_check_branch
    %13 = sbr.rel (0) target = $region5
  $region4: #{csc_qarep_forward.5} parent=0 // pred_region
    _
  $region5: #{csc_qarep_forward.5} parent=0 // pred_fallthru
    _
  // Predicated region
  $region6: #{csc_qarep_forward.5} parent=0 // pred_check
    _
  $region7: #{csc_qarep_forward.5} parent=0 // pred_check_branch
    %15 = sbr.rel (0) target = $region9
  $region8: #{csc_qarep_forward.5} parent=0 // pred_region
    _
  $region9: #{csc_qarep_forward.5} parent=0 // pred_fallthru
    _
  // Predicated region
  $region10: #{csc_qarep_forward.5} parent=0 // pred_check
    _
  $region11: #{csc_qarep_forward.5} parent=0 // pred_check_branch
    %17 = sbr.rel (0) target = $region13
  $region12: #{csc_qarep_forward.5} parent=0 // pred_region
    _
  $region13: #{csc_qarep_forward.5} parent=0 // pred_fallthru
    _
  // Predicated region
  $region14: #{csc_qarep_forward.5} parent=0 // pred_check
    _
  $region15: #{csc_qarep_forward.5} parent=0 // pred_check_branch
    %19 = sbr.rel (0) target = $region17
  $region16: #{csc_qarep_forward.5} parent=0 // pred_region
    _
  $region17: #{csc_qarep_forward.5} parent=0 // pred_fallthru
    _
  // Predicated region
  $region18: #{csc_qarep_forward.5} parent=0 // pred_check
    _
  $region19: #{csc_qarep_forward.5} parent=0 // pred_check_branch
    %21 = sbr.rel (0) target = $region21
  $region20: #{csc_qarep_forward.5} parent=0 // pred_region
    _
  $region21: #{csc_qarep_forward.5} parent=0 // pred_fallthru
    _
  // Predicated region
  $region22: #{csc_qarep_forward.5} parent=0 // pred_check
    _
  $region23: #{csc_qarep_forward.5} parent=0 // pred_check_branch
    %23 = sbr.rel (0) target = $region25
  $region24: #{csc_qarep_forward.5} parent=0 // pred_region
    _
  $region25: #{csc_qarep_forward.5} parent=0 // pred_fallthru
    _
  // Predicated region
  $region26: #{csc_qarep_forward.5} parent=0 // pred_check
    _
  $region27: #{csc_qarep_forward.5} parent=0 // pred_check_branch
    %25 = sbr.rel (0) target = $region29
  $region28: #{csc_qarep_forward.5} parent=0 // pred_region
    _
  $region29: #{csc_qarep_forward.5} parent=0 // pred_fallthru
    _
  %v27 = vld [vmem:[%s0] sm:$0xf]
  %v28 = vld [vmem:[%s0 + $0x4] sm:$0xf]
  %v29 = vld [vmem:[%s0 + $0x8] sm:$0xf]
  %v30 = vld [vmem:[%s0 + $0xc] sm:$0xf]
  %v31 = vld [vmem:[%s0 + $0x10] sm:$0xf]
  %v32 = vld [vmem:[%s0 + $0x14] sm:$0xf]
  %v33 = vld [vmem:[%s0 + $0x18] sm:$0xf]
  %v34 = vld [vmem:[%s0 + $0x1c] sm:$0xf]
  %v35 = vld [vmem:[%s0 + $0x20] sm:$0xf]
  %v36 = vld [vmem:[%s0 + $0x24] sm:$0xf]
  %v37 = vld [vmem:[%s0 + $0x28] sm:$0xf]
  %v38 = vld [vmem:[%s0 + $0x2c] sm:$0xf]
  %v39 = vld [vmem:[%s0 + $0x30] sm:$0xf]
  %v40 = vld [vmem:[%s0 + $0x34] sm:$0xf]
  %v41 = vld [vmem:[%s0 + $0x38] sm:$0xf]
  %v42 = vld [vmem:[%s0 + $0x3c] sm:$0xf]
  %v43 = vld [vmem:[%s0 + $0x40] sm:$0xf]
  %v44 = vld [vmem:[%s0 + $0x44] sm:$0xf]
  %v45 = vld [vmem:[%s0 + $0x48] sm:$0xf]
  %v46 = vld [vmem:[%s0 + $0x4c] sm:$0xf]
  %v47 = vld [vmem:[%s0 + $0x50] sm:$0xf]
  %v48 = vld [vmem:[%s0 + $0x54] sm:$0xf]
  %v49 = vld [vmem:[%s0 + $0x58] sm:$0xf]
  %v50 = vld [vmem:[%s0 + $0x5c] sm:$0xf]
  %v51 = vld [vmem:[%s0 + $0x60] sm:$0xf]
  %v52 = vld [vmem:[%s0 + $0x64] sm:$0xf]
  %v53 = vld [vmem:[%s0 + $0x68] sm:$0xf]
  %v54 = vld [vmem:[%s0 + $0x6c] sm:$0xf]
  %v55 = vld [vmem:[%s0 + $0x70] sm:$0xf]
  %v56 = vld [vmem:[%s0 + $0x74] sm:$0xf]
  %v57 = vld [vmem:[%s0 + $0x78] sm:$0xf]
  %v58 = vld [vmem:[%s0 + $0x7c] sm:$0xf]
  %v59 = vld [vmem:[%s0 + $0x80] sm:$0xf]
  %v60 = vld [vmem:[%s0 + $0x84] sm:$0xf]
  %v61 = vld [vmem:[%s0 + $0x88] sm:$0xf]
  %v62 = vld [vmem:[%s0 + $0x8c] sm:$0xf]
  %v63 = vld [vmem:[%s0 + $0x90] sm:$0xf]
  %v64 = vld [vmem:[%s0 + $0x94] sm:$0xf]
  %v65 = vld [vmem:[%s0 + $0x98] sm:$0xf]
  %v66 = vld [vmem:[%s0 + $0x9c] sm:$0xf]
  %v67 = vld [vmem:[%s0 + $0xa0] sm:$0xf]
  %v68 = vld [vmem:[%s0 + $0xa4] sm:$0xf]
  %v69 = vld [vmem:[%s0 + $0xa8] sm:$0xf]
  %v70 = vld [vmem:[%s0 + $0xac] sm:$0xf]
  %v71 = vld [vmem:[%s0 + $0xb0] sm:$0xf]
  %v72 = vld [vmem:[%s0 + $0xb4] sm:$0xf]
  %v73 = vld [vmem:[%s0 + $0xb8] sm:$0xf]
  %v74 = vld [vmem:[%s0 + $0xbc] sm:$0xf]
  %v75 = vld [vmem:[%s0 + $0xc0] sm:$0xf]
  %v76 = vld [vmem:[%s0 + $0xc4] sm:$0xf]
  %v77 = vld [vmem:[%s0 + $0xc8] sm:$0xf]
  %v78 = vld [vmem:[%s0 + $0xcc] sm:$0xf]
  %v79 = vld [vmem:[%s0 + $0xd0] sm:$0xf]
  %v80 = vld [vmem:[%s0 + $0xd4] sm:$0xf]
  %v81 = vld [vmem:[%s0 + $0xd8] sm:$0xf]
  %v82 = vld [vmem:[%s0 + $0xdc] sm:$0xf]
  %v83 = vld [vmem:[%s0 + $0xe0] sm:$0xf]
  %v84 = vld [vmem:[%s0 + $0xe4] sm:$0xf]
  %v85 = vld [vmem:[%s0 + $0xe8] sm:$0xf]
  %v86 = vld [vmem:[%s0 + $0xec] sm:$0xf]
  %v87 = vld [vmem:[%s0 + $0xf0] sm:$0xf]
  %v88 = vld [vmem:[%s0 + $0xf4] sm:$0xf]
  %v89 = vld [vmem:[%s0 + $0xf8] sm:$0xf]
  %v90 = vld [vmem:[%s0 + $0xfc] sm:$0xf]
  %v91 = vld [vmem:[%s2] sm:$0x1]
  %v92 = vld [vmem:[%s3] sm:$0x1]
  %v94 = vlaneseq
  %v95 = vshrl.u32 %v94, 7
  %v96 = vsub.s32 0, %v95
  %v97 = vrot.slane %v92, %v96
  %v163 = vunpack.c.l.b16 %v27
  %v164 = vunpack.c.l.b16 %v28
  %v165 = vunpack.c.l.b16 %v29
  %v166 = vunpack.c.l.b16 %v30
  %v167 = vunpack.c.l.b16 %v31
  %v168 = vunpack.c.l.b16 %v32
  %v169 = vunpack.c.l.b16 %v33
  %v170 = vunpack.c.l.b16 %v34
  %v171 = vunpack.c.l.b16 %v35
  %v172 = vunpack.c.l.b16 %v36
  %v173 = vunpack.c.l.b16 %v37
  %v174 = vunpack.c.l.b16 %v38
  %v175 = vunpack.c.l.b16 %v39
  %v176 = vunpack.c.l.b16 %v40
  %v177 = vunpack.c.l.b16 %v41
  %v178 = vunpack.c.l.b16 %v42
  %v179 = vunpack.c.l.b16 %v43
  %v180 = vunpack.c.l.b16 %v44
  %v181 = vunpack.c.l.b16 %v45
  %v182 = vunpack.c.l.b16 %v46
  %v183 = vunpack.c.l.b16 %v47
  %v184 = vunpack.c.l.b16 %v48
  %v185 = vunpack.c.l.b16 %v49
  %v186 = vunpack.c.l.b16 %v50
  %v187 = vunpack.c.l.b16 %v51
  %v188 = vunpack.c.l.b16 %v52
  %v189 = vunpack.c.l.b16 %v53
  %v190 = vunpack.c.l.b16 %v54
  %v191 = vunpack.c.l.b16 %v55
  %v192 = vunpack.c.l.b16 %v56
  %v193 = vunpack.c.l.b16 %v57
  %v194 = vunpack.c.l.b16 %v58
  %v195 = vunpack.c.l.b16 %v59
  %v196 = vunpack.c.l.b16 %v60
  %v197 = vunpack.c.l.b16 %v61
  %v198 = vunpack.c.l.b16 %v62
  %v199 = vunpack.c.l.b16 %v63
  %v200 = vunpack.c.l.b16 %v64
  %v201 = vunpack.c.l.b16 %v65
  %v202 = vunpack.c.l.b16 %v66
  %v203 = vunpack.c.l.b16 %v67
  %v204 = vunpack.c.l.b16 %v68
  %v205 = vunpack.c.l.b16 %v69
  %v206 = vunpack.c.l.b16 %v70
  %v207 = vunpack.c.l.b16 %v71
  %v208 = vunpack.c.l.b16 %v72
  %v209 = vunpack.c.l.b16 %v73
  %v210 = vunpack.c.l.b16 %v74
  %v211 = vunpack.c.l.b16 %v75
  %v212 = vunpack.c.l.b16 %v76
  %v213 = vunpack.c.l.b16 %v77
  %v214 = vunpack.c.l.b16 %v78
  %v215 = vunpack.c.l.b16 %v79
  %v216 = vunpack.c.l.b16 %v80
  %v217 = vunpack.c.l.b16 %v81
  %v218 = vunpack.c.l.b16 %v82
  %v219 = vunpack.c.l.b16 %v83
  %v220 = vunpack.c.l.b16 %v84
  %v221 = vunpack.c.l.b16 %v85
  %v222 = vunpack.c.l.b16 %v86
  %v223 = vunpack.c.l.b16 %v87
  %v224 = vunpack.c.l.b16 %v88
  %v225 = vunpack.c.l.b16 %v89
  %v226 = vunpack.c.l.b16 %v90
  %v227 = vpack.c.b16 %v164, %v163
  %v228 = vpack.c.b16 %v166, %v165
  %v229 = vpack.c.b16 %v168, %v167
  %v230 = vpack.c.b16 %v170, %v169
  %v231 = vpack.c.b16 %v172, %v171
  %v232 = vpack.c.b16 %v174, %v173
  %v233 = vpack.c.b16 %v176, %v175
  %v234 = vpack.c.b16 %v178, %v177
  %v235 = vpack.c.b16 %v180, %v179
  %v236 = vpack.c.b16 %v182, %v181
  %v237 = vpack.c.b16 %v184, %v183
  %v238 = vpack.c.b16 %v186, %v185
  %v239 = vpack.c.b16 %v188, %v187
  %v240 = vpack.c.b16 %v190, %v189
  %v241 = vpack.c.b16 %v192, %v191
  %v242 = vpack.c.b16 %v194, %v193
  %v243 = vpack.c.b16 %v196, %v195
  %v244 = vpack.c.b16 %v198, %v197
  %v245 = vpack.c.b16 %v200, %v199
  %v246 = vpack.c.b16 %v202, %v201
  %v247 = vpack.c.b16 %v204, %v203
  %v248 = vpack.c.b16 %v206, %v205
  %v249 = vpack.c.b16 %v208, %v207
  %v250 = vpack.c.b16 %v210, %v209
  %v251 = vpack.c.b16 %v212, %v211
  %v252 = vpack.c.b16 %v214, %v213
  %v253 = vpack.c.b16 %v216, %v215
  %v254 = vpack.c.b16 %v218, %v217
  %v255 = vpack.c.b16 %v220, %v219
  %v256 = vpack.c.b16 %v222, %v221
  %v257 = vpack.c.b16 %v224, %v223
  %v258 = vpack.c.b16 %v226, %v225
  %vm259 = vcmask 15360
  %v261 = vsel %vm259, %v227, 0
  %v264 = vsel %vm259, %v228, 0
  %v267 = vsel %vm259, %v229, 0
  %v270 = vsel %vm259, %v230, 0
  %v273 = vsel %vm259, %v231, 0
  %v276 = vsel %vm259, %v232, 0
  %v279 = vsel %vm259, %v233, 0
  %v282 = vsel %vm259, %v234, 0
  %v285 = vsel %vm259, %v235, 0
  %v288 = vsel %vm259, %v236, 0
  %v291 = vsel %vm259, %v237, 0
  %v294 = vsel %vm259, %v238, 0
  %v297 = vsel %vm259, %v239, 0
  %v300 = vsel %vm259, %v240, 0
  %v303 = vsel %vm259, %v241, 0
  %v306 = vsel %vm259, %v242, 0
  %v309 = vsel %vm259, %v243, 0
  %v312 = vsel %vm259, %v244, 0
  %v315 = vsel %vm259, %v245, 0
  %v318 = vsel %vm259, %v246, 0
  %v321 = vsel %vm259, %v247, 0
  %v324 = vsel %vm259, %v248, 0
  %v327 = vsel %vm259, %v249, 0
  %v330 = vsel %vm259, %v250, 0
  %v333 = vsel %vm259, %v251, 0
  %v336 = vsel %vm259, %v252, 0
  %v339 = vsel %vm259, %v253, 0
  %v342 = vsel %vm259, %v254, 0
  %v345 = vsel %vm259, %v255, 0
  %v348 = vsel %vm259, %v256, 0
  %v351 = vsel %vm259, %v257, 0
  %v354 = vsel %vm259, %v258, 0
  %vm356 = vcmask 1040384
  %v358 = vsel %vm356, %v91, 0
  %360 = vmatprep.subr.bf16.mxu0 0
  %361 = vmatpush1.bf16.msra.mxu0 %v358
  %362 = vmatprep.subr.bf16.mxu0 0
  %363 = vmatpush1.bf16.msra.mxu0 0
  %364 = vmatprep.subr.bf16.mxu0 0
  %365 = vmatpush1.bf16.msra.mxu0 0
  %366 = vmatprep.subr.bf16.mxu0 0
  %367 = vmatpush1.bf16.msra.mxu0 0
  %368 = vmatprep.subr.bf16.mxu0 0
  %369 = vmatpush1.bf16.msra.mxu0 0
  %370 = vmatprep.subr.bf16.mxu0 0
  %371 = vmatpush1.bf16.msra.mxu0 0
  %372 = vmatprep.subr.bf16.mxu0 0
  %373 = vmatpush1.bf16.msra.mxu0 0
  %374 = vmatprep.subr.bf16.mxu0 0
  %375 = vmatpush1.bf16.msra.mxu0 0
  %376 = vmatprep.subr.bf16.mxu0 0
  %377 = vmatpush1.bf16.msra.mxu0 0
  %378 = vmatprep.subr.bf16.mxu0 0
  %379 = vmatpush1.bf16.msra.mxu0 0
  %380 = vmatprep.subr.bf16.mxu0 0
  %381 = vmatpush1.bf16.msra.mxu0 0
  %382 = vmatprep.subr.bf16.mxu0 0
  %383 = vmatpush1.bf16.msra.mxu0 0
  %384 = vmatprep.subr.bf16.mxu0 0
  %385 = vmatpush1.bf16.msra.mxu0 0
  %386 = vmatprep.subr.bf16.mxu0 0
  %387 = vmatpush1.bf16.msra.mxu0 0
  %388 = vmatprep.subr.bf16.mxu0 0
  %389 = vmatpush1.bf16.msra.mxu0 0
  %390 = vmatprep.subr.bf16.mxu0 0
  %391 = vmatpush1.bf16.msra.mxu0 0
  %392 = vmatprep.mubr.bf16.mxu0 0
  %393 = vmatmul.mubr.bf16.gmra.mrb[0].mxu0 %v261
  %v394 = vpop.f32.mrb[0].mxu0
  %v395 = vadd.f32 %v97, %v394
  %v396 = vpop.f32.mrb[0].mxu0
  %v397 = vpop.f32.mrb[0].mxu0
  %v398 = vadd.f32 %v97, %v397
  %v399 = vpop.f32.mrb[0].mxu0
  %400 = vmatprep.mubr.bf16.mxu0 0
  %401 = vmatmul.mubr.bf16.gmra.mrb[0].mxu0 %v264
  %v402 = vpop.f32.mrb[0].mxu0
  %v403 = vadd.f32 %v97, %v402
  %v404 = vpop.f32.mrb[0].mxu0
  %v405 = vpop.f32.mrb[0].mxu0
  %v406 = vadd.f32 %v97, %v405
  %v407 = vpop.f32.mrb[0].mxu0
  %408 = vmatprep.mubr.bf16.mxu0 0
  %409 = vmatmul.mubr.bf16.gmra.mrb[0].mxu0 %v267
  %v410 = vpop.f32.mrb[0].mxu0
  %v411 = vadd.f32 %v97, %v410
  %v412 = vpop.f32.mrb[0].mxu0
  %v413 = vpop.f32.mrb[0].mxu0
  %v414 = vadd.f32 %v97, %v413
  %v415 = vpop.f32.mrb[0].mxu0
  %416 = vmatprep.mubr.bf16.mxu0 0
  %417 = vmatmul.mubr.bf16.gmra.mrb[0].mxu0 %v270
  %v418 = vpop.f32.mrb[0].mxu0
  %v419 = vadd.f32 %v97, %v418
  %v420 = vpop.f32.mrb[0].mxu0
  %v421 = vpop.f32.mrb[0].mxu0
  %v422 = vadd.f32 %v97, %v421
  %v423 = vpop.f32.mrb[0].mxu0
  %424 = vmatprep.mubr.bf16.mxu0 0
  %425 = vmatmul.mubr.bf16.gmra.mrb[0].mxu0 %v273
  %v426 = vpop.f32.mrb[0].mxu0
  %v427 = vadd.f32 %v97, %v426
  %v428 = vpop.f32.mrb[0].mxu0
  %v429 = vpop.f32.mrb[0].mxu0
  %v430 = vadd.f32 %v97, %v429
  %v431 = vpop.f32.mrb[0].mxu0
  %432 = vmatprep.mubr.bf16.mxu0 0
  %433 = vmatmul.mubr.bf16.gmra.mrb[0].mxu0 %v276
  %v434 = vpop.f32.mrb[0].mxu0
  %v435 = vadd.f32 %v97, %v434
  %v436 = vpop.f32.mrb[0].mxu0
  %v437 = vpop.f32.mrb[0].mxu0
  %v438 = vadd.f32 %v97, %v437
  %v439 = vpop.f32.mrb[0].mxu0
  %440 = vmatprep.mubr.bf16.mxu0 0
  %441 = vmatmul.mubr.bf16.gmra.mrb[0].mxu0 %v279
  %v442 = vpop.f32.mrb[0].mxu0
  %v443 = vadd.f32 %v97, %v442
  %v444 = vpop.f32.mrb[0].mxu0
  %v445 = vpop.f32.mrb[0].mxu0
  %v446 = vadd.f32 %v97, %v445
  %v447 = vpop.f32.mrb[0].mxu0
  %448 = vmatprep.mubr.bf16.mxu0 0
  %449 = vmatmul.mubr.bf16.gmra.mrb[0].mxu0 %v282
  %v450 = vpop.f32.mrb[0].mxu0
  %v451 = vadd.f32 %v97, %v450
  %v452 = vpop.f32.mrb[0].mxu0
  %v453 = vpop.f32.mrb[0].mxu0
  %v454 = vadd.f32 %v97, %v453
  %v455 = vpop.f32.mrb[0].mxu0
  %456 = vmatprep.mubr.bf16.mxu0 0
  %457 = vmatmul.mubr.bf16.gmra.mrb[0].mxu0 %v285
  %v458 = vpop.f32.mrb[0].mxu0
  %v459 = vadd.f32 %v97, %v458
  %v460 = vpop.f32.mrb[0].mxu0
  %v461 = vpop.f32.mrb[0].mxu0
  %v462 = vadd.f32 %v97, %v461
  %v463 = vpop.f32.mrb[0].mxu0
  %464 = vmatprep.mubr.bf16.mxu0 0
  %465 = vmatmul.mubr.bf16.gmra.mrb[0].mxu0 %v288
  %v466 = vpop.f32.mrb[0].mxu0
  %v467 = vadd.f32 %v97, %v466
  %v468 = vpop.f32.mrb[0].mxu0
  %v469 = vpop.f32.mrb[0].mxu0
  %v470 = vadd.f32 %v97, %v469
  %v471 = vpop.f32.mrb[0].mxu0
  %472 = vmatprep.mubr.bf16.mxu0 0
  %473 = vmatmul.mubr.bf16.gmra.mrb[0].mxu0 %v291
  %v474 = vpop.f32.mrb[0].mxu0
  %v475 = vadd.f32 %v97, %v474
  %v476 = vpop.f32.mrb[0].mxu0
  %v477 = vpop.f32.mrb[0].mxu0
  %v478 = vadd.f32 %v97, %v477
  %v479 = vpop.f32.mrb[0].mxu0
  %480 = vmatprep.mubr.bf16.mxu0 0
  %481 = vmatmul.mubr.bf16.gmra.mrb[0].mxu0 %v294
  %v482 = vpop.f32.mrb[0].mxu0
  %v483 = vadd.f32 %v97, %v482
  %v484 = vpop.f32.mrb[0].mxu0
  %v485 = vpop.f32.mrb[0].mxu0
  %v486 = vadd.f32 %v97, %v485
  %v487 = vpop.f32.mrb[0].mxu0
  %488 = vmatprep.mubr.bf16.mxu0 0
  %489 = vmatmul.mubr.bf16.gmra.mrb[0].mxu0 %v297
  %v490 = vpop.f32.mrb[0].mxu0
  %v491 = vadd.f32 %v97, %v490
  %v492 = vpop.f32.mrb[0].mxu0
  %v493 = vpop.f32.mrb[0].mxu0
  %v494 = vadd.f32 %v97, %v493
  %v495 = vpop.f32.mrb[0].mxu0
  %496 = vmatprep.mubr.bf16.mxu0 0
  %497 = vmatmul.mubr.bf16.gmra.mrb[0].mxu0 %v300
  %v498 = vpop.f32.mrb[0].mxu0
  %v499 = vadd.f32 %v97, %v498
  %v500 = vpop.f32.mrb[0].mxu0
  %v501 = vpop.f32.mrb[0].mxu0
  %v502 = vadd.f32 %v97, %v501
  %v503 = vpop.f32.mrb[0].mxu0
  %504 = vmatprep.mubr.bf16.mxu0 0
  %505 = vmatmul.mubr.bf16.gmra.mrb[0].mxu0 %v303
  %v506 = vpop.f32.mrb[0].mxu0
  %v507 = vadd.f32 %v97, %v506
  %v508 = vpop.f32.mrb[0].mxu0
  %v509 = vpop.f32.mrb[0].mxu0
  %v510 = vadd.f32 %v97, %v509
  %v511 = vpop.f32.mrb[0].mxu0
  %512 = vmatprep.mubr.bf16.mxu0 0
  %513 = vmatmul.mubr.bf16.gmra.mrb[0].mxu0 %v306
  %v514 = vpop.f32.mrb[0].mxu0
  %v515 = vadd.f32 %v97, %v514
  %v516 = vpop.f32.mrb[0].mxu0
  %v517 = vpop.f32.mrb[0].mxu0
  %v518 = vadd.f32 %v97, %v517
  %v519 = vpop.f32.mrb[0].mxu0
  %520 = vmatprep.mubr.bf16.mxu0 0
  %521 = vmatmul.mubr.bf16.gmra.mrb[0].mxu0 %v309
  %v522 = vpop.f32.mrb[0].mxu0
  %v523 = vadd.f32 %v97, %v522
  %v524 = vpop.f32.mrb[0].mxu0
  %v525 = vpop.f32.mrb[0].mxu0
  %v526 = vadd.f32 %v97, %v525
  %v527 = vpop.f32.mrb[0].mxu0
  %528 = vmatprep.mubr.bf16.mxu0 0
  %529 = vmatmul.mubr.bf16.gmra.mrb[0].mxu0 %v312
  %v530 = vpop.f32.mrb[0].mxu0
  %v531 = vadd.f32 %v97, %v530
  %v532 = vpop.f32.mrb[0].mxu0
  %v533 = vpop.f32.mrb[0].mxu0
  %v534 = vadd.f32 %v97, %v533
  %v535 = vpop.f32.mrb[0].mxu0
  %536 = vmatprep.mubr.bf16.mxu0 0
  %537 = vmatmul.mubr.bf16.gmra.mrb[0].mxu0 %v315
  %v538 = vpop.f32.mrb[0].mxu0
  %v539 = vadd.f32 %v97, %v538
  %v540 = vpop.f32.mrb[0].mxu0
  %v541 = vpop.f32.mrb[0].mxu0
  %v542 = vadd.f32 %v97, %v541
  %v543 = vpop.f32.mrb[0].mxu0
  %544 = vmatprep.mubr.bf16.mxu0 0
  %545 = vmatmul.mubr.bf16.gmra.mrb[0].mxu0 %v318
  %v546 = vpop.f32.mrb[0].mxu0
  %v547 = vadd.f32 %v97, %v546
  %v548 = vpop.f32.mrb[0].mxu0
  %v549 = vpop.f32.mrb[0].mxu0
  %v550 = vadd.f32 %v97, %v549
  %v551 = vpop.f32.mrb[0].mxu0
  %552 = vmatprep.mubr.bf16.mxu0 0
  %553 = vmatmul.mubr.bf16.gmra.mrb[0].mxu0 %v321
  %v554 = vpop.f32.mrb[0].mxu0
  %v555 = vadd.f32 %v97, %v554
  %v556 = vpop.f32.mrb[0].mxu0
  %v557 = vpop.f32.mrb[0].mxu0
  %v558 = vadd.f32 %v97, %v557
  %v559 = vpop.f32.mrb[0].mxu0
  %560 = vmatprep.mubr.bf16.mxu0 0
  %561 = vmatmul.mubr.bf16.gmra.mrb[0].mxu0 %v324
  %v562 = vpop.f32.mrb[0].mxu0
  %v563 = vadd.f32 %v97, %v562
  %v564 = vpop.f32.mrb[0].mxu0
  %v565 = vpop.f32.mrb[0].mxu0
  %v566 = vadd.f32 %v97, %v565
  %v567 = vpop.f32.mrb[0].mxu0
  %568 = vmatprep.mubr.bf16.mxu0 0
  %569 = vmatmul.mubr.bf16.gmra.mrb[0].mxu0 %v327
  %v570 = vpop.f32.mrb[0].mxu0
  %v571 = vadd.f32 %v97, %v570
  %v572 = vpop.f32.mrb[0].mxu0
  %v573 = vpop.f32.mrb[0].mxu0
  %v574 = vadd.f32 %v97, %v573
  %v575 = vpop.f32.mrb[0].mxu0
  %576 = vmatprep.mubr.bf16.mxu0 0
  %577 = vmatmul.mubr.bf16.gmra.mrb[0].mxu0 %v330
  %v578 = vpop.f32.mrb[0].mxu0
  %v579 = vadd.f32 %v97, %v578
  %v580 = vpop.f32.mrb[0].mxu0
  %v581 = vpop.f32.mrb[0].mxu0
  %v582 = vadd.f32 %v97, %v581
  %v583 = vpop.f32.mrb[0].mxu0
  %584 = vmatprep.mubr.bf16.mxu0 0
  %585 = vmatmul.mubr.bf16.gmra.mrb[0].mxu0 %v333
  %v586 = vpop.f32.mrb[0].mxu0
  %v587 = vadd.f32 %v97, %v586
  %v588 = vpop.f32.mrb[0].mxu0
  %v589 = vpop.f32.mrb[0].mxu0
  %v590 = vadd.f32 %v97, %v589
  %v591 = vpop.f32.mrb[0].mxu0
  %592 = vmatprep.mubr.bf16.mxu0 0
  %593 = vmatmul.mubr.bf16.gmra.mrb[0].mxu0 %v336
  %v594 = vpop.f32.mrb[0].mxu0
  %v595 = vadd.f32 %v97, %v594
  %v596 = vpop.f32.mrb[0].mxu0
  %v597 = vpop.f32.mrb[0].mxu0
  %v598 = vadd.f32 %v97, %v597
  %v599 = vpop.f32.mrb[0].mxu0
  %600 = vmatprep.mubr.bf16.mxu0 0
  %601 = vmatmul.mubr.bf16.gmra.mrb[0].mxu0 %v339
  %v602 = vpop.f32.mrb[0].mxu0
  %v603 = vadd.f32 %v97, %v602
  %v604 = vpop.f32.mrb[0].mxu0
  %v605 = vpop.f32.mrb[0].mxu0
  %v606 = vadd.f32 %v97, %v605
  %v607 = vpop.f32.mrb[0].mxu0
  %608 = vmatprep.mubr.bf16.mxu0 0
  %609 = vmatmul.mubr.bf16.gmra.mrb[0].mxu0 %v342
  %v610 = vpop.f32.mrb[0].mxu0
  %v611 = vadd.f32 %v97, %v610
  %v612 = vpop.f32.mrb[0].mxu0
  %v613 = vpop.f32.mrb[0].mxu0
  %v614 = vadd.f32 %v97, %v613
  %v615 = vpop.f32.mrb[0].mxu0
  %616 = vmatprep.mubr.bf16.mxu0 0
  %617 = vmatmul.mubr.bf16.gmra.mrb[0].mxu0 %v345
  %v618 = vpop.f32.mrb[0].mxu0
  %v619 = vadd.f32 %v97, %v618
  %v620 = vpop.f32.mrb[0].mxu0
  %v621 = vpop.f32.mrb[0].mxu0
  %v622 = vadd.f32 %v97, %v621
  %v623 = vpop.f32.mrb[0].mxu0
  %624 = vmatprep.mubr.bf16.mxu0 0
  %625 = vmatmul.mubr.bf16.gmra.mrb[0].mxu0 %v348
  %v626 = vpop.f32.mrb[0].mxu0
  %v627 = vadd.f32 %v97, %v626
  %v628 = vpop.f32.mrb[0].mxu0
  %v629 = vpop.f32.mrb[0].mxu0
  %v630 = vadd.f32 %v97, %v629
  %v631 = vpop.f32.mrb[0].mxu0
  %632 = vmatprep.mubr.bf16.mxu0 0
  %633 = vmatmul.mubr.bf16.gmra.mrb[0].mxu0 %v351
  %v634 = vpop.f32.mrb[0].mxu0
  %v635 = vadd.f32 %v97, %v634
  %v636 = vpop.f32.mrb[0].mxu0
  %v637 = vpop.f32.mrb[0].mxu0
  %v638 = vadd.f32 %v97, %v637
  %v639 = vpop.f32.mrb[0].mxu0
  %640 = vmatprep.mubr.bf16.mxu0 0
  %641 = vmatmul.mubr.bf16.gmra.mrb[0].mxu0 %v354
  %v642 = vpop.f32.mrb[0].mxu0
  %v643 = vadd.f32 %v97, %v642
  %v644 = vpop.f32.mrb[0].mxu0
  %v645 = vpop.f32.mrb[0].mxu0
  %v646 = vadd.f32 %v97, %v645
  %v647 = vpop.f32.mrb[0].mxu0
  %648 = vdwg.mxu0
  %v649 = vxor.u32 %v395, 2147483648
  %v650 = vxor.u32 %v398, 2147483648
  %v651 = vxor.u32 %v403, 2147483648
  %v652 = vxor.u32 %v406, 2147483648
  %v653 = vxor.u32 %v411, 2147483648
  %v654 = vxor.u32 %v414, 2147483648
  %v655 = vxor.u32 %v419, 2147483648
  %v656 = vxor.u32 %v422, 2147483648
  %v657 = vxor.u32 %v427, 2147483648
  %v658 = vxor.u32 %v430, 2147483648
  %v659 = vxor.u32 %v435, 2147483648
  %v660 = vxor.u32 %v438, 2147483648
  %v661 = vxor.u32 %v443, 2147483648
  %v662 = vxor.u32 %v446, 2147483648
  %v663 = vxor.u32 %v451, 2147483648
  %v664 = vxor.u32 %v454, 2147483648
  %v665 = vxor.u32 %v459, 2147483648
  %v666 = vxor.u32 %v462, 2147483648
  %v667 = vxor.u32 %v467, 2147483648
  %v668 = vxor.u32 %v470, 2147483648
  %v669 = vxor.u32 %v475, 2147483648
  %v670 = vxor.u32 %v478, 2147483648
  %v671 = vxor.u32 %v483, 2147483648
  %v672 = vxor.u32 %v486, 2147483648
  %v673 = vxor.u32 %v491, 2147483648
  %v674 = vxor.u32 %v494, 2147483648
  %v675 = vxor.u32 %v499, 2147483648
  %v676 = vxor.u32 %v502, 2147483648
  %v677 = vxor.u32 %v507, 2147483648
  %v678 = vxor.u32 %v510, 2147483648
  %v679 = vxor.u32 %v515, 2147483648
  %v680 = vxor.u32 %v518, 2147483648
  %v681 = vxor.u32 %v523, 2147483648
  %v682 = vxor.u32 %v526, 2147483648
  %v683 = vxor.u32 %v531, 2147483648
  %v684 = vxor.u32 %v534, 2147483648
  %v685 = vxor.u32 %v539, 2147483648
  %v686 = vxor.u32 %v542, 2147483648
  %v687 = vxor.u32 %v547, 2147483648
  %v688 = vxor.u32 %v550, 2147483648
  %v689 = vxor.u32 %v555, 2147483648
  %v690 = vxor.u32 %v558, 2147483648
  %v691 = vxor.u32 %v563, 2147483648
  %v692 = vxor.u32 %v566, 2147483648
  %v693 = vxor.u32 %v571, 2147483648
  %v694 = vxor.u32 %v574, 2147483648
  %v695 = vxor.u32 %v579, 2147483648
  %v696 = vxor.u32 %v582, 2147483648
  %v697 = vxor.u32 %v587, 2147483648
  %v698 = vxor.u32 %v590, 2147483648
  %v699 = vxor.u32 %v595, 2147483648
  %v700 = vxor.u32 %v598, 2147483648
  %v701 = vxor.u32 %v603, 2147483648
  %v702 = vxor.u32 %v606, 2147483648
  %v703 = vxor.u32 %v611, 2147483648
  %v704 = vxor.u32 %v614, 2147483648
  %v705 = vxor.u32 %v619, 2147483648
  %v706 = vxor.u32 %v622, 2147483648
  %v707 = vxor.u32 %v627, 2147483648
  %v708 = vxor.u32 %v630, 2147483648
  %v709 = vxor.u32 %v635, 2147483648
  %v710 = vxor.u32 %v638, 2147483648
  %v711 = vxor.u32 %v643, 2147483648
  %v712 = vxor.u32 %v646, 2147483648
  %v713 = vmul.f32 %v649, 1.442695
  %v714 = vpow.pop %v713
  %v715 = vmul.f32 %v650, 1.442695
  %v716 = vpow.pop %v715
  %v717 = vmul.f32 %v651, 1.442695
  %v718 = vpow.pop %v717
  %v719 = vmul.f32 %v652, 1.442695
  %v720 = vpow.pop %v719
  %v721 = vmul.f32 %v653, 1.442695
  %v722 = vpow.pop %v721
  %v723 = vmul.f32 %v654, 1.442695
  %v724 = vpow.pop %v723
  %v725 = vmul.f32 %v655, 1.442695
  %v726 = vpow.pop %v725
  %v727 = vmul.f32 %v656, 1.442695
  %v728 = vpow.pop %v727
  %v729 = vmul.f32 %v657, 1.442695
  %v730 = vpow.pop %v729
  %v731 = vmul.f32 %v658, 1.442695
  %v732 = vpow.pop %v731
  %v733 = vmul.f32 %v659, 1.442695
  %v734 = vpow.pop %v733
  %v735 = vmul.f32 %v660, 1.442695
  %v736 = vpow.pop %v735
  %v737 = vmul.f32 %v661, 1.442695
  %v738 = vpow.pop %v737
  %v739 = vmul.f32 %v662, 1.442695
  %v740 = vpow.pop %v739
  %v741 = vmul.f32 %v663, 1.442695
  %v742 = vpow.pop %v741
  %v743 = vmul.f32 %v664, 1.442695
  %v744 = vpow.pop %v743
  %v745 = vmul.f32 %v665, 1.442695
  %v746 = vpow.pop %v745
  %v747 = vmul.f32 %v666, 1.442695
  %v748 = vpow.pop %v747
  %v749 = vmul.f32 %v667, 1.442695
  %v750 = vpow.pop %v749
  %v751 = vmul.f32 %v668, 1.442695
  %v752 = vpow.pop %v751
  %v753 = vmul.f32 %v669, 1.442695
  %v754 = vpow.pop %v753
  %v755 = vmul.f32 %v670, 1.442695
  %v756 = vpow.pop %v755
  %v757 = vmul.f32 %v671, 1.442695
  %v758 = vpow.pop %v757
  %v759 = vmul.f32 %v672, 1.442695
  %v760 = vpow.pop %v759
  %v761 = vmul.f32 %v673, 1.442695
  %v762 = vpow.pop %v761
  %v763 = vmul.f32 %v674, 1.442695
  %v764 = vpow.pop %v763
  %v765 = vmul.f32 %v675, 1.442695
  %v766 = vpow.pop %v765
  %v767 = vmul.f32 %v676, 1.442695
  %v768 = vpow.pop %v767
  %v769 = vmul.f32 %v677, 1.442695
  %v770 = vpow.pop %v769
  %v771 = vmul.f32 %v678, 1.442695
  %v772 = vpow.pop %v771
  %v773 = vmul.f32 %v679, 1.442695
  %v774 = vpow.pop %v773
  %v775 = vmul.f32 %v680, 1.442695
  %v776 = vpow.pop %v775
  %v777 = vmul.f32 %v681, 1.442695
  %v778 = vpow.pop %v777
  %v779 = vmul.f32 %v682, 1.442695
  %v780 = vpow.pop %v779
  %v781 = vmul.f32 %v683, 1.442695
  %v782 = vpow.pop %v781
  %v783 = vmul.f32 %v684, 1.442695
  %v784 = vpow.pop %v783
  %v785 = vmul.f32 %v685, 1.442695
  %v786 = vpow.pop %v785
  %v787 = vmul.f32 %v686, 1.442695
  %v788 = vpow.pop %v787
  %v789 = vmul.f32 %v687, 1.442695
  %v790 = vpow.pop %v789
  %v791 = vmul.f32 %v688, 1.442695
  %v792 = vpow.pop %v791
  %v793 = vmul.f32 %v689, 1.442695
  %v794 = vpow.pop %v793
  %v795 = vmul.f32 %v690, 1.442695
  %v796 = vpow.pop %v795
  %v797 = vmul.f32 %v691, 1.442695
  %v798 = vpow.pop %v797
  %v799 = vmul.f32 %v692, 1.442695
  %v800 = vpow.pop %v799
  %v801 = vmul.f32 %v693, 1.442695
  %v802 = vpow.pop %v801
  %v803 = vmul.f32 %v694, 1.442695
  %v804 = vpow.pop %v803
  %v805 = vmul.f32 %v695, 1.442695
  %v806 = vpow.pop %v805
  %v807 = vmul.f32 %v696, 1.442695
  %v808 = vpow.pop %v807
  %v809 = vmul.f32 %v697, 1.442695
  %v810 = vpow.pop %v809
  %v811 = vmul.f32 %v698, 1.442695
  %v812 = vpow.pop %v811
  %v813 = vmul.f32 %v699, 1.442695
  %v814 = vpow.pop %v813
  %v815 = vmul.f32 %v700, 1.442695
  %v816 = vpow.pop %v815
  %v817 = vmul.f32 %v701, 1.442695
  %v818 = vpow.pop %v817
  %v819 = vmul.f32 %v702, 1.442695
  %v820 = vpow.pop %v819
  %v821 = vmul.f32 %v703, 1.442695
  %v822 = vpow.pop %v821
  %v823 = vmul.f32 %v704, 1.442695
  %v824 = vpow.pop %v823
  %v825 = vmul.f32 %v705, 1.442695
  %v826 = vpow.pop %v825
  %v827 = vmul.f32 %v706, 1.442695
  %v828 = vpow.pop %v827
  %v829 = vmul.f32 %v707, 1.442695
  %v830 = vpow.pop %v829
  %v831 = vmul.f32 %v708, 1.442695
  %v832 = vpow.pop %v831
  %v833 = vmul.f32 %v709, 1.442695
  %v834 = vpow.pop %v833
  %v835 = vmul.f32 %v710, 1.442695
  %v836 = vpow.pop %v835
  %v837 = vmul.f32 %v711, 1.442695
  %v838 = vpow.pop %v837
  %v839 = vmul.f32 %v712, 1.442695
  %v840 = vpow.pop %v839
  %v841 = vadd.f32 %v714, 1.0
  %v842 = vadd.f32 %v716, 1.0
  %v843 = vadd.f32 %v718, 1.0
  %v844 = vadd.f32 %v720, 1.0
  %v845 = vadd.f32 %v722, 1.0
  %v846 = vadd.f32 %v724, 1.0
  %v847 = vadd.f32 %v726, 1.0
  %v848 = vadd.f32 %v728, 1.0
  %v849 = vadd.f32 %v730, 1.0
  %v850 = vadd.f32 %v732, 1.0
  %v851 = vadd.f32 %v734, 1.0
  %v852 = vadd.f32 %v736, 1.0
  %v853 = vadd.f32 %v738, 1.0
  %v854 = vadd.f32 %v740, 1.0
  %v855 = vadd.f32 %v742, 1.0
  %v856 = vadd.f32 %v744, 1.0
  %v857 = vadd.f32 %v746, 1.0
  %v858 = vadd.f32 %v748, 1.0
  %v859 = vadd.f32 %v750, 1.0
  %v860 = vadd.f32 %v752, 1.0
  %v861 = vadd.f32 %v754, 1.0
  %v862 = vadd.f32 %v756, 1.0
  %v863 = vadd.f32 %v758, 1.0
  %v864 = vadd.f32 %v760, 1.0
  %v865 = vadd.f32 %v762, 1.0
  %v866 = vadd.f32 %v764, 1.0
  %v867 = vadd.f32 %v766, 1.0
  %v868 = vadd.f32 %v768, 1.0
  %v869 = vadd.f32 %v770, 1.0
  %v870 = vadd.f32 %v772, 1.0
  %v871 = vadd.f32 %v774, 1.0
  %v872 = vadd.f32 %v776, 1.0
  %v873 = vadd.f32 %v778, 1.0
  %v874 = vadd.f32 %v780, 1.0
  %v875 = vadd.f32 %v782, 1.0
  %v876 = vadd.f32 %v784, 1.0
  %v877 = vadd.f32 %v786, 1.0
  %v878 = vadd.f32 %v788, 1.0
  %v879 = vadd.f32 %v790, 1.0
  %v880 = vadd.f32 %v792, 1.0
  %v881 = vadd.f32 %v794, 1.0
  %v882 = vadd.f32 %v796, 1.0
  %v883 = vadd.f32 %v798, 1.0
  %v884 = vadd.f32 %v800, 1.0
  %v885 = vadd.f32 %v802, 1.0
  %v886 = vadd.f32 %v804, 1.0
  %v887 = vadd.f32 %v806, 1.0
  %v888 = vadd.f32 %v808, 1.0
  %v889 = vadd.f32 %v810, 1.0
  %v890 = vadd.f32 %v812, 1.0
  %v891 = vadd.f32 %v814, 1.0
  %v892 = vadd.f32 %v816, 1.0
  %v893 = vadd.f32 %v818, 1.0
  %v894 = vadd.f32 %v820, 1.0
  %v895 = vadd.f32 %v822, 1.0
  %v896 = vadd.f32 %v824, 1.0
  %v897 = vadd.f32 %v826, 1.0
  %v898 = vadd.f32 %v828, 1.0
  %v899 = vadd.f32 %v830, 1.0
  %v900 = vadd.f32 %v832, 1.0
  %v901 = vadd.f32 %v834, 1.0
  %v902 = vadd.f32 %v836, 1.0
  %v903 = vadd.f32 %v838, 1.0
  %v904 = vadd.f32 %v840, 1.0
  %v905 = vrcp.pop %v841
  %v906 = vmul.f32 1.0, %v905
  %v907 = vrcp.pop %v842
  %v908 = vmul.f32 1.0, %v907
  %v909 = vrcp.pop %v843
  %v910 = vmul.f32 1.0, %v909
  %v911 = vrcp.pop %v844
  %v912 = vmul.f32 1.0, %v911
  %v913 = vrcp.pop %v845
  %v914 = vmul.f32 1.0, %v913
  %v915 = vrcp.pop %v846
  %v916 = vmul.f32 1.0, %v915
  %v917 = vrcp.pop %v847
  %v918 = vmul.f32 1.0, %v917
  %v919 = vrcp.pop %v848
  %v920 = vmul.f32 1.0, %v919
  %v921 = vrcp.pop %v849
  %v922 = vmul.f32 1.0, %v921
  %v923 = vrcp.pop %v850
  %v924 = vmul.f32 1.0, %v923
  %v925 = vrcp.pop %v851
  %v926 = vmul.f32 1.0, %v925
  %v927 = vrcp.pop %v852
  %v928 = vmul.f32 1.0, %v927
  %v929 = vrcp.pop %v853
  %v930 = vmul.f32 1.0, %v929
  %v931 = vrcp.pop %v854
  %v932 = vmul.f32 1.0, %v931
  %v933 = vrcp.pop %v855
  %v934 = vmul.f32 1.0, %v933
  %v935 = vrcp.pop %v856
  %v936 = vmul.f32 1.0, %v935
  %v937 = vrcp.pop %v857
  %v938 = vmul.f32 1.0, %v937
  %v939 = vrcp.pop %v858
  %v940 = vmul.f32 1.0, %v939
  %v941 = vrcp.pop %v859
  %v942 = vmul.f32 1.0, %v941
  %v943 = vrcp.pop %v860
  %v944 = vmul.f32 1.0, %v943
  %v945 = vrcp.pop %v861
  %v946 = vmul.f32 1.0, %v945
  %v947 = vrcp.pop %v862
  %v948 = vmul.f32 1.0, %v947
  %v949 = vrcp.pop %v863
  %v950 = vmul.f32 1.0, %v949
  %v951 = vrcp.pop %v864
  %v952 = vmul.f32 1.0, %v951
  %v953 = vrcp.pop %v865
  %v954 = vmul.f32 1.0, %v953
  %v955 = vrcp.pop %v866
  %v956 = vmul.f32 1.0, %v955
  %v957 = vrcp.pop %v867
  %v958 = vmul.f32 1.0, %v957
  %v959 = vrcp.pop %v868
  %v960 = vmul.f32 1.0, %v959
  %v961 = vrcp.pop %v869
  %v962 = vmul.f32 1.0, %v961
  %v963 = vrcp.pop %v870
  %v964 = vmul.f32 1.0, %v963
  %v965 = vrcp.pop %v871
  %v966 = vmul.f32 1.0, %v965
  %v967 = vrcp.pop %v872
  %v968 = vmul.f32 1.0, %v967
  %v969 = vrcp.pop %v873
  %v970 = vmul.f32 1.0, %v969
  %v971 = vrcp.pop %v874
  %v972 = vmul.f32 1.0, %v971
  %v973 = vrcp.pop %v875
  %v974 = vmul.f32 1.0, %v973
  %v975 = vrcp.pop %v876
  %v976 = vmul.f32 1.0, %v975
  %v977 = vrcp.pop %v877
  %v978 = vmul.f32 1.0, %v977
  %v979 = vrcp.pop %v878
  %v980 = vmul.f32 1.0, %v979
  %v981 = vrcp.pop %v879
  %v982 = vmul.f32 1.0, %v981
  %v983 = vrcp.pop %v880
  %v984 = vmul.f32 1.0, %v983
  %v985 = vrcp.pop %v881
  %v986 = vmul.f32 1.0, %v985
  %v987 = vrcp.pop %v882
  %v988 = vmul.f32 1.0, %v987
  %v989 = vrcp.pop %v883
  %v990 = vmul.f32 1.0, %v989
  %v991 = vrcp.pop %v884
  %v992 = vmul.f32 1.0, %v991
  %v993 = vrcp.pop %v885
  %v994 = vmul.f32 1.0, %v993
  %v995 = vrcp.pop %v886
  %v996 = vmul.f32 1.0, %v995
  %v997 = vrcp.pop %v887
  %v998 = vmul.f32 1.0, %v997
  %v999 = vrcp.pop %v888
  %v1000 = vmul.f32 1.0, %v999
  %v1001 = vrcp.pop %v889
  %v1002 = vmul.f32 1.0, %v1001
  %v1003 = vrcp.pop %v890
  %v1004 = vmul.f32 1.0, %v1003
  %v1005 = vrcp.pop %v891
  %v1006 = vmul.f32 1.0, %v1005
  %v1007 = vrcp.pop %v892
  %v1008 = vmul.f32 1.0, %v1007
  %v1009 = vrcp.pop %v893
  %v1010 = vmul.f32 1.0, %v1009
  %v1011 = vrcp.pop %v894
  %v1012 = vmul.f32 1.0, %v1011
  %v1013 = vrcp.pop %v895
  %v1014 = vmul.f32 1.0, %v1013
  %v1015 = vrcp.pop %v896
  %v1016 = vmul.f32 1.0, %v1015
  %v1017 = vrcp.pop %v897
  %v1018 = vmul.f32 1.0, %v1017
  %v1019 = vrcp.pop %v898
  %v1020 = vmul.f32 1.0, %v1019
  %v1021 = vrcp.pop %v899
  %v1022 = vmul.f32 1.0, %v1021
  %v1023 = vrcp.pop %v900
  %v1024 = vmul.f32 1.0, %v1023
  %v1025 = vrcp.pop %v901
  %v1026 = vmul.f32 1.0, %v1025
  %v1027 = vrcp.pop %v902
  %v1028 = vmul.f32 1.0, %v1027
  %v1029 = vrcp.pop %v903
  %v1030 = vmul.f32 1.0, %v1029
  %v1031 = vrcp.pop %v904
  %v1032 = vmul.f32 1.0, %v1031
  %v1033 = vmul.f32 %v395, %v906
  %v1034 = vmul.f32 %v398, %v908
  %v1035 = vmul.f32 %v403, %v910
  %v1036 = vmul.f32 %v406, %v912
  %v1037 = vmul.f32 %v411, %v914
  %v1038 = vmul.f32 %v414, %v916
  %v1039 = vmul.f32 %v419, %v918
  %v1040 = vmul.f32 %v422, %v920
  %v1041 = vmul.f32 %v427, %v922
  %v1042 = vmul.f32 %v430, %v924
  %v1043 = vmul.f32 %v435, %v926
  %v1044 = vmul.f32 %v438, %v928
  %v1045 = vmul.f32 %v443, %v930
  %v1046 = vmul.f32 %v446, %v932
  %v1047 = vmul.f32 %v451, %v934
  %v1048 = vmul.f32 %v454, %v936
  %v1049 = vmul.f32 %v459, %v938
  %v1050 = vmul.f32 %v462, %v940
  %v1051 = vmul.f32 %v467, %v942
  %v1052 = vmul.f32 %v470, %v944
  %v1053 = vmul.f32 %v475, %v946
  %v1054 = vmul.f32 %v478, %v948
  %v1055 = vmul.f32 %v483, %v950
  %v1056 = vmul.f32 %v486, %v952
  %v1057 = vmul.f32 %v491, %v954
  %v1058 = vmul.f32 %v494, %v956
  %v1059 = vmul.f32 %v499, %v958
  %v1060 = vmul.f32 %v502, %v960
  %v1061 = vmul.f32 %v507, %v962
  %v1062 = vmul.f32 %v510, %v964
  %v1063 = vmul.f32 %v515, %v966
  %v1064 = vmul.f32 %v518, %v968
  %v1065 = vmul.f32 %v523, %v970
  %v1066 = vmul.f32 %v526, %v972
  %v1067 = vmul.f32 %v531, %v974
  %v1068 = vmul.f32 %v534, %v976
  %v1069 = vmul.f32 %v539, %v978
  %v1070 = vmul.f32 %v542, %v980
  %v1071 = vmul.f32 %v547, %v982
  %v1072 = vmul.f32 %v550, %v984
  %v1073 = vmul.f32 %v555, %v986
  %v1074 = vmul.f32 %v558, %v988
  %v1075 = vmul.f32 %v563, %v990
  %v1076 = vmul.f32 %v566, %v992
  %v1077 = vmul.f32 %v571, %v994
  %v1078 = vmul.f32 %v574, %v996
  %v1079 = vmul.f32 %v579, %v998
  %v1080 = vmul.f32 %v582, %v1000
  %v1081 = vmul.f32 %v587, %v1002
  %v1082 = vmul.f32 %v590, %v1004
  %v1083 = vmul.f32 %v595, %v1006
  %v1084 = vmul.f32 %v598, %v1008
  %v1085 = vmul.f32 %v603, %v1010
  %v1086 = vmul.f32 %v606, %v1012
  %v1087 = vmul.f32 %v611, %v1014
  %v1088 = vmul.f32 %v614, %v1016
  %v1089 = vmul.f32 %v619, %v1018
  %v1090 = vmul.f32 %v622, %v1020
  %v1091 = vmul.f32 %v627, %v1022
  %v1092 = vmul.f32 %v630, %v1024
  %v1093 = vmul.f32 %v635, %v1026
  %v1094 = vmul.f32 %v638, %v1028
  %v1095 = vmul.f32 %v643, %v1030
  %v1096 = vmul.f32 %v646, %v1032
  %v1097 = vpack.c.bf16 %v1034, %v1033
  %v1098 = vpack.c.bf16 %v1036, %v1035
  %v1099 = vpack.c.bf16 %v1038, %v1037
  %v1100 = vpack.c.bf16 %v1040, %v1039
  %v1101 = vpack.c.bf16 %v1042, %v1041
  %v1102 = vpack.c.bf16 %v1044, %v1043
  %v1103 = vpack.c.bf16 %v1046, %v1045
  %v1104 = vpack.c.bf16 %v1048, %v1047
  %v1105 = vpack.c.bf16 %v1050, %v1049
  %v1106 = vpack.c.bf16 %v1052, %v1051
  %v1107 = vpack.c.bf16 %v1054, %v1053
  %v1108 = vpack.c.bf16 %v1056, %v1055
  %v1109 = vpack.c.bf16 %v1058, %v1057
  %v1110 = vpack.c.bf16 %v1060, %v1059
  %v1111 = vpack.c.bf16 %v1062, %v1061
  %v1112 = vpack.c.bf16 %v1064, %v1063
  %v1113 = vpack.c.bf16 %v1066, %v1065
  %v1114 = vpack.c.bf16 %v1068, %v1067
  %v1115 = vpack.c.bf16 %v1070, %v1069
  %v1116 = vpack.c.bf16 %v1072, %v1071
  %v1117 = vpack.c.bf16 %v1074, %v1073
  %v1118 = vpack.c.bf16 %v1076, %v1075
  %v1119 = vpack.c.bf16 %v1078, %v1077
  %v1120 = vpack.c.bf16 %v1080, %v1079
  %v1121 = vpack.c.bf16 %v1082, %v1081
  %v1122 = vpack.c.bf16 %v1084, %v1083
  %v1123 = vpack.c.bf16 %v1086, %v1085
  %v1124 = vpack.c.bf16 %v1088, %v1087
  %v1125 = vpack.c.bf16 %v1090, %v1089
  %v1126 = vpack.c.bf16 %v1092, %v1091
  %v1127 = vpack.c.bf16 %v1094, %v1093
  %v1128 = vpack.c.bf16 %v1096, %v1095
  %v1129 = vld [vmem:[%s4] sm:$0x1]
  %v1130 = vld [vmem:[%s1] sm:$0xf]
  %v1131 = vld [vmem:[%s1 + $0x4] sm:$0xf]
  %v1132 = vld [vmem:[%s1 + $0x8] sm:$0xf]
  %v1133 = vld [vmem:[%s1 + $0xc] sm:$0xf]
  %v1134 = vld [vmem:[%s1 + $0x10] sm:$0xf]
  %v1135 = vld [vmem:[%s1 + $0x14] sm:$0xf]
  %v1136 = vld [vmem:[%s1 + $0x18] sm:$0xf]
  %v1137 = vld [vmem:[%s1 + $0x1c] sm:$0xf]
  %v1138 = vld [vmem:[%s1 + $0x20] sm:$0xf]
  %v1139 = vld [vmem:[%s1 + $0x24] sm:$0xf]
  %v1140 = vld [vmem:[%s1 + $0x28] sm:$0xf]
  %v1141 = vld [vmem:[%s1 + $0x2c] sm:$0xf]
  %v1142 = vld [vmem:[%s1 + $0x30] sm:$0xf]
  %v1143 = vld [vmem:[%s1 + $0x34] sm:$0xf]
  %v1144 = vld [vmem:[%s1 + $0x38] sm:$0xf]
  %v1145 = vld [vmem:[%s1 + $0x3c] sm:$0xf]
  %v1146 = vld [vmem:[%s1 + $0x40] sm:$0xf]
  %v1147 = vld [vmem:[%s1 + $0x44] sm:$0xf]
  %v1148 = vld [vmem:[%s1 + $0x48] sm:$0xf]
  %v1149 = vld [vmem:[%s1 + $0x4c] sm:$0xf]
  %v1150 = vld [vmem:[%s1 + $0x50] sm:$0xf]
  %v1151 = vld [vmem:[%s1 + $0x54] sm:$0xf]
  %v1152 = vld [vmem:[%s1 + $0x58] sm:$0xf]
  %v1153 = vld [vmem:[%s1 + $0x5c] sm:$0xf]
  %v1154 = vld [vmem:[%s1 + $0x60] sm:$0xf]
  %v1155 = vld [vmem:[%s1 + $0x64] sm:$0xf]
  %v1156 = vld [vmem:[%s1 + $0x68] sm:$0xf]
  %v1157 = vld [vmem:[%s1 + $0x6c] sm:$0xf]
  %v1158 = vld [vmem:[%s1 + $0x70] sm:$0xf]
  %v1159 = vld [vmem:[%s1 + $0x74] sm:$0xf]
  %v1160 = vld [vmem:[%s1 + $0x78] sm:$0xf]
  %v1161 = vld [vmem:[%s1 + $0x7c] sm:$0xf]
  %v1162 = vld [vmem:[%s1 + $0x80] sm:$0xf]
  %v1163 = vld [vmem:[%s1 + $0x84] sm:$0xf]
  %v1164 = vld [vmem:[%s1 + $0x88] sm:$0xf]
  %v1165 = vld [vmem:[%s1 + $0x8c] sm:$0xf]
  %v1166 = vld [vmem:[%s1 + $0x90] sm:$0xf]
  %v1167 = vld [vmem:[%s1 + $0x94] sm:$0xf]
  %v1168 = vld [vmem:[%s1 + $0x98] sm:$0xf]
  %v1169 = vld [vmem:[%s1 + $0x9c] sm:$0xf]
  %v1170 = vld [vmem:[%s1 + $0xa0] sm:$0xf]
  %v1171 = vld [vmem:[%s1 + $0xa4] sm:$0xf]
  %v1172 = vld [vmem:[%s1 + $0xa8] sm:$0xf]
  %v1173 = vld [vmem:[%s1 + $0xac] sm:$0xf]
  %v1174 = vld [vmem:[%s1 + $0xb0] sm:$0xf]
  %v1175 = vld [vmem:[%s1 + $0xb4] sm:$0xf]
  %v1176 = vld [vmem:[%s1 + $0xb8] sm:$0xf]
  %v1177 = vld [vmem:[%s1 + $0xbc] sm:$0xf]
  %v1178 = vld [vmem:[%s1 + $0xc0] sm:$0xf]
  %v1179 = vld [vmem:[%s1 + $0xc4] sm:$0xf]
  %v1180 = vld [vmem:[%s1 + $0xc8] sm:$0xf]
  %v1181 = vld [vmem:[%s1 + $0xcc] sm:$0xf]
  %v1182 = vld [vmem:[%s1 + $0xd0] sm:$0xf]
  %v1183 = vld [vmem:[%s1 + $0xd4] sm:$0xf]
  %v1184 = vld [vmem:[%s1 + $0xd8] sm:$0xf]
  %v1185 = vld [vmem:[%s1 + $0xdc] sm:$0xf]
  %v1186 = vld [vmem:[%s1 + $0xe0] sm:$0xf]
  %v1187 = vld [vmem:[%s1 + $0xe4] sm:$0xf]
  %v1188 = vld [vmem:[%s1 + $0xe8] sm:$0xf]
  %v1189 = vld [vmem:[%s1 + $0xec] sm:$0xf]
  %v1190 = vld [vmem:[%s1 + $0xf0] sm:$0xf]
  %v1191 = vld [vmem:[%s1 + $0xf4] sm:$0xf]
  %v1192 = vld [vmem:[%s1 + $0xf8] sm:$0xf]
  %v1193 = vld [vmem:[%s1 + $0xfc] sm:$0xf]
  %v1194 = vld [vmem:[%s5] sm:$0x1]
  %v1259 = vunpack.c.l.b16 %v1130
  %v1260 = vunpack.c.l.b16 %v1131
  %v1261 = vunpack.c.l.b16 %v1132
  %v1262 = vunpack.c.l.b16 %v1133
  %v1263 = vunpack.c.l.b16 %v1134
  %v1264 = vunpack.c.l.b16 %v1135
  %v1265 = vunpack.c.l.b16 %v1136
  %v1266 = vunpack.c.l.b16 %v1137
  %v1267 = vunpack.c.l.b16 %v1138
  %v1268 = vunpack.c.l.b16 %v1139
  %v1269 = vunpack.c.l.b16 %v1140
  %v1270 = vunpack.c.l.b16 %v1141
  %v1271 = vunpack.c.l.b16 %v1142
  %v1272 = vunpack.c.l.b16 %v1143
  %v1273 = vunpack.c.l.b16 %v1144
  %v1274 = vunpack.c.l.b16 %v1145
  %v1275 = vunpack.c.l.b16 %v1146
  %v1276 = vunpack.c.l.b16 %v1147
  %v1277 = vunpack.c.l.b16 %v1148
  %v1278 = vunpack.c.l.b16 %v1149
  %v1279 = vunpack.c.l.b16 %v1150
  %v1280 = vunpack.c.l.b16 %v1151
  %v1281 = vunpack.c.l.b16 %v1152
  %v1282 = vunpack.c.l.b16 %v1153
  %v1283 = vunpack.c.l.b16 %v1154
  %v1284 = vunpack.c.l.b16 %v1155
  %v1285 = vunpack.c.l.b16 %v1156
  %v1286 = vunpack.c.l.b16 %v1157
  %v1287 = vunpack.c.l.b16 %v1158
  %v1288 = vunpack.c.l.b16 %v1159
  %v1289 = vunpack.c.l.b16 %v1160
  %v1290 = vunpack.c.l.b16 %v1161
  %v1291 = vunpack.c.l.b16 %v1162
  %v1292 = vunpack.c.l.b16 %v1163
  %v1293 = vunpack.c.l.b16 %v1164
  %v1294 = vunpack.c.l.b16 %v1165
  %v1295 = vunpack.c.l.b16 %v1166
  %v1296 = vunpack.c.l.b16 %v1167
  %v1297 = vunpack.c.l.b16 %v1168
  %v1298 = vunpack.c.l.b16 %v1169
  %v1299 = vunpack.c.l.b16 %v1170
  %v1300 = vunpack.c.l.b16 %v1171
  %v1301 = vunpack.c.l.b16 %v1172
  %v1302 = vunpack.c.l.b16 %v1173
  %v1303 = vunpack.c.l.b16 %v1174
  %v1304 = vunpack.c.l.b16 %v1175
  %v1305 = vunpack.c.l.b16 %v1176
  %v1306 = vunpack.c.l.b16 %v1177
  %v1307 = vunpack.c.l.b16 %v1178
  %v1308 = vunpack.c.l.b16 %v1179
  %v1309 = vunpack.c.l.b16 %v1180
  %v1310 = vunpack.c.l.b16 %v1181
  %v1311 = vunpack.c.l.b16 %v1182
  %v1312 = vunpack.c.l.b16 %v1183
  %v1313 = vunpack.c.l.b16 %v1184
  %v1314 = vunpack.c.l.b16 %v1185
  %v1315 = vunpack.c.l.b16 %v1186
  %v1316 = vunpack.c.l.b16 %v1187
  %v1317 = vunpack.c.l.b16 %v1188
  %v1318 = vunpack.c.l.b16 %v1189
  %v1319 = vunpack.c.l.b16 %v1190
  %v1320 = vunpack.c.l.b16 %v1191
  %v1321 = vunpack.c.l.b16 %v1192
  %v1322 = vunpack.c.l.b16 %v1193
  %v1323 = vpack.c.b16 %v1260, %v1259
  %v1324 = vpack.c.b16 %v1262, %v1261
  %v1325 = vpack.c.b16 %v1264, %v1263
  %v1326 = vpack.c.b16 %v1266, %v1265
  %v1327 = vpack.c.b16 %v1268, %v1267
  %v1328 = vpack.c.b16 %v1270, %v1269
  %v1329 = vpack.c.b16 %v1272, %v1271
  %v1330 = vpack.c.b16 %v1274, %v1273
  %v1331 = vpack.c.b16 %v1276, %v1275
  %v1332 = vpack.c.b16 %v1278, %v1277
  %v1333 = vpack.c.b16 %v1280, %v1279
  %v1334 = vpack.c.b16 %v1282, %v1281
  %v1335 = vpack.c.b16 %v1284, %v1283
  %v1336 = vpack.c.b16 %v1286, %v1285
  %v1337 = vpack.c.b16 %v1288, %v1287
  %v1338 = vpack.c.b16 %v1290, %v1289
  %v1339 = vpack.c.b16 %v1292, %v1291
  %v1340 = vpack.c.b16 %v1294, %v1293
  %v1341 = vpack.c.b16 %v1296, %v1295
  %v1342 = vpack.c.b16 %v1298, %v1297
  %v1343 = vpack.c.b16 %v1300, %v1299
  %v1344 = vpack.c.b16 %v1302, %v1301
  %v1345 = vpack.c.b16 %v1304, %v1303
  %v1346 = vpack.c.b16 %v1306, %v1305
  %v1347 = vpack.c.b16 %v1308, %v1307
  %v1348 = vpack.c.b16 %v1310, %v1309
  %v1349 = vpack.c.b16 %v1312, %v1311
  %v1350 = vpack.c.b16 %v1314, %v1313
  %v1351 = vpack.c.b16 %v1316, %v1315
  %v1352 = vpack.c.b16 %v1318, %v1317
  %v1353 = vpack.c.b16 %v1320, %v1319
  %v1354 = vpack.c.b16 %v1322, %v1321
  %v1356 = vsel %vm259, %v1323, 0
  %v1359 = vsel %vm259, %v1324, 0
  %v1362 = vsel %vm259, %v1325, 0
  %v1365 = vsel %vm259, %v1326, 0
  %v1368 = vsel %vm259, %v1327, 0
  %v1371 = vsel %vm259, %v1328, 0
  %v1374 = vsel %vm259, %v1329, 0
  %v1377 = vsel %vm259, %v1330, 0
  %v1380 = vsel %vm259, %v1331, 0
  %v1383 = vsel %vm259, %v1332, 0
  %v1386 = vsel %vm259, %v1333, 0
  %v1389 = vsel %vm259, %v1334, 0
  %v1392 = vsel %vm259, %v1335, 0
  %v1395 = vsel %vm259, %v1336, 0
  %v1398 = vsel %vm259, %v1337, 0
  %v1401 = vsel %vm259, %v1338, 0
  %v1404 = vsel %vm259, %v1339, 0
  %v1407 = vsel %vm259, %v1340, 0
  %v1410 = vsel %vm259, %v1341, 0
  %v1413 = vsel %vm259, %v1342, 0
  %v1416 = vsel %vm259, %v1343, 0
  %v1419 = vsel %vm259, %v1344, 0
  %v1422 = vsel %vm259, %v1345, 0
  %v1425 = vsel %vm259, %v1346, 0
  %v1428 = vsel %vm259, %v1347, 0
  %v1431 = vsel %vm259, %v1348, 0
  %v1434 = vsel %vm259, %v1349, 0
  %v1437 = vsel %vm259, %v1350, 0
  %v1440 = vsel %vm259, %v1351, 0
  %v1443 = vsel %vm259, %v1352, 0
  %v1446 = vsel %vm259, %v1353, 0
  %v1449 = vsel %vm259, %v1354, 0
  %v1452 = vsel %vm356, %v1194, 0
  %1454 = vmatprep.subr.bf16.mxu0 0
  %1455 = vmatpush1.bf16.msra.mxu0 %v1452
  %1456 = vmatprep.subr.bf16.mxu0 0
  %1457 = vmatpush1.bf16.msra.mxu0 0
  %1458 = vmatprep.subr.bf16.mxu0 0
  %1459 = vmatpush1.bf16.msra.mxu0 0
  %1460 = vmatprep.subr.bf16.mxu0 0
  %1461 = vmatpush1.bf16.msra.mxu0 0
  %1462 = vmatprep.subr.bf16.mxu0 0
  %1463 = vmatpush1.bf16.msra.mxu0 0
  %1464 = vmatprep.subr.bf16.mxu0 0
  %1465 = vmatpush1.bf16.msra.mxu0 0
  %1466 = vmatprep.subr.bf16.mxu0 0
  %1467 = vmatpush1.bf16.msra.mxu0 0
  %1468 = vmatprep.subr.bf16.mxu0 0
  %1469 = vmatpush1.bf16.msra.mxu0 0
  %1470 = vmatprep.subr.bf16.mxu0 0
  %1471 = vmatpush1.bf16.msra.mxu0 0
  %1472 = vmatprep.subr.bf16.mxu0 0
  %1473 = vmatpush1.bf16.msra.mxu0 0
  %1474 = vmatprep.subr.bf16.mxu0 0
  %1475 = vmatpush1.bf16.msra.mxu0 0
  %1476 = vmatprep.subr.bf16.mxu0 0
  %1477 = vmatpush1.bf16.msra.mxu0 0
  %1478 = vmatprep.subr.bf16.mxu0 0
  %1479 = vmatpush1.bf16.msra.mxu0 0
  %1480 = vmatprep.subr.bf16.mxu0 0
  %1481 = vmatpush1.bf16.msra.mxu0 0
  %1482 = vmatprep.subr.bf16.mxu0 0
  %1483 = vmatpush1.bf16.msra.mxu0 0
  %1484 = vmatprep.subr.bf16.mxu0 0
  %1485 = vmatpush1.bf16.msra.mxu0 0
  %1486 = vmatprep.mubr.bf16.mxu0 0
  %1487 = vmatmul.mubr.bf16.gmra.mrb[0].mxu0 %v1356
  %v1488 = vpop.f32.mrb[0].mxu0
  %v1489 = vadd.f32 0.0, %v1488
  %v1490 = vpop.f32.mrb[0].mxu0
  %v1491 = vpop.f32.mrb[0].mxu0
  %v1492 = vadd.f32 0.0, %v1491
  %v1493 = vpop.f32.mrb[0].mxu0
  %1494 = vmatprep.mubr.bf16.mxu0 0
  %1495 = vmatmul.mubr.bf16.gmra.mrb[0].mxu0 %v1359
  %v1496 = vpop.f32.mrb[0].mxu0
  %v1497 = vadd.f32 0.0, %v1496
  %v1498 = vpop.f32.mrb[0].mxu0
  %v1499 = vpop.f32.mrb[0].mxu0
  %v1500 = vadd.f32 0.0, %v1499
  %v1501 = vpop.f32.mrb[0].mxu0
  %1502 = vmatprep.mubr.bf16.mxu0 0
  %1503 = vmatmul.mubr.bf16.gmra.mrb[0].mxu0 %v1362
  %v1504 = vpop.f32.mrb[0].mxu0
  %v1505 = vadd.f32 0.0, %v1504
  %v1506 = vpop.f32.mrb[0].mxu0
  %v1507 = vpop.f32.mrb[0].mxu0
  %v1508 = vadd.f32 0.0, %v1507
  %v1509 = vpop.f32.mrb[0].mxu0
  %1510 = vmatprep.mubr.bf16.mxu0 0
  %1511 = vmatmul.mubr.bf16.gmra.mrb[0].mxu0 %v1365
  %v1512 = vpop.f32.mrb[0].mxu0
  %v1513 = vadd.f32 0.0, %v1512
  %v1514 = vpop.f32.mrb[0].mxu0
  %v1515 = vpop.f32.mrb[0].mxu0
  %v1516 = vadd.f32 0.0, %v1515
  %v1517 = vpop.f32.mrb[0].mxu0
  %1518 = vmatprep.mubr.bf16.mxu0 0
  %1519 = vmatmul.mubr.bf16.gmra.mrb[0].mxu0 %v1368
  %v1520 = vpop.f32.mrb[0].mxu0
  %v1521 = vadd.f32 0.0, %v1520
  %v1522 = vpop.f32.mrb[0].mxu0
  %v1523 = vpop.f32.mrb[0].mxu0
  %v1524 = vadd.f32 0.0, %v1523
  %v1525 = vpop.f32.mrb[0].mxu0
  %1526 = vmatprep.mubr.bf16.mxu0 0
  %1527 = vmatmul.mubr.bf16.gmra.mrb[0].mxu0 %v1371
  %v1528 = vpop.f32.mrb[0].mxu0
  %v1529 = vadd.f32 0.0, %v1528
  %v1530 = vpop.f32.mrb[0].mxu0
  %v1531 = vpop.f32.mrb[0].mxu0
  %v1532 = vadd.f32 0.0, %v1531
  %v1533 = vpop.f32.mrb[0].mxu0
  %1534 = vmatprep.mubr.bf16.mxu0 0
  %1535 = vmatmul.mubr.bf16.gmra.mrb[0].mxu0 %v1374
  %v1536 = vpop.f32.mrb[0].mxu0
  %v1537 = vadd.f32 0.0, %v1536
  %v1538 = vpop.f32.mrb[0].mxu0
  %v1539 = vpop.f32.mrb[0].mxu0
  %v1540 = vadd.f32 0.0, %v1539
  %v1541 = vpop.f32.mrb[0].mxu0
  %1542 = vmatprep.mubr.bf16.mxu0 0
  %1543 = vmatmul.mubr.bf16.gmra.mrb[0].mxu0 %v1377
  %v1544 = vpop.f32.mrb[0].mxu0
  %v1545 = vadd.f32 0.0, %v1544
  %v1546 = vpop.f32.mrb[0].mxu0
  %v1547 = vpop.f32.mrb[0].mxu0
  %v1548 = vadd.f32 0.0, %v1547
  %v1549 = vpop.f32.mrb[0].mxu0
  %1550 = vmatprep.mubr.bf16.mxu0 0
  %1551 = vmatmul.mubr.bf16.gmra.mrb[0].mxu0 %v1380
  %v1552 = vpop.f32.mrb[0].mxu0
  %v1553 = vadd.f32 0.0, %v1552
  %v1554 = vpop.f32.mrb[0].mxu0
  %v1555 = vpop.f32.mrb[0].mxu0
  %v1556 = vadd.f32 0.0, %v1555
  %v1557 = vpop.f32.mrb[0].mxu0
  %1558 = vmatprep.mubr.bf16.mxu0 0
  %1559 = vmatmul.mubr.bf16.gmra.mrb[0].mxu0 %v1383
  %v1560 = vpop.f32.mrb[0].mxu0
  %v1561 = vadd.f32 0.0, %v1560
  %v1562 = vpop.f32.mrb[0].mxu0
  %v1563 = vpop.f32.mrb[0].mxu0
  %v1564 = vadd.f32 0.0, %v1563
  %v1565 = vpop.f32.mrb[0].mxu0
  %1566 = vmatprep.mubr.bf16.mxu0 0
  %1567 = vmatmul.mubr.bf16.gmra.mrb[0].mxu0 %v1386
  %v1568 = vpop.f32.mrb[0].mxu0
  %v1569 = vadd.f32 0.0, %v1568
  %v1570 = vpop.f32.mrb[0].mxu0
  %v1571 = vpop.f32.mrb[0].mxu0
  %v1572 = vadd.f32 0.0, %v1571
  %v1573 = vpop.f32.mrb[0].mxu0
  %1574 = vmatprep.mubr.bf16.mxu0 0
  %1575 = vmatmul.mubr.bf16.gmra.mrb[0].mxu0 %v1389
  %v1576 = vpop.f32.mrb[0].mxu0
  %v1577 = vadd.f32 0.0, %v1576
  %v1578 = vpop.f32.mrb[0].mxu0
  %v1579 = vpop.f32.mrb[0].mxu0
  %v1580 = vadd.f32 0.0, %v1579
  %v1581 = vpop.f32.mrb[0].mxu0
  %1582 = vmatprep.mubr.bf16.mxu0 0
  %1583 = vmatmul.mubr.bf16.gmra.mrb[0].mxu0 %v1392
  %v1584 = vpop.f32.mrb[0].mxu0
  %v1585 = vadd.f32 0.0, %v1584
  %v1586 = vpop.f32.mrb[0].mxu0
  %v1587 = vpop.f32.mrb[0].mxu0
  %v1588 = vadd.f32 0.0, %v1587
  %v1589 = vpop.f32.mrb[0].mxu0
  %1590 = vmatprep.mubr.bf16.mxu0 0
  %1591 = vmatmul.mubr.bf16.gmra.mrb[0].mxu0 %v1395
  %v1592 = vpop.f32.mrb[0].mxu0
  %v1593 = vadd.f32 0.0, %v1592
  %v1594 = vpop.f32.mrb[0].mxu0
  %v1595 = vpop.f32.mrb[0].mxu0
  %v1596 = vadd.f32 0.0, %v1595
  %v1597 = vpop.f32.mrb[0].mxu0
  %1598 = vmatprep.mubr.bf16.mxu0 0
  %1599 = vmatmul.mubr.bf16.gmra.mrb[0].mxu0 %v1398
  %v1600 = vpop.f32.mrb[0].mxu0
  %v1601 = vadd.f32 0.0, %v1600
  %v1602 = vpop.f32.mrb[0].mxu0
  %v1603 = vpop.f32.mrb[0].mxu0
  %v1604 = vadd.f32 0.0, %v1603
  %v1605 = vpop.f32.mrb[0].mxu0
  %1606 = vmatprep.mubr.bf16.mxu0 0
  %1607 = vmatmul.mubr.bf16.gmra.mrb[0].mxu0 %v1401
  %v1608 = vpop.f32.mrb[0].mxu0
  %v1609 = vadd.f32 0.0, %v1608
  %v1610 = vpop.f32.mrb[0].mxu0
  %v1611 = vpop.f32.mrb[0].mxu0
  %v1612 = vadd.f32 0.0, %v1611
  %v1613 = vpop.f32.mrb[0].mxu0
  %1614 = vmatprep.mubr.bf16.mxu0 0
  %1615 = vmatmul.mubr.bf16.gmra.mrb[0].mxu0 %v1404
  %v1616 = vpop.f32.mrb[0].mxu0
  %v1617 = vadd.f32 0.0, %v1616
  %v1618 = vpop.f32.mrb[0].mxu0
  %v1619 = vpop.f32.mrb[0].mxu0
  %v1620 = vadd.f32 0.0, %v1619
  %v1621 = vpop.f32.mrb[0].mxu0
  %1622 = vmatprep.mubr.bf16.mxu0 0
  %1623 = vmatmul.mubr.bf16.gmra.mrb[0].mxu0 %v1407
  %v1624 = vpop.f32.mrb[0].mxu0
  %v1625 = vadd.f32 0.0, %v1624
  %v1626 = vpop.f32.mrb[0].mxu0
  %v1627 = vpop.f32.mrb[0].mxu0
  %v1628 = vadd.f32 0.0, %v1627
  %v1629 = vpop.f32.mrb[0].mxu0
  %1630 = vmatprep.mubr.bf16.mxu0 0
  %1631 = vmatmul.mubr.bf16.gmra.mrb[0].mxu0 %v1410
  %v1632 = vpop.f32.mrb[0].mxu0
  %v1633 = vadd.f32 0.0, %v1632
  %v1634 = vpop.f32.mrb[0].mxu0
  %v1635 = vpop.f32.mrb[0].mxu0
  %v1636 = vadd.f32 0.0, %v1635
  %v1637 = vpop.f32.mrb[0].mxu0
  %1638 = vmatprep.mubr.bf16.mxu0 0
  %1639 = vmatmul.mubr.bf16.gmra.mrb[0].mxu0 %v1413
  %v1640 = vpop.f32.mrb[0].mxu0
  %v1641 = vadd.f32 0.0, %v1640
  %v1642 = vpop.f32.mrb[0].mxu0
  %v1643 = vpop.f32.mrb[0].mxu0
  %v1644 = vadd.f32 0.0, %v1643
  %v1645 = vpop.f32.mrb[0].mxu0
  %1646 = vmatprep.mubr.bf16.mxu0 0
  %1647 = vmatmul.mubr.bf16.gmra.mrb[0].mxu0 %v1416
  %v1648 = vpop.f32.mrb[0].mxu0
  %v1649 = vadd.f32 0.0, %v1648
  %v1650 = vpop.f32.mrb[0].mxu0
  %v1651 = vpop.f32.mrb[0].mxu0
  %v1652 = vadd.f32 0.0, %v1651
  %v1653 = vpop.f32.mrb[0].mxu0
  %1654 = vmatprep.mubr.bf16.mxu0 0
  %1655 = vmatmul.mubr.bf16.gmra.mrb[0].mxu0 %v1419
  %v1656 = vpop.f32.mrb[0].mxu0
  %v1657 = vadd.f32 0.0, %v1656
  %v1658 = vpop.f32.mrb[0].mxu0
  %v1659 = vpop.f32.mrb[0].mxu0
  %v1660 = vadd.f32 0.0, %v1659
  %v1661 = vpop.f32.mrb[0].mxu0
  %1662 = vmatprep.mubr.bf16.mxu0 0
  %1663 = vmatmul.mubr.bf16.gmra.mrb[0].mxu0 %v1422
  %v1664 = vpop.f32.mrb[0].mxu0
  %v1665 = vadd.f32 0.0, %v1664
  %v1666 = vpop.f32.mrb[0].mxu0
  %v1667 = vpop.f32.mrb[0].mxu0
  %v1668 = vadd.f32 0.0, %v1667
  %v1669 = vpop.f32.mrb[0].mxu0
  %1670 = vmatprep.mubr.bf16.mxu0 0
  %1671 = vmatmul.mubr.bf16.gmra.mrb[0].mxu0 %v1425
  %v1672 = vpop.f32.mrb[0].mxu0
  %v1673 = vadd.f32 0.0, %v1672
  %v1674 = vpop.f32.mrb[0].mxu0
  %v1675 = vpop.f32.mrb[0].mxu0
  %v1676 = vadd.f32 0.0, %v1675
  %v1677 = vpop.f32.mrb[0].mxu0
  %1678 = vmatprep.mubr.bf16.mxu0 0
  %1679 = vmatmul.mubr.bf16.gmra.mrb[0].mxu0 %v1428
  %v1680 = vpop.f32.mrb[0].mxu0
  %v1681 = vadd.f32 0.0, %v1680
  %v1682 = vpop.f32.mrb[0].mxu0
  %v1683 = vpop.f32.mrb[0].mxu0
  %v1684 = vadd.f32 0.0, %v1683
  %v1685 = vpop.f32.mrb[0].mxu0
  %1686 = vmatprep.mubr.bf16.mxu0 0
  %1687 = vmatmul.mubr.bf16.gmra.mrb[0].mxu0 %v1431
  %v1688 = vpop.f32.mrb[0].mxu0
  %v1689 = vadd.f32 0.0, %v1688
  %v1690 = vpop.f32.mrb[0].mxu0
  %v1691 = vpop.f32.mrb[0].mxu0
  %v1692 = vadd.f32 0.0, %v1691
  %v1693 = vpop.f32.mrb[0].mxu0
  %1694 = vmatprep.mubr.bf16.mxu0 0
  %1695 = vmatmul.mubr.bf16.gmra.mrb[0].mxu0 %v1434
  %v1696 = vpop.f32.mrb[0].mxu0
  %v1697 = vadd.f32 0.0, %v1696
  %v1698 = vpop.f32.mrb[0].mxu0
  %v1699 = vpop.f32.mrb[0].mxu0
  %v1700 = vadd.f32 0.0, %v1699
  %v1701 = vpop.f32.mrb[0].mxu0
  %1702 = vmatprep.mubr.bf16.mxu0 0
  %1703 = vmatmul.mubr.bf16.gmra.mrb[0].mxu0 %v1437
  %v1704 = vpop.f32.mrb[0].mxu0
  %v1705 = vadd.f32 0.0, %v1704
  %v1706 = vpop.f32.mrb[0].mxu0
  %v1707 = vpop.f32.mrb[0].mxu0
  %v1708 = vadd.f32 0.0, %v1707
  %v1709 = vpop.f32.mrb[0].mxu0
  %1710 = vmatprep.mubr.bf16.mxu0 0
  %1711 = vmatmul.mubr.bf16.gmra.mrb[0].mxu0 %v1440
  %v1712 = vpop.f32.mrb[0].mxu0
  %v1713 = vadd.f32 0.0, %v1712
  %v1714 = vpop.f32.mrb[0].mxu0
  %v1715 = vpop.f32.mrb[0].mxu0
  %v1716 = vadd.f32 0.0, %v1715
  %v1717 = vpop.f32.mrb[0].mxu0
  %1718 = vmatprep.mubr.bf16.mxu0 0
  %1719 = vmatmul.mubr.bf16.gmra.mrb[0].mxu0 %v1443
  %v1720 = vpop.f32.mrb[0].mxu0
  %v1721 = vadd.f32 0.0, %v1720
  %v1722 = vpop.f32.mrb[0].mxu0
  %v1723 = vpop.f32.mrb[0].mxu0
  %v1724 = vadd.f32 0.0, %v1723
  %v1725 = vpop.f32.mrb[0].mxu0
  %1726 = vmatprep.mubr.bf16.mxu0 0
  %1727 = vmatmul.mubr.bf16.gmra.mrb[0].mxu0 %v1446
  %v1728 = vpop.f32.mrb[0].mxu0
  %v1729 = vadd.f32 0.0, %v1728
  %v1730 = vpop.f32.mrb[0].mxu0
  %v1731 = vpop.f32.mrb[0].mxu0
  %v1732 = vadd.f32 0.0, %v1731
  %v1733 = vpop.f32.mrb[0].mxu0
  %1734 = vmatprep.mubr.bf16.mxu0 0
  %1735 = vmatmul.mubr.bf16.gmra.mrb[0].mxu0 %v1449
  %v1736 = vpop.f32.mrb[0].mxu0
  %v1737 = vadd.f32 0.0, %v1736
  %v1738 = vpop.f32.mrb[0].mxu0
  %v1739 = vpop.f32.mrb[0].mxu0
  %v1740 = vadd.f32 0.0, %v1739
  %v1741 = vpop.f32.mrb[0].mxu0
  %1742 = vdwg.mxu0
  %v1744 = vsel %vm259, %v1097, 0
  %v1747 = vsel %vm259, %v1098, 0
  %v1750 = vsel %vm259, %v1099, 0
  %v1753 = vsel %vm259, %v1100, 0
  %v1756 = vsel %vm259, %v1101, 0
  %v1759 = vsel %vm259, %v1102, 0
  %v1762 = vsel %vm259, %v1103, 0
  %v1765 = vsel %vm259, %v1104, 0
  %v1768 = vsel %vm259, %v1105, 0
  %v1771 = vsel %vm259, %v1106, 0
  %v1774 = vsel %vm259, %v1107, 0
  %v1777 = vsel %vm259, %v1108, 0
  %v1780 = vsel %vm259, %v1109, 0
  %v1783 = vsel %vm259, %v1110, 0
  %v1786 = vsel %vm259, %v1111, 0
  %v1789 = vsel %vm259, %v1112, 0
  %v1792 = vsel %vm259, %v1113, 0
  %v1795 = vsel %vm259, %v1114, 0
  %v1798 = vsel %vm259, %v1115, 0
  %v1801 = vsel %vm259, %v1116, 0
  %v1804 = vsel %vm259, %v1117, 0
  %v1807 = vsel %vm259, %v1118, 0
  %v1810 = vsel %vm259, %v1119, 0
  %v1813 = vsel %vm259, %v1120, 0
  %v1816 = vsel %vm259, %v1121, 0
  %v1819 = vsel %vm259, %v1122, 0
  %v1822 = vsel %vm259, %v1123, 0
  %v1825 = vsel %vm259, %v1124, 0
  %v1828 = vsel %vm259, %v1125, 0
  %v1831 = vsel %vm259, %v1126, 0
  %v1834 = vsel %vm259, %v1127, 0
  %v1837 = vsel %vm259, %v1128, 0
  %v1840 = vsel %vm356, %v1129, 0
  %1842 = vmatprep.subr.bf16.mxu0 0
  %1843 = vmatpush1.bf16.msra.mxu0 %v1840
  %1844 = vmatprep.subr.bf16.mxu0 0
  %1845 = vmatpush1.bf16.msra.mxu0 0
  %1846 = vmatprep.subr.bf16.mxu0 0
  %1847 = vmatpush1.bf16.msra.mxu0 0
  %1848 = vmatprep.subr.bf16.mxu0 0
  %1849 = vmatpush1.bf16.msra.mxu0 0
  %1850 = vmatprep.subr.bf16.mxu0 0
  %1851 = vmatpush1.bf16.msra.mxu0 0
  %1852 = vmatprep.subr.bf16.mxu0 0
  %1853 = vmatpush1.bf16.msra.mxu0 0
  %1854 = vmatprep.subr.bf16.mxu0 0
  %1855 = vmatpush1.bf16.msra.mxu0 0
  %1856 = vmatprep.subr.bf16.mxu0 0
  %1857 = vmatpush1.bf16.msra.mxu0 0
  %1858 = vmatprep.subr.bf16.mxu0 0
  %1859 = vmatpush1.bf16.msra.mxu0 0
  %1860 = vmatprep.subr.bf16.mxu0 0
  %1861 = vmatpush1.bf16.msra.mxu0 0
  %1862 = vmatprep.subr.bf16.mxu0 0
  %1863 = vmatpush1.bf16.msra.mxu0 0
  %1864 = vmatprep.subr.bf16.mxu0 0
  %1865 = vmatpush1.bf16.msra.mxu0 0
  %1866 = vmatprep.subr.bf16.mxu0 0
  %1867 = vmatpush1.bf16.msra.mxu0 0
  %1868 = vmatprep.subr.bf16.mxu0 0
  %1869 = vmatpush1.bf16.msra.mxu0 0
  %1870 = vmatprep.subr.bf16.mxu0 0
  %1871 = vmatpush1.bf16.msra.mxu0 0
  %1872 = vmatprep.subr.bf16.mxu0 0
  %1873 = vmatpush1.bf16.msra.mxu0 0
  %1874 = vmatprep.mubr.bf16.mxu0 0
  %1875 = vmatmul.mubr.bf16.gmra.mrb[0].mxu0 %v1744
  %v1876 = vpop.f32.mrb[0].mxu0
  %v1877 = vadd.f32 %v1489, %v1876
  %v1878 = vpop.f32.mrb[0].mxu0
  %v1879 = vpop.f32.mrb[0].mxu0
  %v1880 = vadd.f32 %v1492, %v1879
  %v1881 = vpop.f32.mrb[0].mxu0
  %1882 = vmatprep.mubr.bf16.mxu0 0
  %1883 = vmatmul.mubr.bf16.gmra.mrb[0].mxu0 %v1747
  %v1884 = vpop.f32.mrb[0].mxu0
  %v1885 = vadd.f32 %v1497, %v1884
  %v1886 = vpop.f32.mrb[0].mxu0
  %v1887 = vpop.f32.mrb[0].mxu0
  %v1888 = vadd.f32 %v1500, %v1887
  %v1889 = vpop.f32.mrb[0].mxu0
  %1890 = vmatprep.mubr.bf16.mxu0 0
  %1891 = vmatmul.mubr.bf16.gmra.mrb[0].mxu0 %v1750
  %v1892 = vpop.f32.mrb[0].mxu0
  %v1893 = vadd.f32 %v1505, %v1892
  %v1894 = vpop.f32.mrb[0].mxu0
  %v1895 = vpop.f32.mrb[0].mxu0
  %v1896 = vadd.f32 %v1508, %v1895
  %v1897 = vpop.f32.mrb[0].mxu0
  %1898 = vmatprep.mubr.bf16.mxu0 0
  %1899 = vmatmul.mubr.bf16.gmra.mrb[0].mxu0 %v1753
  %v1900 = vpop.f32.mrb[0].mxu0
  %v1901 = vadd.f32 %v1513, %v1900
  %v1902 = vpop.f32.mrb[0].mxu0
  %v1903 = vpop.f32.mrb[0].mxu0
  %v1904 = vadd.f32 %v1516, %v1903
  %v1905 = vpop.f32.mrb[0].mxu0
  %1906 = vmatprep.mubr.bf16.mxu0 0
  %1907 = vmatmul.mubr.bf16.gmra.mrb[0].mxu0 %v1756
  %v1908 = vpop.f32.mrb[0].mxu0
  %v1909 = vadd.f32 %v1521, %v1908
  %v1910 = vpop.f32.mrb[0].mxu0
  %v1911 = vpop.f32.mrb[0].mxu0
  %v1912 = vadd.f32 %v1524, %v1911
  %v1913 = vpop.f32.mrb[0].mxu0
  %1914 = vmatprep.mubr.bf16.mxu0 0
  %1915 = vmatmul.mubr.bf16.gmra.mrb[0].mxu0 %v1759
  %v1916 = vpop.f32.mrb[0].mxu0
  %v1917 = vadd.f32 %v1529, %v1916
  %v1918 = vpop.f32.mrb[0].mxu0
  %v1919 = vpop.f32.mrb[0].mxu0
  %v1920 = vadd.f32 %v1532, %v1919
  %v1921 = vpop.f32.mrb[0].mxu0
  %1922 = vmatprep.mubr.bf16.mxu0 0
  %1923 = vmatmul.mubr.bf16.gmra.mrb[0].mxu0 %v1762
  %v1924 = vpop.f32.mrb[0].mxu0
  %v1925 = vadd.f32 %v1537, %v1924
  %v1926 = vpop.f32.mrb[0].mxu0
  %v1927 = vpop.f32.mrb[0].mxu0
  %v1928 = vadd.f32 %v1540, %v1927
  %v1929 = vpop.f32.mrb[0].mxu0
  %1930 = vmatprep.mubr.bf16.mxu0 0
  %1931 = vmatmul.mubr.bf16.gmra.mrb[0].mxu0 %v1765
  %v1932 = vpop.f32.mrb[0].mxu0
  %v1933 = vadd.f32 %v1545, %v1932
  %v1934 = vpop.f32.mrb[0].mxu0
  %v1935 = vpop.f32.mrb[0].mxu0
  %v1936 = vadd.f32 %v1548, %v1935
  %v1937 = vpop.f32.mrb[0].mxu0
  %1938 = vmatprep.mubr.bf16.mxu0 0
  %1939 = vmatmul.mubr.bf16.gmra.mrb[0].mxu0 %v1768
  %v1940 = vpop.f32.mrb[0].mxu0
  %v1941 = vadd.f32 %v1553, %v1940
  %v1942 = vpop.f32.mrb[0].mxu0
  %v1943 = vpop.f32.mrb[0].mxu0
  %v1944 = vadd.f32 %v1556, %v1943
  %v1945 = vpop.f32.mrb[0].mxu0
  %1946 = vmatprep.mubr.bf16.mxu0 0
  %1947 = vmatmul.mubr.bf16.gmra.mrb[0].mxu0 %v1771
  %v1948 = vpop.f32.mrb[0].mxu0
  %v1949 = vadd.f32 %v1561, %v1948
  %v1950 = vpop.f32.mrb[0].mxu0
  %v1951 = vpop.f32.mrb[0].mxu0
  %v1952 = vadd.f32 %v1564, %v1951
  %v1953 = vpop.f32.mrb[0].mxu0
  %1954 = vmatprep.mubr.bf16.mxu0 0
  %1955 = vmatmul.mubr.bf16.gmra.mrb[0].mxu0 %v1774
  %v1956 = vpop.f32.mrb[0].mxu0
  %v1957 = vadd.f32 %v1569, %v1956
  %v1958 = vpop.f32.mrb[0].mxu0
  %v1959 = vpop.f32.mrb[0].mxu0
  %v1960 = vadd.f32 %v1572, %v1959
  %v1961 = vpop.f32.mrb[0].mxu0
  %1962 = vmatprep.mubr.bf16.mxu0 0
  %1963 = vmatmul.mubr.bf16.gmra.mrb[0].mxu0 %v1777
  %v1964 = vpop.f32.mrb[0].mxu0
  %v1965 = vadd.f32 %v1577, %v1964
  %v1966 = vpop.f32.mrb[0].mxu0
  %v1967 = vpop.f32.mrb[0].mxu0
  %v1968 = vadd.f32 %v1580, %v1967
  %v1969 = vpop.f32.mrb[0].mxu0
  %1970 = vmatprep.mubr.bf16.mxu0 0
  %1971 = vmatmul.mubr.bf16.gmra.mrb[0].mxu0 %v1780
  %v1972 = vpop.f32.mrb[0].mxu0
  %v1973 = vadd.f32 %v1585, %v1972
  %v1974 = vpop.f32.mrb[0].mxu0
  %v1975 = vpop.f32.mrb[0].mxu0
  %v1976 = vadd.f32 %v1588, %v1975
  %v1977 = vpop.f32.mrb[0].mxu0
  %1978 = vmatprep.mubr.bf16.mxu0 0
  %1979 = vmatmul.mubr.bf16.gmra.mrb[0].mxu0 %v1783
  %v1980 = vpop.f32.mrb[0].mxu0
  %v1981 = vadd.f32 %v1593, %v1980
  %v1982 = vpop.f32.mrb[0].mxu0
  %v1983 = vpop.f32.mrb[0].mxu0
  %v1984 = vadd.f32 %v1596, %v1983
  %v1985 = vpop.f32.mrb[0].mxu0
  %1986 = vmatprep.mubr.bf16.mxu0 0
  %1987 = vmatmul.mubr.bf16.gmra.mrb[0].mxu0 %v1786
  %v1988 = vpop.f32.mrb[0].mxu0
  %v1989 = vadd.f32 %v1601, %v1988
  %v1990 = vpop.f32.mrb[0].mxu0
  %v1991 = vpop.f32.mrb[0].mxu0
  %v1992 = vadd.f32 %v1604, %v1991
  %v1993 = vpop.f32.mrb[0].mxu0
  %1994 = vmatprep.mubr.bf16.mxu0 0
  %1995 = vmatmul.mubr.bf16.gmra.mrb[0].mxu0 %v1789
  %v1996 = vpop.f32.mrb[0].mxu0
  %v1997 = vadd.f32 %v1609, %v1996
  %v1998 = vpop.f32.mrb[0].mxu0
  %v1999 = vpop.f32.mrb[0].mxu0
  %v2000 = vadd.f32 %v1612, %v1999
  %v2001 = vpop.f32.mrb[0].mxu0
  %2002 = vmatprep.mubr.bf16.mxu0 0
  %2003 = vmatmul.mubr.bf16.gmra.mrb[0].mxu0 %v1792
  %v2004 = vpop.f32.mrb[0].mxu0
  %v2005 = vadd.f32 %v1617, %v2004
  %v2006 = vpop.f32.mrb[0].mxu0
  %v2007 = vpop.f32.mrb[0].mxu0
  %v2008 = vadd.f32 %v1620, %v2007
  %v2009 = vpop.f32.mrb[0].mxu0
  %2010 = vmatprep.mubr.bf16.mxu0 0
  %2011 = vmatmul.mubr.bf16.gmra.mrb[0].mxu0 %v1795
  %v2012 = vpop.f32.mrb[0].mxu0
  %v2013 = vadd.f32 %v1625, %v2012
  %v2014 = vpop.f32.mrb[0].mxu0
  %v2015 = vpop.f32.mrb[0].mxu0
  %v2016 = vadd.f32 %v1628, %v2015
  %v2017 = vpop.f32.mrb[0].mxu0
  %2018 = vmatprep.mubr.bf16.mxu0 0
  %2019 = vmatmul.mubr.bf16.gmra.mrb[0].mxu0 %v1798
  %v2020 = vpop.f32.mrb[0].mxu0
  %v2021 = vadd.f32 %v1633, %v2020
  %v2022 = vpop.f32.mrb[0].mxu0
  %v2023 = vpop.f32.mrb[0].mxu0
  %v2024 = vadd.f32 %v1636, %v2023
  %v2025 = vpop.f32.mrb[0].mxu0
  %2026 = vmatprep.mubr.bf16.mxu0 0
  %2027 = vmatmul.mubr.bf16.gmra.mrb[0].mxu0 %v1801
  %v2028 = vpop.f32.mrb[0].mxu0
  %v2029 = vadd.f32 %v1641, %v2028
  %v2030 = vpop.f32.mrb[0].mxu0
  %v2031 = vpop.f32.mrb[0].mxu0
  %v2032 = vadd.f32 %v1644, %v2031
  %v2033 = vpop.f32.mrb[0].mxu0
  %2034 = vmatprep.mubr.bf16.mxu0 0
  %2035 = vmatmul.mubr.bf16.gmra.mrb[0].mxu0 %v1804
  %v2036 = vpop.f32.mrb[0].mxu0
  %v2037 = vadd.f32 %v1649, %v2036
  %v2038 = vpop.f32.mrb[0].mxu0
  %v2039 = vpop.f32.mrb[0].mxu0
  %v2040 = vadd.f32 %v1652, %v2039
  %v2041 = vpop.f32.mrb[0].mxu0
  %2042 = vmatprep.mubr.bf16.mxu0 0
  %2043 = vmatmul.mubr.bf16.gmra.mrb[0].mxu0 %v1807
  %v2044 = vpop.f32.mrb[0].mxu0
  %v2045 = vadd.f32 %v1657, %v2044
  %v2046 = vpop.f32.mrb[0].mxu0
  %v2047 = vpop.f32.mrb[0].mxu0
  %v2048 = vadd.f32 %v1660, %v2047
  %v2049 = vpop.f32.mrb[0].mxu0
  %2050 = vmatprep.mubr.bf16.mxu0 0
  %2051 = vmatmul.mubr.bf16.gmra.mrb[0].mxu0 %v1810
  %v2052 = vpop.f32.mrb[0].mxu0
  %v2053 = vadd.f32 %v1665, %v2052
  %v2054 = vpop.f32.mrb[0].mxu0
  %v2055 = vpop.f32.mrb[0].mxu0
  %v2056 = vadd.f32 %v1668, %v2055
  %v2057 = vpop.f32.mrb[0].mxu0
  %2058 = vmatprep.mubr.bf16.mxu0 0
  %2059 = vmatmul.mubr.bf16.gmra.mrb[0].mxu0 %v1813
  %v2060 = vpop.f32.mrb[0].mxu0
  %v2061 = vadd.f32 %v1673, %v2060
  %v2062 = vpop.f32.mrb[0].mxu0
  %v2063 = vpop.f32.mrb[0].mxu0
  %v2064 = vadd.f32 %v1676, %v2063
  %v2065 = vpop.f32.mrb[0].mxu0
  %2066 = vmatprep.mubr.bf16.mxu0 0
  %2067 = vmatmul.mubr.bf16.gmra.mrb[0].mxu0 %v1816
  %v2068 = vpop.f32.mrb[0].mxu0
  %v2069 = vadd.f32 %v1681, %v2068
  %v2070 = vpop.f32.mrb[0].mxu0
  %v2071 = vpop.f32.mrb[0].mxu0
  %v2072 = vadd.f32 %v1684, %v2071
  %v2073 = vpop.f32.mrb[0].mxu0
  %2074 = vmatprep.mubr.bf16.mxu0 0
  %2075 = vmatmul.mubr.bf16.gmra.mrb[0].mxu0 %v1819
  %v2076 = vpop.f32.mrb[0].mxu0
  %v2077 = vadd.f32 %v1689, %v2076
  %v2078 = vpop.f32.mrb[0].mxu0
  %v2079 = vpop.f32.mrb[0].mxu0
  %v2080 = vadd.f32 %v1692, %v2079
  %v2081 = vpop.f32.mrb[0].mxu0
  %2082 = vmatprep.mubr.bf16.mxu0 0
  %2083 = vmatmul.mubr.bf16.gmra.mrb[0].mxu0 %v1822
  %v2084 = vpop.f32.mrb[0].mxu0
  %v2085 = vadd.f32 %v1697, %v2084
  %v2086 = vpop.f32.mrb[0].mxu0
  %v2087 = vpop.f32.mrb[0].mxu0
  %v2088 = vadd.f32 %v1700, %v2087
  %v2089 = vpop.f32.mrb[0].mxu0
  %2090 = vmatprep.mubr.bf16.mxu0 0
  %2091 = vmatmul.mubr.bf16.gmra.mrb[0].mxu0 %v1825
  %v2092 = vpop.f32.mrb[0].mxu0
  %v2093 = vadd.f32 %v1705, %v2092
  %v2094 = vpop.f32.mrb[0].mxu0
  %v2095 = vpop.f32.mrb[0].mxu0
  %v2096 = vadd.f32 %v1708, %v2095
  %v2097 = vpop.f32.mrb[0].mxu0
  %2098 = vmatprep.mubr.bf16.mxu0 0
  %2099 = vmatmul.mubr.bf16.gmra.mrb[0].mxu0 %v1828
  %v2100 = vpop.f32.mrb[0].mxu0
  %v2101 = vadd.f32 %v1713, %v2100
  %v2102 = vpop.f32.mrb[0].mxu0
  %v2103 = vpop.f32.mrb[0].mxu0
  %v2104 = vadd.f32 %v1716, %v2103
  %v2105 = vpop.f32.mrb[0].mxu0
  %2106 = vmatprep.mubr.bf16.mxu0 0
  %2107 = vmatmul.mubr.bf16.gmra.mrb[0].mxu0 %v1831
  %v2108 = vpop.f32.mrb[0].mxu0
  %v2109 = vadd.f32 %v1721, %v2108
  %v2110 = vpop.f32.mrb[0].mxu0
  %v2111 = vpop.f32.mrb[0].mxu0
  %v2112 = vadd.f32 %v1724, %v2111
  %v2113 = vpop.f32.mrb[0].mxu0
  %2114 = vmatprep.mubr.bf16.mxu0 0
  %2115 = vmatmul.mubr.bf16.gmra.mrb[0].mxu0 %v1834
  %v2116 = vpop.f32.mrb[0].mxu0
  %v2117 = vadd.f32 %v1729, %v2116
  %v2118 = vpop.f32.mrb[0].mxu0
  %v2119 = vpop.f32.mrb[0].mxu0
  %v2120 = vadd.f32 %v1732, %v2119
  %v2121 = vpop.f32.mrb[0].mxu0
  %2122 = vmatprep.mubr.bf16.mxu0 0
  %2123 = vmatmul.mubr.bf16.gmra.mrb[0].mxu0 %v1837
  %v2124 = vpop.f32.mrb[0].mxu0
  %v2125 = vadd.f32 %v1737, %v2124
  %v2126 = vpop.f32.mrb[0].mxu0
  %v2127 = vpop.f32.mrb[0].mxu0
  %v2128 = vadd.f32 %v1740, %v2127
  %v2129 = vpop.f32.mrb[0].mxu0
  %2130 = vdwg.mxu0
  %v2131 = vld [vmem:[%s6] sm:$0x1]
  %v2133 = vlaneseq
  %v2134 = vshrl.u32 %v2133, 7
  %v2135 = vsub.s32 0, %v2134
  %v2136 = vrot.slane %v2131, %v2135
  %v2138 = vadd.f32 %v1877, %v2136
  %v2139 = vadd.f32 %v1880, %v2136
  %v2140 = vadd.f32 %v1885, %v2136
  %v2141 = vadd.f32 %v1888, %v2136
  %v2142 = vadd.f32 %v1893, %v2136
  %v2143 = vadd.f32 %v1896, %v2136
  %v2144 = vadd.f32 %v1901, %v2136
  %v2145 = vadd.f32 %v1904, %v2136
  %v2146 = vadd.f32 %v1909, %v2136
  %v2147 = vadd.f32 %v1912, %v2136
  %v2148 = vadd.f32 %v1917, %v2136
  %v2149 = vadd.f32 %v1920, %v2136
  %v2150 = vadd.f32 %v1925, %v2136
  %v2151 = vadd.f32 %v1928, %v2136
  %v2152 = vadd.f32 %v1933, %v2136
  %v2153 = vadd.f32 %v1936, %v2136
  %v2154 = vadd.f32 %v1941, %v2136
  %v2155 = vadd.f32 %v1944, %v2136
  %v2156 = vadd.f32 %v1949, %v2136
  %v2157 = vadd.f32 %v1952, %v2136
  %v2158 = vadd.f32 %v1957, %v2136
  %v2159 = vadd.f32 %v1960, %v2136
  %v2160 = vadd.f32 %v1965, %v2136
  %v2161 = vadd.f32 %v1968, %v2136
  %v2162 = vadd.f32 %v1973, %v2136
  %v2163 = vadd.f32 %v1976, %v2136
  %v2164 = vadd.f32 %v1981, %v2136
  %v2165 = vadd.f32 %v1984, %v2136
  %v2166 = vadd.f32 %v1989, %v2136
  %v2167 = vadd.f32 %v1992, %v2136
  %v2168 = vadd.f32 %v1997, %v2136
  %v2169 = vadd.f32 %v2000, %v2136
  %v2170 = vadd.f32 %v2005, %v2136
  %v2171 = vadd.f32 %v2008, %v2136
  %v2172 = vadd.f32 %v2013, %v2136
  %v2173 = vadd.f32 %v2016, %v2136
  %v2174 = vadd.f32 %v2021, %v2136
  %v2175 = vadd.f32 %v2024, %v2136
  %v2176 = vadd.f32 %v2029, %v2136
  %v2177 = vadd.f32 %v2032, %v2136
  %v2178 = vadd.f32 %v2037, %v2136
  %v2179 = vadd.f32 %v2040, %v2136
  %v2180 = vadd.f32 %v2045, %v2136
  %v2181 = vadd.f32 %v2048, %v2136
  %v2182 = vadd.f32 %v2053, %v2136
  %v2183 = vadd.f32 %v2056, %v2136
  %v2184 = vadd.f32 %v2061, %v2136
  %v2185 = vadd.f32 %v2064, %v2136
  %v2186 = vadd.f32 %v2069, %v2136
  %v2187 = vadd.f32 %v2072, %v2136
  %v2188 = vadd.f32 %v2077, %v2136
  %v2189 = vadd.f32 %v2080, %v2136
  %v2190 = vadd.f32 %v2085, %v2136
  %v2191 = vadd.f32 %v2088, %v2136
  %v2192 = vadd.f32 %v2093, %v2136
  %v2193 = vadd.f32 %v2096, %v2136
  %v2194 = vadd.f32 %v2101, %v2136
  %v2195 = vadd.f32 %v2104, %v2136
  %v2196 = vadd.f32 %v2109, %v2136
  %v2197 = vadd.f32 %v2112, %v2136
  %v2198 = vadd.f32 %v2117, %v2136
  %v2199 = vadd.f32 %v2120, %v2136
  %v2200 = vadd.f32 %v2125, %v2136
  %v2201 = vadd.f32 %v2128, %v2136
  %v2202 = vxor.u32 %v2138, 2147483648
  %v2203 = vxor.u32 %v2139, 2147483648
  %v2204 = vxor.u32 %v2140, 2147483648
  %v2205 = vxor.u32 %v2141, 2147483648
  %v2206 = vxor.u32 %v2142, 2147483648
  %v2207 = vxor.u32 %v2143, 2147483648
  %v2208 = vxor.u32 %v2144, 2147483648
  %v2209 = vxor.u32 %v2145, 2147483648
  %v2210 = vxor.u32 %v2146, 2147483648
  %v2211 = vxor.u32 %v2147, 2147483648
  %v2212 = vxor.u32 %v2148, 2147483648
  %v2213 = vxor.u32 %v2149, 2147483648
  %v2214 = vxor.u32 %v2150, 2147483648
  %v2215 = vxor.u32 %v2151, 2147483648
  %v2216 = vxor.u32 %v2152, 2147483648
  %v2217 = vxor.u32 %v2153, 2147483648
  %v2218 = vxor.u32 %v2154, 2147483648
  %v2219 = vxor.u32 %v2155, 2147483648
  %v2220 = vxor.u32 %v2156, 2147483648
  %v2221 = vxor.u32 %v2157, 2147483648
  %v2222 = vxor.u32 %v2158, 2147483648
  %v2223 = vxor.u32 %v2159, 2147483648
  %v2224 = vxor.u32 %v2160, 2147483648
  %v2225 = vxor.u32 %v2161, 2147483648
  %v2226 = vxor.u32 %v2162, 2147483648
  %v2227 = vxor.u32 %v2163, 2147483648
  %v2228 = vxor.u32 %v2164, 2147483648
  %v2229 = vxor.u32 %v2165, 2147483648
  %v2230 = vxor.u32 %v2166, 2147483648
  %v2231 = vxor.u32 %v2167, 2147483648
  %v2232 = vxor.u32 %v2168, 2147483648
  %v2233 = vxor.u32 %v2169, 2147483648
  %v2234 = vxor.u32 %v2170, 2147483648
  %v2235 = vxor.u32 %v2171, 2147483648
  %v2236 = vxor.u32 %v2172, 2147483648
  %v2237 = vxor.u32 %v2173, 2147483648
  %v2238 = vxor.u32 %v2174, 2147483648
  %v2239 = vxor.u32 %v2175, 2147483648
  %v2240 = vxor.u32 %v2176, 2147483648
  %v2241 = vxor.u32 %v2177, 2147483648
  %v2242 = vxor.u32 %v2178, 2147483648
  %v2243 = vxor.u32 %v2179, 2147483648
  %v2244 = vxor.u32 %v2180, 2147483648
  %v2245 = vxor.u32 %v2181, 2147483648
  %v2246 = vxor.u32 %v2182, 2147483648
  %v2247 = vxor.u32 %v2183, 2147483648
  %v2248 = vxor.u32 %v2184, 2147483648
  %v2249 = vxor.u32 %v2185, 2147483648
  %v2250 = vxor.u32 %v2186, 2147483648
  %v2251 = vxor.u32 %v2187, 2147483648
  %v2252 = vxor.u32 %v2188, 2147483648
  %v2253 = vxor.u32 %v2189, 2147483648
  %v2254 = vxor.u32 %v2190, 2147483648
  %v2255 = vxor.u32 %v2191, 2147483648
  %v2256 = vxor.u32 %v2192, 2147483648
  %v2257 = vxor.u32 %v2193, 2147483648
  %v2258 = vxor.u32 %v2194, 2147483648
  %v2259 = vxor.u32 %v2195, 2147483648
  %v2260 = vxor.u32 %v2196, 2147483648
  %v2261 = vxor.u32 %v2197, 2147483648
  %v2262 = vxor.u32 %v2198, 2147483648
  %v2263 = vxor.u32 %v2199, 2147483648
  %v2264 = vxor.u32 %v2200, 2147483648
  %v2265 = vxor.u32 %v2201, 2147483648
  %v2266 = vmul.f32 %v2202, 1.442695
  %v2267 = vpow.pop %v2266
  %v2268 = vmul.f32 %v2203, 1.442695
  %v2269 = vpow.pop %v2268
  %v2270 = vmul.f32 %v2204, 1.442695
  %v2271 = vpow.pop %v2270
  %v2272 = vmul.f32 %v2205, 1.442695
  %v2273 = vpow.pop %v2272
  %v2274 = vmul.f32 %v2206, 1.442695
  %v2275 = vpow.pop %v2274
  %v2276 = vmul.f32 %v2207, 1.442695
  %v2277 = vpow.pop %v2276
  %v2278 = vmul.f32 %v2208, 1.442695
  %v2279 = vpow.pop %v2278
  %v2280 = vmul.f32 %v2209, 1.442695
  %v2281 = vpow.pop %v2280
  %v2282 = vmul.f32 %v2210, 1.442695
  %v2283 = vpow.pop %v2282
  %v2284 = vmul.f32 %v2211, 1.442695
  %v2285 = vpow.pop %v2284
  %v2286 = vmul.f32 %v2212, 1.442695
  %v2287 = vpow.pop %v2286
  %v2288 = vmul.f32 %v2213, 1.442695
  %v2289 = vpow.pop %v2288
  %v2290 = vmul.f32 %v2214, 1.442695
  %v2291 = vpow.pop %v2290
  %v2292 = vmul.f32 %v2215, 1.442695
  %v2293 = vpow.pop %v2292
  %v2294 = vmul.f32 %v2216, 1.442695
  %v2295 = vpow.pop %v2294
  %v2296 = vmul.f32 %v2217, 1.442695
  %v2297 = vpow.pop %v2296
  %v2298 = vmul.f32 %v2218, 1.442695
  %v2299 = vpow.pop %v2298
  %v2300 = vmul.f32 %v2219, 1.442695
  %v2301 = vpow.pop %v2300
  %v2302 = vmul.f32 %v2220, 1.442695
  %v2303 = vpow.pop %v2302
  %v2304 = vmul.f32 %v2221, 1.442695
  %v2305 = vpow.pop %v2304
  %v2306 = vmul.f32 %v2222, 1.442695
  %v2307 = vpow.pop %v2306
  %v2308 = vmul.f32 %v2223, 1.442695
  %v2309 = vpow.pop %v2308
  %v2310 = vmul.f32 %v2224, 1.442695
  %v2311 = vpow.pop %v2310
  %v2312 = vmul.f32 %v2225, 1.442695
  %v2313 = vpow.pop %v2312
  %v2314 = vmul.f32 %v2226, 1.442695
  %v2315 = vpow.pop %v2314
  %v2316 = vmul.f32 %v2227, 1.442695
  %v2317 = vpow.pop %v2316
  %v2318 = vmul.f32 %v2228, 1.442695
  %v2319 = vpow.pop %v2318
  %v2320 = vmul.f32 %v2229, 1.442695
  %v2321 = vpow.pop %v2320
  %v2322 = vmul.f32 %v2230, 1.442695
  %v2323 = vpow.pop %v2322
  %v2324 = vmul.f32 %v2231, 1.442695
  %v2325 = vpow.pop %v2324
  %v2326 = vmul.f32 %v2232, 1.442695
  %v2327 = vpow.pop %v2326
  %v2328 = vmul.f32 %v2233, 1.442695
  %v2329 = vpow.pop %v2328
  %v2330 = vmul.f32 %v2234, 1.442695
  %v2331 = vpow.pop %v2330
  %v2332 = vmul.f32 %v2235, 1.442695
  %v2333 = vpow.pop %v2332
  %v2334 = vmul.f32 %v2236, 1.442695
  %v2335 = vpow.pop %v2334
  %v2336 = vmul.f32 %v2237, 1.442695
  %v2337 = vpow.pop %v2336
  %v2338 = vmul.f32 %v2238, 1.442695
  %v2339 = vpow.pop %v2338
  %v2340 = vmul.f32 %v2239, 1.442695
  %v2341 = vpow.pop %v2340
  %v2342 = vmul.f32 %v2240, 1.442695
  %v2343 = vpow.pop %v2342
  %v2344 = vmul.f32 %v2241, 1.442695
  %v2345 = vpow.pop %v2344
  %v2346 = vmul.f32 %v2242, 1.442695
  %v2347 = vpow.pop %v2346
  %v2348 = vmul.f32 %v2243, 1.442695
  %v2349 = vpow.pop %v2348
  %v2350 = vmul.f32 %v2244, 1.442695
  %v2351 = vpow.pop %v2350
  %v2352 = vmul.f32 %v2245, 1.442695
  %v2353 = vpow.pop %v2352
  %v2354 = vmul.f32 %v2246, 1.442695
  %v2355 = vpow.pop %v2354
  %v2356 = vmul.f32 %v2247, 1.442695
  %v2357 = vpow.pop %v2356
  %v2358 = vmul.f32 %v2248, 1.442695
  %v2359 = vpow.pop %v2358
  %v2360 = vmul.f32 %v2249, 1.442695
  %v2361 = vpow.pop %v2360
  %v2362 = vmul.f32 %v2250, 1.442695
  %v2363 = vpow.pop %v2362
  %v2364 = vmul.f32 %v2251, 1.442695
  %v2365 = vpow.pop %v2364
  %v2366 = vmul.f32 %v2252, 1.442695
  %v2367 = vpow.pop %v2366
  %v2368 = vmul.f32 %v2253, 1.442695
  %v2369 = vpow.pop %v2368
  %v2370 = vmul.f32 %v2254, 1.442695
  %v2371 = vpow.pop %v2370
  %v2372 = vmul.f32 %v2255, 1.442695
  %v2373 = vpow.pop %v2372
  %v2374 = vmul.f32 %v2256, 1.442695
  %v2375 = vpow.pop %v2374
  %v2376 = vmul.f32 %v2257, 1.442695
  %v2377 = vpow.pop %v2376
  %v2378 = vmul.f32 %v2258, 1.442695
  %v2379 = vpow.pop %v2378
  %v2380 = vmul.f32 %v2259, 1.442695
  %v2381 = vpow.pop %v2380
  %v2382 = vmul.f32 %v2260, 1.442695
  %v2383 = vpow.pop %v2382
  %v2384 = vmul.f32 %v2261, 1.442695
  %v2385 = vpow.pop %v2384
  %v2386 = vmul.f32 %v2262, 1.442695
  %v2387 = vpow.pop %v2386
  %v2388 = vmul.f32 %v2263, 1.442695
  %v2389 = vpow.pop %v2388
  %v2390 = vmul.f32 %v2264, 1.442695
  %v2391 = vpow.pop %v2390
  %v2392 = vmul.f32 %v2265, 1.442695
  %v2393 = vpow.pop %v2392
  %v2394 = vadd.f32 %v2267, 1.0
  %v2395 = vadd.f32 %v2269, 1.0
  %v2396 = vadd.f32 %v2271, 1.0
  %v2397 = vadd.f32 %v2273, 1.0
  %v2398 = vadd.f32 %v2275, 1.0
  %v2399 = vadd.f32 %v2277, 1.0
  %v2400 = vadd.f32 %v2279, 1.0
  %v2401 = vadd.f32 %v2281, 1.0
  %v2402 = vadd.f32 %v2283, 1.0
  %v2403 = vadd.f32 %v2285, 1.0
  %v2404 = vadd.f32 %v2287, 1.0
  %v2405 = vadd.f32 %v2289, 1.0
  %v2406 = vadd.f32 %v2291, 1.0
  %v2407 = vadd.f32 %v2293, 1.0
  %v2408 = vadd.f32 %v2295, 1.0
  %v2409 = vadd.f32 %v2297, 1.0
  %v2410 = vadd.f32 %v2299, 1.0
  %v2411 = vadd.f32 %v2301, 1.0
  %v2412 = vadd.f32 %v2303, 1.0
  %v2413 = vadd.f32 %v2305, 1.0
  %v2414 = vadd.f32 %v2307, 1.0
  %v2415 = vadd.f32 %v2309, 1.0
  %v2416 = vadd.f32 %v2311, 1.0
  %v2417 = vadd.f32 %v2313, 1.0
  %v2418 = vadd.f32 %v2315, 1.0
  %v2419 = vadd.f32 %v2317, 1.0
  %v2420 = vadd.f32 %v2319, 1.0
  %v2421 = vadd.f32 %v2321, 1.0
  %v2422 = vadd.f32 %v2323, 1.0
  %v2423 = vadd.f32 %v2325, 1.0
  %v2424 = vadd.f32 %v2327, 1.0
  %v2425 = vadd.f32 %v2329, 1.0
  %v2426 = vadd.f32 %v2331, 1.0
  %v2427 = vadd.f32 %v2333, 1.0
  %v2428 = vadd.f32 %v2335, 1.0
  %v2429 = vadd.f32 %v2337, 1.0
  %v2430 = vadd.f32 %v2339, 1.0
  %v2431 = vadd.f32 %v2341, 1.0
  %v2432 = vadd.f32 %v2343, 1.0
  %v2433 = vadd.f32 %v2345, 1.0
  %v2434 = vadd.f32 %v2347, 1.0
  %v2435 = vadd.f32 %v2349, 1.0
  %v2436 = vadd.f32 %v2351, 1.0
  %v2437 = vadd.f32 %v2353, 1.0
  %v2438 = vadd.f32 %v2355, 1.0
  %v2439 = vadd.f32 %v2357, 1.0
  %v2440 = vadd.f32 %v2359, 1.0
  %v2441 = vadd.f32 %v2361, 1.0
  %v2442 = vadd.f32 %v2363, 1.0
  %v2443 = vadd.f32 %v2365, 1.0
  %v2444 = vadd.f32 %v2367, 1.0
  %v2445 = vadd.f32 %v2369, 1.0
  %v2446 = vadd.f32 %v2371, 1.0
  %v2447 = vadd.f32 %v2373, 1.0
  %v2448 = vadd.f32 %v2375, 1.0
  %v2449 = vadd.f32 %v2377, 1.0
  %v2450 = vadd.f32 %v2379, 1.0
  %v2451 = vadd.f32 %v2381, 1.0
  %v2452 = vadd.f32 %v2383, 1.0
  %v2453 = vadd.f32 %v2385, 1.0
  %v2454 = vadd.f32 %v2387, 1.0
  %v2455 = vadd.f32 %v2389, 1.0
  %v2456 = vadd.f32 %v2391, 1.0
  %v2457 = vadd.f32 %v2393, 1.0
  %v2458 = vrcp.pop %v2394
  %v2459 = vmul.f32 1.0, %v2458
  %v2460 = vrcp.pop %v2395
  %v2461 = vmul.f32 1.0, %v2460
  %v2462 = vrcp.pop %v2396
  %v2463 = vmul.f32 1.0, %v2462
  %v2464 = vrcp.pop %v2397
  %v2465 = vmul.f32 1.0, %v2464
  %v2466 = vrcp.pop %v2398
  %v2467 = vmul.f32 1.0, %v2466
  %v2468 = vrcp.pop %v2399
  %v2469 = vmul.f32 1.0, %v2468
  %v2470 = vrcp.pop %v2400
  %v2471 = vmul.f32 1.0, %v2470
  %v2472 = vrcp.pop %v2401
  %v2473 = vmul.f32 1.0, %v2472
  %v2474 = vrcp.pop %v2402
  %v2475 = vmul.f32 1.0, %v2474
  %v2476 = vrcp.pop %v2403
  %v2477 = vmul.f32 1.0, %v2476
  %v2478 = vrcp.pop %v2404
  %v2479 = vmul.f32 1.0, %v2478
  %v2480 = vrcp.pop %v2405
  %v2481 = vmul.f32 1.0, %v2480
  %v2482 = vrcp.pop %v2406
  %v2483 = vmul.f32 1.0, %v2482
  %v2484 = vrcp.pop %v2407
  %v2485 = vmul.f32 1.0, %v2484
  %v2486 = vrcp.pop %v2408
  %v2487 = vmul.f32 1.0, %v2486
  %v2488 = vrcp.pop %v2409
  %v2489 = vmul.f32 1.0, %v2488
  %v2490 = vrcp.pop %v2410
  %v2491 = vmul.f32 1.0, %v2490
  %v2492 = vrcp.pop %v2411
  %v2493 = vmul.f32 1.0, %v2492
  %v2494 = vrcp.pop %v2412
  %v2495 = vmul.f32 1.0, %v2494
  %v2496 = vrcp.pop %v2413
  %v2497 = vmul.f32 1.0, %v2496
  %v2498 = vrcp.pop %v2414
  %v2499 = vmul.f32 1.0, %v2498
  %v2500 = vrcp.pop %v2415
  %v2501 = vmul.f32 1.0, %v2500
  %v2502 = vrcp.pop %v2416
  %v2503 = vmul.f32 1.0, %v2502
  %v2504 = vrcp.pop %v2417
  %v2505 = vmul.f32 1.0, %v2504
  %v2506 = vrcp.pop %v2418
  %v2507 = vmul.f32 1.0, %v2506
  %v2508 = vrcp.pop %v2419
  %v2509 = vmul.f32 1.0, %v2508
  %v2510 = vrcp.pop %v2420
  %v2511 = vmul.f32 1.0, %v2510
  %v2512 = vrcp.pop %v2421
  %v2513 = vmul.f32 1.0, %v2512
  %v2514 = vrcp.pop %v2422
  %v2515 = vmul.f32 1.0, %v2514
  %v2516 = vrcp.pop %v2423
  %v2517 = vmul.f32 1.0, %v2516
  %v2518 = vrcp.pop %v2424
  %v2519 = vmul.f32 1.0, %v2518
  %v2520 = vrcp.pop %v2425
  %v2521 = vmul.f32 1.0, %v2520
  %v2522 = vrcp.pop %v2426
  %v2523 = vmul.f32 1.0, %v2522
  %v2524 = vrcp.pop %v2427
  %v2525 = vmul.f32 1.0, %v2524
  %v2526 = vrcp.pop %v2428
  %v2527 = vmul.f32 1.0, %v2526
  %v2528 = vrcp.pop %v2429
  %v2529 = vmul.f32 1.0, %v2528
  %v2530 = vrcp.pop %v2430
  %v2531 = vmul.f32 1.0, %v2530
  %v2532 = vrcp.pop %v2431
  %v2533 = vmul.f32 1.0, %v2532
  %v2534 = vrcp.pop %v2432
  %v2535 = vmul.f32 1.0, %v2534
  %v2536 = vrcp.pop %v2433
  %v2537 = vmul.f32 1.0, %v2536
  %v2538 = vrcp.pop %v2434
  %v2539 = vmul.f32 1.0, %v2538
  %v2540 = vrcp.pop %v2435
  %v2541 = vmul.f32 1.0, %v2540
  %v2542 = vrcp.pop %v2436
  %v2543 = vmul.f32 1.0, %v2542
  %v2544 = vrcp.pop %v2437
  %v2545 = vmul.f32 1.0, %v2544
  %v2546 = vrcp.pop %v2438
  %v2547 = vmul.f32 1.0, %v2546
  %v2548 = vrcp.pop %v2439
  %v2549 = vmul.f32 1.0, %v2548
  %v2550 = vrcp.pop %v2440
  %v2551 = vmul.f32 1.0, %v2550
  %v2552 = vrcp.pop %v2441
  %v2553 = vmul.f32 1.0, %v2552
  %v2554 = vrcp.pop %v2442
  %v2555 = vmul.f32 1.0, %v2554
  %v2556 = vrcp.pop %v2443
  %v2557 = vmul.f32 1.0, %v2556
  %v2558 = vrcp.pop %v2444
  %v2559 = vmul.f32 1.0, %v2558
  %v2560 = vrcp.pop %v2445
  %v2561 = vmul.f32 1.0, %v2560
  %v2562 = vrcp.pop %v2446
  %v2563 = vmul.f32 1.0, %v2562
  %v2564 = vrcp.pop %v2447
  %v2565 = vmul.f32 1.0, %v2564
  %v2566 = vrcp.pop %v2448
  %v2567 = vmul.f32 1.0, %v2566
  %v2568 = vrcp.pop %v2449
  %v2569 = vmul.f32 1.0, %v2568
  %v2570 = vrcp.pop %v2450
  %v2571 = vmul.f32 1.0, %v2570
  %v2572 = vrcp.pop %v2451
  %v2573 = vmul.f32 1.0, %v2572
  %v2574 = vrcp.pop %v2452
  %v2575 = vmul.f32 1.0, %v2574
  %v2576 = vrcp.pop %v2453
  %v2577 = vmul.f32 1.0, %v2576
  %v2578 = vrcp.pop %v2454
  %v2579 = vmul.f32 1.0, %v2578
  %v2580 = vrcp.pop %v2455
  %v2581 = vmul.f32 1.0, %v2580
  %v2582 = vrcp.pop %v2456
  %v2583 = vmul.f32 1.0, %v2582
  %v2584 = vrcp.pop %v2457
  %v2585 = vmul.f32 1.0, %v2584
  %v2586 = vmul.f32 %v2138, %v2459
  %v2587 = vmul.f32 %v2139, %v2461
  %v2588 = vmul.f32 %v2140, %v2463
  %v2589 = vmul.f32 %v2141, %v2465
  %v2590 = vmul.f32 %v2142, %v2467
  %v2591 = vmul.f32 %v2143, %v2469
  %v2592 = vmul.f32 %v2144, %v2471
  %v2593 = vmul.f32 %v2145, %v2473
  %v2594 = vmul.f32 %v2146, %v2475
  %v2595 = vmul.f32 %v2147, %v2477
  %v2596 = vmul.f32 %v2148, %v2479
  %v2597 = vmul.f32 %v2149, %v2481
  %v2598 = vmul.f32 %v2150, %v2483
  %v2599 = vmul.f32 %v2151, %v2485
  %v2600 = vmul.f32 %v2152, %v2487
  %v2601 = vmul.f32 %v2153, %v2489
  %v2602 = vmul.f32 %v2154, %v2491
  %v2603 = vmul.f32 %v2155, %v2493
  %v2604 = vmul.f32 %v2156, %v2495
  %v2605 = vmul.f32 %v2157, %v2497
  %v2606 = vmul.f32 %v2158, %v2499
  %v2607 = vmul.f32 %v2159, %v2501
  %v2608 = vmul.f32 %v2160, %v2503
  %v2609 = vmul.f32 %v2161, %v2505
  %v2610 = vmul.f32 %v2162, %v2507
  %v2611 = vmul.f32 %v2163, %v2509
  %v2612 = vmul.f32 %v2164, %v2511
  %v2613 = vmul.f32 %v2165, %v2513
  %v2614 = vmul.f32 %v2166, %v2515
  %v2615 = vmul.f32 %v2167, %v2517
  %v2616 = vmul.f32 %v2168, %v2519
  %v2617 = vmul.f32 %v2169, %v2521
  %v2618 = vmul.f32 %v2170, %v2523
  %v2619 = vmul.f32 %v2171, %v2525
  %v2620 = vmul.f32 %v2172, %v2527
  %v2621 = vmul.f32 %v2173, %v2529
  %v2622 = vmul.f32 %v2174, %v2531
  %v2623 = vmul.f32 %v2175, %v2533
  %v2624 = vmul.f32 %v2176, %v2535
  %v2625 = vmul.f32 %v2177, %v2537
  %v2626 = vmul.f32 %v2178, %v2539
  %v2627 = vmul.f32 %v2179, %v2541
  %v2628 = vmul.f32 %v2180, %v2543
  %v2629 = vmul.f32 %v2181, %v2545
  %v2630 = vmul.f32 %v2182, %v2547
  %v2631 = vmul.f32 %v2183, %v2549
  %v2632 = vmul.f32 %v2184, %v2551
  %v2633 = vmul.f32 %v2185, %v2553
  %v2634 = vmul.f32 %v2186, %v2555
  %v2635 = vmul.f32 %v2187, %v2557
  %v2636 = vmul.f32 %v2188, %v2559
  %v2637 = vmul.f32 %v2189, %v2561
  %v2638 = vmul.f32 %v2190, %v2563
  %v2639 = vmul.f32 %v2191, %v2565
  %v2640 = vmul.f32 %v2192, %v2567
  %v2641 = vmul.f32 %v2193, %v2569
  %v2642 = vmul.f32 %v2194, %v2571
  %v2643 = vmul.f32 %v2195, %v2573
  %v2644 = vmul.f32 %v2196, %v2575
  %v2645 = vmul.f32 %v2197, %v2577
  %v2646 = vmul.f32 %v2198, %v2579
  %v2647 = vmul.f32 %v2199, %v2581
  %v2648 = vmul.f32 %v2200, %v2583
  %v2649 = vmul.f32 %v2201, %v2585
  %vm2650 = vcmask 31744
  %2651 = vst.msk [vmem:[%s7] sm:$0xff] %vm2650, %v2586
  %2652 = vst.msk [vmem:[%s7 + $0x8] sm:$0xff] %vm2650, %v2587
  %2653 = vst.msk [vmem:[%s7 + $0x10] sm:$0xff] %vm2650, %v2588
  %2654 = vst.msk [vmem:[%s7 + $0x18] sm:$0xff] %vm2650, %v2589
  %2655 = vst.msk [vmem:[%s7 + $0x20] sm:$0xff] %vm2650, %v2590
  %2656 = vst.msk [vmem:[%s7 + $0x28] sm:$0xff] %vm2650, %v2591
  %2657 = vst.msk [vmem:[%s7 + $0x30] sm:$0xff] %vm2650, %v2592
  %2658 = vst.msk [vmem:[%s7 + $0x38] sm:$0xff] %vm2650, %v2593
  %2659 = vst.msk [vmem:[%s7 + $0x40] sm:$0xff] %vm2650, %v2594
  %2660 = vst.msk [vmem:[%s7 + $0x48] sm:$0xff] %vm2650, %v2595
  %2661 = vst.msk [vmem:[%s7 + $0x50] sm:$0xff] %vm2650, %v2596
  %2662 = vst.msk [vmem:[%s7 + $0x58] sm:$0xff] %vm2650, %v2597
  %2663 = vst.msk [vmem:[%s7 + $0x60] sm:$0xff] %vm2650, %v2598
  %2664 = vst.msk [vmem:[%s7 + $0x68] sm:$0xff] %vm2650, %v2599
  %2665 = vst.msk [vmem:[%s7 + $0x70] sm:$0xff] %vm2650, %v2600
  %2666 = vst.msk [vmem:[%s7 + $0x78] sm:$0xff] %vm2650, %v2601
  %2667 = vst.msk [vmem:[%s7 + $0x80] sm:$0xff] %vm2650, %v2602
  %2668 = vst.msk [vmem:[%s7 + $0x88] sm:$0xff] %vm2650, %v2603
  %2669 = vst.msk [vmem:[%s7 + $0x90] sm:$0xff] %vm2650, %v2604
  %2670 = vst.msk [vmem:[%s7 + $0x98] sm:$0xff] %vm2650, %v2605
  %2671 = vst.msk [vmem:[%s7 + $0xa0] sm:$0xff] %vm2650, %v2606
  %2672 = vst.msk [vmem:[%s7 + $0xa8] sm:$0xff] %vm2650, %v2607
  %2673 = vst.msk [vmem:[%s7 + $0xb0] sm:$0xff] %vm2650, %v2608
  %2674 = vst.msk [vmem:[%s7 + $0xb8] sm:$0xff] %vm2650, %v2609
  %2675 = vst.msk [vmem:[%s7 + $0xc0] sm:$0xff] %vm2650, %v2610
  %2676 = vst.msk [vmem:[%s7 + $0xc8] sm:$0xff] %vm2650, %v2611
  %2677 = vst.msk [vmem:[%s7 + $0xd0] sm:$0xff] %vm2650, %v2612
  %2678 = vst.msk [vmem:[%s7 + $0xd8] sm:$0xff] %vm2650, %v2613
  %2679 = vst.msk [vmem:[%s7 + $0xe0] sm:$0xff] %vm2650, %v2614
  %2680 = vst.msk [vmem:[%s7 + $0xe8] sm:$0xff] %vm2650, %v2615
  %2681 = vst.msk [vmem:[%s7 + $0xf0] sm:$0xff] %vm2650, %v2616
  %2682 = vst.msk [vmem:[%s7 + $0xf8] sm:$0xff] %vm2650, %v2617
  %2683 = vst.msk [vmem:[%s7 + $0x100] sm:$0xff] %vm2650, %v2618
  %2684 = vst.msk [vmem:[%s7 + $0x108] sm:$0xff] %vm2650, %v2619
  %2685 = vst.msk [vmem:[%s7 + $0x110] sm:$0xff] %vm2650, %v2620
  %2686 = vst.msk [vmem:[%s7 + $0x118] sm:$0xff] %vm2650, %v2621
  %2687 = vst.msk [vmem:[%s7 + $0x120] sm:$0xff] %vm2650, %v2622
  %2688 = vst.msk [vmem:[%s7 + $0x128] sm:$0xff] %vm2650, %v2623
  %2689 = vst.msk [vmem:[%s7 + $0x130] sm:$0xff] %vm2650, %v2624
  %2690 = vst.msk [vmem:[%s7 + $0x138] sm:$0xff] %vm2650, %v2625
  %2691 = vst.msk [vmem:[%s7 + $0x140] sm:$0xff] %vm2650, %v2626
  %2692 = vst.msk [vmem:[%s7 + $0x148] sm:$0xff] %vm2650, %v2627
  %2693 = vst.msk [vmem:[%s7 + $0x150] sm:$0xff] %vm2650, %v2628
  %2694 = vst.msk [vmem:[%s7 + $0x158] sm:$0xff] %vm2650, %v2629
  %2695 = vst.msk [vmem:[%s7 + $0x160] sm:$0xff] %vm2650, %v2630
  %2696 = vst.msk [vmem:[%s7 + $0x168] sm:$0xff] %vm2650, %v2631
  %2697 = vst.msk [vmem:[%s7 + $0x170] sm:$0xff] %vm2650, %v2632
  %2698 = vst.msk [vmem:[%s7 + $0x178] sm:$0xff] %vm2650, %v2633
  %2699 = vst.msk [vmem:[%s7 + $0x180] sm:$0xff] %vm2650, %v2634
  %2700 = vst.msk [vmem:[%s7 + $0x188] sm:$0xff] %vm2650, %v2635
  %2701 = vst.msk [vmem:[%s7 + $0x190] sm:$0xff] %vm2650, %v2636
  %2702 = vst.msk [vmem:[%s7 + $0x198] sm:$0xff] %vm2650, %v2637
  %2703 = vst.msk [vmem:[%s7 + $0x1a0] sm:$0xff] %vm2650, %v2638
  %2704 = vst.msk [vmem:[%s7 + $0x1a8] sm:$0xff] %vm2650, %v2639
  %2705 = vst.msk [vmem:[%s7 + $0x1b0] sm:$0xff] %vm2650, %v2640
  %2706 = vst.msk [vmem:[%s7 + $0x1b8] sm:$0xff] %vm2650, %v2641
  %2707 = vst.msk [vmem:[%s7 + $0x1c0] sm:$0xff] %vm2650, %v2642
  %2708 = vst.msk [vmem:[%s7 + $0x1c8] sm:$0xff] %vm2650, %v2643
  %2709 = vst.msk [vmem:[%s7 + $0x1d0] sm:$0xff] %vm2650, %v2644
  %2710 = vst.msk [vmem:[%s7 + $0x1d8] sm:$0xff] %vm2650, %v2645
  %2711 = vst.msk [vmem:[%s7 + $0x1e0] sm:$0xff] %vm2650, %v2646
  %2712 = vst.msk [vmem:[%s7 + $0x1e8] sm:$0xff] %vm2650, %v2647
  %2713 = vst.msk [vmem:[%s7 + $0x1f0] sm:$0xff] %vm2650, %v2648
  %2714 = vst.msk [vmem:[%s7 + $0x1f8] sm:$0xff] %vm2650, %v2649
  // Predicated region
  $region30: #{csc_qarep_forward.5} parent=0 // pred_check
    _
  $region31: #{csc_qarep_forward.5} parent=0 // pred_check_branch
    %2716 = sbr.rel (0) target = $region33
  $region32: #{csc_qarep_forward.5} parent=0 // pred_region
    _
  $region33: #{csc_qarep_forward.5} parent=0 // pred_fallthru
    _
  // Predicated region
  $region34: #{csc_qarep_forward.5} parent=0 // pred_check
    _
  $region35: #{csc_qarep_forward.5} parent=0 // pred_check_branch
    %2718 = sbr.rel (0) target = $region37
  $region36: #{csc_qarep_forward.5} parent=0 // pred_region
    _
  $region37: #{csc_qarep_forward.5} parent=0 // pred_fallthru
    _

// kernel: csc_qarep_forward.4
$region0: #{csc_qarep_forward.4}
  #allocation0 [shape = 'u32[]', space=smem, size = 0x4, offset = 0x4, fixed_abs, tag = 'smem constant byte address 0x4 - core index']
  #allocation1 [shape = 'u32[144,128]{1,0:T(1,128)}', space=vmem, size = 0x12000, scoped, tag = 'internal scratch']
  #allocation2 [shape = 'bf16[128,18]{1,0:T(16,128)(2,1)}', space=vmem, size = 0x8000, scoped, tag = 'scratch operand']
  %s0 = inlined_call_operand.vmem [shape: bf16[2,18,18,2], index: 0, kind: input, shape index: {}]
  %s1 = inlined_call_operand.vmem [shape: bf16[18,2], index: 1, kind: input, shape index: {}]
  %s2 = inlined_call_operand.vmem [shape: f32[1,2], index: 2, kind: input, shape index: {}]
  %s3 = inlined_call_operand.vmem [shape: bf16[2,256,2], index: 3, kind: output, shape index: {}]
  %s4 = sld [smem:[#allocation0]]
  $region45: #{csc_qarep_forward.4} parent=0
    _
  %s6 = ssub.s32 1, %s4
  %s7 = scalar_select 0, %s6, %s4
  loop: start=0, step=1, limit=6
  $region2: #{csc_qarep_forward.4} parent=0 // loop_pre_header
    _
  $region3: #{csc_qarep_forward.4} parent=0 // loop_header
    %s9 = sphi 0, %s13
    %p10 = scmp.ge.s32.totalorder %s9, 6
    %s16 = sphi 0, %s35
    %s17 = sphi 0, %s31
    %s18 = sphi 0, %s27
    %s19 = sphi 0, %s16
    %s20 = sphi 0, %s17
    %s21 = sphi 0, %s18
    %s22 = sphi 0, %s19
    %s23 = sphi 0, %s20
    %s24 = sphi 0, %s21
    %s38 = sphi 0, %s40
    %s41 = sphi 0, %s38
    %s42 = sphi 0, %s41
    %s58 = sphi 0, %s42
    %s64 = sphi 0, %s66
    %s67 = sphi 0, %s64
    %s68 = sphi 0, %s67
    %s84 = sphi 0, %s68
    %s90 = sphi 0, %s92
    %s93 = sphi 0, %s90
    %s94 = sphi 0, %s93
    %s110 = sphi 0, %s94
    %s120 = sphi 0, %s122
    %s123 = sphi 0, %s120
    %s124 = sphi 0, %s123
    %s140 = sphi 0, %s124
  $region4: #{csc_qarep_forward.4} parent=0 // loop_header_branch
    %12 = sbr.rel (%p10) target = $region8
  $region5: #{csc_qarep_forward.4} parent=0 // loop_body
    %s14 = ssub.s32 %s9, 1
    %s15 = ssub.s32 %s9, 2
    %s25 = sadd.s32 1, %s18
    %p26 = scmp.ge.s32.totalorder %s25, 1
    %s27 = scalar_select %p26, 0, %s25
    %s28 = sadd.s32 1, %s17
    %s29 = scalar_select %p26, %s28, %s17
    %p30 = scmp.ge.s32.totalorder %s29, 2
    %s31 = scalar_select %p30, 0, %s29
    %s32 = sadd.s32 1, %s16
    %s33 = scalar_select %p30, %s32, %s16
    %p34 = scmp.ge.s32.totalorder %s33, 2
    %s35 = scalar_select %p34, 0, %s33
    %s36 = ssub.s32 %s16, %s35
    %p37 = scmp.eq.s32.totalorder %s36, 0
    %s39 = sadd.s32 %s38, 1
    %s40 = scalar_select %p37, %s38, %s39
    %p43 = pneg %p37
    %p44 = scmp.eq.s32.totalorder %s9, 3
    %p45 = por %p43, %p44
    %p46 = scmp.ne.s32.totalorder %s38, %s41
    %p47 = scmp.eq.s32.totalorder %s9, 0
    %p48 = por %p46, %p47
    %p49 = scmp.ne.s32.totalorder %s38, %s41
    %p50 = scmp.eq.s32.totalorder %s14, 3
    %p51 = por %p49, %p50
    %p52 = scmp.ne.s32.totalorder %s41, %s42
    %p53 = scmp.eq.s32.totalorder %s14, 0
    %p54 = por %p52, %p53
    %p55 = scmp.ne.s32.totalorder %s41, %s42
    %p56 = scmp.eq.s32.totalorder %s15, 3
    %p57 = por %p55, %p56
    %p59 = scmp.ne.s32.totalorder %s42, %s58
    %p60 = scmp.eq.s32.totalorder %s15, 0
    %p61 = por %p59, %p60
    %s62 = ssub.s32 %s18, %s27
    %p63 = scmp.eq.s32.totalorder %s62, 0
    %s65 = sadd.s32 %s64, 1
    %s66 = scalar_select %p63, %s64, %s65
    %p69 = pneg %p63
    %p70 = scmp.eq.s32.totalorder %s9, 3
    %p71 = por %p69, %p70
    %p72 = scmp.ne.s32.totalorder %s64, %s67
    %p73 = scmp.eq.s32.totalorder %s9, 0
    %p74 = por %p72, %p73
    %p75 = scmp.ne.s32.totalorder %s64, %s67
    %p76 = scmp.eq.s32.totalorder %s14, 3
    %p77 = por %p75, %p76
    %p78 = scmp.ne.s32.totalorder %s67, %s68
    %p79 = scmp.eq.s32.totalorder %s14, 0
    %p80 = por %p78, %p79
    %p81 = scmp.ne.s32.totalorder %s67, %s68
    %p82 = scmp.eq.s32.totalorder %s15, 3
    %p83 = por %p81, %p82
    %p85 = scmp.ne.s32.totalorder %s68, %s84
    %p86 = scmp.eq.s32.totalorder %s15, 0
    %p87 = por %p85, %p86
    %s88 = ssub.s32 %s18, %s27
    %p89 = scmp.eq.s32.totalorder %s88, 0
    %s91 = sadd.s32 %s90, 1
    %s92 = scalar_select %p89, %s90, %s91
    %p95 = pneg %p89
    %p96 = scmp.eq.s32.totalorder %s9, 3
    %p97 = por %p95, %p96
    %p98 = scmp.ne.s32.totalorder %s90, %s93
    %p99 = scmp.eq.s32.totalorder %s9, 0
    %p100 = por %p98, %p99
    %p101 = scmp.ne.s32.totalorder %s90, %s93
    %p102 = scmp.eq.s32.totalorder %s14, 3
    %p103 = por %p101, %p102
    %p104 = scmp.ne.s32.totalorder %s93, %s94
    %p105 = scmp.eq.s32.totalorder %s14, 0
    %p106 = por %p104, %p105
    %p107 = scmp.ne.s32.totalorder %s93, %s94
    %p108 = scmp.eq.s32.totalorder %s15, 3
    %p109 = por %p107, %p108
    %p111 = scmp.ne.s32.totalorder %s94, %s110
    %p112 = scmp.eq.s32.totalorder %s15, 0
    %p113 = por %p111, %p112
    %s114 = ssub.s32 %s16, %s35
    %s115 = ssub.s32 %s17, %s31
    %s116 = sor.u32 %s114, %s115
    %s117 = ssub.s32 %s18, %s27
    %s118 = sor.u32 %s116, %s117
    %p119 = scmp.eq.s32.totalorder %s118, 0
    %s121 = sadd.s32 %s120, 1
    %s122 = scalar_select %p119, %s120, %s121
    %p125 = pneg %p119
    %p126 = scmp.eq.s32.totalorder %s9, 3
    %p127 = por %p125, %p126
    %p128 = scmp.ne.s32.totalorder %s120, %s123
    %p129 = scmp.eq.s32.totalorder %s9, 0
    %p130 = por %p128, %p129
    %p131 = scmp.ne.s32.totalorder %s120, %s123
    %p132 = scmp.eq.s32.totalorder %s14, 3
    %p133 = por %p131, %p132
    %p134 = scmp.ne.s32.totalorder %s123, %s124
    %p135 = scmp.eq.s32.totalorder %s14, 0
    %p136 = por %p134, %p135
    %p137 = scmp.ne.s32.totalorder %s123, %s124
    %p138 = scmp.eq.s32.totalorder %s15, 3
    %p139 = por %p137, %p138
    %p141 = scmp.ne.s32.totalorder %s124, %s140
    %p142 = scmp.eq.s32.totalorder %s15, 0
    %p143 = por %p141, %p142
    %p144 = scmp.le.s32.totalorder 1, %s9
    %p145 = scmp.lt.s32.totalorder %s9, 5
    %p146 = pnand %p144, %p145
    %p147 = pneg %p146
    // Predicated region
    $region9: #{csc_qarep_forward.4} parent=5 // pred_check
      _
    $region10: #{csc_qarep_forward.4} parent=5 // pred_check_branch
      %149 = sbr.rel (%p146) target = $region12
    $region11: #{csc_qarep_forward.4} parent=5 // pred_region
      %s150 = ssub.s32 %s9, 1
      // Predicated region
      $region13: #{csc_qarep_forward.4} parent=11 // pred_check
        %p151 = pneg %p80
      $region14: #{csc_qarep_forward.4} parent=11 // pred_check_branch
        %153 = sbr.rel (%p151) target = $region16
      $region15: #{csc_qarep_forward.4} parent=11 // pred_region
        %p154 = scmp.lt.s32.totalorder %s21, 0
        %s155 = scalar_select %p154, %s21, 0
        %s156 = smul.addr %s155, 4
        %s157 = scalar_lea.vmem %s1, %s156
      $region16: #{csc_qarep_forward.4} parent=11 // pred_fallthru
        _
      // Predicated region
      $region17: #{csc_qarep_forward.4} parent=11 // pred_check
        %p158 = pneg %p106
      $region18: #{csc_qarep_forward.4} parent=11 // pred_check_branch
        %160 = sbr.rel (%p158) target = $region20
      $region19: #{csc_qarep_forward.4} parent=11 // pred_region
        %p161 = scmp.lt.s32.totalorder %s21, 0
        %s162 = scalar_select %p161, %s21, 0
        %s163 = scalar_lea.vmem %s2, %s162
      $region20: #{csc_qarep_forward.4} parent=11 // pred_fallthru
        _
    $region12: #{csc_qarep_forward.4} parent=5 // pred_fallthru
      _
    %p164 = scmp.lt.s32.totalorder %s9, 4
    // Predicated region
    $region21: #{csc_qarep_forward.4} parent=5 // pred_check
      %p165 = pneg %p164
    $region22: #{csc_qarep_forward.4} parent=5 // pred_check_branch
      %167 = sbr.rel (%p165) target = $region24
    $region23: #{csc_qarep_forward.4} parent=5 // pred_region
      // Predicated region
      $region25: #{csc_qarep_forward.4} parent=23 // pred_check
        %p168 = pneg %p48
      $region26: #{csc_qarep_forward.4} parent=23 // pred_check_branch
        %170 = sbr.rel (%p168) target = $region28
      $region27: #{csc_qarep_forward.4} parent=23 // pred_region
        %p171 = scmp.lt.s32.totalorder %s16, 1
        %s172 = scalar_select %p171, %s16, 1
        %s173 = smul.addr %s172, 54
        %s174 = smul.addr %s173, 4
        %s175 = scalar_lea.vmem %s0, %s174
      $region28: #{csc_qarep_forward.4} parent=23 // pred_fallthru
        _
    $region24: #{csc_qarep_forward.4} parent=5 // pred_fallthru
      _
    %p176 = scmp.le.s32.totalorder 1, %s9
    %p177 = scmp.lt.s32.totalorder %s9, 5
    %p178 = pnand %p176, %p177
    %p179 = pneg %p178
    // Predicated region
    $region29: #{csc_qarep_forward.4} parent=5 // pred_check
      _
    $region30: #{csc_qarep_forward.4} parent=5 // pred_check_branch
      %181 = sbr.rel (%p178) target = $region32
    $region31: #{csc_qarep_forward.4} parent=5 // pred_region
      %s182 = ssub.s32 %s9, 1
      %p183 = scmp.lt.s32.totalorder %s19, 1
      %s184 = scalar_select %p183, %s19, 1
      %s185 = smul.addr %s184, 54
      %s186 = smul.addr %s185, 4
      %s187 = scalar_lea.vmem %s0, %s186
      %p188 = pneg %p54
      %p189 = pneg %p51
      %p190 = scmp.lt.s32.totalorder %s21, 0
      %s191 = scalar_select %p190, %s21, 0
      %s192 = smul.addr %s191, 4
      %s193 = scalar_lea.vmem %s1, %s192
      %p194 = pneg %p80
      %p195 = pneg %p77
      %p196 = scmp.lt.s32.totalorder %s21, 0
      %s197 = scalar_select %p196, %s21, 0
      %s198 = scalar_lea.vmem %s2, %s197
      %p199 = pneg %p106
      %p200 = pneg %p103
      %p201 = pneg %p136
      %p202 = pneg %p133
      %s203 = smul.u32 16, %s20
      %p204 = scmp.lt.s32.totalorder %s19, 1
      %s205 = scalar_select %p204, %s19, 1
      %p206 = scmp.lt.s32.totalorder %s203, 31
      %s207 = scalar_select %p206, %s203, 31
      %p208 = scmp.lt.s32.totalorder %s21, 0
      %s209 = scalar_select %p208, %s21, 0
      %s210 = sadd.s32 %s209, %s207
      %s211 = smul.addr %s205, 32
      %s212 = sadd.s32 %s210, %s211
      %s213 = smul.addr %s212, 4
      %s214 = scalar_lea.vmem %s3, %s213
      %p215 = scmp.lt.s32.totalorder %s19, 1
      %s216 = scalar_select %p215, %s19, 1
      %s217 = smul.addr %s216, 54
      %s218 = smul.addr %s217, 4
      %s219 = scalar_lea.vmem %s0, %s218
      %p220 = scmp.lt.s32.totalorder %s21, 0
      %s221 = scalar_select %p220, %s21, 0
      %s222 = smul.addr %s221, 4
      %s223 = scalar_lea.vmem %s1, %s222
      %p224 = scmp.lt.s32.totalorder %s21, 0
      %s225 = scalar_select %p224, %s21, 0
      %s226 = scalar_lea.vmem %s2, %s225
      %s227 = smul.u32 16, %s20
      %p228 = scmp.lt.s32.totalorder %s19, 1
      %s229 = scalar_select %p228, %s19, 1
      %p230 = scmp.lt.s32.totalorder %s227, 31
      %s231 = scalar_select %p230, %s227, 31
      %p232 = scmp.lt.s32.totalorder %s21, 0
      %s233 = scalar_select %p232, %s21, 0
      %s234 = sadd.s32 %s233, %s231
      %s235 = smul.addr %s229, 32
      %s236 = sadd.s32 %s234, %s235
      %s237 = smul.addr %s236, 4
      %s238 = scalar_lea.vmem %s3, %s237
      %s239 = smul.u32 16, %s20
      %s241 = smul.u32 %s20, 8
      %s242 = smul.u32 %s241, 3
      %s243 = smul.addr %s242, 4
      %s244 = scalar_lea.vmem %s219, %s243
      %v245 = vld [vmem:[%s244] sm:$0xf]
      %v246 = vld [vmem:[%s244 + $0x4] sm:$0xf]
      %v247 = vld [vmem:[%s244 + $0xc] sm:$0xf]
      %v248 = vld [vmem:[%s244 + $0x10] sm:$0xf]
      %v249 = vld [vmem:[%s244 + $0x18] sm:$0xf]
      %v250 = vld [vmem:[%s244 + $0x1c] sm:$0xf]
      %v251 = vld [vmem:[%s244 + $0x24] sm:$0xf]
      %v252 = vld [vmem:[%s244 + $0x28] sm:$0xf]
      %v253 = vld [vmem:[%s244 + $0x30] sm:$0xf]
      %v254 = vld [vmem:[%s244 + $0x34] sm:$0xf]
      %v255 = vld [vmem:[%s244 + $0x3c] sm:$0xf]
      %v256 = vld [vmem:[%s244 + $0x40] sm:$0xf]
      %v257 = vld [vmem:[%s244 + $0x48] sm:$0xf]
      %v258 = vld [vmem:[%s244 + $0x4c] sm:$0xf]
      %v259 = vld [vmem:[%s244 + $0x54] sm:$0xf]
      %v260 = vld [vmem:[%s244 + $0x58] sm:$0xf]
      %v277 = vunpack.c.l.b16 %v245
      %v278 = vunpack.c.l.b16 %v246
      %v279 = vunpack.c.l.b16 %v247
      %v280 = vunpack.c.l.b16 %v248
      %v281 = vunpack.c.l.b16 %v249
      %v282 = vunpack.c.l.b16 %v250
      %v283 = vunpack.c.l.b16 %v251
      %v284 = vunpack.c.l.b16 %v252
      %v285 = vunpack.c.l.b16 %v253
      %v286 = vunpack.c.l.b16 %v254
      %v287 = vunpack.c.l.b16 %v255
      %v288 = vunpack.c.l.b16 %v256
      %v289 = vunpack.c.l.b16 %v257
      %v290 = vunpack.c.l.b16 %v258
      %v291 = vunpack.c.l.b16 %v259
      %v292 = vunpack.c.l.b16 %v260
      %v293 = vpack.c.b16 %v278, %v277
      %v294 = vpack.c.b16 %v280, %v279
      %v295 = vpack.c.b16 %v282, %v281
      %v296 = vpack.c.b16 %v284, %v283
      %v297 = vpack.c.b16 %v286, %v285
      %v298 = vpack.c.b16 %v288, %v287
      %v299 = vpack.c.b16 %v290, %v289
      %v300 = vpack.c.b16 %v292, %v291
      %vm309 = vcmask 15360
      %310 = vst.msk [vmem:[#allocation2] sm:$0xff] %vm309, %v293
      %311 = vst.msk [vmem:[#allocation2 + $0x8] sm:$0xff] %vm309, %v294
      %312 = vst.msk [vmem:[#allocation2 + $0x10] sm:$0xff] %vm309, %v295
      %313 = vst.msk [vmem:[#allocation2 + $0x18] sm:$0xff] %vm309, %v296
      %314 = vst.msk [vmem:[#allocation2 + $0x20] sm:$0xff] %vm309, %v297
      %315 = vst.msk [vmem:[#allocation2 + $0x28] sm:$0xff] %vm309, %v298
      %316 = vst.msk [vmem:[#allocation2 + $0x30] sm:$0xff] %vm309, %v299
      %317 = vst.msk [vmem:[#allocation2 + $0x38] sm:$0xff] %vm309, %v300
      %v318 = vld [vmem:[%s244] sm:$0xf]
      %v319 = vld [vmem:[%s244 + $0x4] sm:$0xf]
      %v320 = vld [vmem:[%s244 + $0x8] sm:$0x1]
      %v321 = vld [vmem:[%s244 + $0xc] sm:$0xf]
      %v322 = vld [vmem:[%s244 + $0x10] sm:$0xf]
      %v323 = vld [vmem:[%s244 + $0x14] sm:$0x1]
      %v324 = vld [vmem:[%s244 + $0x18] sm:$0xf]
      %v325 = vld [vmem:[%s244 + $0x1c] sm:$0xf]
      %v326 = vld [vmem:[%s244 + $0x20] sm:$0x1]
      %v327 = vld [vmem:[%s244 + $0x24] sm:$0xf]
      %v328 = vld [vmem:[%s244 + $0x28] sm:$0xf]
      %v329 = vld [vmem:[%s244 + $0x2c] sm:$0x1]
      %v330 = vld [vmem:[%s244 + $0x30] sm:$0xf]
      %v331 = vld [vmem:[%s244 + $0x34] sm:$0xf]
      %v332 = vld [vmem:[%s244 + $0x38] sm:$0x1]
      %v333 = vld [vmem:[%s244 + $0x3c] sm:$0xf]
      %v334 = vld [vmem:[%s244 + $0x40] sm:$0xf]
      %v335 = vld [vmem:[%s244 + $0x44] sm:$0x1]
      %v336 = vld [vmem:[%s244 + $0x48] sm:$0xf]
      %v337 = vld [vmem:[%s244 + $0x4c] sm:$0xf]
      %v338 = vld [vmem:[%s244 + $0x50] sm:$0x1]
      %v339 = vld [vmem:[%s244 + $0x54] sm:$0xf]
      %v340 = vld [vmem:[%s244 + $0x58] sm:$0xf]
      %v341 = vld [vmem:[%s244 + $0x5c] sm:$0x1]
      %vm342 = vsmask.f32 3328
      %vm343 = vsmask.f32 7440
      %vm344 = vmor %vm342, %vm343
      %v346 = vshrl.u32 %v318, 16
      %v348 = vrot.slane %v346, 4
      %v349 = vshll.u32 %v318, 16
      %v351 = vrot.slane %v349, 5
      %v352 = vor.u32 %v348, %v351
      %v353 = vrot.slane %v352, 4
      %v355 = vshll.u32 %v319, 16
      %v357 = vrot.slane %v355, 5
      %v358 = vsel %vm344, %v353, %v357
      %v359 = vshrl.u32 %v319, 16
      %v361 = vrot.slane %v359, 4
      %v362 = vor.u32 %v361, %v357
      %v363 = vrot.slane %v362, 4
      %v365 = vshll.u32 %v320, 16
      %v367 = vrot.slane %v365, 5
      %v368 = vsel %vm344, %v363, %v367
      %v370 = vshrl.u32 %v321, 16
      %v372 = vrot.slane %v370, 4
      %v373 = vshll.u32 %v321, 16
      %v375 = vrot.slane %v373, 5
      %v376 = vor.u32 %v372, %v375
      %v377 = vrot.slane %v376, 4
      %v379 = vshll.u32 %v322, 16
      %v381 = vrot.slane %v379, 5
      %v382 = vsel %vm344, %v377, %v381
      %v383 = vshrl.u32 %v322, 16
      %v385 = vrot.slane %v383, 4
      %v386 = vor.u32 %v385, %v381
      %v387 = vrot.slane %v386, 4
      %v389 = vshll.u32 %v323, 16
      %v391 = vrot.slane %v389, 5
      %v392 = vsel %vm344, %v387, %v391
      %v394 = vshrl.u32 %v324, 16
      %v396 = vrot.slane %v394, 4
      %v397 = vshll.u32 %v324, 16
      %v399 = vrot.slane %v397, 5
      %v400 = vor.u32 %v396, %v399
      %v401 = vrot.slane %v400, 4
      %v403 = vshll.u32 %v325, 16
      %v405 = vrot.slane %v403, 5
      %v406 = vsel %vm344, %v401, %v405
      %v407 = vshrl.u32 %v325, 16
      %v409 = vrot.slane %v407, 4
      %v410 = vor.u32 %v409, %v405
      %v411 = vrot.slane %v410, 4
      %v413 = vshll.u32 %v326, 16
      %v415 = vrot.slane %v413, 5
      %v416 = vsel %vm344, %v411, %v415
      %v418 = vshrl.u32 %v327, 16
      %v420 = vrot.slane %v418, 4
      %v421 = vshll.u32 %v327, 16
      %v423 = vrot.slane %v421, 5
      %v424 = vor.u32 %v420, %v423
      %v425 = vrot.slane %v424, 4
      %v427 = vshll.u32 %v328, 16
      %v429 = vrot.slane %v427, 5
      %v430 = vsel %vm344, %v425, %v429
      %v431 = vshrl.u32 %v328, 16
      %v433 = vrot.slane %v431, 4
      %v434 = vor.u32 %v433, %v429
      %v435 = vrot.slane %v434, 4
      %v437 = vshll.u32 %v329, 16
      %v439 = vrot.slane %v437, 5
      %v440 = vsel %vm344, %v435, %v439
      %v442 = vshrl.u32 %v330, 16
      %v444 = vrot.slane %v442, 4
      %v445 = vshll.u32 %v330, 16
      %v447 = vrot.slane %v445, 5
      %v448 = vor.u32 %v444, %v447
      %v449 = vrot.slane %v448, 4
      %v451 = vshll.u32 %v331, 16
      %v453 = vrot.slane %v451, 5
      %v454 = vsel %vm344, %v449, %v453
      %v455 = vshrl.u32 %v331, 16
      %v457 = vrot.slane %v455, 4
      %v458 = vor.u32 %v457, %v453
      %v459 = vrot.slane %v458, 4
      %v461 = vshll.u32 %v332, 16
      %v463 = vrot.slane %v461, 5
      %v464 = vsel %vm344, %v459, %v463
      %v466 = vshrl.u32 %v333, 16
      %v468 = vrot.slane %v466, 4
      %v469 = vshll.u32 %v333, 16
      %v471 = vrot.slane %v469, 5
      %v472 = vor.u32 %v468, %v471
      %v473 = vrot.slane %v472, 4
      %v475 = vshll.u32 %v334, 16
      %v477 = vrot.slane %v475, 5
      %v478 = vsel %vm344, %v473, %v477
      %v479 = vshrl.u32 %v334, 16
      %v481 = vrot.slane %v479, 4
      %v482 = vor.u32 %v481, %v477
      %v483 = vrot.slane %v482, 4
      %v485 = vshll.u32 %v335, 16
      %v487 = vrot.slane %v485, 5
      %v488 = vsel %vm344, %v483, %v487
      %v490 = vshrl.u32 %v336, 16
      %v492 = vrot.slane %v490, 4
      %v493 = vshll.u32 %v336, 16
      %v495 = vrot.slane %v493, 5
      %v496 = vor.u32 %v492, %v495
      %v497 = vrot.slane %v496, 4
      %v499 = vshll.u32 %v337, 16
      %v501 = vrot.slane %v499, 5
      %v502 = vsel %vm344, %v497, %v501
      %v503 = vshrl.u32 %v337, 16
      %v505 = vrot.slane %v503, 4
      %v506 = vor.u32 %v505, %v501
      %v507 = vrot.slane %v506, 4
      %v509 = vshll.u32 %v338, 16
      %v511 = vrot.slane %v509, 5
      %v512 = vsel %vm344, %v507, %v511
      %v514 = vshrl.u32 %v339, 16
      %v516 = vrot.slane %v514, 4
      %v517 = vshll.u32 %v339, 16
      %v519 = vrot.slane %v517, 5
      %v520 = vor.u32 %v516, %v519
      %v521 = vrot.slane %v520, 4
      %v523 = vshll.u32 %v340, 16
      %v525 = vrot.slane %v523, 5
      %v526 = vsel %vm344, %v521, %v525
      %v527 = vshrl.u32 %v340, 16
      %v529 = vrot.slane %v527, 4
      %v530 = vor.u32 %v529, %v525
      %v531 = vrot.slane %v530, 4
      %v533 = vshll.u32 %v341, 16
      %v535 = vrot.slane %v533, 5
      %v536 = vsel %vm344, %v531, %v535
      %v537 = vunpack.c.l.b16 %v358
      %v538 = vunpack.c.l.b16 %v368
      %v539 = vunpack.c.l.b16 %v382
      %v540 = vunpack.c.l.b16 %v392
      %v541 = vunpack.c.l.b16 %v406
      %v542 = vunpack.c.l.b16 %v416
      %v543 = vunpack.c.l.b16 %v430
      %v544 = vunpack.c.l.b16 %v440
      %v545 = vunpack.c.l.b16 %v454
      %v546 = vunpack.c.l.b16 %v464
      %v547 = vunpack.c.l.b16 %v478
      %v548 = vunpack.c.l.b16 %v488
      %v549 = vunpack.c.l.b16 %v502
      %v550 = vunpack.c.l.b16 %v512
      %v551 = vunpack.c.l.b16 %v526
      %v552 = vunpack.c.l.b16 %v536
      %v553 = vpack.c.b16 %v538, %v537
      %v554 = vpack.c.b16 %v540, %v539
      %v555 = vpack.c.b16 %v542, %v541
      %v556 = vpack.c.b16 %v544, %v543
      %v557 = vpack.c.b16 %v546, %v545
      %v558 = vpack.c.b16 %v548, %v547
      %v559 = vpack.c.b16 %v550, %v549
      %v560 = vpack.c.b16 %v552, %v551
      %561 = vrot.lane.b32.xlu0 %v553, 2
      %v562 = vpop.permute.xlu0 %561
      %563 = vrot.lane.b32.xlu0 %v554, 2
      %v564 = vpop.permute.xlu0 %563
      %565 = vrot.lane.b32.xlu0 %v555, 2
      %v566 = vpop.permute.xlu0 %565
      %567 = vrot.lane.b32.xlu0 %v556, 2
      %v568 = vpop.permute.xlu0 %567
      %569 = vrot.lane.b32.xlu0 %v557, 2
      %v570 = vpop.permute.xlu0 %569
      %571 = vrot.lane.b32.xlu0 %v558, 2
      %v572 = vpop.permute.xlu0 %571
      %573 = vrot.lane.b32.xlu0 %v559, 2
      %v574 = vpop.permute.xlu0 %573
      %575 = vrot.lane.b32.xlu0 %v560, 2
      %v576 = vpop.permute.xlu0 %575
      %vm585 = vcmask 31760
      %586 = vst.msk [vmem:[#allocation2] sm:$0xff] %vm585, %v562
      %587 = vst.msk [vmem:[#allocation2 + $0x8] sm:$0xff] %vm585, %v564
      %588 = vst.msk [vmem:[#allocation2 + $0x10] sm:$0xff] %vm585, %v566
      %589 = vst.msk [vmem:[#allocation2 + $0x18] sm:$0xff] %vm585, %v568
      %590 = vst.msk [vmem:[#allocation2 + $0x20] sm:$0xff] %vm585, %v570
      %591 = vst.msk [vmem:[#allocation2 + $0x28] sm:$0xff] %vm585, %v572
      %592 = vst.msk [vmem:[#allocation2 + $0x30] sm:$0xff] %vm585, %v574
      %593 = vst.msk [vmem:[#allocation2 + $0x38] sm:$0xff] %vm585, %v576
      %v594 = vld [vmem:[%s244] sm:$0xe]
      %v595 = vld [vmem:[%s244 + $0x4] sm:$0xf]
      %v596 = vld [vmem:[%s244 + $0x8] sm:$0x1]
      %v597 = vld [vmem:[%s244 + $0xc] sm:$0xe]
      %v598 = vld [vmem:[%s244 + $0x10] sm:$0xf]
      %v599 = vld [vmem:[%s244 + $0x14] sm:$0x1]
      %v600 = vld [vmem:[%s244 + $0x18] sm:$0xe]
      %v601 = vld [vmem:[%s244 + $0x1c] sm:$0xf]
      %v602 = vld [vmem:[%s244 + $0x20] sm:$0x1]
      %v603 = vld [vmem:[%s244 + $0x24] sm:$0xe]
      %v604 = vld [vmem:[%s244 + $0x28] sm:$0xf]
      %v605 = vld [vmem:[%s244 + $0x2c] sm:$0x1]
      %v606 = vld [vmem:[%s244 + $0x30] sm:$0xe]
      %v607 = vld [vmem:[%s244 + $0x34] sm:$0xf]
      %v608 = vld [vmem:[%s244 + $0x38] sm:$0x1]
      %v609 = vld [vmem:[%s244 + $0x3c] sm:$0xe]
      %v610 = vld [vmem:[%s244 + $0x40] sm:$0xf]
      %v611 = vld [vmem:[%s244 + $0x44] sm:$0x1]
      %v612 = vld [vmem:[%s244 + $0x48] sm:$0xe]
      %v613 = vld [vmem:[%s244 + $0x4c] sm:$0xf]
      %v614 = vld [vmem:[%s244 + $0x50] sm:$0x1]
      %v615 = vld [vmem:[%s244 + $0x54] sm:$0xe]
      %v616 = vld [vmem:[%s244 + $0x58] sm:$0xf]
      %v617 = vld [vmem:[%s244 + $0x5c] sm:$0x1]
      %vm642 = vcmask 1042432
      %vm643 = vcmask 1046532
      %vm644 = vmor %vm642, %vm643
      %v645 = vrot.slane %v594, 5
      %v646 = vrot.slane %v645, 4
      %v647 = vrot.slane %v595, 5
      %v648 = vsel %vm644, %v646, %v647
      %v649 = vrot.slane %v647, 4
      %v650 = vrot.slane %v596, 5
      %v651 = vsel %vm644, %v649, %v650
      %v652 = vrot.slane %v597, 5
      %v653 = vrot.slane %v652, 4
      %v654 = vrot.slane %v598, 5
      %v655 = vsel %vm644, %v653, %v654
      %v656 = vrot.slane %v654, 4
      %v657 = vrot.slane %v599, 5
      %v658 = vsel %vm644, %v656, %v657
      %v659 = vrot.slane %v600, 5
      %v660 = vrot.slane %v659, 4
      %v661 = vrot.slane %v601, 5
      %v662 = vsel %vm644, %v660, %v661
      %v663 = vrot.slane %v661, 4
      %v664 = vrot.slane %v602, 5
      %v665 = vsel %vm644, %v663, %v664
      %v666 = vrot.slane %v603, 5
      %v667 = vrot.slane %v666, 4
      %v668 = vrot.slane %v604, 5
      %v669 = vsel %vm644, %v667, %v668
      %v670 = vrot.slane %v668, 4
      %v671 = vrot.slane %v605, 5
      %v672 = vsel %vm644, %v670, %v671
      %v673 = vrot.slane %v606, 5
      %v674 = vrot.slane %v673, 4
      %v675 = vrot.slane %v607, 5
      %v676 = vsel %vm644, %v674, %v675
      %v677 = vrot.slane %v675, 4
      %v678 = vrot.slane %v608, 5
      %v679 = vsel %vm644, %v677, %v678
      %v680 = vrot.slane %v609, 5
      %v681 = vrot.slane %v680, 4
      %v682 = vrot.slane %v610, 5
      %v683 = vsel %vm644, %v681, %v682
      %v684 = vrot.slane %v682, 4
      %v685 = vrot.slane %v611, 5
      %v686 = vsel %vm644, %v684, %v685
      %v687 = vrot.slane %v612, 5
      %v688 = vrot.slane %v687, 4
      %v689 = vrot.slane %v613, 5
      %v690 = vsel %vm644, %v688, %v689
      %v691 = vrot.slane %v689, 4
      %v692 = vrot.slane %v614, 5
      %v693 = vsel %vm644, %v691, %v692
      %v694 = vrot.slane %v615, 5
      %v695 = vrot.slane %v694, 4
      %v696 = vrot.slane %v616, 5
      %v697 = vsel %vm644, %v695, %v696
      %v698 = vrot.slane %v696, 4
      %v699 = vrot.slane %v617, 5
      %v700 = vsel %vm644, %v698, %v699
      %v701 = vunpack.c.l.b16 %v648
      %v702 = vunpack.c.l.b16 %v651
      %v703 = vunpack.c.l.b16 %v655
      %v704 = vunpack.c.l.b16 %v658
      %v705 = vunpack.c.l.b16 %v662
      %v706 = vunpack.c.l.b16 %v665
      %v707 = vunpack.c.l.b16 %v669
      %v708 = vunpack.c.l.b16 %v672
      %v709 = vunpack.c.l.b16 %v676
      %v710 = vunpack.c.l.b16 %v679
      %v711 = vunpack.c.l.b16 %v683
      %v712 = vunpack.c.l.b16 %v686
      %v713 = vunpack.c.l.b16 %v690
      %v714 = vunpack.c.l.b16 %v693
      %v715 = vunpack.c.l.b16 %v697
      %v716 = vunpack.c.l.b16 %v700
      %v717 = vpack.c.b16 %v702, %v701
      %v718 = vpack.c.b16 %v704, %v703
      %v719 = vpack.c.b16 %v706, %v705
      %v720 = vpack.c.b16 %v708, %v707
      %v721 = vpack.c.b16 %v710, %v709
      %v722 = vpack.c.b16 %v712, %v711
      %v723 = vpack.c.b16 %v714, %v713
      %v724 = vpack.c.b16 %v716, %v715
      %725 = vrot.lane.b32.xlu0 %v717, 4
      %v726 = vpop.permute.xlu0 %725
      %727 = vrot.lane.b32.xlu0 %v718, 4
      %v728 = vpop.permute.xlu0 %727
      %729 = vrot.lane.b32.xlu0 %v719, 4
      %v730 = vpop.permute.xlu0 %729
      %731 = vrot.lane.b32.xlu0 %v720, 4
      %v732 = vpop.permute.xlu0 %731
      %733 = vrot.lane.b32.xlu0 %v721, 4
      %v734 = vpop.permute.xlu0 %733
      %735 = vrot.lane.b32.xlu0 %v722, 4
      %v736 = vpop.permute.xlu0 %735
      %737 = vrot.lane.b32.xlu0 %v723, 4
      %v738 = vpop.permute.xlu0 %737
      %739 = vrot.lane.b32.xlu0 %v724, 4
      %v740 = vpop.permute.xlu0 %739
      %vm749 = vcmask 48160
      %750 = vst.msk [vmem:[#allocation2] sm:$0xff] %vm749, %v726
      %751 = vst.msk [vmem:[#allocation2 + $0x8] sm:$0xff] %vm749, %v728
      %752 = vst.msk [vmem:[#allocation2 + $0x10] sm:$0xff] %vm749, %v730
      %753 = vst.msk [vmem:[#allocation2 + $0x18] sm:$0xff] %vm749, %v732
      %754 = vst.msk [vmem:[#allocation2 + $0x20] sm:$0xff] %vm749, %v734
      %755 = vst.msk [vmem:[#allocation2 + $0x28] sm:$0xff] %vm749, %v736
      %756 = vst.msk [vmem:[#allocation2 + $0x30] sm:$0xff] %vm749, %v738
      %757 = vst.msk [vmem:[#allocation2 + $0x38] sm:$0xff] %vm749, %v740
      %s758 = sadd.s32 %s241, 1
      %s759 = smul.u32 %s758, 3
      %s760 = smul.addr %s759, 4
      %s761 = scalar_lea.vmem %s219, %s760
      %v762 = vld [vmem:[%s761] sm:$0xf]
      %v763 = vld [vmem:[%s761 + $0x4] sm:$0xf]
      %v764 = vld [vmem:[%s761 + $0xc] sm:$0xf]
      %v765 = vld [vmem:[%s761 + $0x10] sm:$0xf]
      %v766 = vld [vmem:[%s761 + $0x18] sm:$0xf]
      %v767 = vld [vmem:[%s761 + $0x1c] sm:$0xf]
      %v768 = vld [vmem:[%s761 + $0x24] sm:$0xf]
      %v769 = vld [vmem:[%s761 + $0x28] sm:$0xf]
      %v770 = vld [vmem:[%s761 + $0x30] sm:$0xf]
      %v771 = vld [vmem:[%s761 + $0x34] sm:$0xf]
      %v772 = vld [vmem:[%s761 + $0x3c] sm:$0xf]
      %v773 = vld [vmem:[%s761 + $0x40] sm:$0xf]
      %v774 = vld [vmem:[%s761 + $0x48] sm:$0xf]
      %v775 = vld [vmem:[%s761 + $0x4c] sm:$0xf]
      %v776 = vld [vmem:[%s761 + $0x54] sm:$0xf]
      %v777 = vld [vmem:[%s761 + $0x58] sm:$0xf]
      %v794 = vunpack.c.l.b16 %v762
      %v795 = vunpack.c.l.b16 %v763
      %v796 = vunpack.c.l.b16 %v764
      %v797 = vunpack.c.l.b16 %v765
      %v798 = vunpack.c.l.b16 %v766
      %v799 = vunpack.c.l.b16 %v767
      %v800 = vunpack.c.l.b16 %v768
      %v801 = vunpack.c.l.b16 %v769
      %v802 = vunpack.c.l.b16 %v770
      %v803 = vunpack.c.l.b16 %v771
      %v804 = vunpack.c.l.b16 %v772
      %v805 = vunpack.c.l.b16 %v773
      %v806 = vunpack.c.l.b16 %v774
      %v807 = vunpack.c.l.b16 %v775
      %v808 = vunpack.c.l.b16 %v776
      %v809 = vunpack.c.l.b16 %v777
      %v810 = vpack.c.b16 %v795, %v794
      %v811 = vpack.c.b16 %v797, %v796
      %v812 = vpack.c.b16 %v799, %v798
      %v813 = vpack.c.b16 %v801, %v800
      %v814 = vpack.c.b16 %v803, %v802
      %v815 = vpack.c.b16 %v805, %v804
      %v816 = vpack.c.b16 %v807, %v806
      %v817 = vpack.c.b16 %v809, %v808
      %818 = vrot.lane.b32.xlu0 %v810, 6
      %v819 = vpop.permute.xlu0 %818
      %820 = vrot.lane.b32.xlu0 %v811, 6
      %v821 = vpop.permute.xlu0 %820
      %822 = vrot.lane.b32.xlu0 %v812, 6
      %v823 = vpop.permute.xlu0 %822
      %824 = vrot.lane.b32.xlu0 %v813, 6
      %v825 = vpop.permute.xlu0 %824
      %826 = vrot.lane.b32.xlu0 %v814, 6
      %v827 = vpop.permute.xlu0 %826
      %828 = vrot.lane.b32.xlu0 %v815, 6
      %v829 = vpop.permute.xlu0 %828
      %830 = vrot.lane.b32.xlu0 %v816, 6
      %v831 = vpop.permute.xlu0 %830
      %832 = vrot.lane.b32.xlu0 %v817, 6
      %v833 = vpop.permute.xlu0 %832
      %vm842 = vcmask 64560
      %843 = vst.msk [vmem:[#allocation2] sm:$0xff] %vm842, %v819
      %844 = vst.msk [vmem:[#allocation2 + $0x8] sm:$0xff] %vm842, %v821
      %845 = vst.msk [vmem:[#allocation2 + $0x10] sm:$0xff] %vm842, %v823
      %846 = vst.msk [vmem:[#allocation2 + $0x18] sm:$0xff] %vm842, %v825
      %847 = vst.msk [vmem:[#allocation2 + $0x20] sm:$0xff] %vm842, %v827
      %848 = vst.msk [vmem:[#allocation2 + $0x28] sm:$0xff] %vm842, %v829
      %849 = vst.msk [vmem:[#allocation2 + $0x30] sm:$0xff] %vm842, %v831
      %850 = vst.msk [vmem:[#allocation2 + $0x38] sm:$0xff] %vm842, %v833
      %v851 = vld [vmem:[%s761] sm:$0xf]
      %v852 = vld [vmem:[%s761 + $0x4] sm:$0xf]
      %v853 = vld [vmem:[%s761 + $0x8] sm:$0x1]
      %v854 = vld [vmem:[%s761 + $0xc] sm:$0xf]
      %v855 = vld [vmem:[%s761 + $0x10] sm:$0xf]
      %v856 = vld [vmem:[%s761 + $0x14] sm:$0x1]
      %v857 = vld [vmem:[%s761 + $0x18] sm:$0xf]
      %v858 = vld [vmem:[%s761 + $0x1c] sm:$0xf]
      %v859 = vld [vmem:[%s761 + $0x20] sm:$0x1]
      %v860 = vld [vmem:[%s761 + $0x24] sm:$0xf]
      %v861 = vld [vmem:[%s761 + $0x28] sm:$0xf]
      %v862 = vld [vmem:[%s761 + $0x2c] sm:$0x1]
      %v863 = vld [vmem:[%s761 + $0x30] sm:$0xf]
      %v864 = vld [vmem:[%s761 + $0x34] sm:$0xf]
      %v865 = vld [vmem:[%s761 + $0x38] sm:$0x1]
      %v866 = vld [vmem:[%s761 + $0x3c] sm:$0xf]
      %v867 = vld [vmem:[%s761 + $0x40] sm:$0xf]
      %v868 = vld [vmem:[%s761 + $0x44] sm:$0x1]
      %v869 = vld [vmem:[%s761 + $0x48] sm:$0xf]
      %v870 = vld [vmem:[%s761 + $0x4c] sm:$0xf]
      %v871 = vld [vmem:[%s761 + $0x50] sm:$0x1]
      %v872 = vld [vmem:[%s761 + $0x54] sm:$0xf]
      %v873 = vld [vmem:[%s761 + $0x58] sm:$0xf]
      %v874 = vld [vmem:[%s761 + $0x5c] sm:$0x1]
      %v876 = vshrl.u32 %v851, 16
      %v878 = vrot.slane %v876, 4
      %v879 = vshll.u32 %v851, 16
      %v881 = vrot.slane %v879, 5
      %v882 = vor.u32 %v878, %v881
      %v883 = vrot.slane %v882, 4
      %v885 = vshll.u32 %v852, 16
      %v887 = vrot.slane %v885, 5
      %v888 = vsel %vm344, %v883, %v887
      %v889 = vshrl.u32 %v852, 16
      %v891 = vrot.slane %v889, 4
      %v892 = vor.u32 %v891, %v887
      %v893 = vrot.slane %v892, 4
      %v895 = vshll.u32 %v853, 16
      %v897 = vrot.slane %v895, 5
      %v898 = vsel %vm344, %v893, %v897
      %v900 = vshrl.u32 %v854, 16
      %v902 = vrot.slane %v900, 4
      %v903 = vshll.u32 %v854, 16
      %v905 = vrot.slane %v903, 5
      %v906 = vor.u32 %v902, %v905
      %v907 = vrot.slane %v906, 4
      %v909 = vshll.u32 %v855, 16
      %v911 = vrot.slane %v909, 5
      %v912 = vsel %vm344, %v907, %v911
      %v913 = vshrl.u32 %v855, 16
      %v915 = vrot.slane %v913, 4
      %v916 = vor.u32 %v915, %v911
      %v917 = vrot.slane %v916, 4
      %v919 = vshll.u32 %v856, 16
      %v921 = vrot.slane %v919, 5
      %v922 = vsel %vm344, %v917, %v921
      %v924 = vshrl.u32 %v857, 16
      %v926 = vrot.slane %v924, 4
      %v927 = vshll.u32 %v857, 16
      %v929 = vrot.slane %v927, 5
      %v930 = vor.u32 %v926, %v929
      %v931 = vrot.slane %v930, 4
      %v933 = vshll.u32 %v858, 16
      %v935 = vrot.slane %v933, 5
      %v936 = vsel %vm344, %v931, %v935
      %v937 = vshrl.u32 %v858, 16
      %v939 = vrot.slane %v937, 4
      %v940 = vor.u32 %v939, %v935
      %v941 = vrot.slane %v940, 4
      %v943 = vshll.u32 %v859, 16
      %v945 = vrot.slane %v943, 5
      %v946 = vsel %vm344, %v941, %v945
      %v948 = vshrl.u32 %v860, 16
      %v950 = vrot.slane %v948, 4
      %v951 = vshll.u32 %v860, 16
      %v953 = vrot.slane %v951, 5
      %v954 = vor.u32 %v950, %v953
      %v955 = vrot.slane %v954, 4
      %v957 = vshll.u32 %v861, 16
      %v959 = vrot.slane %v957, 5
      %v960 = vsel %vm344, %v955, %v959
      %v961 = vshrl.u32 %v861, 16
      %v963 = vrot.slane %v961, 4
      %v964 = vor.u32 %v963, %v959
      %v965 = vrot.slane %v964, 4
      %v967 = vshll.u32 %v862, 16
      %v969 = vrot.slane %v967, 5
      %v970 = vsel %vm344, %v965, %v969
      %v972 = vshrl.u32 %v863, 16
      %v974 = vrot.slane %v972, 4
      %v975 = vshll.u32 %v863, 16
      %v977 = vrot.slane %v975, 5
      %v978 = vor.u32 %v974, %v977
      %v979 = vrot.slane %v978, 4
      %v981 = vshll.u32 %v864, 16
      %v983 = vrot.slane %v981, 5
      %v984 = vsel %vm344, %v979, %v983
      %v985 = vshrl.u32 %v864, 16
      %v987 = vrot.slane %v985, 4
      %v988 = vor.u32 %v987, %v983
      %v989 = vrot.slane %v988, 4
      %v991 = vshll.u32 %v865, 16
      %v993 = vrot.slane %v991, 5
      %v994 = vsel %vm344, %v989, %v993
      %v996 = vshrl.u32 %v866, 16
      %v998 = vrot.slane %v996, 4
      %v999 = vshll.u32 %v866, 16
      %v1001 = vrot.slane %v999, 5
      %v1002 = vor.u32 %v998, %v1001
      %v1003 = vrot.slane %v1002, 4
      %v1005 = vshll.u32 %v867, 16
      %v1007 = vrot.slane %v1005, 5
      %v1008 = vsel %vm344, %v1003, %v1007
      %v1009 = vshrl.u32 %v867, 16
      %v1011 = vrot.slane %v1009, 4
      %v1012 = vor.u32 %v1011, %v1007
      %v1013 = vrot.slane %v1012, 4
      %v1015 = vshll.u32 %v868, 16
      %v1017 = vrot.slane %v1015, 5
      %v1018 = vsel %vm344, %v1013, %v1017
      %v1020 = vshrl.u32 %v869, 16
      %v1022 = vrot.slane %v1020, 4
      %v1023 = vshll.u32 %v869, 16
      %v1025 = vrot.slane %v1023, 5
      %v1026 = vor.u32 %v1022, %v1025
      %v1027 = vrot.slane %v1026, 4
      %v1029 = vshll.u32 %v870, 16
      %v1031 = vrot.slane %v1029, 5
      %v1032 = vsel %vm344, %v1027, %v1031
      %v1033 = vshrl.u32 %v870, 16
      %v1035 = vrot.slane %v1033, 4
      %v1036 = vor.u32 %v1035, %v1031
      %v1037 = vrot.slane %v1036, 4
      %v1039 = vshll.u32 %v871, 16
      %v1041 = vrot.slane %v1039, 5
      %v1042 = vsel %vm344, %v1037, %v1041
      %v1044 = vshrl.u32 %v872, 16
      %v1046 = vrot.slane %v1044, 4
      %v1047 = vshll.u32 %v872, 16
      %v1049 = vrot.slane %v1047, 5
      %v1050 = vor.u32 %v1046, %v1049
      %v1051 = vrot.slane %v1050, 4
      %v1053 = vshll.u32 %v873, 16
      %v1055 = vrot.slane %v1053, 5
      %v1056 = vsel %vm344, %v1051, %v1055
      %v1057 = vshrl.u32 %v873, 16
      %v1059 = vrot.slane %v1057, 4
      %v1060 = vor.u32 %v1059, %v1055
      %v1061 = vrot.slane %v1060, 4
      %v1063 = vshll.u32 %v874, 16
      %v1065 = vrot.slane %v1063, 5
      %v1066 = vsel %vm344, %v1061, %v1065
      %v1067 = vunpack.c.l.b16 %v888
      %v1068 = vunpack.c.l.b16 %v898
      %v1069 = vunpack.c.l.b16 %v912
      %v1070 = vunpack.c.l.b16 %v922
      %v1071 = vunpack.c.l.b16 %v936
      %v1072 = vunpack.c.l.b16 %v946
      %v1073 = vunpack.c.l.b16 %v960
      %v1074 = vunpack.c.l.b16 %v970
      %v1075 = vunpack.c.l.b16 %v984
      %v1076 = vunpack.c.l.b16 %v994
      %v1077 = vunpack.c.l.b16 %v1008
      %v1078 = vunpack.c.l.b16 %v1018
      %v1079 = vunpack.c.l.b16 %v1032
      %v1080 = vunpack.c.l.b16 %v1042
      %v1081 = vunpack.c.l.b16 %v1056
      %v1082 = vunpack.c.l.b16 %v1066
      %v1083 = vpack.c.b16 %v1068, %v1067
      %v1084 = vpack.c.b16 %v1070, %v1069
      %v1085 = vpack.c.b16 %v1072, %v1071
      %v1086 = vpack.c.b16 %v1074, %v1073
      %v1087 = vpack.c.b16 %v1076, %v1075
      %v1088 = vpack.c.b16 %v1078, %v1077
      %v1089 = vpack.c.b16 %v1080, %v1079
      %v1090 = vpack.c.b16 %v1082, %v1081
      %1091 = vrot.lane.b32.xlu0 %v1083, 8
      %v1092 = vpop.permute.xlu0 %1091
      %1093 = vrot.lane.b32.xlu0 %v1084, 8
      %v1094 = vpop.permute.xlu0 %1093
      %1095 = vrot.lane.b32.xlu0 %v1085, 8
      %v1096 = vpop.permute.xlu0 %1095
      %1097 = vrot.lane.b32.xlu0 %v1086, 8
      %v1098 = vpop.permute.xlu0 %1097
      %1099 = vrot.lane.b32.xlu0 %v1087, 8
      %v1100 = vpop.permute.xlu0 %1099
      %1101 = vrot.lane.b32.xlu0 %v1088, 8
      %v1102 = vpop.permute.xlu0 %1101
      %1103 = vrot.lane.b32.xlu0 %v1089, 8
      %v1104 = vpop.permute.xlu0 %1103
      %1105 = vrot.lane.b32.xlu0 %v1090, 8
      %v1106 = vpop.permute.xlu0 %1105
      %vm1115 = vcmask 80960
      %1116 = vst.msk [vmem:[#allocation2] sm:$0xff] %vm1115, %v1092
      %1117 = vst.msk [vmem:[#allocation2 + $0x8] sm:$0xff] %vm1115, %v1094
      %1118 = vst.msk [vmem:[#allocation2 + $0x10] sm:$0xff] %vm1115, %v1096
      %1119 = vst.msk [vmem:[#allocation2 + $0x18] sm:$0xff] %vm1115, %v1098
      %1120 = vst.msk [vmem:[#allocation2 + $0x20] sm:$0xff] %vm1115, %v1100
      %1121 = vst.msk [vmem:[#allocation2 + $0x28] sm:$0xff] %vm1115, %v1102
      %1122 = vst.msk [vmem:[#allocation2 + $0x30] sm:$0xff] %vm1115, %v1104
      %1123 = vst.msk [vmem:[#allocation2 + $0x38] sm:$0xff] %vm1115, %v1106
      %v1124 = vld [vmem:[%s761] sm:$0xe]
      %v1125 = vld [vmem:[%s761 + $0x4] sm:$0xf]
      %v1126 = vld [vmem:[%s761 + $0x8] sm:$0x1]
      %v1127 = vld [vmem:[%s761 + $0xc] sm:$0xe]
      %v1128 = vld [vmem:[%s761 + $0x10] sm:$0xf]
      %v1129 = vld [vmem:[%s761 + $0x14] sm:$0x1]
      %v1130 = vld [vmem:[%s761 + $0x18] sm:$0xe]
      %v1131 = vld [vmem:[%s761 + $0x1c] sm:$0xf]
      %v1132 = vld [vmem:[%s761 + $0x20] sm:$0x1]
      %v1133 = vld [vmem:[%s761 + $0x24] sm:$0xe]
      %v1134 = vld [vmem:[%s761 + $0x28] sm:$0xf]
      %v1135 = vld [vmem:[%s761 + $0x2c] sm:$0x1]
      %v1136 = vld [vmem:[%s761 + $0x30] sm:$0xe]
      %v1137 = vld [vmem:[%s761 + $0x34] sm:$0xf]
      %v1138 = vld [vmem:[%s761 + $0x38] sm:$0x1]
      %v1139 = vld [vmem:[%s761 + $0x3c] sm:$0xe]
      %v1140 = vld [vmem:[%s761 + $0x40] sm:$0xf]
      %v1141 = vld [vmem:[%s761 + $0x44] sm:$0x1]
      %v1142 = vld [vmem:[%s761 + $0x48] sm:$0xe]
      %v1143 = vld [vmem:[%s761 + $0x4c] sm:$0xf]
      %v1144 = vld [vmem:[%s761 + $0x50] sm:$0x1]
      %v1145 = vld [vmem:[%s761 + $0x54] sm:$0xe]
      %v1146 = vld [vmem:[%s761 + $0x58] sm:$0xf]
      %v1147 = vld [vmem:[%s761 + $0x5c] sm:$0x1]
      %v1172 = vrot.slane %v1124, 5
      %v1173 = vrot.slane %v1172, 4
      %v1174 = vrot.slane %v1125, 5
      %v1175 = vsel %vm644, %v1173, %v1174
      %v1176 = vrot.slane %v1174, 4
      %v1177 = vrot.slane %v1126, 5
      %v1178 = vsel %vm644, %v1176, %v1177
      %v1179 = vrot.slane %v1127, 5
      %v1180 = vrot.slane %v1179, 4
      %v1181 = vrot.slane %v1128, 5
      %v1182 = vsel %vm644, %v1180, %v1181
      %v1183 = vrot.slane %v1181, 4
      %v1184 = vrot.slane %v1129, 5
      %v1185 = vsel %vm644, %v1183, %v1184
      %v1186 = vrot.slane %v1130, 5
      %v1187 = vrot.slane %v1186, 4
      %v1188 = vrot.slane %v1131, 5
      %v1189 = vsel %vm644, %v1187, %v1188
      %v1190 = vrot.slane %v1188, 4
      %v1191 = vrot.slane %v1132, 5
      %v1192 = vsel %vm644, %v1190, %v1191
      %v1193 = vrot.slane %v1133, 5
      %v1194 = vrot.slane %v1193, 4
      %v1195 = vrot.slane %v1134, 5
      %v1196 = vsel %vm644, %v1194, %v1195
      %v1197 = vrot.slane %v1195, 4
      %v1198 = vrot.slane %v1135, 5
      %v1199 = vsel %vm644, %v1197, %v1198
      %v1200 = vrot.slane %v1136, 5
      %v1201 = vrot.slane %v1200, 4
      %v1202 = vrot.slane %v1137, 5
      %v1203 = vsel %vm644, %v1201, %v1202
      %v1204 = vrot.slane %v1202, 4
      %v1205 = vrot.slane %v1138, 5
      %v1206 = vsel %vm644, %v1204, %v1205
      %v1207 = vrot.slane %v1139, 5
      %v1208 = vrot.slane %v1207, 4
      %v1209 = vrot.slane %v1140, 5
      %v1210 = vsel %vm644, %v1208, %v1209
      %v1211 = vrot.slane %v1209, 4
      %v1212 = vrot.slane %v1141, 5
      %v1213 = vsel %vm644, %v1211, %v1212
      %v1214 = vrot.slane %v1142, 5
      %v1215 = vrot.slane %v1214, 4
      %v1216 = vrot.slane %v1143, 5
      %v1217 = vsel %vm644, %v1215, %v1216
      %v1218 = vrot.slane %v1216, 4
      %v1219 = vrot.slane %v1144, 5
      %v1220 = vsel %vm644, %v1218, %v1219
      %v1221 = vrot.slane %v1145, 5
      %v1222 = vrot.slane %v1221, 4
      %v1223 = vrot.slane %v1146, 5
      %v1224 = vsel %vm644, %v1222, %v1223
      %v1225 = vrot.slane %v1223, 4
      %v1226 = vrot.slane %v1147, 5
      %v1227 = vsel %vm644, %v1225, %v1226
      %v1228 = vunpack.c.l.b16 %v1175
      %v1229 = vunpack.c.l.b16 %v1178
      %v1230 = vunpack.c.l.b16 %v1182
      %v1231 = vunpack.c.l.b16 %v1185
      %v1232 = vunpack.c.l.b16 %v1189
      %v1233 = vunpack.c.l.b16 %v1192
      %v1234 = vunpack.c.l.b16 %v1196
      %v1235 = vunpack.c.l.b16 %v1199
      %v1236 = vunpack.c.l.b16 %v1203
      %v1237 = vunpack.c.l.b16 %v1206
      %v1238 = vunpack.c.l.b16 %v1210
      %v1239 = vunpack.c.l.b16 %v1213
      %v1240 = vunpack.c.l.b16 %v1217
      %v1241 = vunpack.c.l.b16 %v1220
      %v1242 = vunpack.c.l.b16 %v1224
      %v1243 = vunpack.c.l.b16 %v1227
      %v1244 = vpack.c.b16 %v1229, %v1228
      %v1245 = vpack.c.b16 %v1231, %v1230
      %v1246 = vpack.c.b16 %v1233, %v1232
      %v1247 = vpack.c.b16 %v1235, %v1234
      %v1248 = vpack.c.b16 %v1237, %v1236
      %v1249 = vpack.c.b16 %v1239, %v1238
      %v1250 = vpack.c.b16 %v1241, %v1240
      %v1251 = vpack.c.b16 %v1243, %v1242
      %1252 = vrot.lane.b32.xlu0 %v1244, 10
      %v1253 = vpop.permute.xlu0 %1252
      %1254 = vrot.lane.b32.xlu0 %v1245, 10
      %v1255 = vpop.permute.xlu0 %1254
      %1256 = vrot.lane.b32.xlu0 %v1246, 10
      %v1257 = vpop.permute.xlu0 %1256
      %1258 = vrot.lane.b32.xlu0 %v1247, 10
      %v1259 = vpop.permute.xlu0 %1258
      %1260 = vrot.lane.b32.xlu0 %v1248, 10
      %v1261 = vpop.permute.xlu0 %1260
      %1262 = vrot.lane.b32.xlu0 %v1249, 10
      %v1263 = vpop.permute.xlu0 %1262
      %1264 = vrot.lane.b32.xlu0 %v1250, 10
      %v1265 = vpop.permute.xlu0 %1264
      %1266 = vrot.lane.b32.xlu0 %v1251, 10
      %v1267 = vpop.permute.xlu0 %1266
      %vm1276 = vcmask 97360
      %1277 = vst.msk [vmem:[#allocation2] sm:$0xff] %vm1276, %v1253
      %1278 = vst.msk [vmem:[#allocation2 + $0x8] sm:$0xff] %vm1276, %v1255
      %1279 = vst.msk [vmem:[#allocation2 + $0x10] sm:$0xff] %vm1276, %v1257
      %1280 = vst.msk [vmem:[#allocation2 + $0x18] sm:$0xff] %vm1276, %v1259
      %1281 = vst.msk [vmem:[#allocation2 + $0x20] sm:$0xff] %vm1276, %v1261
      %1282 = vst.msk [vmem:[#allocation2 + $0x28] sm:$0xff] %vm1276, %v1263
      %1283 = vst.msk [vmem:[#allocation2 + $0x30] sm:$0xff] %vm1276, %v1265
      %1284 = vst.msk [vmem:[#allocation2 + $0x38] sm:$0xff] %vm1276, %v1267
      %s1285 = sadd.s32 %s241, 2
      %s1286 = smul.u32 %s1285, 3
      %s1287 = smul.addr %s1286, 4
      %s1288 = scalar_lea.vmem %s219, %s1287
      %v1289 = vld [vmem:[%s1288] sm:$0xf]
      %v1290 = vld [vmem:[%s1288 + $0x4] sm:$0xf]
      %v1291 = vld [vmem:[%s1288 + $0xc] sm:$0xf]
      %v1292 = vld [vmem:[%s1288 + $0x10] sm:$0xf]
      %v1293 = vld [vmem:[%s1288 + $0x18] sm:$0xf]
      %v1294 = vld [vmem:[%s1288 + $0x1c] sm:$0xf]
      %v1295 = vld [vmem:[%s1288 + $0x24] sm:$0xf]
      %v1296 = vld [vmem:[%s1288 + $0x28] sm:$0xf]
      %v1297 = vld [vmem:[%s1288 + $0x30] sm:$0xf]
      %v1298 = vld [vmem:[%s1288 + $0x34] sm:$0xf]
      %v1299 = vld [vmem:[%s1288 + $0x3c] sm:$0xf]
      %v1300 = vld [vmem:[%s1288 + $0x40] sm:$0xf]
      %v1301 = vld [vmem:[%s1288 + $0x48] sm:$0xf]
      %v1302 = vld [vmem:[%s1288 + $0x4c] sm:$0xf]
      %v1303 = vld [vmem:[%s1288 + $0x54] sm:$0xf]
      %v1304 = vld [vmem:[%s1288 + $0x58] sm:$0xf]
      %v1321 = vunpack.c.l.b16 %v1289
      %v1322 = vunpack.c.l.b16 %v1290
      %v1323 = vunpack.c.l.b16 %v1291
      %v1324 = vunpack.c.l.b16 %v1292
      %v1325 = vunpack.c.l.b16 %v1293
      %v1326 = vunpack.c.l.b16 %v1294
      %v1327 = vunpack.c.l.b16 %v1295
      %v1328 = vunpack.c.l.b16 %v1296
      %v1329 = vunpack.c.l.b16 %v1297
      %v1330 = vunpack.c.l.b16 %v1298
      %v1331 = vunpack.c.l.b16 %v1299
      %v1332 = vunpack.c.l.b16 %v1300
      %v1333 = vunpack.c.l.b16 %v1301
      %v1334 = vunpack.c.l.b16 %v1302
      %v1335 = vunpack.c.l.b16 %v1303
      %v1336 = vunpack.c.l.b16 %v1304
      %v1337 = vpack.c.b16 %v1322, %v1321
      %v1338 = vpack.c.b16 %v1324, %v1323
      %v1339 = vpack.c.b16 %v1326, %v1325
      %v1340 = vpack.c.b16 %v1328, %v1327
      %v1341 = vpack.c.b16 %v1330, %v1329
      %v1342 = vpack.c.b16 %v1332, %v1331
      %v1343 = vpack.c.b16 %v1334, %v1333
      %v1344 = vpack.c.b16 %v1336, %v1335
      %1345 = vrot.lane.b32.xlu0 %v1337, 12
      %v1346 = vpop.permute.xlu0 %1345
      %1347 = vrot.lane.b32.xlu0 %v1338, 12
      %v1348 = vpop.permute.xlu0 %1347
      %1349 = vrot.lane.b32.xlu0 %v1339, 12
      %v1350 = vpop.permute.xlu0 %1349
      %1351 = vrot.lane.b32.xlu0 %v1340, 12
      %v1352 = vpop.permute.xlu0 %1351
      %1353 = vrot.lane.b32.xlu0 %v1341, 12
      %v1354 = vpop.permute.xlu0 %1353
      %1355 = vrot.lane.b32.xlu0 %v1342, 12
      %v1356 = vpop.permute.xlu0 %1355
      %1357 = vrot.lane.b32.xlu0 %v1343, 12
      %v1358 = vpop.permute.xlu0 %1357
      %1359 = vrot.lane.b32.xlu0 %v1344, 12
      %v1360 = vpop.permute.xlu0 %1359
      %vm1369 = vcmask 113760
      %1370 = vst.msk [vmem:[#allocation2] sm:$0xff] %vm1369, %v1346
      %1371 = vst.msk [vmem:[#allocation2 + $0x8] sm:$0xff] %vm1369, %v1348
      %1372 = vst.msk [vmem:[#allocation2 + $0x10] sm:$0xff] %vm1369, %v1350
      %1373 = vst.msk [vmem:[#allocation2 + $0x18] sm:$0xff] %vm1369, %v1352
      %1374 = vst.msk [vmem:[#allocation2 + $0x20] sm:$0xff] %vm1369, %v1354
      %1375 = vst.msk [vmem:[#allocation2 + $0x28] sm:$0xff] %vm1369, %v1356
      %1376 = vst.msk [vmem:[#allocation2 + $0x30] sm:$0xff] %vm1369, %v1358
      %1377 = vst.msk [vmem:[#allocation2 + $0x38] sm:$0xff] %vm1369, %v1360
      %v1378 = vld [vmem:[%s1288] sm:$0xf]
      %v1379 = vld [vmem:[%s1288 + $0x4] sm:$0xf]
      %v1380 = vld [vmem:[%s1288 + $0x8] sm:$0x1]
      %v1381 = vld [vmem:[%s1288 + $0xc] sm:$0xf]
      %v1382 = vld [vmem:[%s1288 + $0x10] sm:$0xf]
      %v1383 = vld [vmem:[%s1288 + $0x14] sm:$0x1]
      %v1384 = vld [vmem:[%s1288 + $0x18] sm:$0xf]
      %v1385 = vld [vmem:[%s1288 + $0x1c] sm:$0xf]
      %v1386 = vld [vmem:[%s1288 + $0x20] sm:$0x1]
      %v1387 = vld [vmem:[%s1288 + $0x24] sm:$0xf]
      %v1388 = vld [vmem:[%s1288 + $0x28] sm:$0xf]
      %v1389 = vld [vmem:[%s1288 + $0x2c] sm:$0x1]
      %v1390 = vld [vmem:[%s1288 + $0x30] sm:$0xf]
      %v1391 = vld [vmem:[%s1288 + $0x34] sm:$0xf]
      %v1392 = vld [vmem:[%s1288 + $0x38] sm:$0x1]
      %v1393 = vld [vmem:[%s1288 + $0x3c] sm:$0xf]
      %v1394 = vld [vmem:[%s1288 + $0x40] sm:$0xf]
      %v1395 = vld [vmem:[%s1288 + $0x44] sm:$0x1]
      %v1396 = vld [vmem:[%s1288 + $0x48] sm:$0xf]
      %v1397 = vld [vmem:[%s1288 + $0x4c] sm:$0xf]
      %v1398 = vld [vmem:[%s1288 + $0x50] sm:$0x1]
      %v1399 = vld [vmem:[%s1288 + $0x54] sm:$0xf]
      %v1400 = vld [vmem:[%s1288 + $0x58] sm:$0xf]
      %v1401 = vld [vmem:[%s1288 + $0x5c] sm:$0x1]
      %v1403 = vshrl.u32 %v1378, 16
      %v1405 = vrot.slane %v1403, 4
      %v1406 = vshll.u32 %v1378, 16
      %v1408 = vrot.slane %v1406, 5
      %v1409 = vor.u32 %v1405, %v1408
      %v1410 = vrot.slane %v1409, 4
      %v1412 = vshll.u32 %v1379, 16
      %v1414 = vrot.slane %v1412, 5
      %v1415 = vsel %vm344, %v1410, %v1414
      %v1416 = vshrl.u32 %v1379, 16
      %v1418 = vrot.slane %v1416, 4
      %v1419 = vor.u32 %v1418, %v1414
      %v1420 = vrot.slane %v1419, 4
      %v1422 = vshll.u32 %v1380, 16
      %v1424 = vrot.slane %v1422, 5
      %v1425 = vsel %vm344, %v1420, %v1424
      %v1427 = vshrl.u32 %v1381, 16
      %v1429 = vrot.slane %v1427, 4
      %v1430 = vshll.u32 %v1381, 16
      %v1432 = vrot.slane %v1430, 5
      %v1433 = vor.u32 %v1429, %v1432
      %v1434 = vrot.slane %v1433, 4
      %v1436 = vshll.u32 %v1382, 16
      %v1438 = vrot.slane %v1436, 5
      %v1439 = vsel %vm344, %v1434, %v1438
      %v1440 = vshrl.u32 %v1382, 16
      %v1442 = vrot.slane %v1440, 4
      %v1443 = vor.u32 %v1442, %v1438
      %v1444 = vrot.slane %v1443, 4
      %v1446 = vshll.u32 %v1383, 16
      %v1448 = vrot.slane %v1446, 5
      %v1449 = vsel %vm344, %v1444, %v1448
      %v1451 = vshrl.u32 %v1384, 16
      %v1453 = vrot.slane %v1451, 4
      %v1454 = vshll.u32 %v1384, 16
      %v1456 = vrot.slane %v1454, 5
      %v1457 = vor.u32 %v1453, %v1456
      %v1458 = vrot.slane %v1457, 4
      %v1460 = vshll.u32 %v1385, 16
      %v1462 = vrot.slane %v1460, 5
      %v1463 = vsel %vm344, %v1458, %v1462
      %v1464 = vshrl.u32 %v1385, 16
      %v1466 = vrot.slane %v1464, 4
      %v1467 = vor.u32 %v1466, %v1462
      %v1468 = vrot.slane %v1467, 4
      %v1470 = vshll.u32 %v1386, 16
      %v1472 = vrot.slane %v1470, 5
      %v1473 = vsel %vm344, %v1468, %v1472
      %v1475 = vshrl.u32 %v1387, 16
      %v1477 = vrot.slane %v1475, 4
      %v1478 = vshll.u32 %v1387, 16
      %v1480 = vrot.slane %v1478, 5
      %v1481 = vor.u32 %v1477, %v1480
      %v1482 = vrot.slane %v1481, 4
      %v1484 = vshll.u32 %v1388, 16
      %v1486 = vrot.slane %v1484, 5
      %v1487 = vsel %vm344, %v1482, %v1486
      %v1488 = vshrl.u32 %v1388, 16
      %v1490 = vrot.slane %v1488, 4
      %v1491 = vor.u32 %v1490, %v1486
      %v1492 = vrot.slane %v1491, 4
      %v1494 = vshll.u32 %v1389, 16
      %v1496 = vrot.slane %v1494, 5
      %v1497 = vsel %vm344, %v1492, %v1496
      %v1499 = vshrl.u32 %v1390, 16
      %v1501 = vrot.slane %v1499, 4
      %v1502 = vshll.u32 %v1390, 16
      %v1504 = vrot.slane %v1502, 5
      %v1505 = vor.u32 %v1501, %v1504
      %v1506 = vrot.slane %v1505, 4
      %v1508 = vshll.u32 %v1391, 16
      %v1510 = vrot.slane %v1508, 5
      %v1511 = vsel %vm344, %v1506, %v1510
      %v1512 = vshrl.u32 %v1391, 16
      %v1514 = vrot.slane %v1512, 4
      %v1515 = vor.u32 %v1514, %v1510
      %v1516 = vrot.slane %v1515, 4
      %v1518 = vshll.u32 %v1392, 16
      %v1520 = vrot.slane %v1518, 5
      %v1521 = vsel %vm344, %v1516, %v1520
      %v1523 = vshrl.u32 %v1393, 16
      %v1525 = vrot.slane %v1523, 4
      %v1526 = vshll.u32 %v1393, 16
      %v1528 = vrot.slane %v1526, 5
      %v1529 = vor.u32 %v1525, %v1528
      %v1530 = vrot.slane %v1529, 4
      %v1532 = vshll.u32 %v1394, 16
      %v1534 = vrot.slane %v1532, 5
      %v1535 = vsel %vm344, %v1530, %v1534
      %v1536 = vshrl.u32 %v1394, 16
      %v1538 = vrot.slane %v1536, 4
      %v1539 = vor.u32 %v1538, %v1534
      %v1540 = vrot.slane %v1539, 4
      %v1542 = vshll.u32 %v1395, 16
      %v1544 = vrot.slane %v1542, 5
      %v1545 = vsel %vm344, %v1540, %v1544
      %v1547 = vshrl.u32 %v1396, 16
      %v1549 = vrot.slane %v1547, 4
      %v1550 = vshll.u32 %v1396, 16
      %v1552 = vrot.slane %v1550, 5
      %v1553 = vor.u32 %v1549, %v1552
      %v1554 = vrot.slane %v1553, 4
      %v1556 = vshll.u32 %v1397, 16
      %v1558 = vrot.slane %v1556, 5
      %v1559 = vsel %vm344, %v1554, %v1558
      %v1560 = vshrl.u32 %v1397, 16
      %v1562 = vrot.slane %v1560, 4
      %v1563 = vor.u32 %v1562, %v1558
      %v1564 = vrot.slane %v1563, 4
      %v1566 = vshll.u32 %v1398, 16
      %v1568 = vrot.slane %v1566, 5
      %v1569 = vsel %vm344, %v1564, %v1568
      %v1571 = vshrl.u32 %v1399, 16
      %v1573 = vrot.slane %v1571, 4
      %v1574 = vshll.u32 %v1399, 16
      %v1576 = vrot.slane %v1574, 5
      %v1577 = vor.u32 %v1573, %v1576
      %v1578 = vrot.slane %v1577, 4
      %v1580 = vshll.u32 %v1400, 16
      %v1582 = vrot.slane %v1580, 5
      %v1583 = vsel %vm344, %v1578, %v1582
      %v1584 = vshrl.u32 %v1400, 16
      %v1586 = vrot.slane %v1584, 4
      %v1587 = vor.u32 %v1586, %v1582
      %v1588 = vrot.slane %v1587, 4
      %v1590 = vshll.u32 %v1401, 16
      %v1592 = vrot.slane %v1590, 5
      %v1593 = vsel %vm344, %v1588, %v1592
      %v1594 = vunpack.c.l.b16 %v1415
      %v1595 = vunpack.c.l.b16 %v1425
      %v1596 = vunpack.c.l.b16 %v1439
      %v1597 = vunpack.c.l.b16 %v1449
      %v1598 = vunpack.c.l.b16 %v1463
      %v1599 = vunpack.c.l.b16 %v1473
      %v1600 = vunpack.c.l.b16 %v1487
      %v1601 = vunpack.c.l.b16 %v1497
      %v1602 = vunpack.c.l.b16 %v1511
      %v1603 = vunpack.c.l.b16 %v1521
      %v1604 = vunpack.c.l.b16 %v1535
      %v1605 = vunpack.c.l.b16 %v1545
      %v1606 = vunpack.c.l.b16 %v1559
      %v1607 = vunpack.c.l.b16 %v1569
      %v1608 = vunpack.c.l.b16 %v1583
      %v1609 = vunpack.c.l.b16 %v1593
      %v1610 = vpack.c.b16 %v1595, %v1594
      %v1611 = vpack.c.b16 %v1597, %v1596
      %v1612 = vpack.c.b16 %v1599, %v1598
      %v1613 = vpack.c.b16 %v1601, %v1600
      %v1614 = vpack.c.b16 %v1603, %v1602
      %v1615 = vpack.c.b16 %v1605, %v1604
      %v1616 = vpack.c.b16 %v1607, %v1606
      %v1617 = vpack.c.b16 %v1609, %v1608
      %1618 = vrot.lane.b32.xlu0 %v1610, 14
      %v1619 = vpop.permute.xlu0 %1618
      %1620 = vrot.lane.b32.xlu0 %v1611, 14
      %v1621 = vpop.permute.xlu0 %1620
      %1622 = vrot.lane.b32.xlu0 %v1612, 14
      %v1623 = vpop.permute.xlu0 %1622
      %1624 = vrot.lane.b32.xlu0 %v1613, 14
      %v1625 = vpop.permute.xlu0 %1624
      %1626 = vrot.lane.b32.xlu0 %v1614, 14
      %v1627 = vpop.permute.xlu0 %1626
      %1628 = vrot.lane.b32.xlu0 %v1615, 14
      %v1629 = vpop.permute.xlu0 %1628
      %1630 = vrot.lane.b32.xlu0 %v1616, 14
      %v1631 = vpop.permute.xlu0 %1630
      %1632 = vrot.lane.b32.xlu0 %v1617, 14
      %v1633 = vpop.permute.xlu0 %1632
      %vm1642 = vcmask 130160
      %1643 = vst.msk [vmem:[#allocation2] sm:$0xff] %vm1642, %v1619
      %1644 = vst.msk [vmem:[#allocation2 + $0x8] sm:$0xff] %vm1642, %v1621
      %1645 = vst.msk [vmem:[#allocation2 + $0x10] sm:$0xff] %vm1642, %v1623
      %1646 = vst.msk [vmem:[#allocation2 + $0x18] sm:$0xff] %vm1642, %v1625
      %1647 = vst.msk [vmem:[#allocation2 + $0x20] sm:$0xff] %vm1642, %v1627
      %1648 = vst.msk [vmem:[#allocation2 + $0x28] sm:$0xff] %vm1642, %v1629
      %1649 = vst.msk [vmem:[#allocation2 + $0x30] sm:$0xff] %vm1642, %v1631
      %1650 = vst.msk [vmem:[#allocation2 + $0x38] sm:$0xff] %vm1642, %v1633
      %v1651 = vld [vmem:[%s1288] sm:$0xe]
      %v1652 = vld [vmem:[%s1288 + $0x4] sm:$0xf]
      %v1653 = vld [vmem:[%s1288 + $0x8] sm:$0x1]
      %v1654 = vld [vmem:[%s1288 + $0xc] sm:$0xe]
      %v1655 = vld [vmem:[%s1288 + $0x10] sm:$0xf]
      %v1656 = vld [vmem:[%s1288 + $0x14] sm:$0x1]
      %v1657 = vld [vmem:[%s1288 + $0x18] sm:$0xe]
      %v1658 = vld [vmem:[%s1288 + $0x1c] sm:$0xf]
      %v1659 = vld [vmem:[%s1288 + $0x20] sm:$0x1]
      %v1660 = vld [vmem:[%s1288 + $0x24] sm:$0xe]
      %v1661 = vld [vmem:[%s1288 + $0x28] sm:$0xf]
      %v1662 = vld [vmem:[%s1288 + $0x2c] sm:$0x1]
      %v1663 = vld [vmem:[%s1288 + $0x30] sm:$0xe]
      %v1664 = vld [vmem:[%s1288 + $0x34] sm:$0xf]
      %v1665 = vld [vmem:[%s1288 + $0x38] sm:$0x1]
      %v1666 = vld [vmem:[%s1288 + $0x3c] sm:$0xe]
      %v1667 = vld [vmem:[%s1288 + $0x40] sm:$0xf]
      %v1668 = vld [vmem:[%s1288 + $0x44] sm:$0x1]
      %v1669 = vld [vmem:[%s1288 + $0x48] sm:$0xe]
      %v1670 = vld [vmem:[%s1288 + $0x4c] sm:$0xf]
      %v1671 = vld [vmem:[%s1288 + $0x50] sm:$0x1]
      %v1672 = vld [vmem:[%s1288 + $0x54] sm:$0xe]
      %v1673 = vld [vmem:[%s1288 + $0x58] sm:$0xf]
      %v1674 = vld [vmem:[%s1288 + $0x5c] sm:$0x1]
      %v1699 = vrot.slane %v1651, 5
      %v1700 = vrot.slane %v1699, 4
      %v1701 = vrot.slane %v1652, 5
      %v1702 = vsel %vm644, %v1700, %v1701
      %v1703 = vrot.slane %v1701, 4
      %v1704 = vrot.slane %v1653, 5
      %v1705 = vsel %vm644, %v1703, %v1704
      %v1706 = vrot.slane %v1654, 5
      %v1707 = vrot.slane %v1706, 4
      %v1708 = vrot.slane %v1655, 5
      %v1709 = vsel %vm644, %v1707, %v1708
      %v1710 = vrot.slane %v1708, 4
      %v1711 = vrot.slane %v1656, 5
      %v1712 = vsel %vm644, %v1710, %v1711
      %v1713 = vrot.slane %v1657, 5
      %v1714 = vrot.slane %v1713, 4
      %v1715 = vrot.slane %v1658, 5
      %v1716 = vsel %vm644, %v1714, %v1715
      %v1717 = vrot.slane %v1715, 4
      %v1718 = vrot.slane %v1659, 5
      %v1719 = vsel %vm644, %v1717, %v1718
      %v1720 = vrot.slane %v1660, 5
      %v1721 = vrot.slane %v1720, 4
      %v1722 = vrot.slane %v1661, 5
      %v1723 = vsel %vm644, %v1721, %v1722
      %v1724 = vrot.slane %v1722, 4
      %v1725 = vrot.slane %v1662, 5
      %v1726 = vsel %vm644, %v1724, %v1725
      %v1727 = vrot.slane %v1663, 5
      %v1728 = vrot.slane %v1727, 4
      %v1729 = vrot.slane %v1664, 5
      %v1730 = vsel %vm644, %v1728, %v1729
      %v1731 = vrot.slane %v1729, 4
      %v1732 = vrot.slane %v1665, 5
      %v1733 = vsel %vm644, %v1731, %v1732
      %v1734 = vrot.slane %v1666, 5
      %v1735 = vrot.slane %v1734, 4
      %v1736 = vrot.slane %v1667, 5
      %v1737 = vsel %vm644, %v1735, %v1736
      %v1738 = vrot.slane %v1736, 4
      %v1739 = vrot.slane %v1668, 5
      %v1740 = vsel %vm644, %v1738, %v1739
      %v1741 = vrot.slane %v1669, 5
      %v1742 = vrot.slane %v1741, 4
      %v1743 = vrot.slane %v1670, 5
      %v1744 = vsel %vm644, %v1742, %v1743
      %v1745 = vrot.slane %v1743, 4
      %v1746 = vrot.slane %v1671, 5
      %v1747 = vsel %vm644, %v1745, %v1746
      %v1748 = vrot.slane %v1672, 5
      %v1749 = vrot.slane %v1748, 4
      %v1750 = vrot.slane %v1673, 5
      %v1751 = vsel %vm644, %v1749, %v1750
      %v1752 = vrot.slane %v1750, 4
      %v1753 = vrot.slane %v1674, 5
      %v1754 = vsel %vm644, %v1752, %v1753
      %v1755 = vunpack.c.l.b16 %v1702
      %v1756 = vunpack.c.l.b16 %v1705
      %v1757 = vunpack.c.l.b16 %v1709
      %v1758 = vunpack.c.l.b16 %v1712
      %v1759 = vunpack.c.l.b16 %v1716
      %v1760 = vunpack.c.l.b16 %v1719
      %v1761 = vunpack.c.l.b16 %v1723
      %v1762 = vunpack.c.l.b16 %v1726
      %v1763 = vunpack.c.l.b16 %v1730
      %v1764 = vunpack.c.l.b16 %v1733
      %v1765 = vunpack.c.l.b16 %v1737
      %v1766 = vunpack.c.l.b16 %v1740
      %v1767 = vunpack.c.l.b16 %v1744
      %v1768 = vunpack.c.l.b16 %v1747
      %v1769 = vunpack.c.l.b16 %v1751
      %v1770 = vunpack.c.l.b16 %v1754
      %v1771 = vpack.c.b16 %v1756, %v1755
      %v1772 = vpack.c.b16 %v1758, %v1757
      %v1773 = vpack.c.b16 %v1760, %v1759
      %v1774 = vpack.c.b16 %v1762, %v1761
      %v1775 = vpack.c.b16 %v1764, %v1763
      %v1776 = vpack.c.b16 %v1766, %v1765
      %v1777 = vpack.c.b16 %v1768, %v1767
      %v1778 = vpack.c.b16 %v1770, %v1769
      %1779 = vrot.lane.b32.xlu0 %v1771, 16
      %v1780 = vpop.permute.xlu0 %1779
      %1781 = vrot.lane.b32.xlu0 %v1772, 16
      %v1782 = vpop.permute.xlu0 %1781
      %1783 = vrot.lane.b32.xlu0 %v1773, 16
      %v1784 = vpop.permute.xlu0 %1783
      %1785 = vrot.lane.b32.xlu0 %v1774, 16
      %v1786 = vpop.permute.xlu0 %1785
      %1787 = vrot.lane.b32.xlu0 %v1775, 16
      %v1788 = vpop.permute.xlu0 %1787
      %1789 = vrot.lane.b32.xlu0 %v1776, 16
      %v1790 = vpop.permute.xlu0 %1789
      %1791 = vrot.lane.b32.xlu0 %v1777, 16
      %v1792 = vpop.permute.xlu0 %1791
      %1793 = vrot.lane.b32.xlu0 %v1778, 16
      %v1794 = vpop.permute.xlu0 %1793
      %vm1803 = vcmask 146560
      %1804 = vst.msk [vmem:[#allocation2] sm:$0xff] %vm1803, %v1780
      %1805 = vst.msk [vmem:[#allocation2 + $0x8] sm:$0xff] %vm1803, %v1782
      %1806 = vst.msk [vmem:[#allocation2 + $0x10] sm:$0xff] %vm1803, %v1784
      %1807 = vst.msk [vmem:[#allocation2 + $0x18] sm:$0xff] %vm1803, %v1786
      %1808 = vst.msk [vmem:[#allocation2 + $0x20] sm:$0xff] %vm1803, %v1788
      %1809 = vst.msk [vmem:[#allocation2 + $0x28] sm:$0xff] %vm1803, %v1790
      %1810 = vst.msk [vmem:[#allocation2 + $0x30] sm:$0xff] %vm1803, %v1792
      %1811 = vst.msk [vmem:[#allocation2 + $0x38] sm:$0xff] %vm1803, %v1794
      %v1812 = vld [vmem:[#allocation2] sm:$0xff]
      %v1813 = vld [vmem:[#allocation2 + $0x8] sm:$0xff]
      %v1814 = vld [vmem:[#allocation2 + $0x10] sm:$0xff]
      %v1815 = vld [vmem:[#allocation2 + $0x18] sm:$0xff]
      %v1816 = vld [vmem:[#allocation2 + $0x20] sm:$0xff]
      %v1817 = vld [vmem:[#allocation2 + $0x28] sm:$0xff]
      %v1818 = vld [vmem:[#allocation2 + $0x30] sm:$0xff]
      %v1819 = vld [vmem:[#allocation2 + $0x38] sm:$0xff]
      %v1820 = vld [vmem:[%s223] sm:$0xf]
      %v1821 = vld [vmem:[%s223 + $0x4] sm:$0xf]
      %v1822 = vld [vmem:[%s223 + $0x8] sm:$0x1]
      %v1823 = vld [vmem:[%s226] sm:$0x1]
      %v1825 = vlaneseq
      %v1826 = vshrl.u32 %v1825, 7
      %v1827 = vsub.s32 0, %v1826
      %v1828 = vrot.slane %v1823, %v1827
      %v1833 = vunpack.c.l.b16 %v1820
      %v1834 = vunpack.c.l.b16 %v1821
      %v1835 = vunpack.c.l.b16 %v1822
      %v1836 = vpack.c.b16 %v1834, %v1833
      %v1837 = vpack.c.b16 %v1835, %v1835
      %vm1839 = vcmask 146432
      %v1841 = vsel %vm1839, %v1812, 0
      %v1844 = vsel %vm1839, %v1813, 0
      %v1847 = vsel %vm1839, %v1814, 0
      %v1850 = vsel %vm1839, %v1815, 0
      %v1853 = vsel %vm1839, %v1816, 0
      %v1856 = vsel %vm1839, %v1817, 0
      %v1859 = vsel %vm1839, %v1818, 0
      %v1862 = vsel %vm1839, %v1819, 0
      %vm1864 = vcmask 1040384
      %v1866 = vsel %vm1864, %v1837, 0
      %1868 = vmatprep.subr.bf16.mxu0 0
      %1869 = vmatpush1.bf16.msra.mxu0 %v1836
      %1870 = vmatprep.subr.bf16.mxu0 0
      %1871 = vmatpush1.bf16.msra.mxu0 %v1866
      %1872 = vmatprep.subr.bf16.mxu0 0
      %1873 = vmatpush1.bf16.msra.mxu0 0
      %1874 = vmatprep.subr.bf16.mxu0 0
      %1875 = vmatpush1.bf16.msra.mxu0 0
      %1876 = vmatprep.subr.bf16.mxu0 0
      %1877 = vmatpush1.bf16.msra.mxu0 0
      %1878 = vmatprep.subr.bf16.mxu0 0
      %1879 = vmatpush1.bf16.msra.mxu0 0
      %1880 = vmatprep.subr.bf16.mxu0 0
      %1881 = vmatpush1.bf16.msra.mxu0 0
      %1882 = vmatprep.subr.bf16.mxu0 0
      %1883 = vmatpush1.bf16.msra.mxu0 0
      %1884 = vmatprep.subr.bf16.mxu0 0
      %1885 = vmatpush1.bf16.msra.mxu0 0
      %1886 = vmatprep.subr.bf16.mxu0 0
      %1887 = vmatpush1.bf16.msra.mxu0 0
      %1888 = vmatprep.subr.bf16.mxu0 0
      %1889 = vmatpush1.bf16.msra.mxu0 0
      %1890 = vmatprep.subr.bf16.mxu0 0
      %1891 = vmatpush1.bf16.msra.mxu0 0
      %1892 = vmatprep.subr.bf16.mxu0 0
      %1893 = vmatpush1.bf16.msra.mxu0 0
      %1894 = vmatprep.subr.bf16.mxu0 0
      %1895 = vmatpush1.bf16.msra.mxu0 0
      %1896 = vmatprep.subr.bf16.mxu0 0
      %1897 = vmatpush1.bf16.msra.mxu0 0
      %1898 = vmatprep.subr.bf16.mxu0 0
      %1899 = vmatpush1.bf16.msra.mxu0 0
      %1900 = vmatprep.mubr.bf16.mxu0 0
      %1901 = vmatmul.mubr.bf16.gmra.mrb[0].mxu0 %v1841
      %v1902 = vpop.f32.mrb[0].mxu0
      %v1903 = vadd.f32 %v1828, %v1902
      %v1904 = vpop.f32.mrb[0].mxu0
      %v1905 = vpop.f32.mrb[0].mxu0
      %v1906 = vadd.f32 %v1828, %v1905
      %v1907 = vpop.f32.mrb[0].mxu0
      %1908 = vmatprep.mubr.bf16.mxu0 0
      %1909 = vmatmul.mubr.bf16.gmra.mrb[0].mxu0 %v1844
      %v1910 = vpop.f32.mrb[0].mxu0
      %v1911 = vadd.f32 %v1828, %v1910
      %v1912 = vpop.f32.mrb[0].mxu0
      %v1913 = vpop.f32.mrb[0].mxu0
      %v1914 = vadd.f32 %v1828, %v1913
      %v1915 = vpop.f32.mrb[0].mxu0
      %1916 = vmatprep.mubr.bf16.mxu0 0
      %1917 = vmatmul.mubr.bf16.gmra.mrb[0].mxu0 %v1847
      %v1918 = vpop.f32.mrb[0].mxu0
      %v1919 = vadd.f32 %v1828, %v1918
      %v1920 = vpop.f32.mrb[0].mxu0
      %v1921 = vpop.f32.mrb[0].mxu0
      %v1922 = vadd.f32 %v1828, %v1921
      %v1923 = vpop.f32.mrb[0].mxu0
      %1924 = vmatprep.mubr.bf16.mxu0 0
      %1925 = vmatmul.mubr.bf16.gmra.mrb[0].mxu0 %v1850
      %v1926 = vpop.f32.mrb[0].mxu0
      %v1927 = vadd.f32 %v1828, %v1926
      %v1928 = vpop.f32.mrb[0].mxu0
      %v1929 = vpop.f32.mrb[0].mxu0
      %v1930 = vadd.f32 %v1828, %v1929
      %v1931 = vpop.f32.mrb[0].mxu0
      %1932 = vmatprep.mubr.bf16.mxu0 0
      %1933 = vmatmul.mubr.bf16.gmra.mrb[0].mxu0 %v1853
      %v1934 = vpop.f32.mrb[0].mxu0
      %v1935 = vadd.f32 %v1828, %v1934
      %v1936 = vpop.f32.mrb[0].mxu0
      %v1937 = vpop.f32.mrb[0].mxu0
      %v1938 = vadd.f32 %v1828, %v1937
      %v1939 = vpop.f32.mrb[0].mxu0
      %1940 = vmatprep.mubr.bf16.mxu0 0
      %1941 = vmatmul.mubr.bf16.gmra.mrb[0].mxu0 %v1856
      %v1942 = vpop.f32.mrb[0].mxu0
      %v1943 = vadd.f32 %v1828, %v1942
      %v1944 = vpop.f32.mrb[0].mxu0
      %v1945 = vpop.f32.mrb[0].mxu0
      %v1946 = vadd.f32 %v1828, %v1945
      %v1947 = vpop.f32.mrb[0].mxu0
      %1948 = vmatprep.mubr.bf16.mxu0 0
      %1949 = vmatmul.mubr.bf16.gmra.mrb[0].mxu0 %v1859
      %v1950 = vpop.f32.mrb[0].mxu0
      %v1951 = vadd.f32 %v1828, %v1950
      %v1952 = vpop.f32.mrb[0].mxu0
      %v1953 = vpop.f32.mrb[0].mxu0
      %v1954 = vadd.f32 %v1828, %v1953
      %v1955 = vpop.f32.mrb[0].mxu0
      %1956 = vmatprep.mubr.bf16.mxu0 0
      %1957 = vmatmul.mubr.bf16.gmra.mrb[0].mxu0 %v1862
      %v1958 = vpop.f32.mrb[0].mxu0
      %v1959 = vadd.f32 %v1828, %v1958
      %v1960 = vpop.f32.mrb[0].mxu0
      %v1961 = vpop.f32.mrb[0].mxu0
      %v1962 = vadd.f32 %v1828, %v1961
      %v1963 = vpop.f32.mrb[0].mxu0
      %1964 = vdwg.mxu0
      %v1965 = vxor.u32 %v1903, 2147483648
      %v1966 = vxor.u32 %v1906, 2147483648
      %v1967 = vxor.u32 %v1911, 2147483648
      %v1968 = vxor.u32 %v1914, 2147483648
      %v1969 = vxor.u32 %v1919, 2147483648
      %v1970 = vxor.u32 %v1922, 2147483648
      %v1971 = vxor.u32 %v1927, 2147483648
      %v1972 = vxor.u32 %v1930, 2147483648
      %v1973 = vxor.u32 %v1935, 2147483648
      %v1974 = vxor.u32 %v1938, 2147483648
      %v1975 = vxor.u32 %v1943, 2147483648
      %v1976 = vxor.u32 %v1946, 2147483648
      %v1977 = vxor.u32 %v1951, 2147483648
      %v1978 = vxor.u32 %v1954, 2147483648
      %v1979 = vxor.u32 %v1959, 2147483648
      %v1980 = vxor.u32 %v1962, 2147483648
      %v1981 = vmul.f32 %v1965, 1.442695
      %v1982 = vpow.pop %v1981
      %v1983 = vmul.f32 %v1966, 1.442695
      %v1984 = vpow.pop %v1983
      %v1985 = vmul.f32 %v1967, 1.442695
      %v1986 = vpow.pop %v1985
      %v1987 = vmul.f32 %v1968, 1.442695
      %v1988 = vpow.pop %v1987
      %v1989 = vmul.f32 %v1969, 1.442695
      %v1990 = vpow.pop %v1989
      %v1991 = vmul.f32 %v1970, 1.442695
      %v1992 = vpow.pop %v1991
      %v1993 = vmul.f32 %v1971, 1.442695
      %v1994 = vpow.pop %v1993
      %v1995 = vmul.f32 %v1972, 1.442695
      %v1996 = vpow.pop %v1995
      %v1997 = vmul.f32 %v1973, 1.442695
      %v1998 = vpow.pop %v1997
      %v1999 = vmul.f32 %v1974, 1.442695
      %v2000 = vpow.pop %v1999
      %v2001 = vmul.f32 %v1975, 1.442695
      %v2002 = vpow.pop %v2001
      %v2003 = vmul.f32 %v1976, 1.442695
      %v2004 = vpow.pop %v2003
      %v2005 = vmul.f32 %v1977, 1.442695
      %v2006 = vpow.pop %v2005
      %v2007 = vmul.f32 %v1978, 1.442695
      %v2008 = vpow.pop %v2007
      %v2009 = vmul.f32 %v1979, 1.442695
      %v2010 = vpow.pop %v2009
      %v2011 = vmul.f32 %v1980, 1.442695
      %v2012 = vpow.pop %v2011
      %v2013 = vadd.f32 %v1982, 1.0
      %v2014 = vadd.f32 %v1984, 1.0
      %v2015 = vadd.f32 %v1986, 1.0
      %v2016 = vadd.f32 %v1988, 1.0
      %v2017 = vadd.f32 %v1990, 1.0
      %v2018 = vadd.f32 %v1992, 1.0
      %v2019 = vadd.f32 %v1994, 1.0
      %v2020 = vadd.f32 %v1996, 1.0
      %v2021 = vadd.f32 %v1998, 1.0
      %v2022 = vadd.f32 %v2000, 1.0
      %v2023 = vadd.f32 %v2002, 1.0
      %v2024 = vadd.f32 %v2004, 1.0
      %v2025 = vadd.f32 %v2006, 1.0
      %v2026 = vadd.f32 %v2008, 1.0
      %v2027 = vadd.f32 %v2010, 1.0
      %v2028 = vadd.f32 %v2012, 1.0
      %v2029 = vrcp.pop %v2013
      %v2030 = vmul.f32 1.0, %v2029
      %v2031 = vrcp.pop %v2014
      %v2032 = vmul.f32 1.0, %v2031
      %v2033 = vrcp.pop %v2015
      %v2034 = vmul.f32 1.0, %v2033
      %v2035 = vrcp.pop %v2016
      %v2036 = vmul.f32 1.0, %v2035
      %v2037 = vrcp.pop %v2017
      %v2038 = vmul.f32 1.0, %v2037
      %v2039 = vrcp.pop %v2018
      %v2040 = vmul.f32 1.0, %v2039
      %v2041 = vrcp.pop %v2019
      %v2042 = vmul.f32 1.0, %v2041
      %v2043 = vrcp.pop %v2020
      %v2044 = vmul.f32 1.0, %v2043
      %v2045 = vrcp.pop %v2021
      %v2046 = vmul.f32 1.0, %v2045
      %v2047 = vrcp.pop %v2022
      %v2048 = vmul.f32 1.0, %v2047
      %v2049 = vrcp.pop %v2023
      %v2050 = vmul.f32 1.0, %v2049
      %v2051 = vrcp.pop %v2024
      %v2052 = vmul.f32 1.0, %v2051
      %v2053 = vrcp.pop %v2025
      %v2054 = vmul.f32 1.0, %v2053
      %v2055 = vrcp.pop %v2026
      %v2056 = vmul.f32 1.0, %v2055
      %v2057 = vrcp.pop %v2027
      %v2058 = vmul.f32 1.0, %v2057
      %v2059 = vrcp.pop %v2028
      %v2060 = vmul.f32 1.0, %v2059
      %v2061 = vmul.f32 %v1903, %v2030
      %v2062 = vmul.f32 %v1906, %v2032
      %v2063 = vmul.f32 %v1911, %v2034
      %v2064 = vmul.f32 %v1914, %v2036
      %v2065 = vmul.f32 %v1919, %v2038
      %v2066 = vmul.f32 %v1922, %v2040
      %v2067 = vmul.f32 %v1927, %v2042
      %v2068 = vmul.f32 %v1930, %v2044
      %v2069 = vmul.f32 %v1935, %v2046
      %v2070 = vmul.f32 %v1938, %v2048
      %v2071 = vmul.f32 %v1943, %v2050
      %v2072 = vmul.f32 %v1946, %v2052
      %v2073 = vmul.f32 %v1951, %v2054
      %v2074 = vmul.f32 %v1954, %v2056
      %v2075 = vmul.f32 %v1959, %v2058
      %v2076 = vmul.f32 %v1962, %v2060
      %v2077 = vpack.c.bf16 %v2062, %v2061
      %v2078 = vpack.c.bf16 %v2064, %v2063
      %v2079 = vpack.c.bf16 %v2066, %v2065
      %v2080 = vpack.c.bf16 %v2068, %v2067
      %v2081 = vpack.c.bf16 %v2070, %v2069
      %v2082 = vpack.c.bf16 %v2072, %v2071
      %v2083 = vpack.c.bf16 %v2074, %v2073
      %v2084 = vpack.c.bf16 %v2076, %v2075
      %v2093 = vunpack.c.l.b16 %v2077
      %v2094 = vunpack.c.h.b16 %v2077
      %v2095 = vunpack.c.l.b16 %v2078
      %v2096 = vunpack.c.h.b16 %v2078
      %v2097 = vunpack.c.l.b16 %v2079
      %v2098 = vunpack.c.h.b16 %v2079
      %v2099 = vunpack.c.l.b16 %v2080
      %v2100 = vunpack.c.h.b16 %v2080
      %v2101 = vunpack.c.l.b16 %v2081
      %v2102 = vunpack.c.h.b16 %v2081
      %v2103 = vunpack.c.l.b16 %v2082
      %v2104 = vunpack.c.h.b16 %v2082
      %v2105 = vunpack.c.l.b16 %v2083
      %v2106 = vunpack.c.h.b16 %v2083
      %v2107 = vunpack.c.l.b16 %v2084
      %v2108 = vunpack.c.h.b16 %v2084
      %v2109 = vpack.c.b16 %v2093, %v2093
      %v2110 = vpack.c.b16 %v2094, %v2094
      %v2111 = vpack.c.b16 %v2095, %v2095
      %v2112 = vpack.c.b16 %v2096, %v2096
      %v2113 = vpack.c.b16 %v2097, %v2097
      %v2114 = vpack.c.b16 %v2098, %v2098
      %v2115 = vpack.c.b16 %v2099, %v2099
      %v2116 = vpack.c.b16 %v2100, %v2100
      %v2117 = vpack.c.b16 %v2101, %v2101
      %v2118 = vpack.c.b16 %v2102, %v2102
      %v2119 = vpack.c.b16 %v2103, %v2103
      %v2120 = vpack.c.b16 %v2104, %v2104
      %v2121 = vpack.c.b16 %v2105, %v2105
      %v2122 = vpack.c.b16 %v2106, %v2106
      %v2123 = vpack.c.b16 %v2107, %v2107
      %v2124 = vpack.c.b16 %v2108, %v2108
      %vm2141 = vcmask 11264
      %2142 = vst.msk [vmem:[%s238] sm:$0xf] %vm2141, %v2109
      %2143 = vst.msk [vmem:[%s238 + $0x4] sm:$0xf] %vm2141, %v2110
      %2144 = vst.msk [vmem:[%s238 + $0x8] sm:$0xf] %vm2141, %v2111
      %2145 = vst.msk [vmem:[%s238 + $0xc] sm:$0xf] %vm2141, %v2112
      %2146 = vst.msk [vmem:[%s238 + $0x10] sm:$0xf] %vm2141, %v2113
      %2147 = vst.msk [vmem:[%s238 + $0x14] sm:$0xf] %vm2141, %v2114
      %2148 = vst.msk [vmem:[%s238 + $0x18] sm:$0xf] %vm2141, %v2115
      %2149 = vst.msk [vmem:[%s238 + $0x1c] sm:$0xf] %vm2141, %v2116
      %2150 = vst.msk [vmem:[%s238 + $0x20] sm:$0xf] %vm2141, %v2117
      %2151 = vst.msk [vmem:[%s238 + $0x24] sm:$0xf] %vm2141, %v2118
      %2152 = vst.msk [vmem:[%s238 + $0x28] sm:$0xf] %vm2141, %v2119
      %2153 = vst.msk [vmem:[%s238 + $0x2c] sm:$0xf] %vm2141, %v2120
      %2154 = vst.msk [vmem:[%s238 + $0x30] sm:$0xf] %vm2141, %v2121
      %2155 = vst.msk [vmem:[%s238 + $0x34] sm:$0xf] %vm2141, %v2122
      %2156 = vst.msk [vmem:[%s238 + $0x38] sm:$0xf] %vm2141, %v2123
      %2157 = vst.msk [vmem:[%s238 + $0x3c] sm:$0xf] %vm2141, %v2124
      %s2158 = smul.u32 16, %s20
      %p2159 = scmp.lt.s32.totalorder %s19, 1
      %s2160 = scalar_select %p2159, %s19, 1
      %p2161 = scmp.lt.s32.totalorder %s2158, 31
      %s2162 = scalar_select %p2161, %s2158, 31
      %p2163 = scmp.lt.s32.totalorder %s21, 0
      %s2164 = scalar_select %p2163, %s21, 0
      %s2165 = sadd.s32 %s2164, %s2162
      %s2166 = smul.addr %s2160, 32
      %s2167 = sadd.s32 %s2165, %s2166
      %s2168 = smul.addr %s2167, 4
      %s2169 = scalar_lea.vmem %s3, %s2168
      // Predicated region
      $region33: #{csc_qarep_forward.4} parent=31 // pred_check
        %p2170 = pneg %p133
      $region34: #{csc_qarep_forward.4} parent=31 // pred_check_branch
        %2172 = sbr.rel (%p2170) target = $region36
      $region35: #{csc_qarep_forward.4} parent=31 // pred_region
        %s2173 = smul.u32 16, %s20
      $region36: #{csc_qarep_forward.4} parent=31 // pred_fallthru
        _
    $region32: #{csc_qarep_forward.4} parent=5 // pred_fallthru
      _
    %p2174 = scmp.le.s32.totalorder 2, %s9
    // Predicated region
    $region37: #{csc_qarep_forward.4} parent=5 // pred_check
      %p2175 = pneg %p2174
    $region38: #{csc_qarep_forward.4} parent=5 // pred_check_branch
      %2177 = sbr.rel (%p2175) target = $region40
    $region39: #{csc_qarep_forward.4} parent=5 // pred_region
      %s2178 = ssub.s32 %s9, 2
      // Predicated region
      $region41: #{csc_qarep_forward.4} parent=39 // pred_check
        %p2179 = pneg %p139
      $region42: #{csc_qarep_forward.4} parent=39 // pred_check_branch
        %2181 = sbr.rel (%p2179) target = $region44
      $region43: #{csc_qarep_forward.4} parent=39 // pred_region
        %s2182 = smul.u32 16, %s23
        %p2183 = scmp.lt.s32.totalorder %s22, 1
        %s2184 = scalar_select %p2183, %s22, 1
        %p2185 = scmp.lt.s32.totalorder %s2182, 31
        %s2186 = scalar_select %p2185, %s2182, 31
        %p2187 = scmp.lt.s32.totalorder %s24, 0
        %s2188 = scalar_select %p2187, %s24, 0
        %s2189 = sadd.s32 %s2188, %s2186
        %s2190 = smul.addr %s2184, 32
        %s2191 = sadd.s32 %s2189, %s2190
        %s2192 = smul.addr %s2191, 4
        %s2193 = scalar_lea.vmem %s3, %s2192
      $region44: #{csc_qarep_forward.4} parent=39 // pred_fallthru
        _
    $region40: #{csc_qarep_forward.4} parent=5 // pred_fallthru
      _
  $region6: #{csc_qarep_forward.4} parent=0 // loop_footer
    %s13 = sadd.s32 1, %s9
  $region7: #{csc_qarep_forward.4} parent=0 // loop_footer_branch
    %8 = sbr.rel target = $region3
  $region8: #{csc_qarep_forward.4} parent=0 // loop_exit
    _

</llo_original>
